<compile_context>
chip_gen: v6e
topology: v6e:2x2x1
jax: 0.10.0
libtpu: 0.0.40
codegen_flags: <defaults>
</compile_context>

<pallas_src>
import functools
import math

import jax
import jax.numpy as jnp
from jax.experimental import pallas as pl
from jax.experimental.pallas import tpu as pltpu

# ---------------- hyper-parameters (shrunk ViT) ----------------
IMAGE = 64
PATCH = 32
CHANNELS = 3
BATCH = 2
DIM = 256
DEPTH = 2
HEADS = 4
DIM_HEAD = 64
INNER = HEADS * DIM_HEAD
MLP_DIM = 512
PROJ_DIM = 128
NUM_PATCHES = (IMAGE // PATCH) ** 2          # 4
SEQ = NUM_PATCHES + 1                        # 5 (cls + patches)
SEQ_PAD = 8                                  # pad to sublane multiple
PATCH_DIM = CHANNELS * PATCH * PATCH         # 3072
LN_EPS = 1e-5                                # PyTorch nn.LayerNorm default


def _gelu(x):
    # PyTorch nn.GELU default = exact erf formulation
    return 0.5 * x * (1.0 + jax.lax.erf(x * (1.0 / math.sqrt(2.0))))


def _layernorm(x, g, b):
    mu = jnp.mean(x, axis=-1, keepdims=True)
    xc = x - mu
    var = jnp.mean(xc * xc, axis=-1, keepdims=True)
    return xc * jax.lax.rsqrt(var + LN_EPS) * g + b


# ---------------- fused Pallas kernels ----------------
def _embed_kernel(p_ref, w_ref, b_ref, cls_ref, pos_ref, o_ref):
    # patch embed: (NUM_PATCHES, PATCH_DIM) @ (PATCH_DIM, DIM) + bias
    pe = jnp.dot(p_ref[...], w_ref[...], preferred_element_type=jnp.float32) + b_ref[...]
    # assemble [cls | patches | zero-pad] + positional embedding (pos pad rows are 0)
    o_ref[0:1, :] = cls_ref[...] + pos_ref[0:1, :]
    o_ref[1:SEQ, :] = pe + pos_ref[1:SEQ, :]
    o_ref[SEQ:, :] = jnp.zeros((SEQ_PAD - SEQ, DIM), jnp.float32)


def embed_pallas(p, w, b, cls, pos_pad):
    B = p.shape[0]
    return pl.pallas_call(
        _embed_kernel,
        out_shape=jax.ShapeDtypeStruct((B, SEQ_PAD, DIM), jnp.float32),
        grid_spec=pltpu.PrefetchScalarGridSpec(
            num_scalar_prefetch=0,
            grid=(B,),
            in_specs=[
                pl.BlockSpec((None, NUM_PATCHES, PATCH_DIM), lambda b_: (b_, 0, 0)),
                pl.BlockSpec((PATCH_DIM, DIM), lambda b_: (0, 0)),
                pl.BlockSpec((1, DIM), lambda b_: (0, 0)),
                pl.BlockSpec((1, DIM), lambda b_: (0, 0)),
                pl.BlockSpec((SEQ_PAD, DIM), lambda b_: (0, 0)),
            ],
            out_specs=pl.BlockSpec((None, SEQ_PAD, DIM), lambda b_: (b_, 0, 0)),
        ),
        compiler_params=pltpu.CompilerParams(dimension_semantics=("parallel",)),
    )(p, w, b, cls, pos_pad)


def _block_kernel(x_ref, ln1g_ref, ln1b_ref, qw_ref, kw_ref, vw_ref,
                  ow_ref, ob_ref, ln2g_ref, ln2b_ref,
                  m1w_ref, m1b_ref, m2w_ref, m2b_ref, o_ref, *, scale):
    x = x_ref[...]                                               # (SEQ_PAD, DIM)

    # mask: padded key columns must not receive attention weight
    key_valid = jax.lax.broadcasted_iota(jnp.int32, (SEQ_PAD, SEQ_PAD), 1) < SEQ

    # ---- x = x + W_o(softmax(QK^T / sqrt(d)) V) + b_o ----
    h = _layernorm(x, ln1g_ref[...], ln1b_ref[...])
    attn = jnp.zeros((SEQ_PAD, DIM), jnp.float32)
    for hd in range(HEADS):                                      # unrolled, all heads per step
        q = jnp.dot(h, qw_ref[hd], preferred_element_type=jnp.float32)   # (SEQ_PAD, Dh)
        k = jnp.dot(h, kw_ref[hd], preferred_element_type=jnp.float32)
        v = jnp.dot(h, vw_ref[hd], preferred_element_type=jnp.float32)
        s = jax.lax.dot_general(q, k, (((1,), (1,)), ((), ())),
                                preferred_element_type=jnp.float32) * scale  # (SEQ_PAD, SEQ_PAD)
        s = jnp.where(key_valid, s, -1e30)
        s = s - jnp.max(s, axis=-1, keepdims=True)
        p = jnp.exp(s)
        p = p * pl.reciprocal(jnp.sum(p, axis=-1, keepdims=True), approx=True)
        o_h = jnp.dot(p, v, preferred_element_type=jnp.float32)              # (SEQ_PAD, Dh)
        attn = attn + jnp.dot(o_h, ow_ref[hd], preferred_element_type=jnp.float32)
    x = x + attn + ob_ref[...]

    # ---- x = x + MLP(LayerNorm(x)) ----
    h = _layernorm(x, ln2g_ref[...], ln2b_ref[...])
    h = _gelu(jnp.dot(h, m1w_ref[...], preferred_element_type=jnp.float32) + m1b_ref[...])
    h = jnp.dot(h, m2w_ref[...], preferred_element_type=jnp.float32) + m2b_ref[...]
    x = x + h

    # keep padded rows exactly zero for the next layer / mean-pool
    row_valid = jax.lax.broadcasted_iota(jnp.int32, (SEQ_PAD, DIM), 0) < SEQ
    o_ref[...] = jnp.where(row_valid, x, 0.0)


def block_pallas(tok, lyr, scale):
    B = tok.shape[0]
    full2 = lambda b_: (0, 0)
    full3 = lambda b_: (0, 0, 0)
    return pl.pallas_call(
        functools.partial(_block_kernel, scale=scale),
        out_shape=jax.ShapeDtypeStruct((B, SEQ_PAD, DIM), jnp.float32),
        grid_spec=pltpu.PrefetchScalarGridSpec(
            num_scalar_prefetch=0,
            grid=(B,),
            in_specs=[
                pl.BlockSpec((None, SEQ_PAD, DIM), lambda b_: (b_, 0, 0)),
                pl.BlockSpec((1, DIM), full2),                    # ln1_g
                pl.BlockSpec((1, DIM), full2),                    # ln1_b
                pl.BlockSpec((HEADS, DIM, DIM_HEAD), full3),      # q weights (per head)
                pl.BlockSpec((HEADS, DIM, DIM_HEAD), full3),      # k weights
                pl.BlockSpec((HEADS, DIM, DIM_HEAD), full3),      # v weights
                pl.BlockSpec((HEADS, DIM_HEAD, DIM), full3),      # out-proj weights (per head)
                pl.BlockSpec((1, DIM), full2),                    # out-proj bias
                pl.BlockSpec((1, DIM), full2),                    # ln2_g
                pl.BlockSpec((1, DIM), full2),                    # ln2_b
                pl.BlockSpec((DIM, MLP_DIM), full2),              # mlp1_w
                pl.BlockSpec((1, MLP_DIM), full2),                # mlp1_b
                pl.BlockSpec((MLP_DIM, DIM), full2),              # mlp2_w
                pl.BlockSpec((1, DIM), full2),                    # mlp2_b
            ],
            out_specs=pl.BlockSpec((None, SEQ_PAD, DIM), lambda b_: (b_, 0, 0)),
        ),
        compiler_params=pltpu.CompilerParams(dimension_semantics=("parallel",)),
    )(tok, lyr["ln1_g"], lyr["ln1_b"], lyr["qw"], lyr["kw"], lyr["vw"],
      lyr["ow"], lyr["out_b"], lyr["ln2_g"], lyr["ln2_b"],
      lyr["mlp1_w"], lyr["mlp1_b"], lyr["mlp2_w"], lyr["mlp2_b"])


def _tail_kernel(tok_ref, pw_ref, pb_ref, g_ref, b_ref, o_ref):
    tok = tok_ref[...]                                           # (SEQ_PAD, DIM), pad rows == 0
    mean = jnp.sum(tok, axis=0, keepdims=True) * (1.0 / SEQ)     # real-token mean, (1, DIM)
    y = jnp.dot(mean, pw_ref[...], preferred_element_type=jnp.float32) + pb_ref[...]
    y = _layernorm(y, g_ref[...], b_ref[...])
    o_ref[...] = _gelu(y)


def tail_pallas(tok, pw, pb, g, b):
    B = tok.shape[0]
    return pl.pallas_call(
        _tail_kernel,
        out_shape=jax.ShapeDtypeStruct((B, 1, PROJ_DIM), jnp.float32),
        grid_spec=pltpu.PrefetchScalarGridSpec(
            num_scalar_prefetch=0,
            grid=(B,),
            in_specs=[
                pl.BlockSpec((None, SEQ_PAD, DIM), lambda b_: (b_, 0, 0)),
                pl.BlockSpec((DIM, PROJ_DIM), lambda b_: (0, 0)),
                pl.BlockSpec((1, PROJ_DIM), lambda b_: (0, 0)),
                pl.BlockSpec((1, PROJ_DIM), lambda b_: (0, 0)),
                pl.BlockSpec((1, PROJ_DIM), lambda b_: (0, 0)),
            ],
            out_specs=pl.BlockSpec((None, 1, PROJ_DIM), lambda b_: (b_, 0, 0)),
        ),
        compiler_params=pltpu.CompilerParams(dimension_semantics=("parallel",)),
    )(tok, pw, pb, g, b)


# ---------------- parameters ----------------
def init_params(key):
    keys = jax.random.split(key, 4 + DEPTH)

    def dense(k, fin, fout, bias=True):
        kw, kb = jax.random.split(k)
        bound = 1.0 / math.sqrt(fin)  # PyTorch nn.Linear default init
        w = jax.random.uniform(kw, (fin, fout), jnp.float32, -bound, bound)
        b = (jax.random.uniform(kb, (fout,), jnp.float32, -bound, bound)
             if bias else jnp.zeros((fout,), jnp.float32))
        return w, b

    params = {}
    pw, pb = dense(keys[0], PATCH_DIM, DIM)
    params["patch"] = {"w": pw, "b": pb.reshape(1, DIM)}
    params["cls"] = 0.02 * jax.random.normal(keys[1], (1, 1, DIM), jnp.float32)
    params["pos"] = 0.02 * jax.random.normal(keys[2], (1, SEQ, DIM), jnp.float32)

    layers = []
    for d in range(DEPTH):
        lk = jax.random.split(keys[3 + d], 4)
        qkv_w, _ = dense(lk[0], DIM, 3 * INNER, bias=False)       # to_qkv has no bias
        out_w, out_b = dense(lk[1], INNER, DIM)
        m1_w, m1_b = dense(lk[2], DIM, MLP_DIM)
        m2_w, m2_b = dense(lk[3], MLP_DIM, DIM)
        # Reorganize QKV / out-proj into per-head slabs indexed on the leading axis
        # inside the fused kernel (equivalent math, avoids lane slicing/concat).
        qw = qkv_w[:, 0 * INNER:1 * INNER].reshape(DIM, HEADS, DIM_HEAD).transpose(1, 0, 2)
        kw = qkv_w[:, 1 * INNER:2 * INNER].reshape(DIM, HEADS, DIM_HEAD).transpose(1, 0, 2)
        vw = qkv_w[:, 2 * INNER:3 * INNER].reshape(DIM, HEADS, DIM_HEAD).transpose(1, 0, 2)
        ow = out_w.reshape(HEADS, DIM_HEAD, DIM)
        layers.append({
            "ln1_g": jnp.ones((1, DIM), jnp.float32), "ln1_b": jnp.zeros((1, DIM), jnp.float32),
            "qw": qw, "kw": kw, "vw": vw,
            "ow": ow, "out_b": out_b.reshape(1, DIM),
            "ln2_g": jnp.ones((1, DIM), jnp.float32), "ln2_b": jnp.zeros((1, DIM), jnp.float32),
            "mlp1_w": m1_w, "mlp1_b": m1_b.reshape(1, MLP_DIM),
            "mlp2_w": m2_w, "mlp2_b": m2_b.reshape(1, DIM),
        })
    params["layers"] = layers

    prw, prb = dense(keys[3 + DEPTH], DIM, PROJ_DIM)
    params["proj_w"] = prw
    params["proj_b"] = prb.reshape(1, PROJ_DIM)
    params["proj_ln_g"] = jnp.ones((1, PROJ_DIM), jnp.float32)
    params["proj_ln_b"] = jnp.zeros((1, PROJ_DIM), jnp.float32)
    return params


# ---------------- forward pass ----------------
def vit_extractor_forward(params, x):
    B = x.shape[0]
    # patchify: 'b c (h p1) (w p2) -> b (h w) (p1 p2 c)'  (pure layout, XLA ops)
    hp = IMAGE // PATCH
    p = x.reshape(B, CHANNELS, hp, PATCH, hp, PATCH)
    p = p.transpose(0, 2, 4, 3, 5, 1)                            # b h w p1 p2 c
    p = p.reshape(B, NUM_PATCHES, PATCH_DIM)

    pos_pad = jnp.pad(params["pos"][0], ((0, SEQ_PAD - SEQ), (0, 0)))   # (SEQ_PAD, DIM)
    cls = params["cls"].reshape(1, DIM)

    # fused embed: patch linear + cls token + positional embedding + zero pad rows
    tok = embed_pallas(p, params["patch"]["w"], params["patch"]["b"], cls, pos_pad)
    # emb_dropout: identity at inference

    scale = DIM_HEAD ** -0.5
    for lyr in params["layers"]:
        tok = block_pallas(tok, lyr, scale)      # one fused pallas_call per layer

    # fused tail: mean over real tokens -> Linear -> LayerNorm -> GELU
    feat = tail_pallas(tok, params["proj_w"], params["proj_b"],
                       params["proj_ln_g"], params["proj_ln_b"])  # (B, 1, PROJ_DIM)

    pred_seg = jnp.zeros_like(x)
    return feat, pred_seg


if __name__ == "__main__":
    key = jax.random.PRNGKey(0)
    kx, kp = jax.random.split(key)
    x = jax.random.normal(kx, (BATCH, CHANNELS, IMAGE, IMAGE), jnp.float32)
    params = init_params(kp)

    feat, pred_seg = jax.jit(vit_extractor_forward)(params, x)
    jax.block_until_ready((feat, pred_seg))

    assert feat.shape == (BATCH, 1, PROJ_DIM) and feat.dtype == jnp.float32
    assert pred_seg.shape == x.shape and pred_seg.dtype == x.dtype
    assert bool(jnp.all(pred_seg == 0))
    assert bool(jnp.all(jnp.isfinite(feat)))
    print("KERNEL_OK")
</pallas_src>

<mosaic_0001>
module attributes {stable_mosaic.version = 11 : i64} {
  func.func @_embed_kernel(%arg0: i32, %arg1: memref<1x4x3072xf32, #tpu.memory_space<vmem>>, %arg2: memref<3072x256xf32, #tpu.memory_space<vmem>>, %arg3: memref<1x256xf32, #tpu.memory_space<vmem>>, %arg4: memref<1x256xf32, #tpu.memory_space<vmem>>, %arg5: memref<8x256xf32, #tpu.memory_space<vmem>>, %arg6: memref<1x8x256xf32, #tpu.memory_space<vmem>>) attributes {dimension_semantics = [#tpu.dimension_semantics<parallel>], iteration_bounds = array<i64: 2>, scalar_prefetch = 0 : i64, scratch_operands = 0 : i64, tpu.core_type = #tpu.core_type<tc>, window_params = [{transform_indices = @transform_0, window_bounds = array<i64: 1, 4, 3072>}, {pipeline_mode = #tpu.pipeline_mode<synchronous>, transform_indices = @transform_1, window_bounds = array<i64: 3072, 256>}, {pipeline_mode = #tpu.pipeline_mode<synchronous>, transform_indices = @transform_2, window_bounds = array<i64: 1, 256>}, {pipeline_mode = #tpu.pipeline_mode<synchronous>, transform_indices = @transform_3, window_bounds = array<i64: 1, 256>}, {pipeline_mode = #tpu.pipeline_mode<synchronous>, transform_indices = @transform_4, window_bounds = array<i64: 8, 256>}, {transform_indices = @transform_5, window_bounds = array<i64: 1, 8, 256>}]} {
    %c0 = arith.constant 0 : index
    %c0_0 = arith.constant 0 : index
    %c0_1 = arith.constant 0 : index
    %0 = vector.load %arg1[%c0, %c0_0, %c0_1] : memref<1x4x3072xf32, #tpu.memory_space<vmem>>, vector<1x4x3072xf32>
    %1 = vector.shape_cast %0 : vector<1x4x3072xf32> to vector<4x3072xf32>
    %c0_2 = arith.constant 0 : index
    %c0_3 = arith.constant 0 : index
    %2 = vector.load %arg2[%c0_2, %c0_3] : memref<3072x256xf32, #tpu.memory_space<vmem>>, vector<3072x256xf32>
    %cst = arith.constant dense<0.000000e+00> : vector<4x256xf32>
    %3 = tpu.matmul %1, %2, %cst {dimension_numbers = #tpu.dot_dimension_numbers<[1], [0], [0], [1], [0, 0, 1, 1], [], []>} : vector<4x3072xf32>, vector<3072x256xf32>, vector<4x256xf32> -> vector<4x256xf32>
    %c0_4 = arith.constant 0 : index
    %c0_5 = arith.constant 0 : index
    %4 = vector.load %arg3[%c0_4, %c0_5] : memref<1x256xf32, #tpu.memory_space<vmem>>, vector<1x256xf32>
    %5 = vector.broadcast %4 : vector<1x256xf32> to vector<4x256xf32>
    %6 = arith.addf %3, %5 : vector<4x256xf32>
    %c0_6 = arith.constant 0 : index
    %c0_7 = arith.constant 0 : index
    %7 = vector.load %arg4[%c0_6, %c0_7] : memref<1x256xf32, #tpu.memory_space<vmem>>, vector<1x256xf32>
    %c0_8 = arith.constant 0 : index
    %c0_9 = arith.constant 0 : index
    %8 = vector.load %arg5[%c0_8, %c0_9] : memref<8x256xf32, #tpu.memory_space<vmem>>, vector<1x256xf32>
    %9 = arith.addf %7, %8 : vector<1x256xf32>
    %c0_10 = arith.constant 0 : index
    %c0_11 = arith.constant 0 : index
    %c0_12 = arith.constant 0 : index
    %10 = vector.load %arg6[%c0_10, %c0_11, %c0_12] : memref<1x8x256xf32, #tpu.memory_space<vmem>>, vector<1x1x256xf32>
    %11 = vector.shape_cast %10 : vector<1x1x256xf32> to vector<1x256xf32>
    %12 = vector.shape_cast %9 : vector<1x256xf32> to vector<1x1x256xf32>
    tpu.vector_store %arg6[%c0_10, %c0_11, %c0_12], %12 {strides = array<i32>} : memref<1x8x256xf32, #tpu.memory_space<vmem>>, vector<1x1x256xf32>,
    %c1 = arith.constant 1 : index
    %c0_13 = arith.constant 0 : index
    %13 = vector.load %arg5[%c1, %c0_13] : memref<8x256xf32, #tpu.memory_space<vmem>>, vector<4x256xf32>
    %14 = arith.addf %6, %13 : vector<4x256xf32>
    %c0_14 = arith.constant 0 : index
    %c1_15 = arith.constant 1 : index
    %c0_16 = arith.constant 0 : index
    %15 = vector.load %arg6[%c0_14, %c1_15, %c0_16] : memref<1x8x256xf32, #tpu.memory_space<vmem>>, vector<1x4x256xf32>
    %16 = vector.shape_cast %15 : vector<1x4x256xf32> to vector<4x256xf32>
    %17 = vector.shape_cast %14 : vector<4x256xf32> to vector<1x4x256xf32>
    tpu.vector_store %arg6[%c0_14, %c1_15, %c0_16], %17 {strides = array<i32>} : memref<1x8x256xf32, #tpu.memory_space<vmem>>, vector<1x4x256xf32>,
    %cst_17 = arith.constant 0.000000e+00 : f32
    %18 = vector.broadcast %cst_17 : f32 to vector<3x256xf32>
    %c0_18 = arith.constant 0 : index
    %c5 = arith.constant 5 : index
    %c0_19 = arith.constant 0 : index
    %19 = vector.load %arg6[%c0_18, %c5, %c0_19] : memref<1x8x256xf32, #tpu.memory_space<vmem>>, vector<1x3x256xf32>
    %20 = vector.shape_cast %19 : vector<1x3x256xf32> to vector<3x256xf32>
    %21 = vector.shape_cast %18 : vector<3x256xf32> to vector<1x3x256xf32>
    tpu.vector_store %arg6[%c0_18, %c5, %c0_19], %21 {strides = array<i32>} : memref<1x8x256xf32, #tpu.memory_space<vmem>>, vector<1x3x256xf32>,
    return
  }
  func.func @transform_0(%arg0: i32) -> (i32, i32, i32) {
    %c0_i32 = arith.constant 0 : i32
    %c0_i32_0 = arith.constant 0 : i32
    %c0_i32_1 = arith.constant 0 : i32
    return %arg0, %c0_i32, %c0_i32_0 : i32, i32, i32
  }
  func.func @transform_1(%arg0: i32) -> (i32, i32) {
    %c0_i32 = arith.constant 0 : i32
    %c0_i32_0 = arith.constant 0 : i32
    %c0_i32_1 = arith.constant 0 : i32
    return %c0_i32, %c0_i32_0 : i32, i32
  }
  func.func @transform_2(%arg0: i32) -> (i32, i32) {
    %c0_i32 = arith.constant 0 : i32
    %c0_i32_0 = arith.constant 0 : i32
    %c0_i32_1 = arith.constant 0 : i32
    return %c0_i32, %c0_i32_0 : i32, i32
  }
  func.func @transform_3(%arg0: i32) -> (i32, i32) {
    %c0_i32 = arith.constant 0 : i32
    %c0_i32_0 = arith.constant 0 : i32
    %c0_i32_1 = arith.constant 0 : i32
    return %c0_i32, %c0_i32_0 : i32, i32
  }
  func.func @transform_4(%arg0: i32) -> (i32, i32) {
    %c0_i32 = arith.constant 0 : i32
    %c0_i32_0 = arith.constant 0 : i32
    %c0_i32_1 = arith.constant 0 : i32
    return %c0_i32, %c0_i32_0 : i32, i32
  }
  func.func @transform_5(%arg0: i32) -> (i32, i32, i32) {
    %c0_i32 = arith.constant 0 : i32
    %c0_i32_0 = arith.constant 0 : i32
    %c0_i32_1 = arith.constant 0 : i32
    return %arg0, %c0_i32, %c0_i32_0 : i32, i32, i32
  }
}

module attributes {stable_mosaic.version = 11 : i64} {
  func.func @_block_kernel(%arg0: i32, %arg1: memref<1x8x256xf32, #tpu.memory_space<vmem>>, %arg2: memref<1x256xf32, #tpu.memory_space<vmem>>, %arg3: memref<1x256xf32, #tpu.memory_space<vmem>>, %arg4: memref<4x256x64xf32, #tpu.memory_space<vmem>>, %arg5: memref<4x256x64xf32, #tpu.memory_space<vmem>>, %arg6: memref<4x256x64xf32, #tpu.memory_space<vmem>>, %arg7: memref<4x64x256xf32, #tpu.memory_space<vmem>>, %arg8: memref<1x256xf32, #tpu.memory_space<vmem>>, %arg9: memref<1x256xf32, #tpu.memory_space<vmem>>, %arg10: memref<1x256xf32, #tpu.memory_space<vmem>>, %arg11: memref<256x512xf32, #tpu.memory_space<vmem>>, %arg12: memref<1x512xf32, #tpu.memory_space<vmem>>, %arg13: memref<512x256xf32, #tpu.memory_space<vmem>>, %arg14: memref<1x256xf32, #tpu.memory_space<vmem>>, %arg15: memref<1x8x256xf32, #tpu.memory_space<vmem>>) attributes {dimension_semantics = [#tpu.dimension_semantics<parallel>], iteration_bounds = array<i64: 2>, scalar_prefetch = 0 : i64, scratch_operands = 0 : i64, tpu.core_type = #tpu.core_type<tc>, window_params = [{transform_indices = @transform_0, window_bounds = array<i64: 1, 8, 256>}, {pipeline_mode = #tpu.pipeline_mode<synchronous>, transform_indices = @transform_1, window_bounds = array<i64: 1, 256>}, {pipeline_mode = #tpu.pipeline_mode<synchronous>, transform_indices = @transform_2, window_bounds = array<i64: 1, 256>}, {pipeline_mode = #tpu.pipeline_mode<synchronous>, transform_indices = @transform_3, window_bounds = array<i64: 4, 256, 64>}, {pipeline_mode = #tpu.pipeline_mode<synchronous>, transform_indices = @transform_4, window_bounds = array<i64: 4, 256, 64>}, {pipeline_mode = #tpu.pipeline_mode<synchronous>, transform_indices = @transform_5, window_bounds = array<i64: 4, 256, 64>}, {pipeline_mode = #tpu.pipeline_mode<synchronous>, transform_indices = @transform_6, window_bounds = array<i64: 4, 64, 256>}, {pipeline_mode = #tpu.pipeline_mode<synchronous>, transform_indices = @transform_7, window_bounds = array<i64: 1, 256>}, {pipeline_mode = #tpu.pipeline_mode<synchronous>, transform_indices = @transform_8, window_bounds = array<i64: 1, 256>}, {pipeline_mode = #tpu.pipeline_mode<synchronous>, transform_indices = @transform_9, window_bounds = array<i64: 1, 256>}, {pipeline_mode = #tpu.pipeline_mode<synchronous>, transform_indices = @transform_10, window_bounds = array<i64: 256, 512>}, {pipeline_mode = #tpu.pipeline_mode<synchronous>, transform_indices = @transform_11, window_bounds = array<i64: 1, 512>}, {pipeline_mode = #tpu.pipeline_mode<synchronous>, transform_indices = @transform_12, window_bounds = array<i64: 512, 256>}, {pipeline_mode = #tpu.pipeline_mode<synchronous>, transform_indices = @transform_13, window_bounds = array<i64: 1, 256>}, {transform_indices = @transform_14, window_bounds = array<i64: 1, 8, 256>}]} {
    %c0 = arith.constant 0 : index
    %c0_0 = arith.constant 0 : index
    %c0_1 = arith.constant 0 : index
    %0 = vector.load %arg1[%c0, %c0_0, %c0_1] : memref<1x8x256xf32, #tpu.memory_space<vmem>>, vector<1x8x256xf32>
    %1 = vector.shape_cast %0 : vector<1x8x256xf32> to vector<8x256xf32>
    %2 = tpu.iota {dimensions = array<i32: 1>} : vector<8x8xi32>
    %c5_i32 = arith.constant 5 : i32
    %3 = vector.broadcast %c5_i32 : i32 to vector<8x8xi32>
    %4 = arith.cmpi slt, %2, %3 : vector<8x8xi32>
    %c0_2 = arith.constant 0 : index
    %c0_3 = arith.constant 0 : index
    %5 = vector.load %arg2[%c0_2, %c0_3] : memref<1x256xf32, #tpu.memory_space<vmem>>, vector<1x256xf32>
    %c0_4 = arith.constant 0 : index
    %c0_5 = arith.constant 0 : index
    %6 = vector.load %arg3[%c0_4, %c0_5] : memref<1x256xf32, #tpu.memory_space<vmem>>, vector<1x256xf32>
    %cst = arith.constant dense<0.000000e+00> : vector<8xf32>
    %7 = vector.multi_reduction <add>, %1, %cst [1] : vector<8x256xf32> to vector<8xf32>
    %8 = vector.shape_cast %7 : vector<8xf32> to vector<8x1xf32>
    %cst_6 = arith.constant 2.560000e+02 : f32
    %9 = vector.broadcast %cst_6 : f32 to vector<8x1xf32>
    %10 = arith.divf %8, %9 : vector<8x1xf32>
    %11 = vector.broadcast %10 : vector<8x1xf32> to vector<8x256xf32>
    %12 = arith.subf %1, %11 : vector<8x256xf32>
    %13 = arith.mulf %12, %12 : vector<8x256xf32>
    %cst_7 = arith.constant dense<0.000000e+00> : vector<8xf32>
    %14 = vector.multi_reduction <add>, %13, %cst_7 [1] : vector<8x256xf32> to vector<8xf32>
    %15 = vector.shape_cast %14 : vector<8xf32> to vector<8x1xf32>
    %cst_8 = arith.constant 2.560000e+02 : f32
    %16 = vector.broadcast %cst_8 : f32 to vector<8x1xf32>
    %17 = arith.divf %15, %16 : vector<8x1xf32>
    %cst_9 = arith.constant 9.99999974E-6 : f32
    %18 = vector.broadcast %cst_9 : f32 to vector<8x1xf32>
    %19 = arith.addf %17, %18 : vector<8x1xf32>
    %20 = math.rsqrt %19 : vector<8x1xf32>
    %21 = vector.broadcast %20 : vector<8x1xf32> to vector<8x256xf32>
    %22 = arith.mulf %12, %21 : vector<8x256xf32>
    %23 = vector.broadcast %5 : vector<1x256xf32> to vector<8x256xf32>
    %24 = arith.mulf %22, %23 : vector<8x256xf32>
    %25 = vector.broadcast %6 : vector<1x256xf32> to vector<8x256xf32>
    %26 = arith.addf %24, %25 : vector<8x256xf32>
    %cst_10 = arith.constant 0.000000e+00 : f32
    %27 = vector.broadcast %cst_10 : f32 to vector<8x256xf32>
    %c0_11 = arith.constant 0 : index
    %c0_12 = arith.constant 0 : index
    %c0_13 = arith.constant 0 : index
    %28 = vector.load %arg4[%c0_11, %c0_12, %c0_13] : memref<4x256x64xf32, #tpu.memory_space<vmem>>, vector<1x256x64xf32>
    %29 = vector.shape_cast %28 : vector<1x256x64xf32> to vector<256x64xf32>
    %cst_14 = arith.constant dense<0.000000e+00> : vector<8x64xf32>
    %30 = tpu.matmul %26, %29, %cst_14 {dimension_numbers = #tpu.dot_dimension_numbers<[1], [0], [0], [1], [0, 0, 1, 1], [], []>} : vector<8x256xf32>, vector<256x64xf32>, vector<8x64xf32> -> vector<8x64xf32>
    %c0_15 = arith.constant 0 : index
    %c0_16 = arith.constant 0 : index
    %c0_17 = arith.constant 0 : index
    %31 = vector.load %arg5[%c0_15, %c0_16, %c0_17] : memref<4x256x64xf32, #tpu.memory_space<vmem>>, vector<1x256x64xf32>
    %32 = vector.shape_cast %31 : vector<1x256x64xf32> to vector<256x64xf32>
    %cst_18 = arith.constant dense<0.000000e+00> : vector<8x64xf32>
    %33 = tpu.matmul %26, %32, %cst_18 {dimension_numbers = #tpu.dot_dimension_numbers<[1], [0], [0], [1], [0, 0, 1, 1], [], []>} : vector<8x256xf32>, vector<256x64xf32>, vector<8x64xf32> -> vector<8x64xf32>
    %c0_19 = arith.constant 0 : index
    %c0_20 = arith.constant 0 : index
    %c0_21 = arith.constant 0 : index
    %34 = vector.load %arg6[%c0_19, %c0_20, %c0_21] : memref<4x256x64xf32, #tpu.memory_space<vmem>>, vector<1x256x64xf32>
    %35 = vector.shape_cast %34 : vector<1x256x64xf32> to vector<256x64xf32>
    %cst_22 = arith.constant dense<0.000000e+00> : vector<8x64xf32>
    %36 = tpu.matmul %26, %35, %cst_22 {dimension_numbers = #tpu.dot_dimension_numbers<[1], [0], [0], [1], [0, 0, 1, 1], [], []>} : vector<8x256xf32>, vector<256x64xf32>, vector<8x64xf32> -> vector<8x64xf32>
    %cst_23 = arith.constant dense<0.000000e+00> : vector<8x8xf32>
    %37 = tpu.matmul %30, %33, %cst_23 {dimension_numbers = #tpu.dot_dimension_numbers<[1], [1], [0], [0], [0, 0, 1, 0], [], []>} : vector<8x64xf32>, vector<8x64xf32>, vector<8x8xf32> -> vector<8x8xf32>
    %cst_24 = arith.constant 1.250000e-01 : f32
    %38 = vector.broadcast %cst_24 : f32 to vector<8x8xf32>
    %39 = arith.mulf %37, %38 : vector<8x8xf32>
    %cst_25 = arith.constant -1.000000e+30 : f32
    %40 = vector.broadcast %cst_25 : f32 to vector<8x8xf32>
    %41 = arith.select %4, %39, %40 : vector<8x8xi1>, vector<8x8xf32>
    %cst_26 = arith.constant dense<0xFF800000> : vector<8xf32>
    %42 = vector.multi_reduction <maximumf>, %41, %cst_26 [1] : vector<8x8xf32> to vector<8xf32>
    %43 = vector.shape_cast %42 : vector<8xf32> to vector<8x1xf32>
    %44 = vector.broadcast %43 : vector<8x1xf32> to vector<8x8xf32>
    %45 = arith.subf %41, %44 : vector<8x8xf32>
    %46 = math.exp %45 : vector<8x8xf32>
    %cst_27 = arith.constant dense<0.000000e+00> : vector<8xf32>
    %47 = vector.multi_reduction <add>, %46, %cst_27 [1] : vector<8x8xf32> to vector<8xf32>
    %48 = vector.shape_cast %47 : vector<8xf32> to vector<8x1xf32>
    %49 = tpu.reciprocal %48 {approx = true} : vector<8x1xf32> -> vector<8x1xf32>
    %50 = vector.broadcast %49 : vector<8x1xf32> to vector<8x8xf32>
    %51 = arith.mulf %46, %50 : vector<8x8xf32>
    %cst_28 = arith.constant dense<0.000000e+00> : vector<8x64xf32>
    %52 = tpu.matmul %51, %36, %cst_28 {dimension_numbers = #tpu.dot_dimension_numbers<[1], [0], [0], [1], [0, 0, 1, 1], [], []>} : vector<8x8xf32>, vector<8x64xf32>, vector<8x64xf32> -> vector<8x64xf32>
    %c0_29 = arith.constant 0 : index
    %c0_30 = arith.constant 0 : index
    %c0_31 = arith.constant 0 : index
    %53 = vector.load %arg7[%c0_29, %c0_30, %c0_31] : memref<4x64x256xf32, #tpu.memory_space<vmem>>, vector<1x64x256xf32>
    %54 = vector.shape_cast %53 : vector<1x64x256xf32> to vector<64x256xf32>
    %cst_32 = arith.constant dense<0.000000e+00> : vector<8x256xf32>
    %55 = tpu.matmul %52, %54, %cst_32 {dimension_numbers = #tpu.dot_dimension_numbers<[1], [0], [0], [1], [0, 0, 1, 1], [], []>} : vector<8x64xf32>, vector<64x256xf32>, vector<8x256xf32> -> vector<8x256xf32>
    %56 = arith.addf %27, %55 : vector<8x256xf32>
    %c1 = arith.constant 1 : index
    %c0_33 = arith.constant 0 : index
    %c0_34 = arith.constant 0 : index
    %57 = vector.load %arg4[%c1, %c0_33, %c0_34] : memref<4x256x64xf32, #tpu.memory_space<vmem>>, vector<1x256x64xf32>
    %58 = vector.shape_cast %57 : vector<1x256x64xf32> to vector<256x64xf32>
    %cst_35 = arith.constant dense<0.000000e+00> : vector<8x64xf32>
    %59 = tpu.matmul %26, %58, %cst_35 {dimension_numbers = #tpu.dot_dimension_numbers<[1], [0], [0], [1], [0, 0, 1, 1], [], []>} : vector<8x256xf32>, vector<256x64xf32>, vector<8x64xf32> -> vector<8x64xf32>
    %c1_36 = arith.constant 1 : index
    %c0_37 = arith.constant 0 : index
    %c0_38 = arith.constant 0 : index
    %60 = vector.load %arg5[%c1_36, %c0_37, %c0_38] : memref<4x256x64xf32, #tpu.memory_space<vmem>>, vector<1x256x64xf32>
    %61 = vector.shape_cast %60 : vector<1x256x64xf32> to vector<256x64xf32>
    %cst_39 = arith.constant dense<0.000000e+00> : vector<8x64xf32>
    %62 = tpu.matmul %26, %61, %cst_39 {dimension_numbers = #tpu.dot_dimension_numbers<[1], [0], [0], [1], [0, 0, 1, 1], [], []>} : vector<8x256xf32>, vector<256x64xf32>, vector<8x64xf32> -> vector<8x64xf32>
    %c1_40 = arith.constant 1 : index
    %c0_41 = arith.constant 0 : index
    %c0_42 = arith.constant 0 : index
    %63 = vector.load %arg6[%c1_40, %c0_41, %c0_42] : memref<4x256x64xf32, #tpu.memory_space<vmem>>, vector<1x256x64xf32>
    %64 = vector.shape_cast %63 : vector<1x256x64xf32> to vector<256x64xf32>
    %cst_43 = arith.constant dense<0.000000e+00> : vector<8x64xf32>
    %65 = tpu.matmul %26, %64, %cst_43 {dimension_numbers = #tpu.dot_dimension_numbers<[1], [0], [0], [1], [0, 0, 1, 1], [], []>} : vector<8x256xf32>, vector<256x64xf32>, vector<8x64xf32> -> vector<8x64xf32>
    %cst_44 = arith.constant dense<0.000000e+00> : vector<8x8xf32>
    %66 = tpu.matmul %59, %62, %cst_44 {dimension_numbers = #tpu.dot_dimension_numbers<[1], [1], [0], [0], [0, 0, 1, 0], [], []>} : vector<8x64xf32>, vector<8x64xf32>, vector<8x8xf32> -> vector<8x8xf32>
    %cst_45 = arith.constant 1.250000e-01 : f32
    %67 = vector.broadcast %cst_45 : f32 to vector<8x8xf32>
    %68 = arith.mulf %66, %67 : vector<8x8xf32>
    %cst_46 = arith.constant -1.000000e+30 : f32
    %69 = vector.broadcast %cst_46 : f32 to vector<8x8xf32>
    %70 = arith.select %4, %68, %69 : vector<8x8xi1>, vector<8x8xf32>
    %cst_47 = arith.constant dense<0xFF800000> : vector<8xf32>
    %71 = vector.multi_reduction <maximumf>, %70, %cst_47 [1] : vector<8x8xf32> to vector<8xf32>
    %72 = vector.shape_cast %71 : vector<8xf32> to vector<8x1xf32>
    %73 = vector.broadcast %72 : vector<8x1xf32> to vector<8x8xf32>
    %74 = arith.subf %70, %73 : vector<8x8xf32>
    %75 = math.exp %74 : vector<8x8xf32>
    %cst_48 = arith.constant dense<0.000000e+00> : vector<8xf32>
    %76 = vector.multi_reduction <add>, %75, %cst_48 [1] : vector<8x8xf32> to vector<8xf32>
    %77 = vector.shape_cast %76 : vector<8xf32> to vector<8x1xf32>
    %78 = tpu.reciprocal %77 {approx = true} : vector<8x1xf32> -> vector<8x1xf32>
    %79 = vector.broadcast %78 : vector<8x1xf32> to vector<8x8xf32>
    %80 = arith.mulf %75, %79 : vector<8x8xf32>
    %cst_49 = arith.constant dense<0.000000e+00> : vector<8x64xf32>
    %81 = tpu.matmul %80, %65, %cst_49 {dimension_numbers = #tpu.dot_dimension_numbers<[1], [0], [0], [1], [0, 0, 1, 1], [], []>} : vector<8x8xf32>, vector<8x64xf32>, vector<8x64xf32> -> vector<8x64xf32>
    %c1_50 = arith.constant 1 : index
    %c0_51 = arith.constant 0 : index
    %c0_52 = arith.constant 0 : index
    %82 = vector.load %arg7[%c1_50, %c0_51, %c0_52] : memref<4x64x256xf32, #tpu.memory_space<vmem>>, vector<1x64x256xf32>
    %83 = vector.shape_cast %82 : vector<1x64x256xf32> to vector<64x256xf32>
    %cst_53 = arith.constant dense<0.000000e+00> : vector<8x256xf32>
    %84 = tpu.matmul %81, %83, %cst_53 {dimension_numbers = #tpu.dot_dimension_numbers<[1], [0], [0], [1], [0, 0, 1, 1], [], []>} : vector<8x64xf32>, vector<64x256xf32>, vector<8x256xf32> -> vector<8x256xf32>
    %85 = arith.addf %56, %84 : vector<8x256xf32>
    %c2 = arith.constant 2 : index
    %c0_54 = arith.constant 0 : index
    %c0_55 = arith.constant 0 : index
    %86 = vector.load %arg4[%c2, %c0_54, %c0_55] : memref<4x256x64xf32, #tpu.memory_space<vmem>>, vector<1x256x64xf32>
    %87 = vector.shape_cast %86 : vector<1x256x64xf32> to vector<256x64xf32>
    %cst_56 = arith.constant dense<0.000000e+00> : vector<8x64xf32>
    %88 = tpu.matmul %26, %87, %cst_56 {dimension_numbers = #tpu.dot_dimension_numbers<[1], [0], [0], [1], [0, 0, 1, 1], [], []>} : vector<8x256xf32>, vector<256x64xf32>, vector<8x64xf32> -> vector<8x64xf32>
    %c2_57 = arith.constant 2 : index
    %c0_58 = arith.constant 0 : index
    %c0_59 = arith.constant 0 : index
    %89 = vector.load %arg5[%c2_57, %c0_58, %c0_59] : memref<4x256x64xf32, #tpu.memory_space<vmem>>, vector<1x256x64xf32>
    %90 = vector.shape_cast %89 : vector<1x256x64xf32> to vector<256x64xf32>
    %cst_60 = arith.constant dense<0.000000e+00> : vector<8x64xf32>
    %91 = tpu.matmul %26, %90, %cst_60 {dimension_numbers = #tpu.dot_dimension_numbers<[1], [0], [0], [1], [0, 0, 1, 1], [], []>} : vector<8x256xf32>, vector<256x64xf32>, vector<8x64xf32> -> vector<8x64xf32>
    %c2_61 = arith.constant 2 : index
    %c0_62 = arith.constant 0 : index
    %c0_63 = arith.constant 0 : index
    %92 = vector.load %arg6[%c2_61, %c0_62, %c0_63] : memref<4x256x64xf32, #tpu.memory_space<vmem>>, vector<1x256x64xf32>
    %93 = vector.shape_cast %92 : vector<1x256x64xf32> to vector<256x64xf32>
    %cst_64 = arith.constant dense<0.000000e+00> : vector<8x64xf32>
    %94 = tpu.matmul %26, %93, %cst_64 {dimension_numbers = #tpu.dot_dimension_numbers<[1], [0], [0], [1], [0, 0, 1, 1], [], []>} : vector<8x256xf32>, vector<256x64xf32>, vector<8x64xf32> -> vector<8x64xf32>
    %cst_65 = arith.constant dense<0.000000e+00> : vector<8x8xf32>
    %95 = tpu.matmul %88, %91, %cst_65 {dimension_numbers = #tpu.dot_dimension_numbers<[1], [1], [0], [0], [0, 0, 1, 0], [], []>} : vector<8x64xf32>, vector<8x64xf32>, vector<8x8xf32> -> vector<8x8xf32>
    %cst_66 = arith.constant 1.250000e-01 : f32
    %96 = vector.broadcast %cst_66 : f32 to vector<8x8xf32>
    %97 = arith.mulf %95, %96 : vector<8x8xf32>
    %cst_67 = arith.constant -1.000000e+30 : f32
    %98 = vector.broadcast %cst_67 : f32 to vector<8x8xf32>
    %99 = arith.select %4, %97, %98 : vector<8x8xi1>, vector<8x8xf32>
    %cst_68 = arith.constant dense<0xFF800000> : vector<8xf32>
    %100 = vector.multi_reduction <maximumf>, %99, %cst_68 [1] : vector<8x8xf32> to vector<8xf32>
    %101 = vector.shape_cast %100 : vector<8xf32> to vector<8x1xf32>
    %102 = vector.broadcast %101 : vector<8x1xf32> to vector<8x8xf32>
    %103 = arith.subf %99, %102 : vector<8x8xf32>
    %104 = math.exp %103 : vector<8x8xf32>
    %cst_69 = arith.constant dense<0.000000e+00> : vector<8xf32>
    %105 = vector.multi_reduction <add>, %104, %cst_69 [1] : vector<8x8xf32> to vector<8xf32>
    %106 = vector.shape_cast %105 : vector<8xf32> to vector<8x1xf32>
    %107 = tpu.reciprocal %106 {approx = true} : vector<8x1xf32> -> vector<8x1xf32>
    %108 = vector.broadcast %107 : vector<8x1xf32> to vector<8x8xf32>
    %109 = arith.mulf %104, %108 : vector<8x8xf32>
    %cst_70 = arith.constant dense<0.000000e+00> : vector<8x64xf32>
    %110 = tpu.matmul %109, %94, %cst_70 {dimension_numbers = #tpu.dot_dimension_numbers<[1], [0], [0], [1], [0, 0, 1, 1], [], []>} : vector<8x8xf32>, vector<8x64xf32>, vector<8x64xf32> -> vector<8x64xf32>
    %c2_71 = arith.constant 2 : index
    %c0_72 = arith.constant 0 : index
    %c0_73 = arith.constant 0 : index
    %111 = vector.load %arg7[%c2_71, %c0_72, %c0_73] : memref<4x64x256xf32, #tpu.memory_space<vmem>>, vector<1x64x256xf32>
    %112 = vector.shape_cast %111 : vector<1x64x256xf32> to vector<64x256xf32>
    %cst_74 = arith.constant dense<0.000000e+00> : vector<8x256xf32>
    %113 = tpu.matmul %110, %112, %cst_74 {dimension_numbers = #tpu.dot_dimension_numbers<[1], [0], [0], [1], [0, 0, 1, 1], [], []>} : vector<8x64xf32>, vector<64x256xf32>, vector<8x256xf32> -> vector<8x256xf32>
    %114 = arith.addf %85, %113 : vector<8x256xf32>
    %c3 = arith.constant 3 : index
    %c0_75 = arith.constant 0 : index
    %c0_76 = arith.constant 0 : index
    %115 = vector.load %arg4[%c3, %c0_75, %c0_76] : memref<4x256x64xf32, #tpu.memory_space<vmem>>, vector<1x256x64xf32>
    %116 = vector.shape_cast %115 : vector<1x256x64xf32> to vector<256x64xf32>
    %cst_77 = arith.constant dense<0.000000e+00> : vector<8x64xf32>
    %117 = tpu.matmul %26, %116, %cst_77 {dimension_numbers = #tpu.dot_dimension_numbers<[1], [0], [0], [1], [0, 0, 1, 1], [], []>} : vector<8x256xf32>, vector<256x64xf32>, vector<8x64xf32> -> vector<8x64xf32>
    %c3_78 = arith.constant 3 : index
    %c0_79 = arith.constant 0 : index
    %c0_80 = arith.constant 0 : index
    %118 = vector.load %arg5[%c3_78, %c0_79, %c0_80] : memref<4x256x64xf32, #tpu.memory_space<vmem>>, vector<1x256x64xf32>
    %119 = vector.shape_cast %118 : vector<1x256x64xf32> to vector<256x64xf32>
    %cst_81 = arith.constant dense<0.000000e+00> : vector<8x64xf32>
    %120 = tpu.matmul %26, %119, %cst_81 {dimension_numbers = #tpu.dot_dimension_numbers<[1], [0], [0], [1], [0, 0, 1, 1], [], []>} : vector<8x256xf32>, vector<256x64xf32>, vector<8x64xf32> -> vector<8x64xf32>
    %c3_82 = arith.constant 3 : index
    %c0_83 = arith.constant 0 : index
    %c0_84 = arith.constant 0 : index
    %121 = vector.load %arg6[%c3_82, %c0_83, %c0_84] : memref<4x256x64xf32, #tpu.memory_space<vmem>>, vector<1x256x64xf32>
    %122 = vector.shape_cast %121 : vector<1x256x64xf32> to vector<256x64xf32>
    %cst_85 = arith.constant dense<0.000000e+00> : vector<8x64xf32>
    %123 = tpu.matmul %26, %122, %cst_85 {dimension_numbers = #tpu.dot_dimension_numbers<[1], [0], [0], [1], [0, 0, 1, 1], [], []>} : vector<8x256xf32>, vector<256x64xf32>, vector<8x64xf32> -> vector<8x64xf32>
    %cst_86 = arith.constant dense<0.000000e+00> : vector<8x8xf32>
    %124 = tpu.matmul %117, %120, %cst_86 {dimension_numbers = #tpu.dot_dimension_numbers<[1], [1], [0], [0], [0, 0, 1, 0], [], []>} : vector<8x64xf32>, vector<8x64xf32>, vector<8x8xf32> -> vector<8x8xf32>
    %cst_87 = arith.constant 1.250000e-01 : f32
    %125 = vector.broadcast %cst_87 : f32 to vector<8x8xf32>
    %126 = arith.mulf %124, %125 : vector<8x8xf32>
    %cst_88 = arith.constant -1.000000e+30 : f32
    %127 = vector.broadcast %cst_88 : f32 to vector<8x8xf32>
    %128 = arith.select %4, %126, %127 : vector<8x8xi1>, vector<8x8xf32>
    %cst_89 = arith.constant dense<0xFF800000> : vector<8xf32>
    %129 = vector.multi_reduction <maximumf>, %128, %cst_89 [1] : vector<8x8xf32> to vector<8xf32>
    %130 = vector.shape_cast %129 : vector<8xf32> to vector<8x1xf32>
    %131 = vector.broadcast %130 : vector<8x1xf32> to vector<8x8xf32>
    %132 = arith.subf %128, %131 : vector<8x8xf32>
    %133 = math.exp %132 : vector<8x8xf32>
    %cst_90 = arith.constant dense<0.000000e+00> : vector<8xf32>
    %134 = vector.multi_reduction <add>, %133, %cst_90 [1] : vector<8x8xf32> to vector<8xf32>
    %135 = vector.shape_cast %134 : vector<8xf32> to vector<8x1xf32>
    %136 = tpu.reciprocal %135 {approx = true} : vector<8x1xf32> -> vector<8x1xf32>
    %137 = vector.broadcast %136 : vector<8x1xf32> to vector<8x8xf32>
    %138 = arith.mulf %133, %137 : vector<8x8xf32>
    %cst_91 = arith.constant dense<0.000000e+00> : vector<8x64xf32>
    %139 = tpu.matmul %138, %123, %cst_91 {dimension_numbers = #tpu.dot_dimension_numbers<[1], [0], [0], [1], [0, 0, 1, 1], [], []>} : vector<8x8xf32>, vector<8x64xf32>, vector<8x64xf32> -> vector<8x64xf32>
    %c3_92 = arith.constant 3 : index
    %c0_93 = arith.constant 0 : index
    %c0_94 = arith.constant 0 : index
    %140 = vector.load %arg7[%c3_92, %c0_93, %c0_94] : memref<4x64x256xf32, #tpu.memory_space<vmem>>, vector<1x64x256xf32>
    %141 = vector.shape_cast %140 : vector<1x64x256xf32> to vector<64x256xf32>
    %cst_95 = arith.constant dense<0.000000e+00> : vector<8x256xf32>
    %142 = tpu.matmul %139, %141, %cst_95 {dimension_numbers = #tpu.dot_dimension_numbers<[1], [0], [0], [1], [0, 0, 1, 1], [], []>} : vector<8x64xf32>, vector<64x256xf32>, vector<8x256xf32> -> vector<8x256xf32>
    %143 = arith.addf %114, %142 : vector<8x256xf32>
    %144 = arith.addf %1, %143 : vector<8x256xf32>
    %c0_96 = arith.constant 0 : index
    %c0_97 = arith.constant 0 : index
    %145 = vector.load %arg8[%c0_96, %c0_97] : memref<1x256xf32, #tpu.memory_space<vmem>>, vector<1x256xf32>
    %146 = vector.broadcast %145 : vector<1x256xf32> to vector<8x256xf32>
    %147 = arith.addf %144, %146 : vector<8x256xf32>
    %c0_98 = arith.constant 0 : index
    %c0_99 = arith.constant 0 : index
    %148 = vector.load %arg9[%c0_98, %c0_99] : memref<1x256xf32, #tpu.memory_space<vmem>>, vector<1x256xf32>
    %c0_100 = arith.constant 0 : index
    %c0_101 = arith.constant 0 : index
    %149 = vector.load %arg10[%c0_100, %c0_101] : memref<1x256xf32, #tpu.memory_space<vmem>>, vector<1x256xf32>
    %cst_102 = arith.constant dense<0.000000e+00> : vector<8xf32>
    %150 = vector.multi_reduction <add>, %147, %cst_102 [1] : vector<8x256xf32> to vector<8xf32>
    %151 = vector.shape_cast %150 : vector<8xf32> to vector<8x1xf32>
    %cst_103 = arith.constant 2.560000e+02 : f32
    %152 = vector.broadcast %cst_103 : f32 to vector<8x1xf32>
    %153 = arith.divf %151, %152 : vector<8x1xf32>
    %154 = vector.broadcast %153 : vector<8x1xf32> to vector<8x256xf32>
    %155 = arith.subf %147, %154 : vector<8x256xf32>
    %156 = arith.mulf %155, %155 : vector<8x256xf32>
    %cst_104 = arith.constant dense<0.000000e+00> : vector<8xf32>
    %157 = vector.multi_reduction <add>, %156, %cst_104 [1] : vector<8x256xf32> to vector<8xf32>
    %158 = vector.shape_cast %157 : vector<8xf32> to vector<8x1xf32>
    %cst_105 = arith.constant 2.560000e+02 : f32
    %159 = vector.broadcast %cst_105 : f32 to vector<8x1xf32>
    %160 = arith.divf %158, %159 : vector<8x1xf32>
    %cst_106 = arith.constant 9.99999974E-6 : f32
    %161 = vector.broadcast %cst_106 : f32 to vector<8x1xf32>
    %162 = arith.addf %160, %161 : vector<8x1xf32>
    %163 = math.rsqrt %162 : vector<8x1xf32>
    %164 = vector.broadcast %163 : vector<8x1xf32> to vector<8x256xf32>
    %165 = arith.mulf %155, %164 : vector<8x256xf32>
    %166 = vector.broadcast %148 : vector<1x256xf32> to vector<8x256xf32>
    %167 = arith.mulf %165, %166 : vector<8x256xf32>
    %168 = vector.broadcast %149 : vector<1x256xf32> to vector<8x256xf32>
    %169 = arith.addf %167, %168 : vector<8x256xf32>
    %c0_107 = arith.constant 0 : index
    %c0_108 = arith.constant 0 : index
    %170 = vector.load %arg11[%c0_107, %c0_108] : memref<256x512xf32, #tpu.memory_space<vmem>>, vector<256x512xf32>
    %cst_109 = arith.constant dense<0.000000e+00> : vector<8x512xf32>
    %171 = tpu.matmul %169, %170, %cst_109 {dimension_numbers = #tpu.dot_dimension_numbers<[1], [0], [0], [1], [0, 0, 1, 1], [], []>} : vector<8x256xf32>, vector<256x512xf32>, vector<8x512xf32> -> vector<8x512xf32>
    %c0_110 = arith.constant 0 : index
    %c0_111 = arith.constant 0 : index
    %172 = vector.load %arg12[%c0_110, %c0_111] : memref<1x512xf32, #tpu.memory_space<vmem>>, vector<1x512xf32>
    %173 = vector.broadcast %172 : vector<1x512xf32> to vector<8x512xf32>
    %174 = arith.addf %171, %173 : vector<8x512xf32>
    %cst_112 = arith.constant 5.000000e-01 : f32
    %175 = vector.broadcast %cst_112 : f32 to vector<8x512xf32>
    %176 = arith.mulf %175, %174 : vector<8x512xf32>
    %cst_113 = arith.constant 0.707106769 : f32
    %177 = vector.broadcast %cst_113 : f32 to vector<8x512xf32>
    %178 = arith.mulf %174, %177 : vector<8x512xf32>
    %179 = math.erf %178 : vector<8x512xf32>
    %cst_114 = arith.constant 1.000000e+00 : f32
    %180 = vector.broadcast %cst_114 : f32 to vector<8x512xf32>
    %181 = arith.addf %180, %179 : vector<8x512xf32>
    %182 = arith.mulf %176, %181 : vector<8x512xf32>
    %c0_115 = arith.constant 0 : index
    %c0_116 = arith.constant 0 : index
    %183 = vector.load %arg13[%c0_115, %c0_116] : memref<512x256xf32, #tpu.memory_space<vmem>>, vector<512x256xf32>
    %cst_117 = arith.constant dense<0.000000e+00> : vector<8x256xf32>
    %184 = tpu.matmul %182, %183, %cst_117 {dimension_numbers = #tpu.dot_dimension_numbers<[1], [0], [0], [1], [0, 0, 1, 1], [], []>} : vector<8x512xf32>, vector<512x256xf32>, vector<8x256xf32> -> vector<8x256xf32>
    %c0_118 = arith.constant 0 : index
    %c0_119 = arith.constant 0 : index
    %185 = vector.load %arg14[%c0_118, %c0_119] : memref<1x256xf32, #tpu.memory_space<vmem>>, vector<1x256xf32>
    %186 = vector.broadcast %185 : vector<1x256xf32> to vector<8x256xf32>
    %187 = arith.addf %184, %186 : vector<8x256xf32>
    %188 = arith.addf %147, %187 : vector<8x256xf32>
    %189 = tpu.iota {dimensions = array<i32: 0>} : vector<8x256xi32>
    %c5_i32_120 = arith.constant 5 : i32
    %190 = vector.broadcast %c5_i32_120 : i32 to vector<8x256xi32>
    %191 = arith.cmpi slt, %189, %190 : vector<8x256xi32>
    %cst_121 = arith.constant 0.000000e+00 : f32
    %192 = vector.broadcast %cst_121 : f32 to vector<8x256xf32>
    %193 = arith.select %191, %188, %192 : vector<8x256xi1>, vector<8x256xf32>
    %c0_122 = arith.constant 0 : index
    %c0_123 = arith.constant 0 : index
    %c0_124 = arith.constant 0 : index
    %194 = vector.load %arg15[%c0_122, %c0_123, %c0_124] : memref<1x8x256xf32, #tpu.memory_space<vmem>>, vector<1x8x256xf32>
    %195 = vector.shape_cast %194 : vector<1x8x256xf32> to vector<8x256xf32>
    %196 = vector.shape_cast %193 : vector<8x256xf32> to vector<1x8x256xf32>
    tpu.vector_store %arg15[%c0_122, %c0_123, %c0_124], %196 {strides = array<i32>} : memref<1x8x256xf32, #tpu.memory_space<vmem>>, vector<1x8x256xf32>,
    return
  }
  func.func @transform_0(%arg0: i32) -> (i32, i32, i32) {
    %c0_i32 = arith.constant 0 : i32
    %c0_i32_0 = arith.constant 0 : i32
    %c0_i32_1 = arith.constant 0 : i32
    return %arg0, %c0_i32, %c0_i32_0 : i32, i32, i32
  }
  func.func @transform_1(%arg0: i32) -> (i32, i32) {
    %c0_i32 = arith.constant 0 : i32
    %c0_i32_0 = arith.constant 0 : i32
    %c0_i32_1 = arith.constant 0 : i32
    return %c0_i32, %c0_i32_0 : i32, i32
  }
  func.func @transform_2(%arg0: i32) -> (i32, i32) {
    %c0_i32 = arith.constant 0 : i32
    %c0_i32_0 = arith.constant 0 : i32
    %c0_i32_1 = arith.constant 0 : i32
    return %c0_i32, %c0_i32_0 : i32, i32
  }
  func.func @transform_3(%arg0: i32) -> (i32, i32, i32) {
    %c0_i32 = arith.constant 0 : i32
    %c0_i32_0 = arith.constant 0 : i32
    %c0_i32_1 = arith.constant 0 : i32
    %c0_i32_2 = arith.constant 0 : i32
    return %c0_i32, %c0_i32_0, %c0_i32_1 : i32, i32, i32
  }
  func.func @transform_4(%arg0: i32) -> (i32, i32, i32) {
    %c0_i32 = arith.constant 0 : i32
    %c0_i32_0 = arith.constant 0 : i32
    %c0_i32_1 = arith.constant 0 : i32
    %c0_i32_2 = arith.constant 0 : i32
    return %c0_i32, %c0_i32_0, %c0_i32_1 : i32, i32, i32
  }
  func.func @transform_5(%arg0: i32) -> (i32, i32, i32) {
    %c0_i32 = arith.constant 0 : i32
    %c0_i32_0 = arith.constant 0 : i32
    %c0_i32_1 = arith.constant 0 : i32
    %c0_i32_2 = arith.constant 0 : i32
    return %c0_i32, %c0_i32_0, %c0_i32_1 : i32, i32, i32
  }
  func.func @transform_6(%arg0: i32) -> (i32, i32, i32) {
    %c0_i32 = arith.constant 0 : i32
    %c0_i32_0 = arith.constant 0 : i32
    %c0_i32_1 = arith.constant 0 : i32
    %c0_i32_2 = arith.constant 0 : i32
    return %c0_i32, %c0_i32_0, %c0_i32_1 : i32, i32, i32
  }
  func.func @transform_7(%arg0: i32) -> (i32, i32) {
    %c0_i32 = arith.constant 0 : i32
    %c0_i32_0 = arith.constant 0 : i32
    %c0_i32_1 = arith.constant 0 : i32
    return %c0_i32, %c0_i32_0 : i32, i32
  }
  func.func @transform_8(%arg0: i32) -> (i32, i32) {
    %c0_i32 = arith.constant 0 : i32
    %c0_i32_0 = arith.constant 0 : i32
    %c0_i32_1 = arith.constant 0 : i32
    return %c0_i32, %c0_i32_0 : i32, i32
  }
  func.func @transform_9(%arg0: i32) -> (i32, i32) {
    %c0_i32 = arith.constant 0 : i32
    %c0_i32_0 = arith.constant 0 : i32
    %c0_i32_1 = arith.constant 0 : i32
    return %c0_i32, %c0_i32_0 : i32, i32
  }
  func.func @transform_10(%arg0: i32) -> (i32, i32) {
    %c0_i32 = arith.constant 0 : i32
    %c0_i32_0 = arith.constant 0 : i32
    %c0_i32_1 = arith.constant 0 : i32
    return %c0_i32, %c0_i32_0 : i32, i32
  }
  func.func @transform_11(%arg0: i32) -> (i32, i32) {
    %c0_i32 = arith.constant 0 : i32
    %c0_i32_0 = arith.constant 0 : i32
    %c0_i32_1 = arith.constant 0 : i32
    return %c0_i32, %c0_i32_0 : i32, i32
  }
  func.func @transform_12(%arg0: i32) -> (i32, i32) {
    %c0_i32 = arith.constant 0 : i32
    %c0_i32_0 = arith.constant 0 : i32
    %c0_i32_1 = arith.constant 0 : i32
    return %c0_i32, %c0_i32_0 : i32, i32
  }
  func.func @transform_13(%arg0: i32) -> (i32, i32) {
    %c0_i32 = arith.constant 0 : i32
    %c0_i32_0 = arith.constant 0 : i32
    %c0_i32_1 = arith.constant 0 : i32
    return %c0_i32, %c0_i32_0 : i32, i32
  }
  func.func @transform_14(%arg0: i32) -> (i32, i32, i32) {
    %c0_i32 = arith.constant 0 : i32
    %c0_i32_0 = arith.constant 0 : i32
    %c0_i32_1 = arith.constant 0 : i32
    return %arg0, %c0_i32, %c0_i32_0 : i32, i32, i32
  }
}

module attributes {stable_mosaic.version = 11 : i64} {
  func.func @_tail_kernel(%arg0: i32, %arg1: memref<1x8x256xf32, #tpu.memory_space<vmem>>, %arg2: memref<256x128xf32, #tpu.memory_space<vmem>>, %arg3: memref<1x128xf32, #tpu.memory_space<vmem>>, %arg4: memref<1x128xf32, #tpu.memory_space<vmem>>, %arg5: memref<1x128xf32, #tpu.memory_space<vmem>>, %arg6: memref<1x1x128xf32, #tpu.memory_space<vmem>>) attributes {dimension_semantics = [#tpu.dimension_semantics<parallel>], iteration_bounds = array<i64: 2>, scalar_prefetch = 0 : i64, scratch_operands = 0 : i64, tpu.core_type = #tpu.core_type<tc>, window_params = [{transform_indices = @transform_0, window_bounds = array<i64: 1, 8, 256>}, {pipeline_mode = #tpu.pipeline_mode<synchronous>, transform_indices = @transform_1, window_bounds = array<i64: 256, 128>}, {pipeline_mode = #tpu.pipeline_mode<synchronous>, transform_indices = @transform_2, window_bounds = array<i64: 1, 128>}, {pipeline_mode = #tpu.pipeline_mode<synchronous>, transform_indices = @transform_3, window_bounds = array<i64: 1, 128>}, {pipeline_mode = #tpu.pipeline_mode<synchronous>, transform_indices = @transform_4, window_bounds = array<i64: 1, 128>}, {transform_indices = @transform_5, window_bounds = array<i64: 1, 1, 128>}]} {
    %c0 = arith.constant 0 : index
    %c0_0 = arith.constant 0 : index
    %c0_1 = arith.constant 0 : index
    %0 = vector.load %arg1[%c0, %c0_0, %c0_1] : memref<1x8x256xf32, #tpu.memory_space<vmem>>, vector<1x8x256xf32>
    %1 = vector.shape_cast %0 : vector<1x8x256xf32> to vector<8x256xf32>
    %cst = arith.constant dense<0.000000e+00> : vector<256xf32>
    %2 = vector.multi_reduction <add>, %1, %cst [0] : vector<8x256xf32> to vector<256xf32>
    %3 = vector.shape_cast %2 : vector<256xf32> to vector<1x256xf32>
    %cst_2 = arith.constant 2.000000e-01 : f32
    %4 = vector.broadcast %cst_2 : f32 to vector<1x256xf32>
    %5 = arith.mulf %3, %4 : vector<1x256xf32>
    %c0_3 = arith.constant 0 : index
    %c0_4 = arith.constant 0 : index
    %6 = vector.load %arg2[%c0_3, %c0_4] : memref<256x128xf32, #tpu.memory_space<vmem>>, vector<256x128xf32>
    %cst_5 = arith.constant dense<0.000000e+00> : vector<1x128xf32>
    %7 = tpu.matmul %5, %6, %cst_5 {dimension_numbers = #tpu.dot_dimension_numbers<[1], [0], [0], [1], [0, 0, 1, 1], [], []>} : vector<1x256xf32>, vector<256x128xf32>, vector<1x128xf32> -> vector<1x128xf32>
    %c0_6 = arith.constant 0 : index
    %c0_7 = arith.constant 0 : index
    %8 = vector.load %arg3[%c0_6, %c0_7] : memref<1x128xf32, #tpu.memory_space<vmem>>, vector<1x128xf32>
    %9 = arith.addf %7, %8 : vector<1x128xf32>
    %c0_8 = arith.constant 0 : index
    %c0_9 = arith.constant 0 : index
    %10 = vector.load %arg4[%c0_8, %c0_9] : memref<1x128xf32, #tpu.memory_space<vmem>>, vector<1x128xf32>
    %c0_10 = arith.constant 0 : index
    %c0_11 = arith.constant 0 : index
    %11 = vector.load %arg5[%c0_10, %c0_11] : memref<1x128xf32, #tpu.memory_space<vmem>>, vector<1x128xf32>
    %cst_12 = arith.constant dense<0.000000e+00> : vector<1xf32>
    %12 = vector.multi_reduction <add>, %9, %cst_12 [1] : vector<1x128xf32> to vector<1xf32>
    %13 = vector.shape_cast %12 : vector<1xf32> to vector<1x1xf32>
    %cst_13 = arith.constant 1.280000e+02 : f32
    %14 = vector.broadcast %cst_13 : f32 to vector<1x1xf32>
    %15 = arith.divf %13, %14 : vector<1x1xf32>
    %16 = vector.broadcast %15 : vector<1x1xf32> to vector<1x128xf32>
    %17 = arith.subf %9, %16 : vector<1x128xf32>
    %18 = arith.mulf %17, %17 : vector<1x128xf32>
    %cst_14 = arith.constant dense<0.000000e+00> : vector<1xf32>
    %19 = vector.multi_reduction <add>, %18, %cst_14 [1] : vector<1x128xf32> to vector<1xf32>
    %20 = vector.shape_cast %19 : vector<1xf32> to vector<1x1xf32>
    %cst_15 = arith.constant 1.280000e+02 : f32
    %21 = vector.broadcast %cst_15 : f32 to vector<1x1xf32>
    %22 = arith.divf %20, %21 : vector<1x1xf32>
    %cst_16 = arith.constant 9.99999974E-6 : f32
    %23 = vector.broadcast %cst_16 : f32 to vector<1x1xf32>
    %24 = arith.addf %22, %23 : vector<1x1xf32>
    %25 = math.rsqrt %24 : vector<1x1xf32>
    %26 = vector.broadcast %25 : vector<1x1xf32> to vector<1x128xf32>
    %27 = arith.mulf %17, %26 : vector<1x128xf32>
    %28 = arith.mulf %27, %10 : vector<1x128xf32>
    %29 = arith.addf %28, %11 : vector<1x128xf32>
    %cst_17 = arith.constant 5.000000e-01 : f32
    %30 = vector.broadcast %cst_17 : f32 to vector<1x128xf32>
    %31 = arith.mulf %30, %29 : vector<1x128xf32>
    %cst_18 = arith.constant 0.707106769 : f32
    %32 = vector.broadcast %cst_18 : f32 to vector<1x128xf32>
    %33 = arith.mulf %29, %32 : vector<1x128xf32>
    %34 = math.erf %33 : vector<1x128xf32>
    %cst_19 = arith.constant 1.000000e+00 : f32
    %35 = vector.broadcast %cst_19 : f32 to vector<1x128xf32>
    %36 = arith.addf %35, %34 : vector<1x128xf32>
    %37 = arith.mulf %31, %36 : vector<1x128xf32>
    %c0_20 = arith.constant 0 : index
    %c0_21 = arith.constant 0 : index
    %c0_22 = arith.constant 0 : index
    %38 = vector.load %arg6[%c0_20, %c0_21, %c0_22] : memref<1x1x128xf32, #tpu.memory_space<vmem>>, vector<1x1x128xf32>
    %39 = vector.shape_cast %38 : vector<1x1x128xf32> to vector<1x128xf32>
    %40 = vector.shape_cast %37 : vector<1x128xf32> to vector<1x1x128xf32>
    tpu.vector_store %arg6[%c0_20, %c0_21, %c0_22], %40 {strides = array<i32>} : memref<1x1x128xf32, #tpu.memory_space<vmem>>, vector<1x1x128xf32>,
    return
  }
  func.func @transform_0(%arg0: i32) -> (i32, i32, i32) {
    %c0_i32 = arith.constant 0 : i32
    %c0_i32_0 = arith.constant 0 : i32
    %c0_i32_1 = arith.constant 0 : i32
    return %arg0, %c0_i32, %c0_i32_0 : i32, i32, i32
  }
  func.func @transform_1(%arg0: i32) -> (i32, i32) {
    %c0_i32 = arith.constant 0 : i32
    %c0_i32_0 = arith.constant 0 : i32
    %c0_i32_1 = arith.constant 0 : i32
    return %c0_i32, %c0_i32_0 : i32, i32
  }
  func.func @transform_2(%arg0: i32) -> (i32, i32) {
    %c0_i32 = arith.constant 0 : i32
    %c0_i32_0 = arith.constant 0 : i32
    %c0_i32_1 = arith.constant 0 : i32
    return %c0_i32, %c0_i32_0 : i32, i32
  }
  func.func @transform_3(%arg0: i32) -> (i32, i32) {
    %c0_i32 = arith.constant 0 : i32
    %c0_i32_0 = arith.constant 0 : i32
    %c0_i32_1 = arith.constant 0 : i32
    return %c0_i32, %c0_i32_0 : i32, i32
  }
  func.func @transform_4(%arg0: i32) -> (i32, i32) {
    %c0_i32 = arith.constant 0 : i32
    %c0_i32_0 = arith.constant 0 : i32
    %c0_i32_1 = arith.constant 0 : i32
    return %c0_i32, %c0_i32_0 : i32, i32
  }
  func.func @transform_5(%arg0: i32) -> (i32, i32, i32) {
    %c0_i32 = arith.constant 0 : i32
    %c0_i32_0 = arith.constant 0 : i32
    %c0_i32_1 = arith.constant 0 : i32
    return %arg0, %c0_i32, %c0_i32_0 : i32, i32, i32
  }
}

</mosaic_0001>

<llo_original>
// kernel: vit_extractor_forward.4
$region0: #{vit_extractor_forward.4}
  #allocation0 [shape = 'u32[]', space=smem, size = 0x4, offset = 0x4, fixed_abs, tag = 'smem constant byte address 0x4 - core index']
  #allocation1 [shape = 'u32[144,128]{1,0:T(1,128)}', space=vmem, size = 0x12000, scoped, tag = 'internal scratch']
  %s0 = inlined_call_operand.vmem [shape: f32[2,4,3072], index: 0, kind: input, shape index: {}]
  %s1 = inlined_call_operand.vmem [shape: f32[3072,256], index: 1, kind: input, shape index: {}]
  %s2 = inlined_call_operand.vmem [shape: f32[1,256], index: 2, kind: input, shape index: {}]
  %s3 = inlined_call_operand.vmem [shape: f32[1,256], index: 3, kind: input, shape index: {}]
  %s4 = inlined_call_operand.vmem [shape: f32[8,256], index: 4, kind: input, shape index: {}]
  %s5 = inlined_call_operand.vmem [shape: f32[2,8,256], index: 5, kind: output, shape index: {}]
  %s6 = sld [smem:[#allocation0]]
  $region53: #{vit_extractor_forward.4} parent=0
    _
  %s8 = ssub.s32 1, %s6
  %s9 = scalar_select 0, %s8, %s6
  loop: start=0, step=1, limit=4
  $region2: #{vit_extractor_forward.4} parent=0 // loop_pre_header
    _
  $region3: #{vit_extractor_forward.4} parent=0 // loop_header
    %s11 = sphi 0, %s15
    %p12 = scmp.ge.s32.totalorder %s11, 4
    %s21 = sphi 0, %s23
    %s24 = sphi 0, %s21
    %s25 = sphi 0, %s24
    %s41 = sphi 0, %s25
    %s45 = sphi 0, %s45
    %s47 = sphi 0, %s45
    %s48 = sphi 0, %s47
    %s62 = sphi 0, %s48
    %s66 = sphi 0, %s66
    %s68 = sphi 0, %s66
    %s69 = sphi 0, %s68
    %s83 = sphi 0, %s69
    %s87 = sphi 0, %s87
    %s89 = sphi 0, %s87
    %s90 = sphi 0, %s89
    %s104 = sphi 0, %s90
    %s108 = sphi 0, %s108
    %s110 = sphi 0, %s108
    %s111 = sphi 0, %s110
    %s125 = sphi 0, %s111
    %s131 = sphi 0, %s133
    %s134 = sphi 0, %s131
    %s135 = sphi 0, %s134
    %s151 = sphi 0, %s135
  $region4: #{vit_extractor_forward.4} parent=0 // loop_header_branch
    %14 = sbr.rel (%p12) target = $region8
  $region5: #{vit_extractor_forward.4} parent=0 // loop_body
    %s16 = ssub.s32 %s11, 1
    %s17 = ssub.s32 %s11, 2
    %s18 = sadd.s32 %s11, 1
    %s19 = ssub.s32 %s11, %s18
    %p20 = scmp.eq.s32.totalorder %s19, 0
    %s22 = sadd.s32 %s21, 1
    %s23 = scalar_select %p20, %s21, %s22
    %p26 = pneg %p20
    %p27 = scmp.eq.s32.totalorder %s11, 1
    %p28 = por %p26, %p27
    %p29 = scmp.ne.s32.totalorder %s21, %s24
    %p30 = scmp.eq.s32.totalorder %s11, 0
    %p31 = por %p29, %p30
    %p32 = scmp.ne.s32.totalorder %s21, %s24
    %p33 = scmp.eq.s32.totalorder %s16, 1
    %p34 = por %p32, %p33
    %p35 = scmp.ne.s32.totalorder %s24, %s25
    %p36 = scmp.eq.s32.totalorder %s16, 0
    %p37 = por %p35, %p36
    %p38 = scmp.ne.s32.totalorder %s24, %s25
    %p39 = scmp.eq.s32.totalorder %s17, 1
    %p40 = por %p38, %p39
    %p42 = scmp.ne.s32.totalorder %s25, %s41
    %p43 = scmp.eq.s32.totalorder %s17, 0
    %p44 = por %p42, %p43
    %s46 = sadd.s32 %s45, 1
    %p49 = scmp.eq.s32.totalorder %s11, 1
    %p50 = scmp.ne.s32.totalorder %s45, %s47
    %p51 = scmp.eq.s32.totalorder %s11, 0
    %p52 = por %p50, %p51
    %p53 = scmp.ne.s32.totalorder %s45, %s47
    %p54 = scmp.eq.s32.totalorder %s16, 1
    %p55 = por %p53, %p54
    %p56 = scmp.ne.s32.totalorder %s47, %s48
    %p57 = scmp.eq.s32.totalorder %s16, 0
    %p58 = por %p56, %p57
    %p59 = scmp.ne.s32.totalorder %s47, %s48
    %p60 = scmp.eq.s32.totalorder %s17, 1
    %p61 = por %p59, %p60
    %p63 = scmp.ne.s32.totalorder %s48, %s62
    %p64 = scmp.eq.s32.totalorder %s17, 0
    %p65 = por %p63, %p64
    %s67 = sadd.s32 %s66, 1
    %p70 = scmp.eq.s32.totalorder %s11, 1
    %p71 = scmp.ne.s32.totalorder %s66, %s68
    %p72 = scmp.eq.s32.totalorder %s11, 0
    %p73 = por %p71, %p72
    %p74 = scmp.ne.s32.totalorder %s66, %s68
    %p75 = scmp.eq.s32.totalorder %s16, 1
    %p76 = por %p74, %p75
    %p77 = scmp.ne.s32.totalorder %s68, %s69
    %p78 = scmp.eq.s32.totalorder %s16, 0
    %p79 = por %p77, %p78
    %p80 = scmp.ne.s32.totalorder %s68, %s69
    %p81 = scmp.eq.s32.totalorder %s17, 1
    %p82 = por %p80, %p81
    %p84 = scmp.ne.s32.totalorder %s69, %s83
    %p85 = scmp.eq.s32.totalorder %s17, 0
    %p86 = por %p84, %p85
    %s88 = sadd.s32 %s87, 1
    %p91 = scmp.eq.s32.totalorder %s11, 1
    %p92 = scmp.ne.s32.totalorder %s87, %s89
    %p93 = scmp.eq.s32.totalorder %s11, 0
    %p94 = por %p92, %p93
    %p95 = scmp.ne.s32.totalorder %s87, %s89
    %p96 = scmp.eq.s32.totalorder %s16, 1
    %p97 = por %p95, %p96
    %p98 = scmp.ne.s32.totalorder %s89, %s90
    %p99 = scmp.eq.s32.totalorder %s16, 0
    %p100 = por %p98, %p99
    %p101 = scmp.ne.s32.totalorder %s89, %s90
    %p102 = scmp.eq.s32.totalorder %s17, 1
    %p103 = por %p101, %p102
    %p105 = scmp.ne.s32.totalorder %s90, %s104
    %p106 = scmp.eq.s32.totalorder %s17, 0
    %p107 = por %p105, %p106
    %s109 = sadd.s32 %s108, 1
    %p112 = scmp.eq.s32.totalorder %s11, 1
    %p113 = scmp.ne.s32.totalorder %s108, %s110
    %p114 = scmp.eq.s32.totalorder %s11, 0
    %p115 = por %p113, %p114
    %p116 = scmp.ne.s32.totalorder %s108, %s110
    %p117 = scmp.eq.s32.totalorder %s16, 1
    %p118 = por %p116, %p117
    %p119 = scmp.ne.s32.totalorder %s110, %s111
    %p120 = scmp.eq.s32.totalorder %s16, 0
    %p121 = por %p119, %p120
    %p122 = scmp.ne.s32.totalorder %s110, %s111
    %p123 = scmp.eq.s32.totalorder %s17, 1
    %p124 = por %p122, %p123
    %p126 = scmp.ne.s32.totalorder %s111, %s125
    %p127 = scmp.eq.s32.totalorder %s17, 0
    %p128 = por %p126, %p127
    %s129 = ssub.s32 %s11, %s18
    %p130 = scmp.eq.s32.totalorder %s129, 0
    %s132 = sadd.s32 %s131, 1
    %s133 = scalar_select %p130, %s131, %s132
    %p136 = pneg %p130
    %p137 = scmp.eq.s32.totalorder %s11, 1
    %p138 = por %p136, %p137
    %p139 = scmp.ne.s32.totalorder %s131, %s134
    %p140 = scmp.eq.s32.totalorder %s11, 0
    %p141 = por %p139, %p140
    %p142 = scmp.ne.s32.totalorder %s131, %s134
    %p143 = scmp.eq.s32.totalorder %s16, 1
    %p144 = por %p142, %p143
    %p145 = scmp.ne.s32.totalorder %s134, %s135
    %p146 = scmp.eq.s32.totalorder %s16, 0
    %p147 = por %p145, %p146
    %p148 = scmp.ne.s32.totalorder %s134, %s135
    %p149 = scmp.eq.s32.totalorder %s17, 1
    %p150 = por %p148, %p149
    %p152 = scmp.ne.s32.totalorder %s135, %s151
    %p153 = scmp.eq.s32.totalorder %s17, 0
    %p154 = por %p152, %p153
    %p155 = scmp.le.s32.totalorder 1, %s11
    %p156 = scmp.lt.s32.totalorder %s11, 3
    %p157 = pnand %p155, %p156
    %p158 = pneg %p157
    // Predicated region
    $region9: #{vit_extractor_forward.4} parent=5 // pred_check
      _
    $region10: #{vit_extractor_forward.4} parent=5 // pred_check_branch
      %160 = sbr.rel (%p157) target = $region12
    $region11: #{vit_extractor_forward.4} parent=5 // pred_region
      %s161 = ssub.s32 %s11, 1
      // Predicated region
      $region13: #{vit_extractor_forward.4} parent=11 // pred_check
        %p162 = pneg %p58
      $region14: #{vit_extractor_forward.4} parent=11 // pred_check_branch
        %164 = sbr.rel (%p162) target = $region16
      $region15: #{vit_extractor_forward.4} parent=11 // pred_region
        _
      $region16: #{vit_extractor_forward.4} parent=11 // pred_fallthru
        _
      // Predicated region
      $region17: #{vit_extractor_forward.4} parent=11 // pred_check
        %p165 = pneg %p79
      $region18: #{vit_extractor_forward.4} parent=11 // pred_check_branch
        %167 = sbr.rel (%p165) target = $region20
      $region19: #{vit_extractor_forward.4} parent=11 // pred_region
        _
      $region20: #{vit_extractor_forward.4} parent=11 // pred_fallthru
        _
      // Predicated region
      $region21: #{vit_extractor_forward.4} parent=11 // pred_check
        %p168 = pneg %p100
      $region22: #{vit_extractor_forward.4} parent=11 // pred_check_branch
        %170 = sbr.rel (%p168) target = $region24
      $region23: #{vit_extractor_forward.4} parent=11 // pred_region
        _
      $region24: #{vit_extractor_forward.4} parent=11 // pred_fallthru
        _
      // Predicated region
      $region25: #{vit_extractor_forward.4} parent=11 // pred_check
        %p171 = pneg %p121
      $region26: #{vit_extractor_forward.4} parent=11 // pred_check_branch
        %173 = sbr.rel (%p171) target = $region28
      $region27: #{vit_extractor_forward.4} parent=11 // pred_region
        _
      $region28: #{vit_extractor_forward.4} parent=11 // pred_fallthru
        _
    $region12: #{vit_extractor_forward.4} parent=5 // pred_fallthru
      _
    %p174 = scmp.lt.s32.totalorder %s11, 2
    // Predicated region
    $region29: #{vit_extractor_forward.4} parent=5 // pred_check
      %p175 = pneg %p174
    $region30: #{vit_extractor_forward.4} parent=5 // pred_check_branch
      %177 = sbr.rel (%p175) target = $region32
    $region31: #{vit_extractor_forward.4} parent=5 // pred_region
      // Predicated region
      $region33: #{vit_extractor_forward.4} parent=31 // pred_check
        %p178 = pneg %p31
      $region34: #{vit_extractor_forward.4} parent=31 // pred_check_branch
        %180 = sbr.rel (%p178) target = $region36
      $region35: #{vit_extractor_forward.4} parent=31 // pred_region
        %p181 = scmp.lt.s32.totalorder %s11, 1
        %s182 = scalar_select %p181, %s11, 1
        %s183 = smul.addr %s182, 24
        %s184 = smul.addr %s183, 4
        %s185 = scalar_lea.vmem %s0, %s184
      $region36: #{vit_extractor_forward.4} parent=31 // pred_fallthru
        _
    $region32: #{vit_extractor_forward.4} parent=5 // pred_fallthru
      _
    %p186 = scmp.le.s32.totalorder 1, %s11
    %p187 = scmp.lt.s32.totalorder %s11, 3
    %p188 = pnand %p186, %p187
    %p189 = pneg %p188
    // Predicated region
    $region37: #{vit_extractor_forward.4} parent=5 // pred_check
      _
    $region38: #{vit_extractor_forward.4} parent=5 // pred_check_branch
      %191 = sbr.rel (%p188) target = $region40
    $region39: #{vit_extractor_forward.4} parent=5 // pred_region
      %s192 = ssub.s32 %s11, 1
      %p193 = scmp.lt.s32.totalorder %s16, 1
      %s194 = scalar_select %p193, %s16, 1
      %s195 = smul.addr %s194, 24
      %s196 = smul.addr %s195, 4
      %s197 = scalar_lea.vmem %s0, %s196
      %p198 = pneg %p37
      %p199 = pneg %p34
      %p200 = pneg %p58
      %p201 = pneg %p55
      %p202 = pneg %p79
      %p203 = pneg %p76
      %p204 = pneg %p100
      %p205 = pneg %p97
      %p206 = pneg %p121
      %p207 = pneg %p118
      %p208 = pneg %p147
      %p209 = pneg %p144
      %p210 = scmp.lt.s32.totalorder %s16, 1
      %s211 = scalar_select %p210, %s16, 1
      %s212 = smul.addr %s211, 2
      %s213 = smul.addr %s212, 8
      %s214 = scalar_lea.vmem %s5, %s213
      %p215 = scmp.lt.s32.totalorder %s16, 1
      %s216 = scalar_select %p215, %s16, 1
      %s217 = smul.addr %s216, 24
      %s218 = smul.addr %s217, 4
      %s219 = scalar_lea.vmem %s0, %s218
      %p220 = scmp.lt.s32.totalorder %s16, 1
      %s221 = scalar_select %p220, %s16, 1
      %s222 = smul.addr %s221, 2
      %s223 = smul.addr %s222, 8
      %s224 = scalar_lea.vmem %s5, %s223
      %v225 = vld [vmem:[%s219] sm:$0xff]
      %v226 = vld [vmem:[%s219 + $0x8] sm:$0xff]
      %v227 = vld [vmem:[%s219 + $0x10] sm:$0xff]
      %v228 = vld [vmem:[%s219 + $0x18] sm:$0xff]
      %v229 = vld [vmem:[%s219 + $0x20] sm:$0xff]
      %v230 = vld [vmem:[%s219 + $0x28] sm:$0xff]
      %v231 = vld [vmem:[%s219 + $0x30] sm:$0xff]
      %v232 = vld [vmem:[%s219 + $0x38] sm:$0xff]
      %v233 = vld [vmem:[%s219 + $0x40] sm:$0xff]
      %v234 = vld [vmem:[%s219 + $0x48] sm:$0xff]
      %v235 = vld [vmem:[%s219 + $0x50] sm:$0xff]
      %v236 = vld [vmem:[%s219 + $0x58] sm:$0xff]
      %v237 = vld [vmem:[%s1] sm:$0xff]
      %v238 = vld [vmem:[%s1 + $0x8] sm:$0xff]
      %v239 = vld [vmem:[%s1 + $0x10] sm:$0xff]
      %v240 = vld [vmem:[%s1 + $0x18] sm:$0xff]
      %v241 = vld [vmem:[%s1 + $0x20] sm:$0xff]
      %v242 = vld [vmem:[%s1 + $0x28] sm:$0xff]
      %v243 = vld [vmem:[%s1 + $0x30] sm:$0xff]
      %v244 = vld [vmem:[%s1 + $0x38] sm:$0xff]
      %v245 = vld [vmem:[%s1 + $0x40] sm:$0xff]
      %v246 = vld [vmem:[%s1 + $0x48] sm:$0xff]
      %v247 = vld [vmem:[%s1 + $0x50] sm:$0xff]
      %v248 = vld [vmem:[%s1 + $0x58] sm:$0xff]
      %v249 = vld [vmem:[%s1 + $0x60] sm:$0xff]
      %v250 = vld [vmem:[%s1 + $0x68] sm:$0xff]
      %v251 = vld [vmem:[%s1 + $0x70] sm:$0xff]
      %v252 = vld [vmem:[%s1 + $0x78] sm:$0xff]
      %v253 = vld [vmem:[%s1 + $0x80] sm:$0xff]
      %v254 = vld [vmem:[%s1 + $0x88] sm:$0xff]
      %v255 = vld [vmem:[%s1 + $0x90] sm:$0xff]
      %v256 = vld [vmem:[%s1 + $0x98] sm:$0xff]
      %v257 = vld [vmem:[%s1 + $0xa0] sm:$0xff]
      %v258 = vld [vmem:[%s1 + $0xa8] sm:$0xff]
      %v259 = vld [vmem:[%s1 + $0xb0] sm:$0xff]
      %v260 = vld [vmem:[%s1 + $0xb8] sm:$0xff]
      %v261 = vld [vmem:[%s1 + $0xc0] sm:$0xff]
      %v262 = vld [vmem:[%s1 + $0xc8] sm:$0xff]
      %v263 = vld [vmem:[%s1 + $0xd0] sm:$0xff]
      %v264 = vld [vmem:[%s1 + $0xd8] sm:$0xff]
      %v265 = vld [vmem:[%s1 + $0xe0] sm:$0xff]
      %v266 = vld [vmem:[%s1 + $0xe8] sm:$0xff]
      %v267 = vld [vmem:[%s1 + $0xf0] sm:$0xff]
      %v268 = vld [vmem:[%s1 + $0xf8] sm:$0xff]
      %v269 = vld [vmem:[%s1 + $0x100] sm:$0xff]
      %v270 = vld [vmem:[%s1 + $0x108] sm:$0xff]
      %v271 = vld [vmem:[%s1 + $0x110] sm:$0xff]
      %v272 = vld [vmem:[%s1 + $0x118] sm:$0xff]
      %v273 = vld [vmem:[%s1 + $0x120] sm:$0xff]
      %v274 = vld [vmem:[%s1 + $0x128] sm:$0xff]
      %v275 = vld [vmem:[%s1 + $0x130] sm:$0xff]
      %v276 = vld [vmem:[%s1 + $0x138] sm:$0xff]
      %v277 = vld [vmem:[%s1 + $0x140] sm:$0xff]
      %v278 = vld [vmem:[%s1 + $0x148] sm:$0xff]
      %v279 = vld [vmem:[%s1 + $0x150] sm:$0xff]
      %v280 = vld [vmem:[%s1 + $0x158] sm:$0xff]
      %v281 = vld [vmem:[%s1 + $0x160] sm:$0xff]
      %v282 = vld [vmem:[%s1 + $0x168] sm:$0xff]
      %v283 = vld [vmem:[%s1 + $0x170] sm:$0xff]
      %v284 = vld [vmem:[%s1 + $0x178] sm:$0xff]
      %v285 = vld [vmem:[%s1 + $0x180] sm:$0xff]
      %v286 = vld [vmem:[%s1 + $0x188] sm:$0xff]
      %v287 = vld [vmem:[%s1 + $0x190] sm:$0xff]
      %v288 = vld [vmem:[%s1 + $0x198] sm:$0xff]
      %v289 = vld [vmem:[%s1 + $0x1a0] sm:$0xff]
      %v290 = vld [vmem:[%s1 + $0x1a8] sm:$0xff]
      %v291 = vld [vmem:[%s1 + $0x1b0] sm:$0xff]
      %v292 = vld [vmem:[%s1 + $0x1b8] sm:$0xff]
      %v293 = vld [vmem:[%s1 + $0x1c0] sm:$0xff]
      %v294 = vld [vmem:[%s1 + $0x1c8] sm:$0xff]
      %v295 = vld [vmem:[%s1 + $0x1d0] sm:$0xff]
      %v296 = vld [vmem:[%s1 + $0x1d8] sm:$0xff]
      %v297 = vld [vmem:[%s1 + $0x1e0] sm:$0xff]
      %v298 = vld [vmem:[%s1 + $0x1e8] sm:$0xff]
      %v299 = vld [vmem:[%s1 + $0x1f0] sm:$0xff]
      %v300 = vld [vmem:[%s1 + $0x1f8] sm:$0xff]
      %v301 = vld [vmem:[%s1 + $0x200] sm:$0xff]
      %v302 = vld [vmem:[%s1 + $0x208] sm:$0xff]
      %v303 = vld [vmem:[%s1 + $0x210] sm:$0xff]
      %v304 = vld [vmem:[%s1 + $0x218] sm:$0xff]
      %v305 = vld [vmem:[%s1 + $0x220] sm:$0xff]
      %v306 = vld [vmem:[%s1 + $0x228] sm:$0xff]
      %v307 = vld [vmem:[%s1 + $0x230] sm:$0xff]
      %v308 = vld [vmem:[%s1 + $0x238] sm:$0xff]
      %v309 = vld [vmem:[%s1 + $0x240] sm:$0xff]
      %v310 = vld [vmem:[%s1 + $0x248] sm:$0xff]
      %v311 = vld [vmem:[%s1 + $0x250] sm:$0xff]
      %v312 = vld [vmem:[%s1 + $0x258] sm:$0xff]
      %v313 = vld [vmem:[%s1 + $0x260] sm:$0xff]
      %v314 = vld [vmem:[%s1 + $0x268] sm:$0xff]
      %v315 = vld [vmem:[%s1 + $0x270] sm:$0xff]
      %v316 = vld [vmem:[%s1 + $0x278] sm:$0xff]
      %v317 = vld [vmem:[%s1 + $0x280] sm:$0xff]
      %v318 = vld [vmem:[%s1 + $0x288] sm:$0xff]
      %v319 = vld [vmem:[%s1 + $0x290] sm:$0xff]
      %v320 = vld [vmem:[%s1 + $0x298] sm:$0xff]
      %v321 = vld [vmem:[%s1 + $0x2a0] sm:$0xff]
      %v322 = vld [vmem:[%s1 + $0x2a8] sm:$0xff]
      %v323 = vld [vmem:[%s1 + $0x2b0] sm:$0xff]
      %v324 = vld [vmem:[%s1 + $0x2b8] sm:$0xff]
      %v325 = vld [vmem:[%s1 + $0x2c0] sm:$0xff]
      %v326 = vld [vmem:[%s1 + $0x2c8] sm:$0xff]
      %v327 = vld [vmem:[%s1 + $0x2d0] sm:$0xff]
      %v328 = vld [vmem:[%s1 + $0x2d8] sm:$0xff]
      %v329 = vld [vmem:[%s1 + $0x2e0] sm:$0xff]
      %v330 = vld [vmem:[%s1 + $0x2e8] sm:$0xff]
      %v331 = vld [vmem:[%s1 + $0x2f0] sm:$0xff]
      %v332 = vld [vmem:[%s1 + $0x2f8] sm:$0xff]
      %v333 = vld [vmem:[%s1 + $0x300] sm:$0xff]
      %v334 = vld [vmem:[%s1 + $0x308] sm:$0xff]
      %v335 = vld [vmem:[%s1 + $0x310] sm:$0xff]
      %v336 = vld [vmem:[%s1 + $0x318] sm:$0xff]
      %v337 = vld [vmem:[%s1 + $0x320] sm:$0xff]
      %v338 = vld [vmem:[%s1 + $0x328] sm:$0xff]
      %v339 = vld [vmem:[%s1 + $0x330] sm:$0xff]
      %v340 = vld [vmem:[%s1 + $0x338] sm:$0xff]
      %v341 = vld [vmem:[%s1 + $0x340] sm:$0xff]
      %v342 = vld [vmem:[%s1 + $0x348] sm:$0xff]
      %v343 = vld [vmem:[%s1 + $0x350] sm:$0xff]
      %v344 = vld [vmem:[%s1 + $0x358] sm:$0xff]
      %v345 = vld [vmem:[%s1 + $0x360] sm:$0xff]
      %v346 = vld [vmem:[%s1 + $0x368] sm:$0xff]
      %v347 = vld [vmem:[%s1 + $0x370] sm:$0xff]
      %v348 = vld [vmem:[%s1 + $0x378] sm:$0xff]
      %v349 = vld [vmem:[%s1 + $0x380] sm:$0xff]
      %v350 = vld [vmem:[%s1 + $0x388] sm:$0xff]
      %v351 = vld [vmem:[%s1 + $0x390] sm:$0xff]
      %v352 = vld [vmem:[%s1 + $0x398] sm:$0xff]
      %v353 = vld [vmem:[%s1 + $0x3a0] sm:$0xff]
      %v354 = vld [vmem:[%s1 + $0x3a8] sm:$0xff]
      %v355 = vld [vmem:[%s1 + $0x3b0] sm:$0xff]
      %v356 = vld [vmem:[%s1 + $0x3b8] sm:$0xff]
      %v357 = vld [vmem:[%s1 + $0x3c0] sm:$0xff]
      %v358 = vld [vmem:[%s1 + $0x3c8] sm:$0xff]
      %v359 = vld [vmem:[%s1 + $0x3d0] sm:$0xff]
      %v360 = vld [vmem:[%s1 + $0x3d8] sm:$0xff]
      %v361 = vld [vmem:[%s1 + $0x3e0] sm:$0xff]
      %v362 = vld [vmem:[%s1 + $0x3e8] sm:$0xff]
      %v363 = vld [vmem:[%s1 + $0x3f0] sm:$0xff]
      %v364 = vld [vmem:[%s1 + $0x3f8] sm:$0xff]
      %v365 = vld [vmem:[%s1 + $0x400] sm:$0xff]
      %v366 = vld [vmem:[%s1 + $0x408] sm:$0xff]
      %v367 = vld [vmem:[%s1 + $0x410] sm:$0xff]
      %v368 = vld [vmem:[%s1 + $0x418] sm:$0xff]
      %v369 = vld [vmem:[%s1 + $0x420] sm:$0xff]
      %v370 = vld [vmem:[%s1 + $0x428] sm:$0xff]
      %v371 = vld [vmem:[%s1 + $0x430] sm:$0xff]
      %v372 = vld [vmem:[%s1 + $0x438] sm:$0xff]
      %v373 = vld [vmem:[%s1 + $0x440] sm:$0xff]
      %v374 = vld [vmem:[%s1 + $0x448] sm:$0xff]
      %v375 = vld [vmem:[%s1 + $0x450] sm:$0xff]
      %v376 = vld [vmem:[%s1 + $0x458] sm:$0xff]
      %v377 = vld [vmem:[%s1 + $0x460] sm:$0xff]
      %v378 = vld [vmem:[%s1 + $0x468] sm:$0xff]
      %v379 = vld [vmem:[%s1 + $0x470] sm:$0xff]
      %v380 = vld [vmem:[%s1 + $0x478] sm:$0xff]
      %v381 = vld [vmem:[%s1 + $0x480] sm:$0xff]
      %v382 = vld [vmem:[%s1 + $0x488] sm:$0xff]
      %v383 = vld [vmem:[%s1 + $0x490] sm:$0xff]
      %v384 = vld [vmem:[%s1 + $0x498] sm:$0xff]
      %v385 = vld [vmem:[%s1 + $0x4a0] sm:$0xff]
      %v386 = vld [vmem:[%s1 + $0x4a8] sm:$0xff]
      %v387 = vld [vmem:[%s1 + $0x4b0] sm:$0xff]
      %v388 = vld [vmem:[%s1 + $0x4b8] sm:$0xff]
      %v389 = vld [vmem:[%s1 + $0x4c0] sm:$0xff]
      %v390 = vld [vmem:[%s1 + $0x4c8] sm:$0xff]
      %v391 = vld [vmem:[%s1 + $0x4d0] sm:$0xff]
      %v392 = vld [vmem:[%s1 + $0x4d8] sm:$0xff]
      %v393 = vld [vmem:[%s1 + $0x4e0] sm:$0xff]
      %v394 = vld [vmem:[%s1 + $0x4e8] sm:$0xff]
      %v395 = vld [vmem:[%s1 + $0x4f0] sm:$0xff]
      %v396 = vld [vmem:[%s1 + $0x4f8] sm:$0xff]
      %v397 = vld [vmem:[%s1 + $0x500] sm:$0xff]
      %v398 = vld [vmem:[%s1 + $0x508] sm:$0xff]
      %v399 = vld [vmem:[%s1 + $0x510] sm:$0xff]
      %v400 = vld [vmem:[%s1 + $0x518] sm:$0xff]
      %v401 = vld [vmem:[%s1 + $0x520] sm:$0xff]
      %v402 = vld [vmem:[%s1 + $0x528] sm:$0xff]
      %v403 = vld [vmem:[%s1 + $0x530] sm:$0xff]
      %v404 = vld [vmem:[%s1 + $0x538] sm:$0xff]
      %v405 = vld [vmem:[%s1 + $0x540] sm:$0xff]
      %v406 = vld [vmem:[%s1 + $0x548] sm:$0xff]
      %v407 = vld [vmem:[%s1 + $0x550] sm:$0xff]
      %v408 = vld [vmem:[%s1 + $0x558] sm:$0xff]
      %v409 = vld [vmem:[%s1 + $0x560] sm:$0xff]
      %v410 = vld [vmem:[%s1 + $0x568] sm:$0xff]
      %v411 = vld [vmem:[%s1 + $0x570] sm:$0xff]
      %v412 = vld [vmem:[%s1 + $0x578] sm:$0xff]
      %v413 = vld [vmem:[%s1 + $0x580] sm:$0xff]
      %v414 = vld [vmem:[%s1 + $0x588] sm:$0xff]
      %v415 = vld [vmem:[%s1 + $0x590] sm:$0xff]
      %v416 = vld [vmem:[%s1 + $0x598] sm:$0xff]
      %v417 = vld [vmem:[%s1 + $0x5a0] sm:$0xff]
      %v418 = vld [vmem:[%s1 + $0x5a8] sm:$0xff]
      %v419 = vld [vmem:[%s1 + $0x5b0] sm:$0xff]
      %v420 = vld [vmem:[%s1 + $0x5b8] sm:$0xff]
      %v421 = vld [vmem:[%s1 + $0x5c0] sm:$0xff]
      %v422 = vld [vmem:[%s1 + $0x5c8] sm:$0xff]
      %v423 = vld [vmem:[%s1 + $0x5d0] sm:$0xff]
      %v424 = vld [vmem:[%s1 + $0x5d8] sm:$0xff]
      %v425 = vld [vmem:[%s1 + $0x5e0] sm:$0xff]
      %v426 = vld [vmem:[%s1 + $0x5e8] sm:$0xff]
      %v427 = vld [vmem:[%s1 + $0x5f0] sm:$0xff]
      %v428 = vld [vmem:[%s1 + $0x5f8] sm:$0xff]
      %v429 = vld [vmem:[%s1 + $0x600] sm:$0xff]
      %v430 = vld [vmem:[%s1 + $0x608] sm:$0xff]
      %v431 = vld [vmem:[%s1 + $0x610] sm:$0xff]
      %v432 = vld [vmem:[%s1 + $0x618] sm:$0xff]
      %v433 = vld [vmem:[%s1 + $0x620] sm:$0xff]
      %v434 = vld [vmem:[%s1 + $0x628] sm:$0xff]
      %v435 = vld [vmem:[%s1 + $0x630] sm:$0xff]
      %v436 = vld [vmem:[%s1 + $0x638] sm:$0xff]
      %v437 = vld [vmem:[%s1 + $0x640] sm:$0xff]
      %v438 = vld [vmem:[%s1 + $0x648] sm:$0xff]
      %v439 = vld [vmem:[%s1 + $0x650] sm:$0xff]
      %v440 = vld [vmem:[%s1 + $0x658] sm:$0xff]
      %v441 = vld [vmem:[%s1 + $0x660] sm:$0xff]
      %v442 = vld [vmem:[%s1 + $0x668] sm:$0xff]
      %v443 = vld [vmem:[%s1 + $0x670] sm:$0xff]
      %v444 = vld [vmem:[%s1 + $0x678] sm:$0xff]
      %v445 = vld [vmem:[%s1 + $0x680] sm:$0xff]
      %v446 = vld [vmem:[%s1 + $0x688] sm:$0xff]
      %v447 = vld [vmem:[%s1 + $0x690] sm:$0xff]
      %v448 = vld [vmem:[%s1 + $0x698] sm:$0xff]
      %v449 = vld [vmem:[%s1 + $0x6a0] sm:$0xff]
      %v450 = vld [vmem:[%s1 + $0x6a8] sm:$0xff]
      %v451 = vld [vmem:[%s1 + $0x6b0] sm:$0xff]
      %v452 = vld [vmem:[%s1 + $0x6b8] sm:$0xff]
      %v453 = vld [vmem:[%s1 + $0x6c0] sm:$0xff]
      %v454 = vld [vmem:[%s1 + $0x6c8] sm:$0xff]
      %v455 = vld [vmem:[%s1 + $0x6d0] sm:$0xff]
      %v456 = vld [vmem:[%s1 + $0x6d8] sm:$0xff]
      %v457 = vld [vmem:[%s1 + $0x6e0] sm:$0xff]
      %v458 = vld [vmem:[%s1 + $0x6e8] sm:$0xff]
      %v459 = vld [vmem:[%s1 + $0x6f0] sm:$0xff]
      %v460 = vld [vmem:[%s1 + $0x6f8] sm:$0xff]
      %v461 = vld [vmem:[%s1 + $0x700] sm:$0xff]
      %v462 = vld [vmem:[%s1 + $0x708] sm:$0xff]
      %v463 = vld [vmem:[%s1 + $0x710] sm:$0xff]
      %v464 = vld [vmem:[%s1 + $0x718] sm:$0xff]
      %v465 = vld [vmem:[%s1 + $0x720] sm:$0xff]
      %v466 = vld [vmem:[%s1 + $0x728] sm:$0xff]
      %v467 = vld [vmem:[%s1 + $0x730] sm:$0xff]
      %v468 = vld [vmem:[%s1 + $0x738] sm:$0xff]
      %v469 = vld [vmem:[%s1 + $0x740] sm:$0xff]
      %v470 = vld [vmem:[%s1 + $0x748] sm:$0xff]
      %v471 = vld [vmem:[%s1 + $0x750] sm:$0xff]
      %v472 = vld [vmem:[%s1 + $0x758] sm:$0xff]
      %v473 = vld [vmem:[%s1 + $0x760] sm:$0xff]
      %v474 = vld [vmem:[%s1 + $0x768] sm:$0xff]
      %v475 = vld [vmem:[%s1 + $0x770] sm:$0xff]
      %v476 = vld [vmem:[%s1 + $0x778] sm:$0xff]
      %v477 = vld [vmem:[%s1 + $0x780] sm:$0xff]
      %v478 = vld [vmem:[%s1 + $0x788] sm:$0xff]
      %v479 = vld [vmem:[%s1 + $0x790] sm:$0xff]
      %v480 = vld [vmem:[%s1 + $0x798] sm:$0xff]
      %v481 = vld [vmem:[%s1 + $0x7a0] sm:$0xff]
      %v482 = vld [vmem:[%s1 + $0x7a8] sm:$0xff]
      %v483 = vld [vmem:[%s1 + $0x7b0] sm:$0xff]
      %v484 = vld [vmem:[%s1 + $0x7b8] sm:$0xff]
      %v485 = vld [vmem:[%s1 + $0x7c0] sm:$0xff]
      %v486 = vld [vmem:[%s1 + $0x7c8] sm:$0xff]
      %v487 = vld [vmem:[%s1 + $0x7d0] sm:$0xff]
      %v488 = vld [vmem:[%s1 + $0x7d8] sm:$0xff]
      %v489 = vld [vmem:[%s1 + $0x7e0] sm:$0xff]
      %v490 = vld [vmem:[%s1 + $0x7e8] sm:$0xff]
      %v491 = vld [vmem:[%s1 + $0x7f0] sm:$0xff]
      %v492 = vld [vmem:[%s1 + $0x7f8] sm:$0xff]
      %v493 = vld [vmem:[%s1 + $0x800] sm:$0xff]
      %v494 = vld [vmem:[%s1 + $0x808] sm:$0xff]
      %v495 = vld [vmem:[%s1 + $0x810] sm:$0xff]
      %v496 = vld [vmem:[%s1 + $0x818] sm:$0xff]
      %v497 = vld [vmem:[%s1 + $0x820] sm:$0xff]
      %v498 = vld [vmem:[%s1 + $0x828] sm:$0xff]
      %v499 = vld [vmem:[%s1 + $0x830] sm:$0xff]
      %v500 = vld [vmem:[%s1 + $0x838] sm:$0xff]
      %v501 = vld [vmem:[%s1 + $0x840] sm:$0xff]
      %v502 = vld [vmem:[%s1 + $0x848] sm:$0xff]
      %v503 = vld [vmem:[%s1 + $0x850] sm:$0xff]
      %v504 = vld [vmem:[%s1 + $0x858] sm:$0xff]
      %v505 = vld [vmem:[%s1 + $0x860] sm:$0xff]
      %v506 = vld [vmem:[%s1 + $0x868] sm:$0xff]
      %v507 = vld [vmem:[%s1 + $0x870] sm:$0xff]
      %v508 = vld [vmem:[%s1 + $0x878] sm:$0xff]
      %v509 = vld [vmem:[%s1 + $0x880] sm:$0xff]
      %v510 = vld [vmem:[%s1 + $0x888] sm:$0xff]
      %v511 = vld [vmem:[%s1 + $0x890] sm:$0xff]
      %v512 = vld [vmem:[%s1 + $0x898] sm:$0xff]
      %v513 = vld [vmem:[%s1 + $0x8a0] sm:$0xff]
      %v514 = vld [vmem:[%s1 + $0x8a8] sm:$0xff]
      %v515 = vld [vmem:[%s1 + $0x8b0] sm:$0xff]
      %v516 = vld [vmem:[%s1 + $0x8b8] sm:$0xff]
      %v517 = vld [vmem:[%s1 + $0x8c0] sm:$0xff]
      %v518 = vld [vmem:[%s1 + $0x8c8] sm:$0xff]
      %v519 = vld [vmem:[%s1 + $0x8d0] sm:$0xff]
      %v520 = vld [vmem:[%s1 + $0x8d8] sm:$0xff]
      %v521 = vld [vmem:[%s1 + $0x8e0] sm:$0xff]
      %v522 = vld [vmem:[%s1 + $0x8e8] sm:$0xff]
      %v523 = vld [vmem:[%s1 + $0x8f0] sm:$0xff]
      %v524 = vld [vmem:[%s1 + $0x8f8] sm:$0xff]
      %v525 = vld [vmem:[%s1 + $0x900] sm:$0xff]
      %v526 = vld [vmem:[%s1 + $0x908] sm:$0xff]
      %v527 = vld [vmem:[%s1 + $0x910] sm:$0xff]
      %v528 = vld [vmem:[%s1 + $0x918] sm:$0xff]
      %v529 = vld [vmem:[%s1 + $0x920] sm:$0xff]
      %v530 = vld [vmem:[%s1 + $0x928] sm:$0xff]
      %v531 = vld [vmem:[%s1 + $0x930] sm:$0xff]
      %v532 = vld [vmem:[%s1 + $0x938] sm:$0xff]
      %v533 = vld [vmem:[%s1 + $0x940] sm:$0xff]
      %v534 = vld [vmem:[%s1 + $0x948] sm:$0xff]
      %v535 = vld [vmem:[%s1 + $0x950] sm:$0xff]
      %v536 = vld [vmem:[%s1 + $0x958] sm:$0xff]
      %v537 = vld [vmem:[%s1 + $0x960] sm:$0xff]
      %v538 = vld [vmem:[%s1 + $0x968] sm:$0xff]
      %v539 = vld [vmem:[%s1 + $0x970] sm:$0xff]
      %v540 = vld [vmem:[%s1 + $0x978] sm:$0xff]
      %v541 = vld [vmem:[%s1 + $0x980] sm:$0xff]
      %v542 = vld [vmem:[%s1 + $0x988] sm:$0xff]
      %v543 = vld [vmem:[%s1 + $0x990] sm:$0xff]
      %v544 = vld [vmem:[%s1 + $0x998] sm:$0xff]
      %v545 = vld [vmem:[%s1 + $0x9a0] sm:$0xff]
      %v546 = vld [vmem:[%s1 + $0x9a8] sm:$0xff]
      %v547 = vld [vmem:[%s1 + $0x9b0] sm:$0xff]
      %v548 = vld [vmem:[%s1 + $0x9b8] sm:$0xff]
      %v549 = vld [vmem:[%s1 + $0x9c0] sm:$0xff]
      %v550 = vld [vmem:[%s1 + $0x9c8] sm:$0xff]
      %v551 = vld [vmem:[%s1 + $0x9d0] sm:$0xff]
      %v552 = vld [vmem:[%s1 + $0x9d8] sm:$0xff]
      %v553 = vld [vmem:[%s1 + $0x9e0] sm:$0xff]
      %v554 = vld [vmem:[%s1 + $0x9e8] sm:$0xff]
      %v555 = vld [vmem:[%s1 + $0x9f0] sm:$0xff]
      %v556 = vld [vmem:[%s1 + $0x9f8] sm:$0xff]
      %v557 = vld [vmem:[%s1 + $0xa00] sm:$0xff]
      %v558 = vld [vmem:[%s1 + $0xa08] sm:$0xff]
      %v559 = vld [vmem:[%s1 + $0xa10] sm:$0xff]
      %v560 = vld [vmem:[%s1 + $0xa18] sm:$0xff]
      %v561 = vld [vmem:[%s1 + $0xa20] sm:$0xff]
      %v562 = vld [vmem:[%s1 + $0xa28] sm:$0xff]
      %v563 = vld [vmem:[%s1 + $0xa30] sm:$0xff]
      %v564 = vld [vmem:[%s1 + $0xa38] sm:$0xff]
      %v565 = vld [vmem:[%s1 + $0xa40] sm:$0xff]
      %v566 = vld [vmem:[%s1 + $0xa48] sm:$0xff]
      %v567 = vld [vmem:[%s1 + $0xa50] sm:$0xff]
      %v568 = vld [vmem:[%s1 + $0xa58] sm:$0xff]
      %v569 = vld [vmem:[%s1 + $0xa60] sm:$0xff]
      %v570 = vld [vmem:[%s1 + $0xa68] sm:$0xff]
      %v571 = vld [vmem:[%s1 + $0xa70] sm:$0xff]
      %v572 = vld [vmem:[%s1 + $0xa78] sm:$0xff]
      %v573 = vld [vmem:[%s1 + $0xa80] sm:$0xff]
      %v574 = vld [vmem:[%s1 + $0xa88] sm:$0xff]
      %v575 = vld [vmem:[%s1 + $0xa90] sm:$0xff]
      %v576 = vld [vmem:[%s1 + $0xa98] sm:$0xff]
      %v577 = vld [vmem:[%s1 + $0xaa0] sm:$0xff]
      %v578 = vld [vmem:[%s1 + $0xaa8] sm:$0xff]
      %v579 = vld [vmem:[%s1 + $0xab0] sm:$0xff]
      %v580 = vld [vmem:[%s1 + $0xab8] sm:$0xff]
      %v581 = vld [vmem:[%s1 + $0xac0] sm:$0xff]
      %v582 = vld [vmem:[%s1 + $0xac8] sm:$0xff]
      %v583 = vld [vmem:[%s1 + $0xad0] sm:$0xff]
      %v584 = vld [vmem:[%s1 + $0xad8] sm:$0xff]
      %v585 = vld [vmem:[%s1 + $0xae0] sm:$0xff]
      %v586 = vld [vmem:[%s1 + $0xae8] sm:$0xff]
      %v587 = vld [vmem:[%s1 + $0xaf0] sm:$0xff]
      %v588 = vld [vmem:[%s1 + $0xaf8] sm:$0xff]
      %v589 = vld [vmem:[%s1 + $0xb00] sm:$0xff]
      %v590 = vld [vmem:[%s1 + $0xb08] sm:$0xff]
      %v591 = vld [vmem:[%s1 + $0xb10] sm:$0xff]
      %v592 = vld [vmem:[%s1 + $0xb18] sm:$0xff]
      %v593 = vld [vmem:[%s1 + $0xb20] sm:$0xff]
      %v594 = vld [vmem:[%s1 + $0xb28] sm:$0xff]
      %v595 = vld [vmem:[%s1 + $0xb30] sm:$0xff]
      %v596 = vld [vmem:[%s1 + $0xb38] sm:$0xff]
      %v597 = vld [vmem:[%s1 + $0xb40] sm:$0xff]
      %v598 = vld [vmem:[%s1 + $0xb48] sm:$0xff]
      %v599 = vld [vmem:[%s1 + $0xb50] sm:$0xff]
      %v600 = vld [vmem:[%s1 + $0xb58] sm:$0xff]
      %v601 = vld [vmem:[%s1 + $0xb60] sm:$0xff]
      %v602 = vld [vmem:[%s1 + $0xb68] sm:$0xff]
      %v603 = vld [vmem:[%s1 + $0xb70] sm:$0xff]
      %v604 = vld [vmem:[%s1 + $0xb78] sm:$0xff]
      %v605 = vld [vmem:[%s1 + $0xb80] sm:$0xff]
      %v606 = vld [vmem:[%s1 + $0xb88] sm:$0xff]
      %v607 = vld [vmem:[%s1 + $0xb90] sm:$0xff]
      %v608 = vld [vmem:[%s1 + $0xb98] sm:$0xff]
      %v609 = vld [vmem:[%s1 + $0xba0] sm:$0xff]
      %v610 = vld [vmem:[%s1 + $0xba8] sm:$0xff]
      %v611 = vld [vmem:[%s1 + $0xbb0] sm:$0xff]
      %v612 = vld [vmem:[%s1 + $0xbb8] sm:$0xff]
      %v613 = vld [vmem:[%s1 + $0xbc0] sm:$0xff]
      %v614 = vld [vmem:[%s1 + $0xbc8] sm:$0xff]
      %v615 = vld [vmem:[%s1 + $0xbd0] sm:$0xff]
      %v616 = vld [vmem:[%s1 + $0xbd8] sm:$0xff]
      %v617 = vld [vmem:[%s1 + $0xbe0] sm:$0xff]
      %v618 = vld [vmem:[%s1 + $0xbe8] sm:$0xff]
      %v619 = vld [vmem:[%s1 + $0xbf0] sm:$0xff]
      %v620 = vld [vmem:[%s1 + $0xbf8] sm:$0xff]
      %v621 = vld [vmem:[%s1 + $0xc00] sm:$0xff]
      %v622 = vld [vmem:[%s1 + $0xc08] sm:$0xff]
      %v623 = vld [vmem:[%s1 + $0xc10] sm:$0xff]
      %v624 = vld [vmem:[%s1 + $0xc18] sm:$0xff]
      %v625 = vld [vmem:[%s1 + $0xc20] sm:$0xff]
      %v626 = vld [vmem:[%s1 + $0xc28] sm:$0xff]
      %v627 = vld [vmem:[%s1 + $0xc30] sm:$0xff]
      %v628 = vld [vmem:[%s1 + $0xc38] sm:$0xff]
      %v629 = vld [vmem:[%s1 + $0xc40] sm:$0xff]
      %v630 = vld [vmem:[%s1 + $0xc48] sm:$0xff]
      %v631 = vld [vmem:[%s1 + $0xc50] sm:$0xff]
      %v632 = vld [vmem:[%s1 + $0xc58] sm:$0xff]
      %v633 = vld [vmem:[%s1 + $0xc60] sm:$0xff]
      %v634 = vld [vmem:[%s1 + $0xc68] sm:$0xff]
      %v635 = vld [vmem:[%s1 + $0xc70] sm:$0xff]
      %v636 = vld [vmem:[%s1 + $0xc78] sm:$0xff]
      %v637 = vld [vmem:[%s1 + $0xc80] sm:$0xff]
      %v638 = vld [vmem:[%s1 + $0xc88] sm:$0xff]
      %v639 = vld [vmem:[%s1 + $0xc90] sm:$0xff]
      %v640 = vld [vmem:[%s1 + $0xc98] sm:$0xff]
      %v641 = vld [vmem:[%s1 + $0xca0] sm:$0xff]
      %v642 = vld [vmem:[%s1 + $0xca8] sm:$0xff]
      %v643 = vld [vmem:[%s1 + $0xcb0] sm:$0xff]
      %v644 = vld [vmem:[%s1 + $0xcb8] sm:$0xff]
      %v645 = vld [vmem:[%s1 + $0xcc0] sm:$0xff]
      %v646 = vld [vmem:[%s1 + $0xcc8] sm:$0xff]
      %v647 = vld [vmem:[%s1 + $0xcd0] sm:$0xff]
      %v648 = vld [vmem:[%s1 + $0xcd8] sm:$0xff]
      %v649 = vld [vmem:[%s1 + $0xce0] sm:$0xff]
      %v650 = vld [vmem:[%s1 + $0xce8] sm:$0xff]
      %v651 = vld [vmem:[%s1 + $0xcf0] sm:$0xff]
      %v652 = vld [vmem:[%s1 + $0xcf8] sm:$0xff]
      %v653 = vld [vmem:[%s1 + $0xd00] sm:$0xff]
      %v654 = vld [vmem:[%s1 + $0xd08] sm:$0xff]
      %v655 = vld [vmem:[%s1 + $0xd10] sm:$0xff]
      %v656 = vld [vmem:[%s1 + $0xd18] sm:$0xff]
      %v657 = vld [vmem:[%s1 + $0xd20] sm:$0xff]
      %v658 = vld [vmem:[%s1 + $0xd28] sm:$0xff]
      %v659 = vld [vmem:[%s1 + $0xd30] sm:$0xff]
      %v660 = vld [vmem:[%s1 + $0xd38] sm:$0xff]
      %v661 = vld [vmem:[%s1 + $0xd40] sm:$0xff]
      %v662 = vld [vmem:[%s1 + $0xd48] sm:$0xff]
      %v663 = vld [vmem:[%s1 + $0xd50] sm:$0xff]
      %v664 = vld [vmem:[%s1 + $0xd58] sm:$0xff]
      %v665 = vld [vmem:[%s1 + $0xd60] sm:$0xff]
      %v666 = vld [vmem:[%s1 + $0xd68] sm:$0xff]
      %v667 = vld [vmem:[%s1 + $0xd70] sm:$0xff]
      %v668 = vld [vmem:[%s1 + $0xd78] sm:$0xff]
      %v669 = vld [vmem:[%s1 + $0xd80] sm:$0xff]
      %v670 = vld [vmem:[%s1 + $0xd88] sm:$0xff]
      %v671 = vld [vmem:[%s1 + $0xd90] sm:$0xff]
      %v672 = vld [vmem:[%s1 + $0xd98] sm:$0xff]
      %v673 = vld [vmem:[%s1 + $0xda0] sm:$0xff]
      %v674 = vld [vmem:[%s1 + $0xda8] sm:$0xff]
      %v675 = vld [vmem:[%s1 + $0xdb0] sm:$0xff]
      %v676 = vld [vmem:[%s1 + $0xdb8] sm:$0xff]
      %v677 = vld [vmem:[%s1 + $0xdc0] sm:$0xff]
      %v678 = vld [vmem:[%s1 + $0xdc8] sm:$0xff]
      %v679 = vld [vmem:[%s1 + $0xdd0] sm:$0xff]
      %v680 = vld [vmem:[%s1 + $0xdd8] sm:$0xff]
      %v681 = vld [vmem:[%s1 + $0xde0] sm:$0xff]
      %v682 = vld [vmem:[%s1 + $0xde8] sm:$0xff]
      %v683 = vld [vmem:[%s1 + $0xdf0] sm:$0xff]
      %v684 = vld [vmem:[%s1 + $0xdf8] sm:$0xff]
      %v685 = vld [vmem:[%s1 + $0xe00] sm:$0xff]
      %v686 = vld [vmem:[%s1 + $0xe08] sm:$0xff]
      %v687 = vld [vmem:[%s1 + $0xe10] sm:$0xff]
      %v688 = vld [vmem:[%s1 + $0xe18] sm:$0xff]
      %v689 = vld [vmem:[%s1 + $0xe20] sm:$0xff]
      %v690 = vld [vmem:[%s1 + $0xe28] sm:$0xff]
      %v691 = vld [vmem:[%s1 + $0xe30] sm:$0xff]
      %v692 = vld [vmem:[%s1 + $0xe38] sm:$0xff]
      %v693 = vld [vmem:[%s1 + $0xe40] sm:$0xff]
      %v694 = vld [vmem:[%s1 + $0xe48] sm:$0xff]
      %v695 = vld [vmem:[%s1 + $0xe50] sm:$0xff]
      %v696 = vld [vmem:[%s1 + $0xe58] sm:$0xff]
      %v697 = vld [vmem:[%s1 + $0xe60] sm:$0xff]
      %v698 = vld [vmem:[%s1 + $0xe68] sm:$0xff]
      %v699 = vld [vmem:[%s1 + $0xe70] sm:$0xff]
      %v700 = vld [vmem:[%s1 + $0xe78] sm:$0xff]
      %v701 = vld [vmem:[%s1 + $0xe80] sm:$0xff]
      %v702 = vld [vmem:[%s1 + $0xe88] sm:$0xff]
      %v703 = vld [vmem:[%s1 + $0xe90] sm:$0xff]
      %v704 = vld [vmem:[%s1 + $0xe98] sm:$0xff]
      %v705 = vld [vmem:[%s1 + $0xea0] sm:$0xff]
      %v706 = vld [vmem:[%s1 + $0xea8] sm:$0xff]
      %v707 = vld [vmem:[%s1 + $0xeb0] sm:$0xff]
      %v708 = vld [vmem:[%s1 + $0xeb8] sm:$0xff]
      %v709 = vld [vmem:[%s1 + $0xec0] sm:$0xff]
      %v710 = vld [vmem:[%s1 + $0xec8] sm:$0xff]
      %v711 = vld [vmem:[%s1 + $0xed0] sm:$0xff]
      %v712 = vld [vmem:[%s1 + $0xed8] sm:$0xff]
      %v713 = vld [vmem:[%s1 + $0xee0] sm:$0xff]
      %v714 = vld [vmem:[%s1 + $0xee8] sm:$0xff]
      %v715 = vld [vmem:[%s1 + $0xef0] sm:$0xff]
      %v716 = vld [vmem:[%s1 + $0xef8] sm:$0xff]
      %v717 = vld [vmem:[%s1 + $0xf00] sm:$0xff]
      %v718 = vld [vmem:[%s1 + $0xf08] sm:$0xff]
      %v719 = vld [vmem:[%s1 + $0xf10] sm:$0xff]
      %v720 = vld [vmem:[%s1 + $0xf18] sm:$0xff]
      %v721 = vld [vmem:[%s1 + $0xf20] sm:$0xff]
      %v722 = vld [vmem:[%s1 + $0xf28] sm:$0xff]
      %v723 = vld [vmem:[%s1 + $0xf30] sm:$0xff]
      %v724 = vld [vmem:[%s1 + $0xf38] sm:$0xff]
      %v725 = vld [vmem:[%s1 + $0xf40] sm:$0xff]
      %v726 = vld [vmem:[%s1 + $0xf48] sm:$0xff]
      %v727 = vld [vmem:[%s1 + $0xf50] sm:$0xff]
      %v728 = vld [vmem:[%s1 + $0xf58] sm:$0xff]
      %v729 = vld [vmem:[%s1 + $0xf60] sm:$0xff]
      %v730 = vld [vmem:[%s1 + $0xf68] sm:$0xff]
      %v731 = vld [vmem:[%s1 + $0xf70] sm:$0xff]
      %v732 = vld [vmem:[%s1 + $0xf78] sm:$0xff]
      %v733 = vld [vmem:[%s1 + $0xf80] sm:$0xff]
      %v734 = vld [vmem:[%s1 + $0xf88] sm:$0xff]
      %v735 = vld [vmem:[%s1 + $0xf90] sm:$0xff]
      %v736 = vld [vmem:[%s1 + $0xf98] sm:$0xff]
      %v737 = vld [vmem:[%s1 + $0xfa0] sm:$0xff]
      %v738 = vld [vmem:[%s1 + $0xfa8] sm:$0xff]
      %v739 = vld [vmem:[%s1 + $0xfb0] sm:$0xff]
      %v740 = vld [vmem:[%s1 + $0xfb8] sm:$0xff]
      %v741 = vld [vmem:[%s1 + $0xfc0] sm:$0xff]
      %v742 = vld [vmem:[%s1 + $0xfc8] sm:$0xff]
      %v743 = vld [vmem:[%s1 + $0xfd0] sm:$0xff]
      %v744 = vld [vmem:[%s1 + $0xfd8] sm:$0xff]
      %v745 = vld [vmem:[%s1 + $0xfe0] sm:$0xff]
      %v746 = vld [vmem:[%s1 + $0xfe8] sm:$0xff]
      %v747 = vld [vmem:[%s1 + $0xff0] sm:$0xff]
      %v748 = vld [vmem:[%s1 + $0xff8] sm:$0xff]
      %v749 = vld [vmem:[%s1 + $0x1000] sm:$0xff]
      %v750 = vld [vmem:[%s1 + $0x1008] sm:$0xff]
      %v751 = vld [vmem:[%s1 + $0x1010] sm:$0xff]
      %v752 = vld [vmem:[%s1 + $0x1018] sm:$0xff]
      %v753 = vld [vmem:[%s1 + $0x1020] sm:$0xff]
      %v754 = vld [vmem:[%s1 + $0x1028] sm:$0xff]
      %v755 = vld [vmem:[%s1 + $0x1030] sm:$0xff]
      %v756 = vld [vmem:[%s1 + $0x1038] sm:$0xff]
      %v757 = vld [vmem:[%s1 + $0x1040] sm:$0xff]
      %v758 = vld [vmem:[%s1 + $0x1048] sm:$0xff]
      %v759 = vld [vmem:[%s1 + $0x1050] sm:$0xff]
      %v760 = vld [vmem:[%s1 + $0x1058] sm:$0xff]
      %v761 = vld [vmem:[%s1 + $0x1060] sm:$0xff]
      %v762 = vld [vmem:[%s1 + $0x1068] sm:$0xff]
      %v763 = vld [vmem:[%s1 + $0x1070] sm:$0xff]
      %v764 = vld [vmem:[%s1 + $0x1078] sm:$0xff]
      %v765 = vld [vmem:[%s1 + $0x1080] sm:$0xff]
      %v766 = vld [vmem:[%s1 + $0x1088] sm:$0xff]
      %v767 = vld [vmem:[%s1 + $0x1090] sm:$0xff]
      %v768 = vld [vmem:[%s1 + $0x1098] sm:$0xff]
      %v769 = vld [vmem:[%s1 + $0x10a0] sm:$0xff]
      %v770 = vld [vmem:[%s1 + $0x10a8] sm:$0xff]
      %v771 = vld [vmem:[%s1 + $0x10b0] sm:$0xff]
      %v772 = vld [vmem:[%s1 + $0x10b8] sm:$0xff]
      %v773 = vld [vmem:[%s1 + $0x10c0] sm:$0xff]
      %v774 = vld [vmem:[%s1 + $0x10c8] sm:$0xff]
      %v775 = vld [vmem:[%s1 + $0x10d0] sm:$0xff]
      %v776 = vld [vmem:[%s1 + $0x10d8] sm:$0xff]
      %v777 = vld [vmem:[%s1 + $0x10e0] sm:$0xff]
      %v778 = vld [vmem:[%s1 + $0x10e8] sm:$0xff]
      %v779 = vld [vmem:[%s1 + $0x10f0] sm:$0xff]
      %v780 = vld [vmem:[%s1 + $0x10f8] sm:$0xff]
      %v781 = vld [vmem:[%s1 + $0x1100] sm:$0xff]
      %v782 = vld [vmem:[%s1 + $0x1108] sm:$0xff]
      %v783 = vld [vmem:[%s1 + $0x1110] sm:$0xff]
      %v784 = vld [vmem:[%s1 + $0x1118] sm:$0xff]
      %v785 = vld [vmem:[%s1 + $0x1120] sm:$0xff]
      %v786 = vld [vmem:[%s1 + $0x1128] sm:$0xff]
      %v787 = vld [vmem:[%s1 + $0x1130] sm:$0xff]
      %v788 = vld [vmem:[%s1 + $0x1138] sm:$0xff]
      %v789 = vld [vmem:[%s1 + $0x1140] sm:$0xff]
      %v790 = vld [vmem:[%s1 + $0x1148] sm:$0xff]
      %v791 = vld [vmem:[%s1 + $0x1150] sm:$0xff]
      %v792 = vld [vmem:[%s1 + $0x1158] sm:$0xff]
      %v793 = vld [vmem:[%s1 + $0x1160] sm:$0xff]
      %v794 = vld [vmem:[%s1 + $0x1168] sm:$0xff]
      %v795 = vld [vmem:[%s1 + $0x1170] sm:$0xff]
      %v796 = vld [vmem:[%s1 + $0x1178] sm:$0xff]
      %v797 = vld [vmem:[%s1 + $0x1180] sm:$0xff]
      %v798 = vld [vmem:[%s1 + $0x1188] sm:$0xff]
      %v799 = vld [vmem:[%s1 + $0x1190] sm:$0xff]
      %v800 = vld [vmem:[%s1 + $0x1198] sm:$0xff]
      %v801 = vld [vmem:[%s1 + $0x11a0] sm:$0xff]
      %v802 = vld [vmem:[%s1 + $0x11a8] sm:$0xff]
      %v803 = vld [vmem:[%s1 + $0x11b0] sm:$0xff]
      %v804 = vld [vmem:[%s1 + $0x11b8] sm:$0xff]
      %v805 = vld [vmem:[%s1 + $0x11c0] sm:$0xff]
      %v806 = vld [vmem:[%s1 + $0x11c8] sm:$0xff]
      %v807 = vld [vmem:[%s1 + $0x11d0] sm:$0xff]
      %v808 = vld [vmem:[%s1 + $0x11d8] sm:$0xff]
      %v809 = vld [vmem:[%s1 + $0x11e0] sm:$0xff]
      %v810 = vld [vmem:[%s1 + $0x11e8] sm:$0xff]
      %v811 = vld [vmem:[%s1 + $0x11f0] sm:$0xff]
      %v812 = vld [vmem:[%s1 + $0x11f8] sm:$0xff]
      %v813 = vld [vmem:[%s1 + $0x1200] sm:$0xff]
      %v814 = vld [vmem:[%s1 + $0x1208] sm:$0xff]
      %v815 = vld [vmem:[%s1 + $0x1210] sm:$0xff]
      %v816 = vld [vmem:[%s1 + $0x1218] sm:$0xff]
      %v817 = vld [vmem:[%s1 + $0x1220] sm:$0xff]
      %v818 = vld [vmem:[%s1 + $0x1228] sm:$0xff]
      %v819 = vld [vmem:[%s1 + $0x1230] sm:$0xff]
      %v820 = vld [vmem:[%s1 + $0x1238] sm:$0xff]
      %v821 = vld [vmem:[%s1 + $0x1240] sm:$0xff]
      %v822 = vld [vmem:[%s1 + $0x1248] sm:$0xff]
      %v823 = vld [vmem:[%s1 + $0x1250] sm:$0xff]
      %v824 = vld [vmem:[%s1 + $0x1258] sm:$0xff]
      %v825 = vld [vmem:[%s1 + $0x1260] sm:$0xff]
      %v826 = vld [vmem:[%s1 + $0x1268] sm:$0xff]
      %v827 = vld [vmem:[%s1 + $0x1270] sm:$0xff]
      %v828 = vld [vmem:[%s1 + $0x1278] sm:$0xff]
      %v829 = vld [vmem:[%s1 + $0x1280] sm:$0xff]
      %v830 = vld [vmem:[%s1 + $0x1288] sm:$0xff]
      %v831 = vld [vmem:[%s1 + $0x1290] sm:$0xff]
      %v832 = vld [vmem:[%s1 + $0x1298] sm:$0xff]
      %v833 = vld [vmem:[%s1 + $0x12a0] sm:$0xff]
      %v834 = vld [vmem:[%s1 + $0x12a8] sm:$0xff]
      %v835 = vld [vmem:[%s1 + $0x12b0] sm:$0xff]
      %v836 = vld [vmem:[%s1 + $0x12b8] sm:$0xff]
      %v837 = vld [vmem:[%s1 + $0x12c0] sm:$0xff]
      %v838 = vld [vmem:[%s1 + $0x12c8] sm:$0xff]
      %v839 = vld [vmem:[%s1 + $0x12d0] sm:$0xff]
      %v840 = vld [vmem:[%s1 + $0x12d8] sm:$0xff]
      %v841 = vld [vmem:[%s1 + $0x12e0] sm:$0xff]
      %v842 = vld [vmem:[%s1 + $0x12e8] sm:$0xff]
      %v843 = vld [vmem:[%s1 + $0x12f0] sm:$0xff]
      %v844 = vld [vmem:[%s1 + $0x12f8] sm:$0xff]
      %v845 = vld [vmem:[%s1 + $0x1300] sm:$0xff]
      %v846 = vld [vmem:[%s1 + $0x1308] sm:$0xff]
      %v847 = vld [vmem:[%s1 + $0x1310] sm:$0xff]
      %v848 = vld [vmem:[%s1 + $0x1318] sm:$0xff]
      %v849 = vld [vmem:[%s1 + $0x1320] sm:$0xff]
      %v850 = vld [vmem:[%s1 + $0x1328] sm:$0xff]
      %v851 = vld [vmem:[%s1 + $0x1330] sm:$0xff]
      %v852 = vld [vmem:[%s1 + $0x1338] sm:$0xff]
      %v853 = vld [vmem:[%s1 + $0x1340] sm:$0xff]
      %v854 = vld [vmem:[%s1 + $0x1348] sm:$0xff]
      %v855 = vld [vmem:[%s1 + $0x1350] sm:$0xff]
      %v856 = vld [vmem:[%s1 + $0x1358] sm:$0xff]
      %v857 = vld [vmem:[%s1 + $0x1360] sm:$0xff]
      %v858 = vld [vmem:[%s1 + $0x1368] sm:$0xff]
      %v859 = vld [vmem:[%s1 + $0x1370] sm:$0xff]
      %v860 = vld [vmem:[%s1 + $0x1378] sm:$0xff]
      %v861 = vld [vmem:[%s1 + $0x1380] sm:$0xff]
      %v862 = vld [vmem:[%s1 + $0x1388] sm:$0xff]
      %v863 = vld [vmem:[%s1 + $0x1390] sm:$0xff]
      %v864 = vld [vmem:[%s1 + $0x1398] sm:$0xff]
      %v865 = vld [vmem:[%s1 + $0x13a0] sm:$0xff]
      %v866 = vld [vmem:[%s1 + $0x13a8] sm:$0xff]
      %v867 = vld [vmem:[%s1 + $0x13b0] sm:$0xff]
      %v868 = vld [vmem:[%s1 + $0x13b8] sm:$0xff]
      %v869 = vld [vmem:[%s1 + $0x13c0] sm:$0xff]
      %v870 = vld [vmem:[%s1 + $0x13c8] sm:$0xff]
      %v871 = vld [vmem:[%s1 + $0x13d0] sm:$0xff]
      %v872 = vld [vmem:[%s1 + $0x13d8] sm:$0xff]
      %v873 = vld [vmem:[%s1 + $0x13e0] sm:$0xff]
      %v874 = vld [vmem:[%s1 + $0x13e8] sm:$0xff]
      %v875 = vld [vmem:[%s1 + $0x13f0] sm:$0xff]
      %v876 = vld [vmem:[%s1 + $0x13f8] sm:$0xff]
      %v877 = vld [vmem:[%s1 + $0x1400] sm:$0xff]
      %v878 = vld [vmem:[%s1 + $0x1408] sm:$0xff]
      %v879 = vld [vmem:[%s1 + $0x1410] sm:$0xff]
      %v880 = vld [vmem:[%s1 + $0x1418] sm:$0xff]
      %v881 = vld [vmem:[%s1 + $0x1420] sm:$0xff]
      %v882 = vld [vmem:[%s1 + $0x1428] sm:$0xff]
      %v883 = vld [vmem:[%s1 + $0x1430] sm:$0xff]
      %v884 = vld [vmem:[%s1 + $0x1438] sm:$0xff]
      %v885 = vld [vmem:[%s1 + $0x1440] sm:$0xff]
      %v886 = vld [vmem:[%s1 + $0x1448] sm:$0xff]
      %v887 = vld [vmem:[%s1 + $0x1450] sm:$0xff]
      %v888 = vld [vmem:[%s1 + $0x1458] sm:$0xff]
      %v889 = vld [vmem:[%s1 + $0x1460] sm:$0xff]
      %v890 = vld [vmem:[%s1 + $0x1468] sm:$0xff]
      %v891 = vld [vmem:[%s1 + $0x1470] sm:$0xff]
      %v892 = vld [vmem:[%s1 + $0x1478] sm:$0xff]
      %v893 = vld [vmem:[%s1 + $0x1480] sm:$0xff]
      %v894 = vld [vmem:[%s1 + $0x1488] sm:$0xff]
      %v895 = vld [vmem:[%s1 + $0x1490] sm:$0xff]
      %v896 = vld [vmem:[%s1 + $0x1498] sm:$0xff]
      %v897 = vld [vmem:[%s1 + $0x14a0] sm:$0xff]
      %v898 = vld [vmem:[%s1 + $0x14a8] sm:$0xff]
      %v899 = vld [vmem:[%s1 + $0x14b0] sm:$0xff]
      %v900 = vld [vmem:[%s1 + $0x14b8] sm:$0xff]
      %v901 = vld [vmem:[%s1 + $0x14c0] sm:$0xff]
      %v902 = vld [vmem:[%s1 + $0x14c8] sm:$0xff]
      %v903 = vld [vmem:[%s1 + $0x14d0] sm:$0xff]
      %v904 = vld [vmem:[%s1 + $0x14d8] sm:$0xff]
      %v905 = vld [vmem:[%s1 + $0x14e0] sm:$0xff]
      %v906 = vld [vmem:[%s1 + $0x14e8] sm:$0xff]
      %v907 = vld [vmem:[%s1 + $0x14f0] sm:$0xff]
      %v908 = vld [vmem:[%s1 + $0x14f8] sm:$0xff]
      %v909 = vld [vmem:[%s1 + $0x1500] sm:$0xff]
      %v910 = vld [vmem:[%s1 + $0x1508] sm:$0xff]
      %v911 = vld [vmem:[%s1 + $0x1510] sm:$0xff]
      %v912 = vld [vmem:[%s1 + $0x1518] sm:$0xff]
      %v913 = vld [vmem:[%s1 + $0x1520] sm:$0xff]
      %v914 = vld [vmem:[%s1 + $0x1528] sm:$0xff]
      %v915 = vld [vmem:[%s1 + $0x1530] sm:$0xff]
      %v916 = vld [vmem:[%s1 + $0x1538] sm:$0xff]
      %v917 = vld [vmem:[%s1 + $0x1540] sm:$0xff]
      %v918 = vld [vmem:[%s1 + $0x1548] sm:$0xff]
      %v919 = vld [vmem:[%s1 + $0x1550] sm:$0xff]
      %v920 = vld [vmem:[%s1 + $0x1558] sm:$0xff]
      %v921 = vld [vmem:[%s1 + $0x1560] sm:$0xff]
      %v922 = vld [vmem:[%s1 + $0x1568] sm:$0xff]
      %v923 = vld [vmem:[%s1 + $0x1570] sm:$0xff]
      %v924 = vld [vmem:[%s1 + $0x1578] sm:$0xff]
      %v925 = vld [vmem:[%s1 + $0x1580] sm:$0xff]
      %v926 = vld [vmem:[%s1 + $0x1588] sm:$0xff]
      %v927 = vld [vmem:[%s1 + $0x1590] sm:$0xff]
      %v928 = vld [vmem:[%s1 + $0x1598] sm:$0xff]
      %v929 = vld [vmem:[%s1 + $0x15a0] sm:$0xff]
      %v930 = vld [vmem:[%s1 + $0x15a8] sm:$0xff]
      %v931 = vld [vmem:[%s1 + $0x15b0] sm:$0xff]
      %v932 = vld [vmem:[%s1 + $0x15b8] sm:$0xff]
      %v933 = vld [vmem:[%s1 + $0x15c0] sm:$0xff]
      %v934 = vld [vmem:[%s1 + $0x15c8] sm:$0xff]
      %v935 = vld [vmem:[%s1 + $0x15d0] sm:$0xff]
      %v936 = vld [vmem:[%s1 + $0x15d8] sm:$0xff]
      %v937 = vld [vmem:[%s1 + $0x15e0] sm:$0xff]
      %v938 = vld [vmem:[%s1 + $0x15e8] sm:$0xff]
      %v939 = vld [vmem:[%s1 + $0x15f0] sm:$0xff]
      %v940 = vld [vmem:[%s1 + $0x15f8] sm:$0xff]
      %v941 = vld [vmem:[%s1 + $0x1600] sm:$0xff]
      %v942 = vld [vmem:[%s1 + $0x1608] sm:$0xff]
      %v943 = vld [vmem:[%s1 + $0x1610] sm:$0xff]
      %v944 = vld [vmem:[%s1 + $0x1618] sm:$0xff]
      %v945 = vld [vmem:[%s1 + $0x1620] sm:$0xff]
      %v946 = vld [vmem:[%s1 + $0x1628] sm:$0xff]
      %v947 = vld [vmem:[%s1 + $0x1630] sm:$0xff]
      %v948 = vld [vmem:[%s1 + $0x1638] sm:$0xff]
      %v949 = vld [vmem:[%s1 + $0x1640] sm:$0xff]
      %v950 = vld [vmem:[%s1 + $0x1648] sm:$0xff]
      %v951 = vld [vmem:[%s1 + $0x1650] sm:$0xff]
      %v952 = vld [vmem:[%s1 + $0x1658] sm:$0xff]
      %v953 = vld [vmem:[%s1 + $0x1660] sm:$0xff]
      %v954 = vld [vmem:[%s1 + $0x1668] sm:$0xff]
      %v955 = vld [vmem:[%s1 + $0x1670] sm:$0xff]
      %v956 = vld [vmem:[%s1 + $0x1678] sm:$0xff]
      %v957 = vld [vmem:[%s1 + $0x1680] sm:$0xff]
      %v958 = vld [vmem:[%s1 + $0x1688] sm:$0xff]
      %v959 = vld [vmem:[%s1 + $0x1690] sm:$0xff]
      %v960 = vld [vmem:[%s1 + $0x1698] sm:$0xff]
      %v961 = vld [vmem:[%s1 + $0x16a0] sm:$0xff]
      %v962 = vld [vmem:[%s1 + $0x16a8] sm:$0xff]
      %v963 = vld [vmem:[%s1 + $0x16b0] sm:$0xff]
      %v964 = vld [vmem:[%s1 + $0x16b8] sm:$0xff]
      %v965 = vld [vmem:[%s1 + $0x16c0] sm:$0xff]
      %v966 = vld [vmem:[%s1 + $0x16c8] sm:$0xff]
      %v967 = vld [vmem:[%s1 + $0x16d0] sm:$0xff]
      %v968 = vld [vmem:[%s1 + $0x16d8] sm:$0xff]
      %v969 = vld [vmem:[%s1 + $0x16e0] sm:$0xff]
      %v970 = vld [vmem:[%s1 + $0x16e8] sm:$0xff]
      %v971 = vld [vmem:[%s1 + $0x16f0] sm:$0xff]
      %v972 = vld [vmem:[%s1 + $0x16f8] sm:$0xff]
      %v973 = vld [vmem:[%s1 + $0x1700] sm:$0xff]
      %v974 = vld [vmem:[%s1 + $0x1708] sm:$0xff]
      %v975 = vld [vmem:[%s1 + $0x1710] sm:$0xff]
      %v976 = vld [vmem:[%s1 + $0x1718] sm:$0xff]
      %v977 = vld [vmem:[%s1 + $0x1720] sm:$0xff]
      %v978 = vld [vmem:[%s1 + $0x1728] sm:$0xff]
      %v979 = vld [vmem:[%s1 + $0x1730] sm:$0xff]
      %v980 = vld [vmem:[%s1 + $0x1738] sm:$0xff]
      %v981 = vld [vmem:[%s1 + $0x1740] sm:$0xff]
      %v982 = vld [vmem:[%s1 + $0x1748] sm:$0xff]
      %v983 = vld [vmem:[%s1 + $0x1750] sm:$0xff]
      %v984 = vld [vmem:[%s1 + $0x1758] sm:$0xff]
      %v985 = vld [vmem:[%s1 + $0x1760] sm:$0xff]
      %v986 = vld [vmem:[%s1 + $0x1768] sm:$0xff]
      %v987 = vld [vmem:[%s1 + $0x1770] sm:$0xff]
      %v988 = vld [vmem:[%s1 + $0x1778] sm:$0xff]
      %v989 = vld [vmem:[%s1 + $0x1780] sm:$0xff]
      %v990 = vld [vmem:[%s1 + $0x1788] sm:$0xff]
      %v991 = vld [vmem:[%s1 + $0x1790] sm:$0xff]
      %v992 = vld [vmem:[%s1 + $0x1798] sm:$0xff]
      %v993 = vld [vmem:[%s1 + $0x17a0] sm:$0xff]
      %v994 = vld [vmem:[%s1 + $0x17a8] sm:$0xff]
      %v995 = vld [vmem:[%s1 + $0x17b0] sm:$0xff]
      %v996 = vld [vmem:[%s1 + $0x17b8] sm:$0xff]
      %v997 = vld [vmem:[%s1 + $0x17c0] sm:$0xff]
      %v998 = vld [vmem:[%s1 + $0x17c8] sm:$0xff]
      %v999 = vld [vmem:[%s1 + $0x17d0] sm:$0xff]
      %v1000 = vld [vmem:[%s1 + $0x17d8] sm:$0xff]
      %v1001 = vld [vmem:[%s1 + $0x17e0] sm:$0xff]
      %v1002 = vld [vmem:[%s1 + $0x17e8] sm:$0xff]
      %v1003 = vld [vmem:[%s1 + $0x17f0] sm:$0xff]
      %v1004 = vld [vmem:[%s1 + $0x17f8] sm:$0xff]
      %v1005 = vld [vmem:[%s2] sm:$0x3]
      %v1007 = vlaneseq
      %v1008 = vshrl.u32 %v1007, 7
      %v1009 = vsub.s32 0, %v1008
      %v1010 = vrot.slane %v1005, %v1009
      %v1011 = vlaneseq
      %v1012 = vshrl.u32 %v1011, 7
      %v1013 = vsub.s32 1, %v1012
      %v1014 = vrot.slane %v1005, %v1013
      %v1029 = vcombine.high %v225, %v225
      %v1030 = vcombine.high %v226, %v226
      %v1031 = vcombine.high %v227, %v227
      %v1032 = vcombine.high %v228, %v228
      %v1033 = vcombine.high %v229, %v229
      %v1034 = vcombine.high %v230, %v230
      %v1035 = vcombine.high %v231, %v231
      %v1036 = vcombine.high %v232, %v232
      %v1037 = vcombine.high %v233, %v233
      %v1038 = vcombine.high %v234, %v234
      %v1039 = vcombine.high %v235, %v235
      %v1040 = vcombine.high %v236, %v236
      %1053 = vmatprep.subr.mxu0 %v268
      %1054 = vmatpush1.msra.mxu0 %v267
      %1055 = vmatprep.subr.mxu0 %v266
      %1056 = vmatpush1.msra.mxu0 %v265
      %1057 = vmatprep.subr.mxu0 %v264
      %1058 = vmatpush1.msra.mxu0 %v263
      %1059 = vmatprep.subr.mxu0 %v262
      %1060 = vmatpush1.msra.mxu0 %v261
      %1061 = vmatprep.subr.mxu0 %v260
      %1062 = vmatpush1.msra.mxu0 %v259
      %1063 = vmatprep.subr.mxu0 %v258
      %1064 = vmatpush1.msra.mxu0 %v257
      %1065 = vmatprep.subr.mxu0 %v256
      %1066 = vmatpush1.msra.mxu0 %v255
      %1067 = vmatprep.subr.mxu0 %v254
      %1068 = vmatpush1.msra.mxu0 %v253
      %1069 = vmatprep.subr.mxu0 %v252
      %1070 = vmatpush1.msra.mxu0 %v251
      %1071 = vmatprep.subr.mxu0 %v250
      %1072 = vmatpush1.msra.mxu0 %v249
      %1073 = vmatprep.subr.mxu0 %v248
      %1074 = vmatpush1.msra.mxu0 %v247
      %1075 = vmatprep.subr.mxu0 %v246
      %1076 = vmatpush1.msra.mxu0 %v245
      %1077 = vmatprep.subr.mxu0 %v244
      %1078 = vmatpush1.msra.mxu0 %v243
      %1079 = vmatprep.subr.mxu0 %v242
      %1080 = vmatpush1.msra.mxu0 %v241
      %1081 = vmatprep.subr.mxu0 %v240
      %1082 = vmatpush1.msra.mxu0 %v239
      %1083 = vmatprep.subr.mxu0 %v238
      %1084 = vmatpush1.msra.mxu0 %v237
      %1085 = vmatprep.subr.mxu0 %v300
      %1086 = vmatpush2.msra.mxu0 %v299
      %1087 = vmatprep.subr.mxu0 %v298
      %1088 = vmatpush2.msra.mxu0 %v297
      %1089 = vmatprep.subr.mxu0 %v296
      %1090 = vmatpush2.msra.mxu0 %v295
      %1091 = vmatprep.subr.mxu0 %v294
      %1092 = vmatpush2.msra.mxu0 %v293
      %1093 = vmatprep.subr.mxu0 %v292
      %1094 = vmatpush2.msra.mxu0 %v291
      %1095 = vmatprep.subr.mxu0 %v290
      %1096 = vmatpush2.msra.mxu0 %v289
      %1097 = vmatprep.subr.mxu0 %v288
      %1098 = vmatpush2.msra.mxu0 %v287
      %1099 = vmatprep.subr.mxu0 %v286
      %1100 = vmatpush2.msra.mxu0 %v285
      %1101 = vmatprep.subr.mxu0 %v284
      %1102 = vmatpush2.msra.mxu0 %v283
      %1103 = vmatprep.subr.mxu0 %v282
      %1104 = vmatpush2.msra.mxu0 %v281
      %1105 = vmatprep.subr.mxu0 %v280
      %1106 = vmatpush2.msra.mxu0 %v279
      %1107 = vmatprep.subr.mxu0 %v278
      %1108 = vmatpush2.msra.mxu0 %v277
      %1109 = vmatprep.subr.mxu0 %v276
      %1110 = vmatpush2.msra.mxu0 %v275
      %1111 = vmatprep.subr.mxu0 %v274
      %1112 = vmatpush2.msra.mxu0 %v273
      %1113 = vmatprep.subr.mxu0 %v272
      %1114 = vmatpush2.msra.mxu0 %v271
      %1115 = vmatprep.subr.mxu0 %v270
      %1116 = vmatpush2.msra.mxu0 %v269
      %1117 = vmatprep.mubr.f32.mxu0 %v1029
      %1118 = vmatmul.mubr.f32.gmra.mxu0 %v225
      %v1119 = vpop.f32.mrf.mxu0
      %v1120 = vadd.f32 %v1010, %v1119
      %v1121 = vpop.f32.mrf.mxu0
      %v1122 = vadd.f32 %v1014, %v1121
      %1123 = vdwg.mxu0
      %1124 = vmatprep.subr.mxu0 %v332
      %1125 = vmatpush1.msra.mxu0 %v331
      %1126 = vmatprep.subr.mxu0 %v330
      %1127 = vmatpush1.msra.mxu0 %v329
      %1128 = vmatprep.subr.mxu0 %v328
      %1129 = vmatpush1.msra.mxu0 %v327
      %1130 = vmatprep.subr.mxu0 %v326
      %1131 = vmatpush1.msra.mxu0 %v325
      %1132 = vmatprep.subr.mxu0 %v324
      %1133 = vmatpush1.msra.mxu0 %v323
      %1134 = vmatprep.subr.mxu0 %v322
      %1135 = vmatpush1.msra.mxu0 %v321
      %1136 = vmatprep.subr.mxu0 %v320
      %1137 = vmatpush1.msra.mxu0 %v319
      %1138 = vmatprep.subr.mxu0 %v318
      %1139 = vmatpush1.msra.mxu0 %v317
      %1140 = vmatprep.subr.mxu0 %v316
      %1141 = vmatpush1.msra.mxu0 %v315
      %1142 = vmatprep.subr.mxu0 %v314
      %1143 = vmatpush1.msra.mxu0 %v313
      %1144 = vmatprep.subr.mxu0 %v312
      %1145 = vmatpush1.msra.mxu0 %v311
      %1146 = vmatprep.subr.mxu0 %v310
      %1147 = vmatpush1.msra.mxu0 %v309
      %1148 = vmatprep.subr.mxu0 %v308
      %1149 = vmatpush1.msra.mxu0 %v307
      %1150 = vmatprep.subr.mxu0 %v306
      %1151 = vmatpush1.msra.mxu0 %v305
      %1152 = vmatprep.subr.mxu0 %v304
      %1153 = vmatpush1.msra.mxu0 %v303
      %1154 = vmatprep.subr.mxu0 %v302
      %1155 = vmatpush1.msra.mxu0 %v301
      %1156 = vmatprep.subr.mxu0 %v364
      %1157 = vmatpush2.msra.mxu0 %v363
      %1158 = vmatprep.subr.mxu0 %v362
      %1159 = vmatpush2.msra.mxu0 %v361
      %1160 = vmatprep.subr.mxu0 %v360
      %1161 = vmatpush2.msra.mxu0 %v359
      %1162 = vmatprep.subr.mxu0 %v358
      %1163 = vmatpush2.msra.mxu0 %v357
      %1164 = vmatprep.subr.mxu0 %v356
      %1165 = vmatpush2.msra.mxu0 %v355
      %1166 = vmatprep.subr.mxu0 %v354
      %1167 = vmatpush2.msra.mxu0 %v353
      %1168 = vmatprep.subr.mxu0 %v352
      %1169 = vmatpush2.msra.mxu0 %v351
      %1170 = vmatprep.subr.mxu0 %v350
      %1171 = vmatpush2.msra.mxu0 %v349
      %1172 = vmatprep.subr.mxu0 %v348
      %1173 = vmatpush2.msra.mxu0 %v347
      %1174 = vmatprep.subr.mxu0 %v346
      %1175 = vmatpush2.msra.mxu0 %v345
      %1176 = vmatprep.subr.mxu0 %v344
      %1177 = vmatpush2.msra.mxu0 %v343
      %1178 = vmatprep.subr.mxu0 %v342
      %1179 = vmatpush2.msra.mxu0 %v341
      %1180 = vmatprep.subr.mxu0 %v340
      %1181 = vmatpush2.msra.mxu0 %v339
      %1182 = vmatprep.subr.mxu0 %v338
      %1183 = vmatpush2.msra.mxu0 %v337
      %1184 = vmatprep.subr.mxu0 %v336
      %1185 = vmatpush2.msra.mxu0 %v335
      %1186 = vmatprep.subr.mxu0 %v334
      %1187 = vmatpush2.msra.mxu0 %v333
      %1188 = vmatprep.mubr.f32.mxu0 %v1030
      %1189 = vmatmul.mubr.f32.gmra.mxu0 %v226
      %v1190 = vpop.f32.mrf.mxu0
      %v1191 = vadd.f32 %v1120, %v1190
      %v1192 = vpop.f32.mrf.mxu0
      %v1193 = vadd.f32 %v1122, %v1192
      %1194 = vdwg.mxu0
      %1195 = vmatprep.subr.mxu0 %v396
      %1196 = vmatpush1.msra.mxu0 %v395
      %1197 = vmatprep.subr.mxu0 %v394
      %1198 = vmatpush1.msra.mxu0 %v393
      %1199 = vmatprep.subr.mxu0 %v392
      %1200 = vmatpush1.msra.mxu0 %v391
      %1201 = vmatprep.subr.mxu0 %v390
      %1202 = vmatpush1.msra.mxu0 %v389
      %1203 = vmatprep.subr.mxu0 %v388
      %1204 = vmatpush1.msra.mxu0 %v387
      %1205 = vmatprep.subr.mxu0 %v386
      %1206 = vmatpush1.msra.mxu0 %v385
      %1207 = vmatprep.subr.mxu0 %v384
      %1208 = vmatpush1.msra.mxu0 %v383
      %1209 = vmatprep.subr.mxu0 %v382
      %1210 = vmatpush1.msra.mxu0 %v381
      %1211 = vmatprep.subr.mxu0 %v380
      %1212 = vmatpush1.msra.mxu0 %v379
      %1213 = vmatprep.subr.mxu0 %v378
      %1214 = vmatpush1.msra.mxu0 %v377
      %1215 = vmatprep.subr.mxu0 %v376
      %1216 = vmatpush1.msra.mxu0 %v375
      %1217 = vmatprep.subr.mxu0 %v374
      %1218 = vmatpush1.msra.mxu0 %v373
      %1219 = vmatprep.subr.mxu0 %v372
      %1220 = vmatpush1.msra.mxu0 %v371
      %1221 = vmatprep.subr.mxu0 %v370
      %1222 = vmatpush1.msra.mxu0 %v369
      %1223 = vmatprep.subr.mxu0 %v368
      %1224 = vmatpush1.msra.mxu0 %v367
      %1225 = vmatprep.subr.mxu0 %v366
      %1226 = vmatpush1.msra.mxu0 %v365
      %1227 = vmatprep.subr.mxu0 %v428
      %1228 = vmatpush2.msra.mxu0 %v427
      %1229 = vmatprep.subr.mxu0 %v426
      %1230 = vmatpush2.msra.mxu0 %v425
      %1231 = vmatprep.subr.mxu0 %v424
      %1232 = vmatpush2.msra.mxu0 %v423
      %1233 = vmatprep.subr.mxu0 %v422
      %1234 = vmatpush2.msra.mxu0 %v421
      %1235 = vmatprep.subr.mxu0 %v420
      %1236 = vmatpush2.msra.mxu0 %v419
      %1237 = vmatprep.subr.mxu0 %v418
      %1238 = vmatpush2.msra.mxu0 %v417
      %1239 = vmatprep.subr.mxu0 %v416
      %1240 = vmatpush2.msra.mxu0 %v415
      %1241 = vmatprep.subr.mxu0 %v414
      %1242 = vmatpush2.msra.mxu0 %v413
      %1243 = vmatprep.subr.mxu0 %v412
      %1244 = vmatpush2.msra.mxu0 %v411
      %1245 = vmatprep.subr.mxu0 %v410
      %1246 = vmatpush2.msra.mxu0 %v409
      %1247 = vmatprep.subr.mxu0 %v408
      %1248 = vmatpush2.msra.mxu0 %v407
      %1249 = vmatprep.subr.mxu0 %v406
      %1250 = vmatpush2.msra.mxu0 %v405
      %1251 = vmatprep.subr.mxu0 %v404
      %1252 = vmatpush2.msra.mxu0 %v403
      %1253 = vmatprep.subr.mxu0 %v402
      %1254 = vmatpush2.msra.mxu0 %v401
      %1255 = vmatprep.subr.mxu0 %v400
      %1256 = vmatpush2.msra.mxu0 %v399
      %1257 = vmatprep.subr.mxu0 %v398
      %1258 = vmatpush2.msra.mxu0 %v397
      %1259 = vmatprep.mubr.f32.mxu0 %v1031
      %1260 = vmatmul.mubr.f32.gmra.mxu0 %v227
      %v1261 = vpop.f32.mrf.mxu0
      %v1262 = vadd.f32 %v1191, %v1261
      %v1263 = vpop.f32.mrf.mxu0
      %v1264 = vadd.f32 %v1193, %v1263
      %1265 = vdwg.mxu0
      %1266 = vmatprep.subr.mxu0 %v460
      %1267 = vmatpush1.msra.mxu0 %v459
      %1268 = vmatprep.subr.mxu0 %v458
      %1269 = vmatpush1.msra.mxu0 %v457
      %1270 = vmatprep.subr.mxu0 %v456
      %1271 = vmatpush1.msra.mxu0 %v455
      %1272 = vmatprep.subr.mxu0 %v454
      %1273 = vmatpush1.msra.mxu0 %v453
      %1274 = vmatprep.subr.mxu0 %v452
      %1275 = vmatpush1.msra.mxu0 %v451
      %1276 = vmatprep.subr.mxu0 %v450
      %1277 = vmatpush1.msra.mxu0 %v449
      %1278 = vmatprep.subr.mxu0 %v448
      %1279 = vmatpush1.msra.mxu0 %v447
      %1280 = vmatprep.subr.mxu0 %v446
      %1281 = vmatpush1.msra.mxu0 %v445
      %1282 = vmatprep.subr.mxu0 %v444
      %1283 = vmatpush1.msra.mxu0 %v443
      %1284 = vmatprep.subr.mxu0 %v442
      %1285 = vmatpush1.msra.mxu0 %v441
      %1286 = vmatprep.subr.mxu0 %v440
      %1287 = vmatpush1.msra.mxu0 %v439
      %1288 = vmatprep.subr.mxu0 %v438
      %1289 = vmatpush1.msra.mxu0 %v437
      %1290 = vmatprep.subr.mxu0 %v436
      %1291 = vmatpush1.msra.mxu0 %v435
      %1292 = vmatprep.subr.mxu0 %v434
      %1293 = vmatpush1.msra.mxu0 %v433
      %1294 = vmatprep.subr.mxu0 %v432
      %1295 = vmatpush1.msra.mxu0 %v431
      %1296 = vmatprep.subr.mxu0 %v430
      %1297 = vmatpush1.msra.mxu0 %v429
      %1298 = vmatprep.subr.mxu0 %v492
      %1299 = vmatpush2.msra.mxu0 %v491
      %1300 = vmatprep.subr.mxu0 %v490
      %1301 = vmatpush2.msra.mxu0 %v489
      %1302 = vmatprep.subr.mxu0 %v488
      %1303 = vmatpush2.msra.mxu0 %v487
      %1304 = vmatprep.subr.mxu0 %v486
      %1305 = vmatpush2.msra.mxu0 %v485
      %1306 = vmatprep.subr.mxu0 %v484
      %1307 = vmatpush2.msra.mxu0 %v483
      %1308 = vmatprep.subr.mxu0 %v482
      %1309 = vmatpush2.msra.mxu0 %v481
      %1310 = vmatprep.subr.mxu0 %v480
      %1311 = vmatpush2.msra.mxu0 %v479
      %1312 = vmatprep.subr.mxu0 %v478
      %1313 = vmatpush2.msra.mxu0 %v477
      %1314 = vmatprep.subr.mxu0 %v476
      %1315 = vmatpush2.msra.mxu0 %v475
      %1316 = vmatprep.subr.mxu0 %v474
      %1317 = vmatpush2.msra.mxu0 %v473
      %1318 = vmatprep.subr.mxu0 %v472
      %1319 = vmatpush2.msra.mxu0 %v471
      %1320 = vmatprep.subr.mxu0 %v470
      %1321 = vmatpush2.msra.mxu0 %v469
      %1322 = vmatprep.subr.mxu0 %v468
      %1323 = vmatpush2.msra.mxu0 %v467
      %1324 = vmatprep.subr.mxu0 %v466
      %1325 = vmatpush2.msra.mxu0 %v465
      %1326 = vmatprep.subr.mxu0 %v464
      %1327 = vmatpush2.msra.mxu0 %v463
      %1328 = vmatprep.subr.mxu0 %v462
      %1329 = vmatpush2.msra.mxu0 %v461
      %1330 = vmatprep.mubr.f32.mxu0 %v1032
      %1331 = vmatmul.mubr.f32.gmra.mxu0 %v228
      %v1332 = vpop.f32.mrf.mxu0
      %v1333 = vadd.f32 %v1262, %v1332
      %v1334 = vpop.f32.mrf.mxu0
      %v1335 = vadd.f32 %v1264, %v1334
      %1336 = vdwg.mxu0
      %1337 = vmatprep.subr.mxu0 %v524
      %1338 = vmatpush1.msra.mxu0 %v523
      %1339 = vmatprep.subr.mxu0 %v522
      %1340 = vmatpush1.msra.mxu0 %v521
      %1341 = vmatprep.subr.mxu0 %v520
      %1342 = vmatpush1.msra.mxu0 %v519
      %1343 = vmatprep.subr.mxu0 %v518
      %1344 = vmatpush1.msra.mxu0 %v517
      %1345 = vmatprep.subr.mxu0 %v516
      %1346 = vmatpush1.msra.mxu0 %v515
      %1347 = vmatprep.subr.mxu0 %v514
      %1348 = vmatpush1.msra.mxu0 %v513
      %1349 = vmatprep.subr.mxu0 %v512
      %1350 = vmatpush1.msra.mxu0 %v511
      %1351 = vmatprep.subr.mxu0 %v510
      %1352 = vmatpush1.msra.mxu0 %v509
      %1353 = vmatprep.subr.mxu0 %v508
      %1354 = vmatpush1.msra.mxu0 %v507
      %1355 = vmatprep.subr.mxu0 %v506
      %1356 = vmatpush1.msra.mxu0 %v505
      %1357 = vmatprep.subr.mxu0 %v504
      %1358 = vmatpush1.msra.mxu0 %v503
      %1359 = vmatprep.subr.mxu0 %v502
      %1360 = vmatpush1.msra.mxu0 %v501
      %1361 = vmatprep.subr.mxu0 %v500
      %1362 = vmatpush1.msra.mxu0 %v499
      %1363 = vmatprep.subr.mxu0 %v498
      %1364 = vmatpush1.msra.mxu0 %v497
      %1365 = vmatprep.subr.mxu0 %v496
      %1366 = vmatpush1.msra.mxu0 %v495
      %1367 = vmatprep.subr.mxu0 %v494
      %1368 = vmatpush1.msra.mxu0 %v493
      %1369 = vmatprep.subr.mxu0 %v556
      %1370 = vmatpush2.msra.mxu0 %v555
      %1371 = vmatprep.subr.mxu0 %v554
      %1372 = vmatpush2.msra.mxu0 %v553
      %1373 = vmatprep.subr.mxu0 %v552
      %1374 = vmatpush2.msra.mxu0 %v551
      %1375 = vmatprep.subr.mxu0 %v550
      %1376 = vmatpush2.msra.mxu0 %v549
      %1377 = vmatprep.subr.mxu0 %v548
      %1378 = vmatpush2.msra.mxu0 %v547
      %1379 = vmatprep.subr.mxu0 %v546
      %1380 = vmatpush2.msra.mxu0 %v545
      %1381 = vmatprep.subr.mxu0 %v544
      %1382 = vmatpush2.msra.mxu0 %v543
      %1383 = vmatprep.subr.mxu0 %v542
      %1384 = vmatpush2.msra.mxu0 %v541
      %1385 = vmatprep.subr.mxu0 %v540
      %1386 = vmatpush2.msra.mxu0 %v539
      %1387 = vmatprep.subr.mxu0 %v538
      %1388 = vmatpush2.msra.mxu0 %v537
      %1389 = vmatprep.subr.mxu0 %v536
      %1390 = vmatpush2.msra.mxu0 %v535
      %1391 = vmatprep.subr.mxu0 %v534
      %1392 = vmatpush2.msra.mxu0 %v533
      %1393 = vmatprep.subr.mxu0 %v532
      %1394 = vmatpush2.msra.mxu0 %v531
      %1395 = vmatprep.subr.mxu0 %v530
      %1396 = vmatpush2.msra.mxu0 %v529
      %1397 = vmatprep.subr.mxu0 %v528
      %1398 = vmatpush2.msra.mxu0 %v527
      %1399 = vmatprep.subr.mxu0 %v526
      %1400 = vmatpush2.msra.mxu0 %v525
      %1401 = vmatprep.mubr.f32.mxu0 %v1033
      %1402 = vmatmul.mubr.f32.gmra.mxu0 %v229
      %v1403 = vpop.f32.mrf.mxu0
      %v1404 = vadd.f32 %v1333, %v1403
      %v1405 = vpop.f32.mrf.mxu0
      %v1406 = vadd.f32 %v1335, %v1405
      %1407 = vdwg.mxu0
      %1408 = vmatprep.subr.mxu0 %v588
      %1409 = vmatpush1.msra.mxu0 %v587
      %1410 = vmatprep.subr.mxu0 %v586
      %1411 = vmatpush1.msra.mxu0 %v585
      %1412 = vmatprep.subr.mxu0 %v584
      %1413 = vmatpush1.msra.mxu0 %v583
      %1414 = vmatprep.subr.mxu0 %v582
      %1415 = vmatpush1.msra.mxu0 %v581
      %1416 = vmatprep.subr.mxu0 %v580
      %1417 = vmatpush1.msra.mxu0 %v579
      %1418 = vmatprep.subr.mxu0 %v578
      %1419 = vmatpush1.msra.mxu0 %v577
      %1420 = vmatprep.subr.mxu0 %v576
      %1421 = vmatpush1.msra.mxu0 %v575
      %1422 = vmatprep.subr.mxu0 %v574
      %1423 = vmatpush1.msra.mxu0 %v573
      %1424 = vmatprep.subr.mxu0 %v572
      %1425 = vmatpush1.msra.mxu0 %v571
      %1426 = vmatprep.subr.mxu0 %v570
      %1427 = vmatpush1.msra.mxu0 %v569
      %1428 = vmatprep.subr.mxu0 %v568
      %1429 = vmatpush1.msra.mxu0 %v567
      %1430 = vmatprep.subr.mxu0 %v566
      %1431 = vmatpush1.msra.mxu0 %v565
      %1432 = vmatprep.subr.mxu0 %v564
      %1433 = vmatpush1.msra.mxu0 %v563
      %1434 = vmatprep.subr.mxu0 %v562
      %1435 = vmatpush1.msra.mxu0 %v561
      %1436 = vmatprep.subr.mxu0 %v560
      %1437 = vmatpush1.msra.mxu0 %v559
      %1438 = vmatprep.subr.mxu0 %v558
      %1439 = vmatpush1.msra.mxu0 %v557
      %1440 = vmatprep.subr.mxu0 %v620
      %1441 = vmatpush2.msra.mxu0 %v619
      %1442 = vmatprep.subr.mxu0 %v618
      %1443 = vmatpush2.msra.mxu0 %v617
      %1444 = vmatprep.subr.mxu0 %v616
      %1445 = vmatpush2.msra.mxu0 %v615
      %1446 = vmatprep.subr.mxu0 %v614
      %1447 = vmatpush2.msra.mxu0 %v613
      %1448 = vmatprep.subr.mxu0 %v612
      %1449 = vmatpush2.msra.mxu0 %v611
      %1450 = vmatprep.subr.mxu0 %v610
      %1451 = vmatpush2.msra.mxu0 %v609
      %1452 = vmatprep.subr.mxu0 %v608
      %1453 = vmatpush2.msra.mxu0 %v607
      %1454 = vmatprep.subr.mxu0 %v606
      %1455 = vmatpush2.msra.mxu0 %v605
      %1456 = vmatprep.subr.mxu0 %v604
      %1457 = vmatpush2.msra.mxu0 %v603
      %1458 = vmatprep.subr.mxu0 %v602
      %1459 = vmatpush2.msra.mxu0 %v601
      %1460 = vmatprep.subr.mxu0 %v600
      %1461 = vmatpush2.msra.mxu0 %v599
      %1462 = vmatprep.subr.mxu0 %v598
      %1463 = vmatpush2.msra.mxu0 %v597
      %1464 = vmatprep.subr.mxu0 %v596
      %1465 = vmatpush2.msra.mxu0 %v595
      %1466 = vmatprep.subr.mxu0 %v594
      %1467 = vmatpush2.msra.mxu0 %v593
      %1468 = vmatprep.subr.mxu0 %v592
      %1469 = vmatpush2.msra.mxu0 %v591
      %1470 = vmatprep.subr.mxu0 %v590
      %1471 = vmatpush2.msra.mxu0 %v589
      %1472 = vmatprep.mubr.f32.mxu0 %v1034
      %1473 = vmatmul.mubr.f32.gmra.mxu0 %v230
      %v1474 = vpop.f32.mrf.mxu0
      %v1475 = vadd.f32 %v1404, %v1474
      %v1476 = vpop.f32.mrf.mxu0
      %v1477 = vadd.f32 %v1406, %v1476
      %1478 = vdwg.mxu0
      %1479 = vmatprep.subr.mxu0 %v652
      %1480 = vmatpush1.msra.mxu0 %v651
      %1481 = vmatprep.subr.mxu0 %v650
      %1482 = vmatpush1.msra.mxu0 %v649
      %1483 = vmatprep.subr.mxu0 %v648
      %1484 = vmatpush1.msra.mxu0 %v647
      %1485 = vmatprep.subr.mxu0 %v646
      %1486 = vmatpush1.msra.mxu0 %v645
      %1487 = vmatprep.subr.mxu0 %v644
      %1488 = vmatpush1.msra.mxu0 %v643
      %1489 = vmatprep.subr.mxu0 %v642
      %1490 = vmatpush1.msra.mxu0 %v641
      %1491 = vmatprep.subr.mxu0 %v640
      %1492 = vmatpush1.msra.mxu0 %v639
      %1493 = vmatprep.subr.mxu0 %v638
      %1494 = vmatpush1.msra.mxu0 %v637
      %1495 = vmatprep.subr.mxu0 %v636
      %1496 = vmatpush1.msra.mxu0 %v635
      %1497 = vmatprep.subr.mxu0 %v634
      %1498 = vmatpush1.msra.mxu0 %v633
      %1499 = vmatprep.subr.mxu0 %v632
      %1500 = vmatpush1.msra.mxu0 %v631
      %1501 = vmatprep.subr.mxu0 %v630
      %1502 = vmatpush1.msra.mxu0 %v629
      %1503 = vmatprep.subr.mxu0 %v628
      %1504 = vmatpush1.msra.mxu0 %v627
      %1505 = vmatprep.subr.mxu0 %v626
      %1506 = vmatpush1.msra.mxu0 %v625
      %1507 = vmatprep.subr.mxu0 %v624
      %1508 = vmatpush1.msra.mxu0 %v623
      %1509 = vmatprep.subr.mxu0 %v622
      %1510 = vmatpush1.msra.mxu0 %v621
      %1511 = vmatprep.subr.mxu0 %v684
      %1512 = vmatpush2.msra.mxu0 %v683
      %1513 = vmatprep.subr.mxu0 %v682
      %1514 = vmatpush2.msra.mxu0 %v681
      %1515 = vmatprep.subr.mxu0 %v680
      %1516 = vmatpush2.msra.mxu0 %v679
      %1517 = vmatprep.subr.mxu0 %v678
      %1518 = vmatpush2.msra.mxu0 %v677
      %1519 = vmatprep.subr.mxu0 %v676
      %1520 = vmatpush2.msra.mxu0 %v675
      %1521 = vmatprep.subr.mxu0 %v674
      %1522 = vmatpush2.msra.mxu0 %v673
      %1523 = vmatprep.subr.mxu0 %v672
      %1524 = vmatpush2.msra.mxu0 %v671
      %1525 = vmatprep.subr.mxu0 %v670
      %1526 = vmatpush2.msra.mxu0 %v669
      %1527 = vmatprep.subr.mxu0 %v668
      %1528 = vmatpush2.msra.mxu0 %v667
      %1529 = vmatprep.subr.mxu0 %v666
      %1530 = vmatpush2.msra.mxu0 %v665
      %1531 = vmatprep.subr.mxu0 %v664
      %1532 = vmatpush2.msra.mxu0 %v663
      %1533 = vmatprep.subr.mxu0 %v662
      %1534 = vmatpush2.msra.mxu0 %v661
      %1535 = vmatprep.subr.mxu0 %v660
      %1536 = vmatpush2.msra.mxu0 %v659
      %1537 = vmatprep.subr.mxu0 %v658
      %1538 = vmatpush2.msra.mxu0 %v657
      %1539 = vmatprep.subr.mxu0 %v656
      %1540 = vmatpush2.msra.mxu0 %v655
      %1541 = vmatprep.subr.mxu0 %v654
      %1542 = vmatpush2.msra.mxu0 %v653
      %1543 = vmatprep.mubr.f32.mxu0 %v1035
      %1544 = vmatmul.mubr.f32.gmra.mxu0 %v231
      %v1545 = vpop.f32.mrf.mxu0
      %v1546 = vadd.f32 %v1475, %v1545
      %v1547 = vpop.f32.mrf.mxu0
      %v1548 = vadd.f32 %v1477, %v1547
      %1549 = vdwg.mxu0
      %1550 = vmatprep.subr.mxu0 %v716
      %1551 = vmatpush1.msra.mxu0 %v715
      %1552 = vmatprep.subr.mxu0 %v714
      %1553 = vmatpush1.msra.mxu0 %v713
      %1554 = vmatprep.subr.mxu0 %v712
      %1555 = vmatpush1.msra.mxu0 %v711
      %1556 = vmatprep.subr.mxu0 %v710
      %1557 = vmatpush1.msra.mxu0 %v709
      %1558 = vmatprep.subr.mxu0 %v708
      %1559 = vmatpush1.msra.mxu0 %v707
      %1560 = vmatprep.subr.mxu0 %v706
      %1561 = vmatpush1.msra.mxu0 %v705
      %1562 = vmatprep.subr.mxu0 %v704
      %1563 = vmatpush1.msra.mxu0 %v703
      %1564 = vmatprep.subr.mxu0 %v702
      %1565 = vmatpush1.msra.mxu0 %v701
      %1566 = vmatprep.subr.mxu0 %v700
      %1567 = vmatpush1.msra.mxu0 %v699
      %1568 = vmatprep.subr.mxu0 %v698
      %1569 = vmatpush1.msra.mxu0 %v697
      %1570 = vmatprep.subr.mxu0 %v696
      %1571 = vmatpush1.msra.mxu0 %v695
      %1572 = vmatprep.subr.mxu0 %v694
      %1573 = vmatpush1.msra.mxu0 %v693
      %1574 = vmatprep.subr.mxu0 %v692
      %1575 = vmatpush1.msra.mxu0 %v691
      %1576 = vmatprep.subr.mxu0 %v690
      %1577 = vmatpush1.msra.mxu0 %v689
      %1578 = vmatprep.subr.mxu0 %v688
      %1579 = vmatpush1.msra.mxu0 %v687
      %1580 = vmatprep.subr.mxu0 %v686
      %1581 = vmatpush1.msra.mxu0 %v685
      %1582 = vmatprep.subr.mxu0 %v748
      %1583 = vmatpush2.msra.mxu0 %v747
      %1584 = vmatprep.subr.mxu0 %v746
      %1585 = vmatpush2.msra.mxu0 %v745
      %1586 = vmatprep.subr.mxu0 %v744
      %1587 = vmatpush2.msra.mxu0 %v743
      %1588 = vmatprep.subr.mxu0 %v742
      %1589 = vmatpush2.msra.mxu0 %v741
      %1590 = vmatprep.subr.mxu0 %v740
      %1591 = vmatpush2.msra.mxu0 %v739
      %1592 = vmatprep.subr.mxu0 %v738
      %1593 = vmatpush2.msra.mxu0 %v737
      %1594 = vmatprep.subr.mxu0 %v736
      %1595 = vmatpush2.msra.mxu0 %v735
      %1596 = vmatprep.subr.mxu0 %v734
      %1597 = vmatpush2.msra.mxu0 %v733
      %1598 = vmatprep.subr.mxu0 %v732
      %1599 = vmatpush2.msra.mxu0 %v731
      %1600 = vmatprep.subr.mxu0 %v730
      %1601 = vmatpush2.msra.mxu0 %v729
      %1602 = vmatprep.subr.mxu0 %v728
      %1603 = vmatpush2.msra.mxu0 %v727
      %1604 = vmatprep.subr.mxu0 %v726
      %1605 = vmatpush2.msra.mxu0 %v725
      %1606 = vmatprep.subr.mxu0 %v724
      %1607 = vmatpush2.msra.mxu0 %v723
      %1608 = vmatprep.subr.mxu0 %v722
      %1609 = vmatpush2.msra.mxu0 %v721
      %1610 = vmatprep.subr.mxu0 %v720
      %1611 = vmatpush2.msra.mxu0 %v719
      %1612 = vmatprep.subr.mxu0 %v718
      %1613 = vmatpush2.msra.mxu0 %v717
      %1614 = vmatprep.mubr.f32.mxu0 %v1036
      %1615 = vmatmul.mubr.f32.gmra.mxu0 %v232
      %v1616 = vpop.f32.mrf.mxu0
      %v1617 = vadd.f32 %v1546, %v1616
      %v1618 = vpop.f32.mrf.mxu0
      %v1619 = vadd.f32 %v1548, %v1618
      %1620 = vdwg.mxu0
      %1621 = vmatprep.subr.mxu0 %v780
      %1622 = vmatpush1.msra.mxu0 %v779
      %1623 = vmatprep.subr.mxu0 %v778
      %1624 = vmatpush1.msra.mxu0 %v777
      %1625 = vmatprep.subr.mxu0 %v776
      %1626 = vmatpush1.msra.mxu0 %v775
      %1627 = vmatprep.subr.mxu0 %v774
      %1628 = vmatpush1.msra.mxu0 %v773
      %1629 = vmatprep.subr.mxu0 %v772
      %1630 = vmatpush1.msra.mxu0 %v771
      %1631 = vmatprep.subr.mxu0 %v770
      %1632 = vmatpush1.msra.mxu0 %v769
      %1633 = vmatprep.subr.mxu0 %v768
      %1634 = vmatpush1.msra.mxu0 %v767
      %1635 = vmatprep.subr.mxu0 %v766
      %1636 = vmatpush1.msra.mxu0 %v765
      %1637 = vmatprep.subr.mxu0 %v764
      %1638 = vmatpush1.msra.mxu0 %v763
      %1639 = vmatprep.subr.mxu0 %v762
      %1640 = vmatpush1.msra.mxu0 %v761
      %1641 = vmatprep.subr.mxu0 %v760
      %1642 = vmatpush1.msra.mxu0 %v759
      %1643 = vmatprep.subr.mxu0 %v758
      %1644 = vmatpush1.msra.mxu0 %v757
      %1645 = vmatprep.subr.mxu0 %v756
      %1646 = vmatpush1.msra.mxu0 %v755
      %1647 = vmatprep.subr.mxu0 %v754
      %1648 = vmatpush1.msra.mxu0 %v753
      %1649 = vmatprep.subr.mxu0 %v752
      %1650 = vmatpush1.msra.mxu0 %v751
      %1651 = vmatprep.subr.mxu0 %v750
      %1652 = vmatpush1.msra.mxu0 %v749
      %1653 = vmatprep.subr.mxu0 %v812
      %1654 = vmatpush2.msra.mxu0 %v811
      %1655 = vmatprep.subr.mxu0 %v810
      %1656 = vmatpush2.msra.mxu0 %v809
      %1657 = vmatprep.subr.mxu0 %v808
      %1658 = vmatpush2.msra.mxu0 %v807
      %1659 = vmatprep.subr.mxu0 %v806
      %1660 = vmatpush2.msra.mxu0 %v805
      %1661 = vmatprep.subr.mxu0 %v804
      %1662 = vmatpush2.msra.mxu0 %v803
      %1663 = vmatprep.subr.mxu0 %v802
      %1664 = vmatpush2.msra.mxu0 %v801
      %1665 = vmatprep.subr.mxu0 %v800
      %1666 = vmatpush2.msra.mxu0 %v799
      %1667 = vmatprep.subr.mxu0 %v798
      %1668 = vmatpush2.msra.mxu0 %v797
      %1669 = vmatprep.subr.mxu0 %v796
      %1670 = vmatpush2.msra.mxu0 %v795
      %1671 = vmatprep.subr.mxu0 %v794
      %1672 = vmatpush2.msra.mxu0 %v793
      %1673 = vmatprep.subr.mxu0 %v792
      %1674 = vmatpush2.msra.mxu0 %v791
      %1675 = vmatprep.subr.mxu0 %v790
      %1676 = vmatpush2.msra.mxu0 %v789
      %1677 = vmatprep.subr.mxu0 %v788
      %1678 = vmatpush2.msra.mxu0 %v787
      %1679 = vmatprep.subr.mxu0 %v786
      %1680 = vmatpush2.msra.mxu0 %v785
      %1681 = vmatprep.subr.mxu0 %v784
      %1682 = vmatpush2.msra.mxu0 %v783
      %1683 = vmatprep.subr.mxu0 %v782
      %1684 = vmatpush2.msra.mxu0 %v781
      %1685 = vmatprep.mubr.f32.mxu0 %v1037
      %1686 = vmatmul.mubr.f32.gmra.mxu0 %v233
      %v1687 = vpop.f32.mrf.mxu0
      %v1688 = vadd.f32 %v1617, %v1687
      %v1689 = vpop.f32.mrf.mxu0
      %v1690 = vadd.f32 %v1619, %v1689
      %1691 = vdwg.mxu0
      %1692 = vmatprep.subr.mxu0 %v844
      %1693 = vmatpush1.msra.mxu0 %v843
      %1694 = vmatprep.subr.mxu0 %v842
      %1695 = vmatpush1.msra.mxu0 %v841
      %1696 = vmatprep.subr.mxu0 %v840
      %1697 = vmatpush1.msra.mxu0 %v839
      %1698 = vmatprep.subr.mxu0 %v838
      %1699 = vmatpush1.msra.mxu0 %v837
      %1700 = vmatprep.subr.mxu0 %v836
      %1701 = vmatpush1.msra.mxu0 %v835
      %1702 = vmatprep.subr.mxu0 %v834
      %1703 = vmatpush1.msra.mxu0 %v833
      %1704 = vmatprep.subr.mxu0 %v832
      %1705 = vmatpush1.msra.mxu0 %v831
      %1706 = vmatprep.subr.mxu0 %v830
      %1707 = vmatpush1.msra.mxu0 %v829
      %1708 = vmatprep.subr.mxu0 %v828
      %1709 = vmatpush1.msra.mxu0 %v827
      %1710 = vmatprep.subr.mxu0 %v826
      %1711 = vmatpush1.msra.mxu0 %v825
      %1712 = vmatprep.subr.mxu0 %v824
      %1713 = vmatpush1.msra.mxu0 %v823
      %1714 = vmatprep.subr.mxu0 %v822
      %1715 = vmatpush1.msra.mxu0 %v821
      %1716 = vmatprep.subr.mxu0 %v820
      %1717 = vmatpush1.msra.mxu0 %v819
      %1718 = vmatprep.subr.mxu0 %v818
      %1719 = vmatpush1.msra.mxu0 %v817
      %1720 = vmatprep.subr.mxu0 %v816
      %1721 = vmatpush1.msra.mxu0 %v815
      %1722 = vmatprep.subr.mxu0 %v814
      %1723 = vmatpush1.msra.mxu0 %v813
      %1724 = vmatprep.subr.mxu0 %v876
      %1725 = vmatpush2.msra.mxu0 %v875
      %1726 = vmatprep.subr.mxu0 %v874
      %1727 = vmatpush2.msra.mxu0 %v873
      %1728 = vmatprep.subr.mxu0 %v872
      %1729 = vmatpush2.msra.mxu0 %v871
      %1730 = vmatprep.subr.mxu0 %v870
      %1731 = vmatpush2.msra.mxu0 %v869
      %1732 = vmatprep.subr.mxu0 %v868
      %1733 = vmatpush2.msra.mxu0 %v867
      %1734 = vmatprep.subr.mxu0 %v866
      %1735 = vmatpush2.msra.mxu0 %v865
      %1736 = vmatprep.subr.mxu0 %v864
      %1737 = vmatpush2.msra.mxu0 %v863
      %1738 = vmatprep.subr.mxu0 %v862
      %1739 = vmatpush2.msra.mxu0 %v861
      %1740 = vmatprep.subr.mxu0 %v860
      %1741 = vmatpush2.msra.mxu0 %v859
      %1742 = vmatprep.subr.mxu0 %v858
      %1743 = vmatpush2.msra.mxu0 %v857
      %1744 = vmatprep.subr.mxu0 %v856
      %1745 = vmatpush2.msra.mxu0 %v855
      %1746 = vmatprep.subr.mxu0 %v854
      %1747 = vmatpush2.msra.mxu0 %v853
      %1748 = vmatprep.subr.mxu0 %v852
      %1749 = vmatpush2.msra.mxu0 %v851
      %1750 = vmatprep.subr.mxu0 %v850
      %1751 = vmatpush2.msra.mxu0 %v849
      %1752 = vmatprep.subr.mxu0 %v848
      %1753 = vmatpush2.msra.mxu0 %v847
      %1754 = vmatprep.subr.mxu0 %v846
      %1755 = vmatpush2.msra.mxu0 %v845
      %1756 = vmatprep.mubr.f32.mxu0 %v1038
      %1757 = vmatmul.mubr.f32.gmra.mxu0 %v234
      %v1758 = vpop.f32.mrf.mxu0
      %v1759 = vadd.f32 %v1688, %v1758
      %v1760 = vpop.f32.mrf.mxu0
      %v1761 = vadd.f32 %v1690, %v1760
      %1762 = vdwg.mxu0
      %1763 = vmatprep.subr.mxu0 %v908
      %1764 = vmatpush1.msra.mxu0 %v907
      %1765 = vmatprep.subr.mxu0 %v906
      %1766 = vmatpush1.msra.mxu0 %v905
      %1767 = vmatprep.subr.mxu0 %v904
      %1768 = vmatpush1.msra.mxu0 %v903
      %1769 = vmatprep.subr.mxu0 %v902
      %1770 = vmatpush1.msra.mxu0 %v901
      %1771 = vmatprep.subr.mxu0 %v900
      %1772 = vmatpush1.msra.mxu0 %v899
      %1773 = vmatprep.subr.mxu0 %v898
      %1774 = vmatpush1.msra.mxu0 %v897
      %1775 = vmatprep.subr.mxu0 %v896
      %1776 = vmatpush1.msra.mxu0 %v895
      %1777 = vmatprep.subr.mxu0 %v894
      %1778 = vmatpush1.msra.mxu0 %v893
      %1779 = vmatprep.subr.mxu0 %v892
      %1780 = vmatpush1.msra.mxu0 %v891
      %1781 = vmatprep.subr.mxu0 %v890
      %1782 = vmatpush1.msra.mxu0 %v889
      %1783 = vmatprep.subr.mxu0 %v888
      %1784 = vmatpush1.msra.mxu0 %v887
      %1785 = vmatprep.subr.mxu0 %v886
      %1786 = vmatpush1.msra.mxu0 %v885
      %1787 = vmatprep.subr.mxu0 %v884
      %1788 = vmatpush1.msra.mxu0 %v883
      %1789 = vmatprep.subr.mxu0 %v882
      %1790 = vmatpush1.msra.mxu0 %v881
      %1791 = vmatprep.subr.mxu0 %v880
      %1792 = vmatpush1.msra.mxu0 %v879
      %1793 = vmatprep.subr.mxu0 %v878
      %1794 = vmatpush1.msra.mxu0 %v877
      %1795 = vmatprep.subr.mxu0 %v940
      %1796 = vmatpush2.msra.mxu0 %v939
      %1797 = vmatprep.subr.mxu0 %v938
      %1798 = vmatpush2.msra.mxu0 %v937
      %1799 = vmatprep.subr.mxu0 %v936
      %1800 = vmatpush2.msra.mxu0 %v935
      %1801 = vmatprep.subr.mxu0 %v934
      %1802 = vmatpush2.msra.mxu0 %v933
      %1803 = vmatprep.subr.mxu0 %v932
      %1804 = vmatpush2.msra.mxu0 %v931
      %1805 = vmatprep.subr.mxu0 %v930
      %1806 = vmatpush2.msra.mxu0 %v929
      %1807 = vmatprep.subr.mxu0 %v928
      %1808 = vmatpush2.msra.mxu0 %v927
      %1809 = vmatprep.subr.mxu0 %v926
      %1810 = vmatpush2.msra.mxu0 %v925
      %1811 = vmatprep.subr.mxu0 %v924
      %1812 = vmatpush2.msra.mxu0 %v923
      %1813 = vmatprep.subr.mxu0 %v922
      %1814 = vmatpush2.msra.mxu0 %v921
      %1815 = vmatprep.subr.mxu0 %v920
      %1816 = vmatpush2.msra.mxu0 %v919
      %1817 = vmatprep.subr.mxu0 %v918
      %1818 = vmatpush2.msra.mxu0 %v917
      %1819 = vmatprep.subr.mxu0 %v916
      %1820 = vmatpush2.msra.mxu0 %v915
      %1821 = vmatprep.subr.mxu0 %v914
      %1822 = vmatpush2.msra.mxu0 %v913
      %1823 = vmatprep.subr.mxu0 %v912
      %1824 = vmatpush2.msra.mxu0 %v911
      %1825 = vmatprep.subr.mxu0 %v910
      %1826 = vmatpush2.msra.mxu0 %v909
      %1827 = vmatprep.mubr.f32.mxu0 %v1039
      %1828 = vmatmul.mubr.f32.gmra.mxu0 %v235
      %v1829 = vpop.f32.mrf.mxu0
      %v1830 = vadd.f32 %v1759, %v1829
      %v1831 = vpop.f32.mrf.mxu0
      %v1832 = vadd.f32 %v1761, %v1831
      %1833 = vdwg.mxu0
      %1834 = vmatprep.subr.mxu0 %v972
      %1835 = vmatpush1.msra.mxu0 %v971
      %1836 = vmatprep.subr.mxu0 %v970
      %1837 = vmatpush1.msra.mxu0 %v969
      %1838 = vmatprep.subr.mxu0 %v968
      %1839 = vmatpush1.msra.mxu0 %v967
      %1840 = vmatprep.subr.mxu0 %v966
      %1841 = vmatpush1.msra.mxu0 %v965
      %1842 = vmatprep.subr.mxu0 %v964
      %1843 = vmatpush1.msra.mxu0 %v963
      %1844 = vmatprep.subr.mxu0 %v962
      %1845 = vmatpush1.msra.mxu0 %v961
      %1846 = vmatprep.subr.mxu0 %v960
      %1847 = vmatpush1.msra.mxu0 %v959
      %1848 = vmatprep.subr.mxu0 %v958
      %1849 = vmatpush1.msra.mxu0 %v957
      %1850 = vmatprep.subr.mxu0 %v956
      %1851 = vmatpush1.msra.mxu0 %v955
      %1852 = vmatprep.subr.mxu0 %v954
      %1853 = vmatpush1.msra.mxu0 %v953
      %1854 = vmatprep.subr.mxu0 %v952
      %1855 = vmatpush1.msra.mxu0 %v951
      %1856 = vmatprep.subr.mxu0 %v950
      %1857 = vmatpush1.msra.mxu0 %v949
      %1858 = vmatprep.subr.mxu0 %v948
      %1859 = vmatpush1.msra.mxu0 %v947
      %1860 = vmatprep.subr.mxu0 %v946
      %1861 = vmatpush1.msra.mxu0 %v945
      %1862 = vmatprep.subr.mxu0 %v944
      %1863 = vmatpush1.msra.mxu0 %v943
      %1864 = vmatprep.subr.mxu0 %v942
      %1865 = vmatpush1.msra.mxu0 %v941
      %1866 = vmatprep.subr.mxu0 %v1004
      %1867 = vmatpush2.msra.mxu0 %v1003
      %1868 = vmatprep.subr.mxu0 %v1002
      %1869 = vmatpush2.msra.mxu0 %v1001
      %1870 = vmatprep.subr.mxu0 %v1000
      %1871 = vmatpush2.msra.mxu0 %v999
      %1872 = vmatprep.subr.mxu0 %v998
      %1873 = vmatpush2.msra.mxu0 %v997
      %1874 = vmatprep.subr.mxu0 %v996
      %1875 = vmatpush2.msra.mxu0 %v995
      %1876 = vmatprep.subr.mxu0 %v994
      %1877 = vmatpush2.msra.mxu0 %v993
      %1878 = vmatprep.subr.mxu0 %v992
      %1879 = vmatpush2.msra.mxu0 %v991
      %1880 = vmatprep.subr.mxu0 %v990
      %1881 = vmatpush2.msra.mxu0 %v989
      %1882 = vmatprep.subr.mxu0 %v988
      %1883 = vmatpush2.msra.mxu0 %v987
      %1884 = vmatprep.subr.mxu0 %v986
      %1885 = vmatpush2.msra.mxu0 %v985
      %1886 = vmatprep.subr.mxu0 %v984
      %1887 = vmatpush2.msra.mxu0 %v983
      %1888 = vmatprep.subr.mxu0 %v982
      %1889 = vmatpush2.msra.mxu0 %v981
      %1890 = vmatprep.subr.mxu0 %v980
      %1891 = vmatpush2.msra.mxu0 %v979
      %1892 = vmatprep.subr.mxu0 %v978
      %1893 = vmatpush2.msra.mxu0 %v977
      %1894 = vmatprep.subr.mxu0 %v976
      %1895 = vmatpush2.msra.mxu0 %v975
      %1896 = vmatprep.subr.mxu0 %v974
      %1897 = vmatpush2.msra.mxu0 %v973
      %1898 = vmatprep.mubr.f32.mxu0 %v1040
      %1899 = vmatmul.mubr.f32.gmra.mxu0 %v236
      %v1900 = vpop.f32.mrf.mxu0
      %v1901 = vadd.f32 %v1830, %v1900
      %v1902 = vpop.f32.mrf.mxu0
      %v1903 = vadd.f32 %v1832, %v1902
      %1904 = vdwg.mxu0
      %v1905 = vld [vmem:[%s3] sm:$0x3]
      %v1906 = vld [vmem:[%s4] ss:$8 sm:$0x3]
      %v1907 = vadd.f32 %v1905, %v1906
      %v1908 = vlaneseq
      %vm1909 = vcmp.ge.s32.totalorder %v1908, 0
      %vm1910 = vcmp.lt.s32.totalorder %v1908, 256
      %vm1911 = vmand %vm1909, %vm1910
      %1912 = vst.msk [vmem:[%s224] ss:$8 sm:$0x3] %vm1911, %v1907
      %1913 = vst.msk [vmem:[%s224] ss:$8 sm:$0x0] %vm1911, %v1907
      %v1914 = vld [vmem:[%s4] sm:$0x1e]
      %v1915 = vld [vmem:[%s4 + $0x8] sm:$0x1e]
      %v1918 = vrot.slane %v1914, 1
      %v1919 = vrot.slane %v1915, 1
      %v1922 = vadd.f32 %v1901, %v1918
      %v1923 = vadd.f32 %v1903, %v1919
      %v1926 = vrot.slane %v1922, 7
      %v1927 = vrot.slane %v1923, 7
      %1930 = vst [vmem:[%s224] sm:$0x1e] %v1926
      %1931 = vst [vmem:[%s224 + $0x8] sm:$0x1e] %v1927
      %1932 = vst [vmem:[%s224] sm:$0xe0] 0.0
      %1933 = vst [vmem:[%s224 + $0x8] sm:$0xe0] 0.0
      %p1934 = scmp.lt.s32.totalorder %s16, 1
      %s1935 = scalar_select %p1934, %s16, 1
      %s1936 = smul.addr %s1935, 2
      %s1937 = smul.addr %s1936, 8
      %s1938 = scalar_lea.vmem %s5, %s1937
      // Predicated region
      $region41: #{vit_extractor_forward.4} parent=39 // pred_check
        %p1939 = pneg %p144
      $region42: #{vit_extractor_forward.4} parent=39 // pred_check_branch
        %1941 = sbr.rel (%p1939) target = $region44
      $region43: #{vit_extractor_forward.4} parent=39 // pred_region
        _
      $region44: #{vit_extractor_forward.4} parent=39 // pred_fallthru
        _
    $region40: #{vit_extractor_forward.4} parent=5 // pred_fallthru
      _
    %p1942 = scmp.le.s32.totalorder 2, %s11
    // Predicated region
    $region45: #{vit_extractor_forward.4} parent=5 // pred_check
      %p1943 = pneg %p1942
    $region46: #{vit_extractor_forward.4} parent=5 // pred_check_branch
      %1945 = sbr.rel (%p1943) target = $region48
    $region47: #{vit_extractor_forward.4} parent=5 // pred_region
      %s1946 = ssub.s32 %s11, 2
      // Predicated region
      $region49: #{vit_extractor_forward.4} parent=47 // pred_check
        %p1947 = pneg %p150
      $region50: #{vit_extractor_forward.4} parent=47 // pred_check_branch
        %1949 = sbr.rel (%p1947) target = $region52
      $region51: #{vit_extractor_forward.4} parent=47 // pred_region
        %p1950 = scmp.lt.s32.totalorder %s17, 1
        %s1951 = scalar_select %p1950, %s17, 1
        %s1952 = smul.addr %s1951, 2
        %s1953 = smul.addr %s1952, 8
        %s1954 = scalar_lea.vmem %s5, %s1953
      $region52: #{vit_extractor_forward.4} parent=47 // pred_fallthru
        _
    $region48: #{vit_extractor_forward.4} parent=5 // pred_fallthru
      _
  $region6: #{vit_extractor_forward.4} parent=0 // loop_footer
    %s15 = sadd.s32 1, %s11
  $region7: #{vit_extractor_forward.4} parent=0 // loop_footer_branch
    %10 = sbr.rel target = $region3
  $region8: #{vit_extractor_forward.4} parent=0 // loop_exit
    _

// kernel: vit_extractor_forward.7
$region0: #{vit_extractor_forward.7}
  #allocation0 [shape = 'u32[]', space=smem, size = 0x4, offset = 0x4, fixed_abs, tag = 'smem constant byte address 0x4 - core index']
  #allocation1 [shape = 'u32[144,128]{1,0:T(1,128)}', space=vmem, size = 0x12000, scoped, tag = 'internal scratch']
  %s0 = inlined_call_operand.vmem [shape: f32[2,8,256], index: 0, kind: input, shape index: {}]
  %s1 = inlined_call_operand.vmem [shape: f32[256,128], index: 1, kind: input, shape index: {}]
  %s2 = inlined_call_operand.vmem [shape: f32[1,128], index: 2, kind: input, shape index: {}]
  %s3 = inlined_call_operand.vmem [shape: f32[1,128], index: 3, kind: input, shape index: {}]
  %s4 = inlined_call_operand.vmem [shape: f32[1,128], index: 4, kind: input, shape index: {}]
  %s5 = inlined_call_operand.hbm [shape: f32[2,1,128], index: 5, kind: output, shape index: {}]
  %s6 = sld [smem:[#allocation0]]
  $region53: #{vit_extractor_forward.7} parent=0
    _
  %s8 = ssub.s32 1, %s6
  %s9 = scalar_select 0, %s8, %s6
  $region1: #{vit_extractor_forward.7} parent=0
    #allocation2 [shape = 'u8[1024]{0}', space=vmem, size = 0x400, scoped, tag = 'output window, operand 0']
    #allocation3 [shape = 's32[2]{0}', space=sflag, size = 0x8, scoped, tag = 'scoped memory for vit_extractor_forward.7']
    %10 = vsyncpa [#allocation3], 0
    %s11 = scalar_lea.sflag [#allocation3], 1
    %12 = vsyncpa %s11, 0
    loop: start=0, step=1, limit=4
    $region2: #{vit_extractor_forward.7} parent=1 // loop_pre_header
      _
    $region3: #{vit_extractor_forward.7} parent=1 // loop_header
      %s14 = sphi 0, %s18
      %p15 = scmp.ge.s32.totalorder %s14, 4
      %s24 = sphi 0, %s26
      %s27 = sphi 0, %s24
      %s28 = sphi 0, %s27
      %s44 = sphi 0, %s28
      %s48 = sphi 0, %s48
      %s50 = sphi 0, %s48
      %s51 = sphi 0, %s50
      %s65 = sphi 0, %s51
      %s69 = sphi 0, %s69
      %s71 = sphi 0, %s69
      %s72 = sphi 0, %s71
      %s86 = sphi 0, %s72
      %s90 = sphi 0, %s90
      %s92 = sphi 0, %s90
      %s93 = sphi 0, %s92
      %s107 = sphi 0, %s93
      %s111 = sphi 0, %s111
      %s113 = sphi 0, %s111
      %s114 = sphi 0, %s113
      %s128 = sphi 0, %s114
      %s134 = sphi 0, %s136
      %s137 = sphi 0, %s134
      %s138 = sphi 0, %s137
      %s154 = sphi 0, %s138
    $region4: #{vit_extractor_forward.7} parent=1 // loop_header_branch
      %17 = sbr.rel (%p15) target = $region8
    $region5: #{vit_extractor_forward.7} parent=1 // loop_body
      %s19 = ssub.s32 %s14, 1
      %s20 = ssub.s32 %s14, 2
      %s21 = sadd.s32 %s14, 1
      %s22 = ssub.s32 %s14, %s21
      %p23 = scmp.eq.s32.totalorder %s22, 0
      %s25 = sadd.s32 %s24, 1
      %s26 = scalar_select %p23, %s24, %s25
      %p29 = pneg %p23
      %p30 = scmp.eq.s32.totalorder %s14, 1
      %p31 = por %p29, %p30
      %p32 = scmp.ne.s32.totalorder %s24, %s27
      %p33 = scmp.eq.s32.totalorder %s14, 0
      %p34 = por %p32, %p33
      %p35 = scmp.ne.s32.totalorder %s24, %s27
      %p36 = scmp.eq.s32.totalorder %s19, 1
      %p37 = por %p35, %p36
      %p38 = scmp.ne.s32.totalorder %s27, %s28
      %p39 = scmp.eq.s32.totalorder %s19, 0
      %p40 = por %p38, %p39
      %p41 = scmp.ne.s32.totalorder %s27, %s28
      %p42 = scmp.eq.s32.totalorder %s20, 1
      %p43 = por %p41, %p42
      %p45 = scmp.ne.s32.totalorder %s28, %s44
      %p46 = scmp.eq.s32.totalorder %s20, 0
      %p47 = por %p45, %p46
      %s49 = sadd.s32 %s48, 1
      %p52 = scmp.eq.s32.totalorder %s14, 1
      %p53 = scmp.ne.s32.totalorder %s48, %s50
      %p54 = scmp.eq.s32.totalorder %s14, 0
      %p55 = por %p53, %p54
      %p56 = scmp.ne.s32.totalorder %s48, %s50
      %p57 = scmp.eq.s32.totalorder %s19, 1
      %p58 = por %p56, %p57
      %p59 = scmp.ne.s32.totalorder %s50, %s51
      %p60 = scmp.eq.s32.totalorder %s19, 0
      %p61 = por %p59, %p60
      %p62 = scmp.ne.s32.totalorder %s50, %s51
      %p63 = scmp.eq.s32.totalorder %s20, 1
      %p64 = por %p62, %p63
      %p66 = scmp.ne.s32.totalorder %s51, %s65
      %p67 = scmp.eq.s32.totalorder %s20, 0
      %p68 = por %p66, %p67
      %s70 = sadd.s32 %s69, 1
      %p73 = scmp.eq.s32.totalorder %s14, 1
      %p74 = scmp.ne.s32.totalorder %s69, %s71
      %p75 = scmp.eq.s32.totalorder %s14, 0
      %p76 = por %p74, %p75
      %p77 = scmp.ne.s32.totalorder %s69, %s71
      %p78 = scmp.eq.s32.totalorder %s19, 1
      %p79 = por %p77, %p78
      %p80 = scmp.ne.s32.totalorder %s71, %s72
      %p81 = scmp.eq.s32.totalorder %s19, 0
      %p82 = por %p80, %p81
      %p83 = scmp.ne.s32.totalorder %s71, %s72
      %p84 = scmp.eq.s32.totalorder %s20, 1
      %p85 = por %p83, %p84
      %p87 = scmp.ne.s32.totalorder %s72, %s86
      %p88 = scmp.eq.s32.totalorder %s20, 0
      %p89 = por %p87, %p88
      %s91 = sadd.s32 %s90, 1
      %p94 = scmp.eq.s32.totalorder %s14, 1
      %p95 = scmp.ne.s32.totalorder %s90, %s92
      %p96 = scmp.eq.s32.totalorder %s14, 0
      %p97 = por %p95, %p96
      %p98 = scmp.ne.s32.totalorder %s90, %s92
      %p99 = scmp.eq.s32.totalorder %s19, 1
      %p100 = por %p98, %p99
      %p101 = scmp.ne.s32.totalorder %s92, %s93
      %p102 = scmp.eq.s32.totalorder %s19, 0
      %p103 = por %p101, %p102
      %p104 = scmp.ne.s32.totalorder %s92, %s93
      %p105 = scmp.eq.s32.totalorder %s20, 1
      %p106 = por %p104, %p105
      %p108 = scmp.ne.s32.totalorder %s93, %s107
      %p109 = scmp.eq.s32.totalorder %s20, 0
      %p110 = por %p108, %p109
      %s112 = sadd.s32 %s111, 1
      %p115 = scmp.eq.s32.totalorder %s14, 1
      %p116 = scmp.ne.s32.totalorder %s111, %s113
      %p117 = scmp.eq.s32.totalorder %s14, 0
      %p118 = por %p116, %p117
      %p119 = scmp.ne.s32.totalorder %s111, %s113
      %p120 = scmp.eq.s32.totalorder %s19, 1
      %p121 = por %p119, %p120
      %p122 = scmp.ne.s32.totalorder %s113, %s114
      %p123 = scmp.eq.s32.totalorder %s19, 0
      %p124 = por %p122, %p123
      %p125 = scmp.ne.s32.totalorder %s113, %s114
      %p126 = scmp.eq.s32.totalorder %s20, 1
      %p127 = por %p125, %p126
      %p129 = scmp.ne.s32.totalorder %s114, %s128
      %p130 = scmp.eq.s32.totalorder %s20, 0
      %p131 = por %p129, %p130
      %s132 = ssub.s32 %s14, %s21
      %p133 = scmp.eq.s32.totalorder %s132, 0
      %s135 = sadd.s32 %s134, 1
      %s136 = scalar_select %p133, %s134, %s135
      %p139 = pneg %p133
      %p140 = scmp.eq.s32.totalorder %s14, 1
      %p141 = por %p139, %p140
      %p142 = scmp.ne.s32.totalorder %s134, %s137
      %p143 = scmp.eq.s32.totalorder %s14, 0
      %p144 = por %p142, %p143
      %p145 = scmp.ne.s32.totalorder %s134, %s137
      %p146 = scmp.eq.s32.totalorder %s19, 1
      %p147 = por %p145, %p146
      %p148 = scmp.ne.s32.totalorder %s137, %s138
      %p149 = scmp.eq.s32.totalorder %s19, 0
      %p150 = por %p148, %p149
      %p151 = scmp.ne.s32.totalorder %s137, %s138
      %p152 = scmp.eq.s32.totalorder %s20, 1
      %p153 = por %p151, %p152
      %p155 = scmp.ne.s32.totalorder %s138, %s154
      %p156 = scmp.eq.s32.totalorder %s20, 0
      %p157 = por %p155, %p156
      %p158 = scmp.le.s32.totalorder 1, %s14
      %p159 = scmp.lt.s32.totalorder %s14, 3
      %p160 = pnand %p158, %p159
      %p161 = pneg %p160
      // Predicated region
      $region9: #{vit_extractor_forward.7} parent=5 // pred_check
        _
      $region10: #{vit_extractor_forward.7} parent=5 // pred_check_branch
        %163 = sbr.rel (%p160) target = $region12
      $region11: #{vit_extractor_forward.7} parent=5 // pred_region
        %s164 = ssub.s32 %s14, 1
        // Predicated region
        $region13: #{vit_extractor_forward.7} parent=11 // pred_check
          %p165 = pneg %p61
        $region14: #{vit_extractor_forward.7} parent=11 // pred_check_branch
          %167 = sbr.rel (%p165) target = $region16
        $region15: #{vit_extractor_forward.7} parent=11 // pred_region
          _
        $region16: #{vit_extractor_forward.7} parent=11 // pred_fallthru
          _
        // Predicated region
        $region17: #{vit_extractor_forward.7} parent=11 // pred_check
          %p168 = pneg %p82
        $region18: #{vit_extractor_forward.7} parent=11 // pred_check_branch
          %170 = sbr.rel (%p168) target = $region20
        $region19: #{vit_extractor_forward.7} parent=11 // pred_region
          _
        $region20: #{vit_extractor_forward.7} parent=11 // pred_fallthru
          _
        // Predicated region
        $region21: #{vit_extractor_forward.7} parent=11 // pred_check
          %p171 = pneg %p103
        $region22: #{vit_extractor_forward.7} parent=11 // pred_check_branch
          %173 = sbr.rel (%p171) target = $region24
        $region23: #{vit_extractor_forward.7} parent=11 // pred_region
          _
        $region24: #{vit_extractor_forward.7} parent=11 // pred_fallthru
          _
        // Predicated region
        $region25: #{vit_extractor_forward.7} parent=11 // pred_check
          %p174 = pneg %p124
        $region26: #{vit_extractor_forward.7} parent=11 // pred_check_branch
          %176 = sbr.rel (%p174) target = $region28
        $region27: #{vit_extractor_forward.7} parent=11 // pred_region
          _
        $region28: #{vit_extractor_forward.7} parent=11 // pred_fallthru
          _
      $region12: #{vit_extractor_forward.7} parent=5 // pred_fallthru
        _
      %p177 = scmp.lt.s32.totalorder %s14, 2
      // Predicated region
      $region29: #{vit_extractor_forward.7} parent=5 // pred_check
        %p178 = pneg %p177
      $region30: #{vit_extractor_forward.7} parent=5 // pred_check_branch
        %180 = sbr.rel (%p178) target = $region32
      $region31: #{vit_extractor_forward.7} parent=5 // pred_region
        // Predicated region
        $region33: #{vit_extractor_forward.7} parent=31 // pred_check
          %p181 = pneg %p34
        $region34: #{vit_extractor_forward.7} parent=31 // pred_check_branch
          %183 = sbr.rel (%p181) target = $region36
        $region35: #{vit_extractor_forward.7} parent=31 // pred_region
          %p184 = scmp.lt.s32.totalorder %s14, 1
          %s185 = scalar_select %p184, %s14, 1
          %s186 = smul.addr %s185, 2
          %s187 = smul.addr %s186, 8
          %s188 = scalar_lea.vmem %s0, %s187
        $region36: #{vit_extractor_forward.7} parent=31 // pred_fallthru
          _
      $region32: #{vit_extractor_forward.7} parent=5 // pred_fallthru
        _
      %p189 = scmp.le.s32.totalorder 1, %s14
      %p190 = scmp.lt.s32.totalorder %s14, 3
      %p191 = pnand %p189, %p190
      %p192 = pneg %p191
      // Predicated region
      $region37: #{vit_extractor_forward.7} parent=5 // pred_check
        _
      $region38: #{vit_extractor_forward.7} parent=5 // pred_check_branch
        %194 = sbr.rel (%p191) target = $region40
      $region39: #{vit_extractor_forward.7} parent=5 // pred_region
        %s195 = ssub.s32 %s14, 1
        %p196 = scmp.lt.s32.totalorder %s19, 1
        %s197 = scalar_select %p196, %s19, 1
        %s198 = smul.addr %s197, 2
        %s199 = smul.addr %s198, 8
        %s200 = scalar_lea.vmem %s0, %s199
        %p201 = pneg %p40
        %p202 = pneg %p37
        %p203 = pneg %p61
        %p204 = pneg %p58
        %p205 = pneg %p82
        %p206 = pneg %p79
        %p207 = pneg %p103
        %p208 = pneg %p100
        %p209 = pneg %p124
        %p210 = pneg %p121
        %p211 = pneg %p150
        %p212 = pneg %p147
        %s213 = sand.u32 %s137, 1
        %s214 = scalar_lea.sflag [#allocation3], %s213
        %s215 = sand.u32 %s137, 1
        %s216 = scalar_lea.vmem [#allocation2], %s215
        %p217 = scmp.lt.s32.totalorder %s19, 1
        %s218 = scalar_select %p217, %s19, 1
        %s219 = smul.addr %s218, 2
        %s220 = smul.addr %s219, 8
        %s221 = scalar_lea.vmem %s0, %s220
        %v222 = vld [vmem:[%s221] sm:$0xff]
        %v223 = vld [vmem:[%s221 + $0x8] sm:$0xff]
        %v224 = vrot.slane %v222, 4
        %v225 = vadd.f32 %v222, %v224
        %v226 = vrot.slane %v225, 2
        %v227 = vadd.f32 %v225, %v226
        %v228 = vrot.slane %v227, 1
        %v229 = vadd.f32 %v227, %v228
        %v230 = vrot.slane %v223, 4
        %v231 = vadd.f32 %v223, %v230
        %v232 = vrot.slane %v231, 2
        %v233 = vadd.f32 %v231, %v232
        %v234 = vrot.slane %v233, 1
        %v235 = vadd.f32 %v233, %v234
        %v236 = vmul.f32 %v229, 0.2
        %v237 = vmul.f32 %v235, 0.2
        %v238 = vld [vmem:[%s1] sm:$0xff]
        %v239 = vld [vmem:[%s1 + $0x8] sm:$0xff]
        %v240 = vld [vmem:[%s1 + $0x10] sm:$0xff]
        %v241 = vld [vmem:[%s1 + $0x18] sm:$0xff]
        %v242 = vld [vmem:[%s1 + $0x20] sm:$0xff]
        %v243 = vld [vmem:[%s1 + $0x28] sm:$0xff]
        %v244 = vld [vmem:[%s1 + $0x30] sm:$0xff]
        %v245 = vld [vmem:[%s1 + $0x38] sm:$0xff]
        %v246 = vld [vmem:[%s1 + $0x40] sm:$0xff]
        %v247 = vld [vmem:[%s1 + $0x48] sm:$0xff]
        %v248 = vld [vmem:[%s1 + $0x50] sm:$0xff]
        %v249 = vld [vmem:[%s1 + $0x58] sm:$0xff]
        %v250 = vld [vmem:[%s1 + $0x60] sm:$0xff]
        %v251 = vld [vmem:[%s1 + $0x68] sm:$0xff]
        %v252 = vld [vmem:[%s1 + $0x70] sm:$0xff]
        %v253 = vld [vmem:[%s1 + $0x78] sm:$0xff]
        %v254 = vld [vmem:[%s1 + $0x80] sm:$0xff]
        %v255 = vld [vmem:[%s1 + $0x88] sm:$0xff]
        %v256 = vld [vmem:[%s1 + $0x90] sm:$0xff]
        %v257 = vld [vmem:[%s1 + $0x98] sm:$0xff]
        %v258 = vld [vmem:[%s1 + $0xa0] sm:$0xff]
        %v259 = vld [vmem:[%s1 + $0xa8] sm:$0xff]
        %v260 = vld [vmem:[%s1 + $0xb0] sm:$0xff]
        %v261 = vld [vmem:[%s1 + $0xb8] sm:$0xff]
        %v262 = vld [vmem:[%s1 + $0xc0] sm:$0xff]
        %v263 = vld [vmem:[%s1 + $0xc8] sm:$0xff]
        %v264 = vld [vmem:[%s1 + $0xd0] sm:$0xff]
        %v265 = vld [vmem:[%s1 + $0xd8] sm:$0xff]
        %v266 = vld [vmem:[%s1 + $0xe0] sm:$0xff]
        %v267 = vld [vmem:[%s1 + $0xe8] sm:$0xff]
        %v268 = vld [vmem:[%s1 + $0xf0] sm:$0xff]
        %v269 = vld [vmem:[%s1 + $0xf8] sm:$0xff]
        %v270 = vld [vmem:[%s2] sm:$0x1]
        %271 = vmatprep.subr.mxu0 0.0
        %272 = vmatpush1.msra.mxu0 %v253
        %273 = vmatprep.subr.mxu0 0.0
        %274 = vmatpush1.msra.mxu0 %v252
        %275 = vmatprep.subr.mxu0 0.0
        %276 = vmatpush1.msra.mxu0 %v251
        %277 = vmatprep.subr.mxu0 0.0
        %278 = vmatpush1.msra.mxu0 %v250
        %279 = vmatprep.subr.mxu0 0.0
        %280 = vmatpush1.msra.mxu0 %v249
        %281 = vmatprep.subr.mxu0 0.0
        %282 = vmatpush1.msra.mxu0 %v248
        %283 = vmatprep.subr.mxu0 0.0
        %284 = vmatpush1.msra.mxu0 %v247
        %285 = vmatprep.subr.mxu0 0.0
        %286 = vmatpush1.msra.mxu0 %v246
        %287 = vmatprep.subr.mxu0 0.0
        %288 = vmatpush1.msra.mxu0 %v245
        %289 = vmatprep.subr.mxu0 0.0
        %290 = vmatpush1.msra.mxu0 %v244
        %291 = vmatprep.subr.mxu0 0.0
        %292 = vmatpush1.msra.mxu0 %v243
        %293 = vmatprep.subr.mxu0 0.0
        %294 = vmatpush1.msra.mxu0 %v242
        %295 = vmatprep.subr.mxu0 0.0
        %296 = vmatpush1.msra.mxu0 %v241
        %297 = vmatprep.subr.mxu0 0.0
        %298 = vmatpush1.msra.mxu0 %v240
        %299 = vmatprep.subr.mxu0 0.0
        %300 = vmatpush1.msra.mxu0 %v239
        %301 = vmatprep.subr.mxu0 0.0
        %302 = vmatpush1.msra.mxu0 %v238
        %303 = vmatprep.subr.mxu0 0.0
        %304 = vmatpush2.msra.mxu0 %v269
        %305 = vmatprep.subr.mxu0 0.0
        %306 = vmatpush2.msra.mxu0 %v268
        %307 = vmatprep.subr.mxu0 0.0
        %308 = vmatpush2.msra.mxu0 %v267
        %309 = vmatprep.subr.mxu0 0.0
        %310 = vmatpush2.msra.mxu0 %v266
        %311 = vmatprep.subr.mxu0 0.0
        %312 = vmatpush2.msra.mxu0 %v265
        %313 = vmatprep.subr.mxu0 0.0
        %314 = vmatpush2.msra.mxu0 %v264
        %315 = vmatprep.subr.mxu0 0.0
        %316 = vmatpush2.msra.mxu0 %v263
        %317 = vmatprep.subr.mxu0 0.0
        %318 = vmatpush2.msra.mxu0 %v262
        %319 = vmatprep.subr.mxu0 0.0
        %320 = vmatpush2.msra.mxu0 %v261
        %321 = vmatprep.subr.mxu0 0.0
        %322 = vmatpush2.msra.mxu0 %v260
        %323 = vmatprep.subr.mxu0 0.0
        %324 = vmatpush2.msra.mxu0 %v259
        %325 = vmatprep.subr.mxu0 0.0
        %326 = vmatpush2.msra.mxu0 %v258
        %327 = vmatprep.subr.mxu0 0.0
        %328 = vmatpush2.msra.mxu0 %v257
        %329 = vmatprep.subr.mxu0 0.0
        %330 = vmatpush2.msra.mxu0 %v256
        %331 = vmatprep.subr.mxu0 0.0
        %332 = vmatpush2.msra.mxu0 %v255
        %333 = vmatprep.subr.mxu0 0.0
        %334 = vmatpush2.msra.mxu0 %v254
        %335 = vmatprep.mubr.f32.mxu0 %v237
        %336 = vmatmul.mubr.f32.gmra.mxu0 %v236
        %v337 = vpop.f32.mrf.mxu0
        %v338 = vadd.f32 %v270, %v337
        %v339 = vpop.f32.mrf.mxu0
        %340 = vdwg.mxu0
        %v341 = vld [vmem:[%s3] sm:$0x1]
        %v342 = vld [vmem:[%s4] sm:$0x1]
        %vm343 = vcmask 1040384
        %v344 = vsel %vm343, %v338, 0.0
        %345 = vadd.xlane.f32.xlu0 %v344
        %v346 = vpop.xlane.xlu0 %345
        %v347 = vrcp.pop 128.0
        %v348 = vmul.f32 %v346, %v347
        %v349 = vsub.f32 %v338, %v348
        %v350 = vmul.f32 %v349, %v349
        %v351 = vsel %vm343, %v350, 0.0
        %352 = vadd.xlane.f32.xlu0 %v351
        %v353 = vpop.xlane.xlu0 %352
        %v354 = vmul.f32 %v353, %v347
        %v355 = vadd.f32 %v354, 1e-05
        %v356 = vrsqrt.pop %v355
        %v357 = vmul.f32 %v349, %v356
        %v358 = vmul.f32 %v357, %v341
        %v359 = vadd.f32 %v358, %v342
        %v360 = vmul.f32 %v359, 0.5
        %v361 = vmul.f32 %v359, 0.70710677
        %v362 = verf.f32.pop %v361
        %v363 = vadd.f32 %v362, 1.0
        %v364 = vmul.f32 %v360, %v363
        %365 = vst [vmem:[%s216] sm:$0x1] %v364
        %s366 = sand.u32 %s137, 1
        %s367 = scalar_lea.sflag [#allocation3], %s366
        %s368 = sand.u32 %s137, 1
        %s369 = scalar_lea.vmem [#allocation2], %s368
        // Predicated region
        $region41: #{vit_extractor_forward.7} parent=39 // pred_check
          %p370 = pneg %p147
        $region42: #{vit_extractor_forward.7} parent=39 // pred_check_branch
          %372 = sbr.rel (%p370) target = $region44
        $region43: #{vit_extractor_forward.7} parent=39 // pred_region
          %s374 = ssub.s32 16, 16
          %375 = vsyncadd %s367, %s374
          %s376 = smul.addr %s19, 16
          %s377 = scalar_lea.hbm %s5, %s376
          %s379 = sshll.u32 %s369, 4
          %s380 = int_to_ptr.vmem [resolvable:$true] %s379
          %382 = dma.vmem_to_hbm [thread:$0]  %s380, 16, %s377, %s367
        $region44: #{vit_extractor_forward.7} parent=39 // pred_fallthru
          _
      $region40: #{vit_extractor_forward.7} parent=5 // pred_fallthru
        _
      %p383 = scmp.le.s32.totalorder 2, %s14
      // Predicated region
      $region45: #{vit_extractor_forward.7} parent=5 // pred_check
        %p384 = pneg %p383
      $region46: #{vit_extractor_forward.7} parent=5 // pred_check_branch
        %386 = sbr.rel (%p384) target = $region48
      $region47: #{vit_extractor_forward.7} parent=5 // pred_region
        %s387 = ssub.s32 %s14, 2
        // Predicated region
        $region49: #{vit_extractor_forward.7} parent=47 // pred_check
          %p388 = pneg %p153
        $region50: #{vit_extractor_forward.7} parent=47 // pred_check_branch
          %390 = sbr.rel (%p388) target = $region52
        $region51: #{vit_extractor_forward.7} parent=47 // pred_region
          %s391 = sand.u32 %s138, 1
          %s392 = scalar_lea.sflag [#allocation3], %s391
          %s393 = sand.u32 %s138, 1
          %s394 = scalar_lea.vmem [#allocation2], %s393
          %395 = dma.done %s392, 16
        $region52: #{vit_extractor_forward.7} parent=47 // pred_fallthru
          _
      $region48: #{vit_extractor_forward.7} parent=5 // pred_fallthru
        _
    $region6: #{vit_extractor_forward.7} parent=1 // loop_footer
      %s18 = sadd.s32 1, %s14
    $region7: #{vit_extractor_forward.7} parent=1 // loop_footer_branch
      %13 = sbr.rel target = $region3
    $region8: #{vit_extractor_forward.7} parent=1 // loop_exit
      _
    %396 = vsyncpa [#allocation3], 1
    %s397 = scalar_lea.sflag [#allocation3], 1
    %398 = vsyncpa %s397, 1

// kernel: vit_extractor_forward.5
$region0: #{vit_extractor_forward.5}
  #allocation0 [shape = 'u32[]', space=smem, size = 0x4, offset = 0x4, fixed_abs, tag = 'smem constant byte address 0x4 - core index']
  #allocation1 [shape = 'u32[144,128]{1,0:T(1,128)}', space=vmem, size = 0x12000, scoped, tag = 'internal scratch']
  %s0 = inlined_call_operand.vmem [shape: f32[2,8,256], index: 0, kind: input, shape index: {}]
  %s1 = inlined_call_operand.vmem [shape: f32[1,256], index: 1, kind: input, shape index: {}]
  %s2 = inlined_call_operand.vmem [shape: f32[1,256], index: 2, kind: input, shape index: {}]
  %s3 = inlined_call_operand.vmem [shape: f32[4,256,64], index: 3, kind: input, shape index: {}]
  %s4 = inlined_call_operand.vmem [shape: f32[4,256,64], index: 4, kind: input, shape index: {}]
  %s5 = inlined_call_operand.vmem [shape: f32[4,256,64], index: 5, kind: input, shape index: {}]
  %s6 = inlined_call_operand.vmem [shape: f32[4,64,256], index: 6, kind: input, shape index: {}]
  %s7 = inlined_call_operand.vmem [shape: f32[1,256], index: 7, kind: input, shape index: {}]
  %s8 = inlined_call_operand.vmem [shape: f32[1,256], index: 8, kind: input, shape index: {}]
  %s9 = inlined_call_operand.vmem [shape: f32[1,256], index: 9, kind: input, shape index: {}]
  %s10 = inlined_call_operand.vmem [shape: f32[256,512], index: 10, kind: input, shape index: {}]
  %s11 = inlined_call_operand.vmem [shape: f32[1,512], index: 11, kind: input, shape index: {}]
  %s12 = inlined_call_operand.vmem [shape: f32[512,256], index: 12, kind: input, shape index: {}]
  %s13 = inlined_call_operand.vmem [shape: f32[1,256], index: 13, kind: input, shape index: {}]
  %s14 = inlined_call_operand.vmem [shape: f32[2,8,256], index: 14, kind: output, shape index: {}]
  %s15 = sld [smem:[#allocation0]]
  $region89: #{vit_extractor_forward.5} parent=0
    _
  %s17 = ssub.s32 1, %s15
  %s18 = scalar_select 0, %s17, %s15
  loop: start=0, step=1, limit=4
  $region2: #{vit_extractor_forward.5} parent=0 // loop_pre_header
    _
  $region3: #{vit_extractor_forward.5} parent=0 // loop_header
    %s20 = sphi 0, %s24
    %p21 = scmp.ge.s32.totalorder %s20, 4
    %s30 = sphi 0, %s32
    %s33 = sphi 0, %s30
    %s34 = sphi 0, %s33
    %s50 = sphi 0, %s34
    %s54 = sphi 0, %s54
    %s56 = sphi 0, %s54
    %s57 = sphi 0, %s56
    %s71 = sphi 0, %s57
    %s75 = sphi 0, %s75
    %s77 = sphi 0, %s75
    %s78 = sphi 0, %s77
    %s92 = sphi 0, %s78
    %s96 = sphi 0, %s96
    %s98 = sphi 0, %s96
    %s99 = sphi 0, %s98
    %s113 = sphi 0, %s99
    %s117 = sphi 0, %s117
    %s119 = sphi 0, %s117
    %s120 = sphi 0, %s119
    %s134 = sphi 0, %s120
    %s138 = sphi 0, %s138
    %s140 = sphi 0, %s138
    %s141 = sphi 0, %s140
    %s155 = sphi 0, %s141
    %s159 = sphi 0, %s159
    %s161 = sphi 0, %s159
    %s162 = sphi 0, %s161
    %s176 = sphi 0, %s162
    %s180 = sphi 0, %s180
    %s182 = sphi 0, %s180
    %s183 = sphi 0, %s182
    %s197 = sphi 0, %s183
    %s201 = sphi 0, %s201
    %s203 = sphi 0, %s201
    %s204 = sphi 0, %s203
    %s218 = sphi 0, %s204
    %s222 = sphi 0, %s222
    %s224 = sphi 0, %s222
    %s225 = sphi 0, %s224
    %s239 = sphi 0, %s225
    %s243 = sphi 0, %s243
    %s245 = sphi 0, %s243
    %s246 = sphi 0, %s245
    %s260 = sphi 0, %s246
    %s264 = sphi 0, %s264
    %s266 = sphi 0, %s264
    %s267 = sphi 0, %s266
    %s281 = sphi 0, %s267
    %s285 = sphi 0, %s285
    %s287 = sphi 0, %s285
    %s288 = sphi 0, %s287
    %s302 = sphi 0, %s288
    %s306 = sphi 0, %s306
    %s308 = sphi 0, %s306
    %s309 = sphi 0, %s308
    %s323 = sphi 0, %s309
    %s329 = sphi 0, %s331
    %s332 = sphi 0, %s329
    %s333 = sphi 0, %s332
    %s349 = sphi 0, %s333
  $region4: #{vit_extractor_forward.5} parent=0 // loop_header_branch
    %23 = sbr.rel (%p21) target = $region8
  $region5: #{vit_extractor_forward.5} parent=0 // loop_body
    %s25 = ssub.s32 %s20, 1
    %s26 = ssub.s32 %s20, 2
    %s27 = sadd.s32 %s20, 1
    %s28 = ssub.s32 %s20, %s27
    %p29 = scmp.eq.s32.totalorder %s28, 0
    %s31 = sadd.s32 %s30, 1
    %s32 = scalar_select %p29, %s30, %s31
    %p35 = pneg %p29
    %p36 = scmp.eq.s32.totalorder %s20, 1
    %p37 = por %p35, %p36
    %p38 = scmp.ne.s32.totalorder %s30, %s33
    %p39 = scmp.eq.s32.totalorder %s20, 0
    %p40 = por %p38, %p39
    %p41 = scmp.ne.s32.totalorder %s30, %s33
    %p42 = scmp.eq.s32.totalorder %s25, 1
    %p43 = por %p41, %p42
    %p44 = scmp.ne.s32.totalorder %s33, %s34
    %p45 = scmp.eq.s32.totalorder %s25, 0
    %p46 = por %p44, %p45
    %p47 = scmp.ne.s32.totalorder %s33, %s34
    %p48 = scmp.eq.s32.totalorder %s26, 1
    %p49 = por %p47, %p48
    %p51 = scmp.ne.s32.totalorder %s34, %s50
    %p52 = scmp.eq.s32.totalorder %s26, 0
    %p53 = por %p51, %p52
    %s55 = sadd.s32 %s54, 1
    %p58 = scmp.eq.s32.totalorder %s20, 1
    %p59 = scmp.ne.s32.totalorder %s54, %s56
    %p60 = scmp.eq.s32.totalorder %s20, 0
    %p61 = por %p59, %p60
    %p62 = scmp.ne.s32.totalorder %s54, %s56
    %p63 = scmp.eq.s32.totalorder %s25, 1
    %p64 = por %p62, %p63
    %p65 = scmp.ne.s32.totalorder %s56, %s57
    %p66 = scmp.eq.s32.totalorder %s25, 0
    %p67 = por %p65, %p66
    %p68 = scmp.ne.s32.totalorder %s56, %s57
    %p69 = scmp.eq.s32.totalorder %s26, 1
    %p70 = por %p68, %p69
    %p72 = scmp.ne.s32.totalorder %s57, %s71
    %p73 = scmp.eq.s32.totalorder %s26, 0
    %p74 = por %p72, %p73
    %s76 = sadd.s32 %s75, 1
    %p79 = scmp.eq.s32.totalorder %s20, 1
    %p80 = scmp.ne.s32.totalorder %s75, %s77
    %p81 = scmp.eq.s32.totalorder %s20, 0
    %p82 = por %p80, %p81
    %p83 = scmp.ne.s32.totalorder %s75, %s77
    %p84 = scmp.eq.s32.totalorder %s25, 1
    %p85 = por %p83, %p84
    %p86 = scmp.ne.s32.totalorder %s77, %s78
    %p87 = scmp.eq.s32.totalorder %s25, 0
    %p88 = por %p86, %p87
    %p89 = scmp.ne.s32.totalorder %s77, %s78
    %p90 = scmp.eq.s32.totalorder %s26, 1
    %p91 = por %p89, %p90
    %p93 = scmp.ne.s32.totalorder %s78, %s92
    %p94 = scmp.eq.s32.totalorder %s26, 0
    %p95 = por %p93, %p94
    %s97 = sadd.s32 %s96, 1
    %p100 = scmp.eq.s32.totalorder %s20, 1
    %p101 = scmp.ne.s32.totalorder %s96, %s98
    %p102 = scmp.eq.s32.totalorder %s20, 0
    %p103 = por %p101, %p102
    %p104 = scmp.ne.s32.totalorder %s96, %s98
    %p105 = scmp.eq.s32.totalorder %s25, 1
    %p106 = por %p104, %p105
    %p107 = scmp.ne.s32.totalorder %s98, %s99
    %p108 = scmp.eq.s32.totalorder %s25, 0
    %p109 = por %p107, %p108
    %p110 = scmp.ne.s32.totalorder %s98, %s99
    %p111 = scmp.eq.s32.totalorder %s26, 1
    %p112 = por %p110, %p111
    %p114 = scmp.ne.s32.totalorder %s99, %s113
    %p115 = scmp.eq.s32.totalorder %s26, 0
    %p116 = por %p114, %p115
    %s118 = sadd.s32 %s117, 1
    %p121 = scmp.eq.s32.totalorder %s20, 1
    %p122 = scmp.ne.s32.totalorder %s117, %s119
    %p123 = scmp.eq.s32.totalorder %s20, 0
    %p124 = por %p122, %p123
    %p125 = scmp.ne.s32.totalorder %s117, %s119
    %p126 = scmp.eq.s32.totalorder %s25, 1
    %p127 = por %p125, %p126
    %p128 = scmp.ne.s32.totalorder %s119, %s120
    %p129 = scmp.eq.s32.totalorder %s25, 0
    %p130 = por %p128, %p129
    %p131 = scmp.ne.s32.totalorder %s119, %s120
    %p132 = scmp.eq.s32.totalorder %s26, 1
    %p133 = por %p131, %p132
    %p135 = scmp.ne.s32.totalorder %s120, %s134
    %p136 = scmp.eq.s32.totalorder %s26, 0
    %p137 = por %p135, %p136
    %s139 = sadd.s32 %s138, 1
    %p142 = scmp.eq.s32.totalorder %s20, 1
    %p143 = scmp.ne.s32.totalorder %s138, %s140
    %p144 = scmp.eq.s32.totalorder %s20, 0
    %p145 = por %p143, %p144
    %p146 = scmp.ne.s32.totalorder %s138, %s140
    %p147 = scmp.eq.s32.totalorder %s25, 1
    %p148 = por %p146, %p147
    %p149 = scmp.ne.s32.totalorder %s140, %s141
    %p150 = scmp.eq.s32.totalorder %s25, 0
    %p151 = por %p149, %p150
    %p152 = scmp.ne.s32.totalorder %s140, %s141
    %p153 = scmp.eq.s32.totalorder %s26, 1
    %p154 = por %p152, %p153
    %p156 = scmp.ne.s32.totalorder %s141, %s155
    %p157 = scmp.eq.s32.totalorder %s26, 0
    %p158 = por %p156, %p157
    %s160 = sadd.s32 %s159, 1
    %p163 = scmp.eq.s32.totalorder %s20, 1
    %p164 = scmp.ne.s32.totalorder %s159, %s161
    %p165 = scmp.eq.s32.totalorder %s20, 0
    %p166 = por %p164, %p165
    %p167 = scmp.ne.s32.totalorder %s159, %s161
    %p168 = scmp.eq.s32.totalorder %s25, 1
    %p169 = por %p167, %p168
    %p170 = scmp.ne.s32.totalorder %s161, %s162
    %p171 = scmp.eq.s32.totalorder %s25, 0
    %p172 = por %p170, %p171
    %p173 = scmp.ne.s32.totalorder %s161, %s162
    %p174 = scmp.eq.s32.totalorder %s26, 1
    %p175 = por %p173, %p174
    %p177 = scmp.ne.s32.totalorder %s162, %s176
    %p178 = scmp.eq.s32.totalorder %s26, 0
    %p179 = por %p177, %p178
    %s181 = sadd.s32 %s180, 1
    %p184 = scmp.eq.s32.totalorder %s20, 1
    %p185 = scmp.ne.s32.totalorder %s180, %s182
    %p186 = scmp.eq.s32.totalorder %s20, 0
    %p187 = por %p185, %p186
    %p188 = scmp.ne.s32.totalorder %s180, %s182
    %p189 = scmp.eq.s32.totalorder %s25, 1
    %p190 = por %p188, %p189
    %p191 = scmp.ne.s32.totalorder %s182, %s183
    %p192 = scmp.eq.s32.totalorder %s25, 0
    %p193 = por %p191, %p192
    %p194 = scmp.ne.s32.totalorder %s182, %s183
    %p195 = scmp.eq.s32.totalorder %s26, 1
    %p196 = por %p194, %p195
    %p198 = scmp.ne.s32.totalorder %s183, %s197
    %p199 = scmp.eq.s32.totalorder %s26, 0
    %p200 = por %p198, %p199
    %s202 = sadd.s32 %s201, 1
    %p205 = scmp.eq.s32.totalorder %s20, 1
    %p206 = scmp.ne.s32.totalorder %s201, %s203
    %p207 = scmp.eq.s32.totalorder %s20, 0
    %p208 = por %p206, %p207
    %p209 = scmp.ne.s32.totalorder %s201, %s203
    %p210 = scmp.eq.s32.totalorder %s25, 1
    %p211 = por %p209, %p210
    %p212 = scmp.ne.s32.totalorder %s203, %s204
    %p213 = scmp.eq.s32.totalorder %s25, 0
    %p214 = por %p212, %p213
    %p215 = scmp.ne.s32.totalorder %s203, %s204
    %p216 = scmp.eq.s32.totalorder %s26, 1
    %p217 = por %p215, %p216
    %p219 = scmp.ne.s32.totalorder %s204, %s218
    %p220 = scmp.eq.s32.totalorder %s26, 0
    %p221 = por %p219, %p220
    %s223 = sadd.s32 %s222, 1
    %p226 = scmp.eq.s32.totalorder %s20, 1
    %p227 = scmp.ne.s32.totalorder %s222, %s224
    %p228 = scmp.eq.s32.totalorder %s20, 0
    %p229 = por %p227, %p228
    %p230 = scmp.ne.s32.totalorder %s222, %s224
    %p231 = scmp.eq.s32.totalorder %s25, 1
    %p232 = por %p230, %p231
    %p233 = scmp.ne.s32.totalorder %s224, %s225
    %p234 = scmp.eq.s32.totalorder %s25, 0
    %p235 = por %p233, %p234
    %p236 = scmp.ne.s32.totalorder %s224, %s225
    %p237 = scmp.eq.s32.totalorder %s26, 1
    %p238 = por %p236, %p237
    %p240 = scmp.ne.s32.totalorder %s225, %s239
    %p241 = scmp.eq.s32.totalorder %s26, 0
    %p242 = por %p240, %p241
    %s244 = sadd.s32 %s243, 1
    %p247 = scmp.eq.s32.totalorder %s20, 1
    %p248 = scmp.ne.s32.totalorder %s243, %s245
    %p249 = scmp.eq.s32.totalorder %s20, 0
    %p250 = por %p248, %p249
    %p251 = scmp.ne.s32.totalorder %s243, %s245
    %p252 = scmp.eq.s32.totalorder %s25, 1
    %p253 = por %p251, %p252
    %p254 = scmp.ne.s32.totalorder %s245, %s246
    %p255 = scmp.eq.s32.totalorder %s25, 0
    %p256 = por %p254, %p255
    %p257 = scmp.ne.s32.totalorder %s245, %s246
    %p258 = scmp.eq.s32.totalorder %s26, 1
    %p259 = por %p257, %p258
    %p261 = scmp.ne.s32.totalorder %s246, %s260
    %p262 = scmp.eq.s32.totalorder %s26, 0
    %p263 = por %p261, %p262
    %s265 = sadd.s32 %s264, 1
    %p268 = scmp.eq.s32.totalorder %s20, 1
    %p269 = scmp.ne.s32.totalorder %s264, %s266
    %p270 = scmp.eq.s32.totalorder %s20, 0
    %p271 = por %p269, %p270
    %p272 = scmp.ne.s32.totalorder %s264, %s266
    %p273 = scmp.eq.s32.totalorder %s25, 1
    %p274 = por %p272, %p273
    %p275 = scmp.ne.s32.totalorder %s266, %s267
    %p276 = scmp.eq.s32.totalorder %s25, 0
    %p277 = por %p275, %p276
    %p278 = scmp.ne.s32.totalorder %s266, %s267
    %p279 = scmp.eq.s32.totalorder %s26, 1
    %p280 = por %p278, %p279
    %p282 = scmp.ne.s32.totalorder %s267, %s281
    %p283 = scmp.eq.s32.totalorder %s26, 0
    %p284 = por %p282, %p283
    %s286 = sadd.s32 %s285, 1
    %p289 = scmp.eq.s32.totalorder %s20, 1
    %p290 = scmp.ne.s32.totalorder %s285, %s287
    %p291 = scmp.eq.s32.totalorder %s20, 0
    %p292 = por %p290, %p291
    %p293 = scmp.ne.s32.totalorder %s285, %s287
    %p294 = scmp.eq.s32.totalorder %s25, 1
    %p295 = por %p293, %p294
    %p296 = scmp.ne.s32.totalorder %s287, %s288
    %p297 = scmp.eq.s32.totalorder %s25, 0
    %p298 = por %p296, %p297
    %p299 = scmp.ne.s32.totalorder %s287, %s288
    %p300 = scmp.eq.s32.totalorder %s26, 1
    %p301 = por %p299, %p300
    %p303 = scmp.ne.s32.totalorder %s288, %s302
    %p304 = scmp.eq.s32.totalorder %s26, 0
    %p305 = por %p303, %p304
    %s307 = sadd.s32 %s306, 1
    %p310 = scmp.eq.s32.totalorder %s20, 1
    %p311 = scmp.ne.s32.totalorder %s306, %s308
    %p312 = scmp.eq.s32.totalorder %s20, 0
    %p313 = por %p311, %p312
    %p314 = scmp.ne.s32.totalorder %s306, %s308
    %p315 = scmp.eq.s32.totalorder %s25, 1
    %p316 = por %p314, %p315
    %p317 = scmp.ne.s32.totalorder %s308, %s309
    %p318 = scmp.eq.s32.totalorder %s25, 0
    %p319 = por %p317, %p318
    %p320 = scmp.ne.s32.totalorder %s308, %s309
    %p321 = scmp.eq.s32.totalorder %s26, 1
    %p322 = por %p320, %p321
    %p324 = scmp.ne.s32.totalorder %s309, %s323
    %p325 = scmp.eq.s32.totalorder %s26, 0
    %p326 = por %p324, %p325
    %s327 = ssub.s32 %s20, %s27
    %p328 = scmp.eq.s32.totalorder %s327, 0
    %s330 = sadd.s32 %s329, 1
    %s331 = scalar_select %p328, %s329, %s330
    %p334 = pneg %p328
    %p335 = scmp.eq.s32.totalorder %s20, 1
    %p336 = por %p334, %p335
    %p337 = scmp.ne.s32.totalorder %s329, %s332
    %p338 = scmp.eq.s32.totalorder %s20, 0
    %p339 = por %p337, %p338
    %p340 = scmp.ne.s32.totalorder %s329, %s332
    %p341 = scmp.eq.s32.totalorder %s25, 1
    %p342 = por %p340, %p341
    %p343 = scmp.ne.s32.totalorder %s332, %s333
    %p344 = scmp.eq.s32.totalorder %s25, 0
    %p345 = por %p343, %p344
    %p346 = scmp.ne.s32.totalorder %s332, %s333
    %p347 = scmp.eq.s32.totalorder %s26, 1
    %p348 = por %p346, %p347
    %p350 = scmp.ne.s32.totalorder %s333, %s349
    %p351 = scmp.eq.s32.totalorder %s26, 0
    %p352 = por %p350, %p351
    %p353 = scmp.le.s32.totalorder 1, %s20
    %p354 = scmp.lt.s32.totalorder %s20, 3
    %p355 = pnand %p353, %p354
    %p356 = pneg %p355
    // Predicated region
    $region9: #{vit_extractor_forward.5} parent=5 // pred_check
      _
    $region10: #{vit_extractor_forward.5} parent=5 // pred_check_branch
      %358 = sbr.rel (%p355) target = $region12
    $region11: #{vit_extractor_forward.5} parent=5 // pred_region
      %s359 = ssub.s32 %s20, 1
      // Predicated region
      $region13: #{vit_extractor_forward.5} parent=11 // pred_check
        %p360 = pneg %p67
      $region14: #{vit_extractor_forward.5} parent=11 // pred_check_branch
        %362 = sbr.rel (%p360) target = $region16
      $region15: #{vit_extractor_forward.5} parent=11 // pred_region
        _
      $region16: #{vit_extractor_forward.5} parent=11 // pred_fallthru
        _
      // Predicated region
      $region17: #{vit_extractor_forward.5} parent=11 // pred_check
        %p363 = pneg %p88
      $region18: #{vit_extractor_forward.5} parent=11 // pred_check_branch
        %365 = sbr.rel (%p363) target = $region20
      $region19: #{vit_extractor_forward.5} parent=11 // pred_region
        _
      $region20: #{vit_extractor_forward.5} parent=11 // pred_fallthru
        _
      // Predicated region
      $region21: #{vit_extractor_forward.5} parent=11 // pred_check
        %p366 = pneg %p109
      $region22: #{vit_extractor_forward.5} parent=11 // pred_check_branch
        %368 = sbr.rel (%p366) target = $region24
      $region23: #{vit_extractor_forward.5} parent=11 // pred_region
        _
      $region24: #{vit_extractor_forward.5} parent=11 // pred_fallthru
        _
      // Predicated region
      $region25: #{vit_extractor_forward.5} parent=11 // pred_check
        %p369 = pneg %p130
      $region26: #{vit_extractor_forward.5} parent=11 // pred_check_branch
        %371 = sbr.rel (%p369) target = $region28
      $region27: #{vit_extractor_forward.5} parent=11 // pred_region
        _
      $region28: #{vit_extractor_forward.5} parent=11 // pred_fallthru
        _
      // Predicated region
      $region29: #{vit_extractor_forward.5} parent=11 // pred_check
        %p372 = pneg %p151
      $region30: #{vit_extractor_forward.5} parent=11 // pred_check_branch
        %374 = sbr.rel (%p372) target = $region32
      $region31: #{vit_extractor_forward.5} parent=11 // pred_region
        _
      $region32: #{vit_extractor_forward.5} parent=11 // pred_fallthru
        _
      // Predicated region
      $region33: #{vit_extractor_forward.5} parent=11 // pred_check
        %p375 = pneg %p172
      $region34: #{vit_extractor_forward.5} parent=11 // pred_check_branch
        %377 = sbr.rel (%p375) target = $region36
      $region35: #{vit_extractor_forward.5} parent=11 // pred_region
        _
      $region36: #{vit_extractor_forward.5} parent=11 // pred_fallthru
        _
      // Predicated region
      $region37: #{vit_extractor_forward.5} parent=11 // pred_check
        %p378 = pneg %p193
      $region38: #{vit_extractor_forward.5} parent=11 // pred_check_branch
        %380 = sbr.rel (%p378) target = $region40
      $region39: #{vit_extractor_forward.5} parent=11 // pred_region
        _
      $region40: #{vit_extractor_forward.5} parent=11 // pred_fallthru
        _
      // Predicated region
      $region41: #{vit_extractor_forward.5} parent=11 // pred_check
        %p381 = pneg %p214
      $region42: #{vit_extractor_forward.5} parent=11 // pred_check_branch
        %383 = sbr.rel (%p381) target = $region44
      $region43: #{vit_extractor_forward.5} parent=11 // pred_region
        _
      $region44: #{vit_extractor_forward.5} parent=11 // pred_fallthru
        _
      // Predicated region
      $region45: #{vit_extractor_forward.5} parent=11 // pred_check
        %p384 = pneg %p235
      $region46: #{vit_extractor_forward.5} parent=11 // pred_check_branch
        %386 = sbr.rel (%p384) target = $region48
      $region47: #{vit_extractor_forward.5} parent=11 // pred_region
        _
      $region48: #{vit_extractor_forward.5} parent=11 // pred_fallthru
        _
      // Predicated region
      $region49: #{vit_extractor_forward.5} parent=11 // pred_check
        %p387 = pneg %p256
      $region50: #{vit_extractor_forward.5} parent=11 // pred_check_branch
        %389 = sbr.rel (%p387) target = $region52
      $region51: #{vit_extractor_forward.5} parent=11 // pred_region
        _
      $region52: #{vit_extractor_forward.5} parent=11 // pred_fallthru
        _
      // Predicated region
      $region53: #{vit_extractor_forward.5} parent=11 // pred_check
        %p390 = pneg %p277
      $region54: #{vit_extractor_forward.5} parent=11 // pred_check_branch
        %392 = sbr.rel (%p390) target = $region56
      $region55: #{vit_extractor_forward.5} parent=11 // pred_region
        _
      $region56: #{vit_extractor_forward.5} parent=11 // pred_fallthru
        _
      // Predicated region
      $region57: #{vit_extractor_forward.5} parent=11 // pred_check
        %p393 = pneg %p298
      $region58: #{vit_extractor_forward.5} parent=11 // pred_check_branch
        %395 = sbr.rel (%p393) target = $region60
      $region59: #{vit_extractor_forward.5} parent=11 // pred_region
        _
      $region60: #{vit_extractor_forward.5} parent=11 // pred_fallthru
        _
      // Predicated region
      $region61: #{vit_extractor_forward.5} parent=11 // pred_check
        %p396 = pneg %p319
      $region62: #{vit_extractor_forward.5} parent=11 // pred_check_branch
        %398 = sbr.rel (%p396) target = $region64
      $region63: #{vit_extractor_forward.5} parent=11 // pred_region
        _
      $region64: #{vit_extractor_forward.5} parent=11 // pred_fallthru
        _
    $region12: #{vit_extractor_forward.5} parent=5 // pred_fallthru
      _
    %p399 = scmp.lt.s32.totalorder %s20, 2
    // Predicated region
    $region65: #{vit_extractor_forward.5} parent=5 // pred_check
      %p400 = pneg %p399
    $region66: #{vit_extractor_forward.5} parent=5 // pred_check_branch
      %402 = sbr.rel (%p400) target = $region68
    $region67: #{vit_extractor_forward.5} parent=5 // pred_region
      // Predicated region
      $region69: #{vit_extractor_forward.5} parent=67 // pred_check
        %p403 = pneg %p40
      $region70: #{vit_extractor_forward.5} parent=67 // pred_check_branch
        %405 = sbr.rel (%p403) target = $region72
      $region71: #{vit_extractor_forward.5} parent=67 // pred_region
        %p406 = scmp.lt.s32.totalorder %s20, 1
        %s407 = scalar_select %p406, %s20, 1
        %s408 = smul.addr %s407, 2
        %s409 = smul.addr %s408, 8
        %s410 = scalar_lea.vmem %s0, %s409
      $region72: #{vit_extractor_forward.5} parent=67 // pred_fallthru
        _
    $region68: #{vit_extractor_forward.5} parent=5 // pred_fallthru
      _
    %p411 = scmp.le.s32.totalorder 1, %s20
    %p412 = scmp.lt.s32.totalorder %s20, 3
    %p413 = pnand %p411, %p412
    %p414 = pneg %p413
    // Predicated region
    $region73: #{vit_extractor_forward.5} parent=5 // pred_check
      _
    $region74: #{vit_extractor_forward.5} parent=5 // pred_check_branch
      %416 = sbr.rel (%p413) target = $region76
    $region75: #{vit_extractor_forward.5} parent=5 // pred_region
      %s417 = ssub.s32 %s20, 1
      %p418 = scmp.lt.s32.totalorder %s25, 1
      %s419 = scalar_select %p418, %s25, 1
      %s420 = smul.addr %s419, 2
      %s421 = smul.addr %s420, 8
      %s422 = scalar_lea.vmem %s0, %s421
      %p423 = pneg %p46
      %p424 = pneg %p43
      %p425 = pneg %p67
      %p426 = pneg %p64
      %p427 = pneg %p88
      %p428 = pneg %p85
      %p429 = pneg %p109
      %p430 = pneg %p106
      %p431 = pneg %p130
      %p432 = pneg %p127
      %p433 = pneg %p151
      %p434 = pneg %p148
      %p435 = pneg %p172
      %p436 = pneg %p169
      %p437 = pneg %p193
      %p438 = pneg %p190
      %p439 = pneg %p214
      %p440 = pneg %p211
      %p441 = pneg %p235
      %p442 = pneg %p232
      %p443 = pneg %p256
      %p444 = pneg %p253
      %p445 = pneg %p277
      %p446 = pneg %p274
      %p447 = pneg %p298
      %p448 = pneg %p295
      %p449 = pneg %p319
      %p450 = pneg %p316
      %p451 = pneg %p345
      %p452 = pneg %p342
      %p453 = scmp.lt.s32.totalorder %s25, 1
      %s454 = scalar_select %p453, %s25, 1
      %s455 = smul.addr %s454, 2
      %s456 = smul.addr %s455, 8
      %s457 = scalar_lea.vmem %s14, %s456
      %p458 = scmp.lt.s32.totalorder %s25, 1
      %s459 = scalar_select %p458, %s25, 1
      %s460 = smul.addr %s459, 2
      %s461 = smul.addr %s460, 8
      %s462 = scalar_lea.vmem %s0, %s461
      %p463 = scmp.lt.s32.totalorder %s25, 1
      %s464 = scalar_select %p463, %s25, 1
      %s465 = smul.addr %s464, 2
      %s466 = smul.addr %s465, 8
      %s467 = scalar_lea.vmem %s14, %s466
      %v468 = vld [vmem:[%s462] sm:$0xff]
      %v469 = vld [vmem:[%s462 + $0x8] sm:$0xff]
      %v470 = vlaneseq
      %v471 = vand.u32 %v470, 127
      %vm472 = vcmp.lt.s32.totalorder %v471, 5
      %v473 = vld [vmem:[%s1] sm:$0x3]
      %v474 = vld [vmem:[%s2] sm:$0x3]
      %v475 = vadd.f32 %v468, %v469
      %476 = vadd.xlane.f32.xlu0 %v475
      %v477 = vpop.xlane.xlu0 %476
      %v478 = vrcp.pop 256.0
      %v479 = vmul.f32 %v477, %v478
      %v480 = vsub.f32 %v468, %v479
      %v481 = vsub.f32 %v469, %v479
      %v482 = vmul.f32 %v480, %v480
      %v483 = vmul.f32 %v481, %v481
      %v484 = vadd.f32 %v482, %v483
      %485 = vadd.xlane.f32.xlu0 %v484
      %v486 = vpop.xlane.xlu0 %485
      %v487 = vmul.f32 %v486, %v478
      %v488 = vadd.f32 %v487, 1e-05
      %v489 = vrsqrt.pop %v488
      %v490 = vmul.f32 %v480, %v489
      %v491 = vmul.f32 %v481, %v489
      %v493 = vlaneseq
      %v494 = vshrl.u32 %v493, 7
      %v495 = vsub.s32 0, %v494
      %v496 = vrot.slane %v473, %v495
      %v497 = vlaneseq
      %v498 = vshrl.u32 %v497, 7
      %v499 = vsub.s32 1, %v498
      %v500 = vrot.slane %v473, %v499
      %v503 = vmul.f32 %v490, %v496
      %v504 = vmul.f32 %v491, %v500
      %v506 = vlaneseq
      %v507 = vshrl.u32 %v506, 7
      %v508 = vsub.s32 0, %v507
      %v509 = vrot.slane %v474, %v508
      %v510 = vlaneseq
      %v511 = vshrl.u32 %v510, 7
      %v512 = vsub.s32 1, %v511
      %v513 = vrot.slane %v474, %v512
      %v516 = vadd.f32 %v503, %v509
      %v517 = vadd.f32 %v504, %v513
      %v518 = vld [vmem:[%s3] sm:$0xff]
      %v519 = vld [vmem:[%s3 + $0x8] sm:$0xff]
      %v520 = vld [vmem:[%s3 + $0x10] sm:$0xff]
      %v521 = vld [vmem:[%s3 + $0x18] sm:$0xff]
      %v522 = vld [vmem:[%s3 + $0x20] sm:$0xff]
      %v523 = vld [vmem:[%s3 + $0x28] sm:$0xff]
      %v524 = vld [vmem:[%s3 + $0x30] sm:$0xff]
      %v525 = vld [vmem:[%s3 + $0x38] sm:$0xff]
      %v526 = vld [vmem:[%s3 + $0x40] sm:$0xff]
      %v527 = vld [vmem:[%s3 + $0x48] sm:$0xff]
      %v528 = vld [vmem:[%s3 + $0x50] sm:$0xff]
      %v529 = vld [vmem:[%s3 + $0x58] sm:$0xff]
      %v530 = vld [vmem:[%s3 + $0x60] sm:$0xff]
      %v531 = vld [vmem:[%s3 + $0x68] sm:$0xff]
      %v532 = vld [vmem:[%s3 + $0x70] sm:$0xff]
      %v533 = vld [vmem:[%s3 + $0x78] sm:$0xff]
      %v534 = vld [vmem:[%s3 + $0x80] sm:$0xff]
      %v535 = vld [vmem:[%s3 + $0x88] sm:$0xff]
      %v536 = vld [vmem:[%s3 + $0x90] sm:$0xff]
      %v537 = vld [vmem:[%s3 + $0x98] sm:$0xff]
      %v538 = vld [vmem:[%s3 + $0xa0] sm:$0xff]
      %v539 = vld [vmem:[%s3 + $0xa8] sm:$0xff]
      %v540 = vld [vmem:[%s3 + $0xb0] sm:$0xff]
      %v541 = vld [vmem:[%s3 + $0xb8] sm:$0xff]
      %v542 = vld [vmem:[%s3 + $0xc0] sm:$0xff]
      %v543 = vld [vmem:[%s3 + $0xc8] sm:$0xff]
      %v544 = vld [vmem:[%s3 + $0xd0] sm:$0xff]
      %v545 = vld [vmem:[%s3 + $0xd8] sm:$0xff]
      %v546 = vld [vmem:[%s3 + $0xe0] sm:$0xff]
      %v547 = vld [vmem:[%s3 + $0xe8] sm:$0xff]
      %v548 = vld [vmem:[%s3 + $0xf0] sm:$0xff]
      %v549 = vld [vmem:[%s3 + $0xf8] sm:$0xff]
      %550 = vmatprep.subr.mxu0 0.0
      %551 = vmatpush1.msra.mxu0 %v533
      %552 = vmatprep.subr.mxu0 0.0
      %553 = vmatpush1.msra.mxu0 %v532
      %554 = vmatprep.subr.mxu0 0.0
      %555 = vmatpush1.msra.mxu0 %v531
      %556 = vmatprep.subr.mxu0 0.0
      %557 = vmatpush1.msra.mxu0 %v530
      %558 = vmatprep.subr.mxu0 0.0
      %559 = vmatpush1.msra.mxu0 %v529
      %560 = vmatprep.subr.mxu0 0.0
      %561 = vmatpush1.msra.mxu0 %v528
      %562 = vmatprep.subr.mxu0 0.0
      %563 = vmatpush1.msra.mxu0 %v527
      %564 = vmatprep.subr.mxu0 0.0
      %565 = vmatpush1.msra.mxu0 %v526
      %566 = vmatprep.subr.mxu0 0.0
      %567 = vmatpush1.msra.mxu0 %v525
      %568 = vmatprep.subr.mxu0 0.0
      %569 = vmatpush1.msra.mxu0 %v524
      %570 = vmatprep.subr.mxu0 0.0
      %571 = vmatpush1.msra.mxu0 %v523
      %572 = vmatprep.subr.mxu0 0.0
      %573 = vmatpush1.msra.mxu0 %v522
      %574 = vmatprep.subr.mxu0 0.0
      %575 = vmatpush1.msra.mxu0 %v521
      %576 = vmatprep.subr.mxu0 0.0
      %577 = vmatpush1.msra.mxu0 %v520
      %578 = vmatprep.subr.mxu0 0.0
      %579 = vmatpush1.msra.mxu0 %v519
      %580 = vmatprep.subr.mxu0 0.0
      %581 = vmatpush1.msra.mxu0 %v518
      %582 = vmatprep.subr.mxu0 0.0
      %583 = vmatpush2.msra.mxu0 %v549
      %584 = vmatprep.subr.mxu0 0.0
      %585 = vmatpush2.msra.mxu0 %v548
      %586 = vmatprep.subr.mxu0 0.0
      %587 = vmatpush2.msra.mxu0 %v547
      %588 = vmatprep.subr.mxu0 0.0
      %589 = vmatpush2.msra.mxu0 %v546
      %590 = vmatprep.subr.mxu0 0.0
      %591 = vmatpush2.msra.mxu0 %v545
      %592 = vmatprep.subr.mxu0 0.0
      %593 = vmatpush2.msra.mxu0 %v544
      %594 = vmatprep.subr.mxu0 0.0
      %595 = vmatpush2.msra.mxu0 %v543
      %596 = vmatprep.subr.mxu0 0.0
      %597 = vmatpush2.msra.mxu0 %v542
      %598 = vmatprep.subr.mxu0 0.0
      %599 = vmatpush2.msra.mxu0 %v541
      %600 = vmatprep.subr.mxu0 0.0
      %601 = vmatpush2.msra.mxu0 %v540
      %602 = vmatprep.subr.mxu0 0.0
      %603 = vmatpush2.msra.mxu0 %v539
      %604 = vmatprep.subr.mxu0 0.0
      %605 = vmatpush2.msra.mxu0 %v538
      %606 = vmatprep.subr.mxu0 0.0
      %607 = vmatpush2.msra.mxu0 %v537
      %608 = vmatprep.subr.mxu0 0.0
      %609 = vmatpush2.msra.mxu0 %v536
      %610 = vmatprep.subr.mxu0 0.0
      %611 = vmatpush2.msra.mxu0 %v535
      %612 = vmatprep.subr.mxu0 0.0
      %613 = vmatpush2.msra.mxu0 %v534
      %614 = vmatprep.mubr.f32.mxu0 %v517
      %615 = vmatmul.mubr.f32.gmra.mxu0 %v516
      %v616 = vpop.f32.mrf.mxu0
      %v617 = vadd.f32 0.0, %v616
      %v618 = vpop.f32.mrf.mxu0
      %619 = vdwg.mxu0
      %v620 = vld [vmem:[%s4] sm:$0xff]
      %v621 = vld [vmem:[%s4 + $0x8] sm:$0xff]
      %v622 = vld [vmem:[%s4 + $0x10] sm:$0xff]
      %v623 = vld [vmem:[%s4 + $0x18] sm:$0xff]
      %v624 = vld [vmem:[%s4 + $0x20] sm:$0xff]
      %v625 = vld [vmem:[%s4 + $0x28] sm:$0xff]
      %v626 = vld [vmem:[%s4 + $0x30] sm:$0xff]
      %v627 = vld [vmem:[%s4 + $0x38] sm:$0xff]
      %v628 = vld [vmem:[%s4 + $0x40] sm:$0xff]
      %v629 = vld [vmem:[%s4 + $0x48] sm:$0xff]
      %v630 = vld [vmem:[%s4 + $0x50] sm:$0xff]
      %v631 = vld [vmem:[%s4 + $0x58] sm:$0xff]
      %v632 = vld [vmem:[%s4 + $0x60] sm:$0xff]
      %v633 = vld [vmem:[%s4 + $0x68] sm:$0xff]
      %v634 = vld [vmem:[%s4 + $0x70] sm:$0xff]
      %v635 = vld [vmem:[%s4 + $0x78] sm:$0xff]
      %v636 = vld [vmem:[%s4 + $0x80] sm:$0xff]
      %v637 = vld [vmem:[%s4 + $0x88] sm:$0xff]
      %v638 = vld [vmem:[%s4 + $0x90] sm:$0xff]
      %v639 = vld [vmem:[%s4 + $0x98] sm:$0xff]
      %v640 = vld [vmem:[%s4 + $0xa0] sm:$0xff]
      %v641 = vld [vmem:[%s4 + $0xa8] sm:$0xff]
      %v642 = vld [vmem:[%s4 + $0xb0] sm:$0xff]
      %v643 = vld [vmem:[%s4 + $0xb8] sm:$0xff]
      %v644 = vld [vmem:[%s4 + $0xc0] sm:$0xff]
      %v645 = vld [vmem:[%s4 + $0xc8] sm:$0xff]
      %v646 = vld [vmem:[%s4 + $0xd0] sm:$0xff]
      %v647 = vld [vmem:[%s4 + $0xd8] sm:$0xff]
      %v648 = vld [vmem:[%s4 + $0xe0] sm:$0xff]
      %v649 = vld [vmem:[%s4 + $0xe8] sm:$0xff]
      %v650 = vld [vmem:[%s4 + $0xf0] sm:$0xff]
      %v651 = vld [vmem:[%s4 + $0xf8] sm:$0xff]
      %652 = vmatprep.subr.mxu0 0.0
      %653 = vmatpush1.msra.mxu0 %v635
      %654 = vmatprep.subr.mxu0 0.0
      %655 = vmatpush1.msra.mxu0 %v634
      %656 = vmatprep.subr.mxu0 0.0
      %657 = vmatpush1.msra.mxu0 %v633
      %658 = vmatprep.subr.mxu0 0.0
      %659 = vmatpush1.msra.mxu0 %v632
      %660 = vmatprep.subr.mxu0 0.0
      %661 = vmatpush1.msra.mxu0 %v631
      %662 = vmatprep.subr.mxu0 0.0
      %663 = vmatpush1.msra.mxu0 %v630
      %664 = vmatprep.subr.mxu0 0.0
      %665 = vmatpush1.msra.mxu0 %v629
      %666 = vmatprep.subr.mxu0 0.0
      %667 = vmatpush1.msra.mxu0 %v628
      %668 = vmatprep.subr.mxu0 0.0
      %669 = vmatpush1.msra.mxu0 %v627
      %670 = vmatprep.subr.mxu0 0.0
      %671 = vmatpush1.msra.mxu0 %v626
      %672 = vmatprep.subr.mxu0 0.0
      %673 = vmatpush1.msra.mxu0 %v625
      %674 = vmatprep.subr.mxu0 0.0
      %675 = vmatpush1.msra.mxu0 %v624
      %676 = vmatprep.subr.mxu0 0.0
      %677 = vmatpush1.msra.mxu0 %v623
      %678 = vmatprep.subr.mxu0 0.0
      %679 = vmatpush1.msra.mxu0 %v622
      %680 = vmatprep.subr.mxu0 0.0
      %681 = vmatpush1.msra.mxu0 %v621
      %682 = vmatprep.subr.mxu0 0.0
      %683 = vmatpush1.msra.mxu0 %v620
      %684 = vmatprep.subr.mxu0 0.0
      %685 = vmatpush2.msra.mxu0 %v651
      %686 = vmatprep.subr.mxu0 0.0
      %687 = vmatpush2.msra.mxu0 %v650
      %688 = vmatprep.subr.mxu0 0.0
      %689 = vmatpush2.msra.mxu0 %v649
      %690 = vmatprep.subr.mxu0 0.0
      %691 = vmatpush2.msra.mxu0 %v648
      %692 = vmatprep.subr.mxu0 0.0
      %693 = vmatpush2.msra.mxu0 %v647
      %694 = vmatprep.subr.mxu0 0.0
      %695 = vmatpush2.msra.mxu0 %v646
      %696 = vmatprep.subr.mxu0 0.0
      %697 = vmatpush2.msra.mxu0 %v645
      %698 = vmatprep.subr.mxu0 0.0
      %699 = vmatpush2.msra.mxu0 %v644
      %700 = vmatprep.subr.mxu0 0.0
      %701 = vmatpush2.msra.mxu0 %v643
      %702 = vmatprep.subr.mxu0 0.0
      %703 = vmatpush2.msra.mxu0 %v642
      %704 = vmatprep.subr.mxu0 0.0
      %705 = vmatpush2.msra.mxu0 %v641
      %706 = vmatprep.subr.mxu0 0.0
      %707 = vmatpush2.msra.mxu0 %v640
      %708 = vmatprep.subr.mxu0 0.0
      %709 = vmatpush2.msra.mxu0 %v639
      %710 = vmatprep.subr.mxu0 0.0
      %711 = vmatpush2.msra.mxu0 %v638
      %712 = vmatprep.subr.mxu0 0.0
      %713 = vmatpush2.msra.mxu0 %v637
      %714 = vmatprep.subr.mxu0 0.0
      %715 = vmatpush2.msra.mxu0 %v636
      %716 = vmatprep.mubr.f32.mxu0 %v517
      %717 = vmatmul.mubr.f32.gmra.mxu0 %v516
      %v718 = vpop.f32.mrf.mxu0
      %v719 = vadd.f32 0.0, %v718
      %v720 = vpop.f32.mrf.mxu0
      %721 = vdwg.mxu0
      %v722 = vld [vmem:[%s5] sm:$0xff]
      %v723 = vld [vmem:[%s5 + $0x8] sm:$0xff]
      %v724 = vld [vmem:[%s5 + $0x10] sm:$0xff]
      %v725 = vld [vmem:[%s5 + $0x18] sm:$0xff]
      %v726 = vld [vmem:[%s5 + $0x20] sm:$0xff]
      %v727 = vld [vmem:[%s5 + $0x28] sm:$0xff]
      %v728 = vld [vmem:[%s5 + $0x30] sm:$0xff]
      %v729 = vld [vmem:[%s5 + $0x38] sm:$0xff]
      %v730 = vld [vmem:[%s5 + $0x40] sm:$0xff]
      %v731 = vld [vmem:[%s5 + $0x48] sm:$0xff]
      %v732 = vld [vmem:[%s5 + $0x50] sm:$0xff]
      %v733 = vld [vmem:[%s5 + $0x58] sm:$0xff]
      %v734 = vld [vmem:[%s5 + $0x60] sm:$0xff]
      %v735 = vld [vmem:[%s5 + $0x68] sm:$0xff]
      %v736 = vld [vmem:[%s5 + $0x70] sm:$0xff]
      %v737 = vld [vmem:[%s5 + $0x78] sm:$0xff]
      %v738 = vld [vmem:[%s5 + $0x80] sm:$0xff]
      %v739 = vld [vmem:[%s5 + $0x88] sm:$0xff]
      %v740 = vld [vmem:[%s5 + $0x90] sm:$0xff]
      %v741 = vld [vmem:[%s5 + $0x98] sm:$0xff]
      %v742 = vld [vmem:[%s5 + $0xa0] sm:$0xff]
      %v743 = vld [vmem:[%s5 + $0xa8] sm:$0xff]
      %v744 = vld [vmem:[%s5 + $0xb0] sm:$0xff]
      %v745 = vld [vmem:[%s5 + $0xb8] sm:$0xff]
      %v746 = vld [vmem:[%s5 + $0xc0] sm:$0xff]
      %v747 = vld [vmem:[%s5 + $0xc8] sm:$0xff]
      %v748 = vld [vmem:[%s5 + $0xd0] sm:$0xff]
      %v749 = vld [vmem:[%s5 + $0xd8] sm:$0xff]
      %v750 = vld [vmem:[%s5 + $0xe0] sm:$0xff]
      %v751 = vld [vmem:[%s5 + $0xe8] sm:$0xff]
      %v752 = vld [vmem:[%s5 + $0xf0] sm:$0xff]
      %v753 = vld [vmem:[%s5 + $0xf8] sm:$0xff]
      %754 = vmatprep.subr.mxu0 0.0
      %755 = vmatpush1.msra.mxu0 %v737
      %756 = vmatprep.subr.mxu0 0.0
      %757 = vmatpush1.msra.mxu0 %v736
      %758 = vmatprep.subr.mxu0 0.0
      %759 = vmatpush1.msra.mxu0 %v735
      %760 = vmatprep.subr.mxu0 0.0
      %761 = vmatpush1.msra.mxu0 %v734
      %762 = vmatprep.subr.mxu0 0.0
      %763 = vmatpush1.msra.mxu0 %v733
      %764 = vmatprep.subr.mxu0 0.0
      %765 = vmatpush1.msra.mxu0 %v732
      %766 = vmatprep.subr.mxu0 0.0
      %767 = vmatpush1.msra.mxu0 %v731
      %768 = vmatprep.subr.mxu0 0.0
      %769 = vmatpush1.msra.mxu0 %v730
      %770 = vmatprep.subr.mxu0 0.0
      %771 = vmatpush1.msra.mxu0 %v729
      %772 = vmatprep.subr.mxu0 0.0
      %773 = vmatpush1.msra.mxu0 %v728
      %774 = vmatprep.subr.mxu0 0.0
      %775 = vmatpush1.msra.mxu0 %v727
      %776 = vmatprep.subr.mxu0 0.0
      %777 = vmatpush1.msra.mxu0 %v726
      %778 = vmatprep.subr.mxu0 0.0
      %779 = vmatpush1.msra.mxu0 %v725
      %780 = vmatprep.subr.mxu0 0.0
      %781 = vmatpush1.msra.mxu0 %v724
      %782 = vmatprep.subr.mxu0 0.0
      %783 = vmatpush1.msra.mxu0 %v723
      %784 = vmatprep.subr.mxu0 0.0
      %785 = vmatpush1.msra.mxu0 %v722
      %786 = vmatprep.subr.mxu0 0.0
      %787 = vmatpush2.msra.mxu0 %v753
      %788 = vmatprep.subr.mxu0 0.0
      %789 = vmatpush2.msra.mxu0 %v752
      %790 = vmatprep.subr.mxu0 0.0
      %791 = vmatpush2.msra.mxu0 %v751
      %792 = vmatprep.subr.mxu0 0.0
      %793 = vmatpush2.msra.mxu0 %v750
      %794 = vmatprep.subr.mxu0 0.0
      %795 = vmatpush2.msra.mxu0 %v749
      %796 = vmatprep.subr.mxu0 0.0
      %797 = vmatpush2.msra.mxu0 %v748
      %798 = vmatprep.subr.mxu0 0.0
      %799 = vmatpush2.msra.mxu0 %v747
      %800 = vmatprep.subr.mxu0 0.0
      %801 = vmatpush2.msra.mxu0 %v746
      %802 = vmatprep.subr.mxu0 0.0
      %803 = vmatpush2.msra.mxu0 %v745
      %804 = vmatprep.subr.mxu0 0.0
      %805 = vmatpush2.msra.mxu0 %v744
      %806 = vmatprep.subr.mxu0 0.0
      %807 = vmatpush2.msra.mxu0 %v743
      %808 = vmatprep.subr.mxu0 0.0
      %809 = vmatpush2.msra.mxu0 %v742
      %810 = vmatprep.subr.mxu0 0.0
      %811 = vmatpush2.msra.mxu0 %v741
      %812 = vmatprep.subr.mxu0 0.0
      %813 = vmatpush2.msra.mxu0 %v740
      %814 = vmatprep.subr.mxu0 0.0
      %815 = vmatpush2.msra.mxu0 %v739
      %816 = vmatprep.subr.mxu0 0.0
      %817 = vmatpush2.msra.mxu0 %v738
      %818 = vmatprep.mubr.f32.mxu0 %v517
      %819 = vmatmul.mubr.f32.gmra.mxu0 %v516
      %v820 = vpop.f32.mrf.mxu0
      %v821 = vadd.f32 0.0, %v820
      %v822 = vpop.f32.mrf.mxu0
      %823 = vdwg.mxu0
      %vm824 = vcmask 523264
      %v826 = vsel %vm824, %v617, 0
      %v829 = vsel %vm824, %v719, 0
      %831 = vmatprep.subr.mxu0 0.0
      %832 = vmatpush1.xpose.msra.mxu0 0.0
      %833 = vmatprep.subr.mxu0 0.0
      %834 = vmatpush1.xpose.msra.mxu0 0.0
      %835 = vmatprep.subr.mxu0 0.0
      %836 = vmatpush1.xpose.msra.mxu0 0.0
      %837 = vmatprep.subr.mxu0 0.0
      %838 = vmatpush1.xpose.msra.mxu0 0.0
      %839 = vmatprep.subr.mxu0 0.0
      %840 = vmatpush1.xpose.msra.mxu0 0.0
      %841 = vmatprep.subr.mxu0 0.0
      %842 = vmatpush1.xpose.msra.mxu0 0.0
      %843 = vmatprep.subr.mxu0 0.0
      %844 = vmatpush1.xpose.msra.mxu0 0.0
      %845 = vmatprep.subr.mxu0 0.0
      %846 = vmatpush1.xpose.msra.mxu0 0.0
      %847 = vmatprep.subr.mxu0 0.0
      %848 = vmatpush1.xpose.msra.mxu0 0.0
      %849 = vmatprep.subr.mxu0 0.0
      %850 = vmatpush1.xpose.msra.mxu0 0.0
      %851 = vmatprep.subr.mxu0 0.0
      %852 = vmatpush1.xpose.msra.mxu0 0.0
      %853 = vmatprep.subr.mxu0 0.0
      %854 = vmatpush1.xpose.msra.mxu0 0.0
      %855 = vmatprep.subr.mxu0 0.0
      %856 = vmatpush1.xpose.msra.mxu0 0.0
      %857 = vmatprep.subr.mxu0 0.0
      %858 = vmatpush1.xpose.msra.mxu0 0.0
      %859 = vmatprep.subr.mxu0 0.0
      %860 = vmatpush1.xpose.msra.mxu0 0.0
      %861 = vmatprep.subr.mxu0 0.0
      %862 = vmatpush1.xpose.msra.mxu0 %v829
      %863 = vmatprep.subr.mxu0 0.0
      %864 = vmatpush2.xpose.msra.mxu0 0.0
      %865 = vmatprep.subr.mxu0 0.0
      %866 = vmatpush2.xpose.msra.mxu0 0.0
      %867 = vmatprep.subr.mxu0 0.0
      %868 = vmatpush2.xpose.msra.mxu0 0.0
      %869 = vmatprep.subr.mxu0 0.0
      %870 = vmatpush2.xpose.msra.mxu0 0.0
      %871 = vmatprep.subr.mxu0 0.0
      %872 = vmatpush2.xpose.msra.mxu0 0.0
      %873 = vmatprep.subr.mxu0 0.0
      %874 = vmatpush2.xpose.msra.mxu0 0.0
      %875 = vmatprep.subr.mxu0 0.0
      %876 = vmatpush2.xpose.msra.mxu0 0.0
      %877 = vmatprep.subr.mxu0 0.0
      %878 = vmatpush2.xpose.msra.mxu0 0.0
      %879 = vmatprep.subr.mxu0 0.0
      %880 = vmatpush2.xpose.msra.mxu0 0.0
      %881 = vmatprep.subr.mxu0 0.0
      %882 = vmatpush2.xpose.msra.mxu0 0.0
      %883 = vmatprep.subr.mxu0 0.0
      %884 = vmatpush2.xpose.msra.mxu0 0.0
      %885 = vmatprep.subr.mxu0 0.0
      %886 = vmatpush2.xpose.msra.mxu0 0.0
      %887 = vmatprep.subr.mxu0 0.0
      %888 = vmatpush2.xpose.msra.mxu0 0.0
      %889 = vmatprep.subr.mxu0 0.0
      %890 = vmatpush2.xpose.msra.mxu0 0.0
      %891 = vmatprep.subr.mxu0 0.0
      %892 = vmatpush2.xpose.msra.mxu0 0.0
      %893 = vmatprep.subr.mxu0 0.0
      %894 = vmatpush2.xpose.msra.mxu0 0.0
      %895 = vmatprep.mubr.f32.mxu0 0.0
      %896 = vmatmul.mubr.f32.gmra.mxu0 %v826
      %v897 = vpop.f32.mrf.mxu0
      %v898 = vadd.f32 0.0, %v897
      %v899 = vpop.f32.mrf.mxu0
      %900 = vdwg.mxu0
      %v901 = vmul.f32 %v898, 0.125
      %v902 = vsel %vm472, %v901, -1e+30
      %vm903 = vcmask 64512
      %v904 = vsel %vm903, %v902, -inf
      %905 = vmax.xlane.f32.xlu0 %v904
      %v906 = vpop.xlane.xlu0 %905
      %v907 = vsub.f32 %v902, %v906
      %v908 = vmul.f32 %v907, 1.442695
      %v909 = vpow.pop %v908
      %v910 = vsel %vm903, %v909, 0.0
      %911 = vadd.xlane.f32.xlu0 %v910
      %v912 = vpop.xlane.xlu0 %911
      %v913 = vrcp.pop %v912
      %v914 = vmul.f32 %v909, %v913
      %v916 = vsel %vm903, %v914, 0
      %918 = vmatprep.subr.mxu0 0.0
      %919 = vmatpush1.msra.mxu0 0.0
      %920 = vmatprep.subr.mxu0 0.0
      %921 = vmatpush1.msra.mxu0 0.0
      %922 = vmatprep.subr.mxu0 0.0
      %923 = vmatpush1.msra.mxu0 0.0
      %924 = vmatprep.subr.mxu0 0.0
      %925 = vmatpush1.msra.mxu0 0.0
      %926 = vmatprep.subr.mxu0 0.0
      %927 = vmatpush1.msra.mxu0 0.0
      %928 = vmatprep.subr.mxu0 0.0
      %929 = vmatpush1.msra.mxu0 0.0
      %930 = vmatprep.subr.mxu0 0.0
      %931 = vmatpush1.msra.mxu0 0.0
      %932 = vmatprep.subr.mxu0 0.0
      %933 = vmatpush1.msra.mxu0 0.0
      %934 = vmatprep.subr.mxu0 0.0
      %935 = vmatpush1.msra.mxu0 0.0
      %936 = vmatprep.subr.mxu0 0.0
      %937 = vmatpush1.msra.mxu0 0.0
      %938 = vmatprep.subr.mxu0 0.0
      %939 = vmatpush1.msra.mxu0 0.0
      %940 = vmatprep.subr.mxu0 0.0
      %941 = vmatpush1.msra.mxu0 0.0
      %942 = vmatprep.subr.mxu0 0.0
      %943 = vmatpush1.msra.mxu0 0.0
      %944 = vmatprep.subr.mxu0 0.0
      %945 = vmatpush1.msra.mxu0 0.0
      %946 = vmatprep.subr.mxu0 0.0
      %947 = vmatpush1.msra.mxu0 0.0
      %948 = vmatprep.subr.mxu0 0.0
      %949 = vmatpush1.msra.mxu0 %v821
      %950 = vmatprep.subr.mxu0 0.0
      %951 = vmatpush2.msra.mxu0 0.0
      %952 = vmatprep.subr.mxu0 0.0
      %953 = vmatpush2.msra.mxu0 0.0
      %954 = vmatprep.subr.mxu0 0.0
      %955 = vmatpush2.msra.mxu0 0.0
      %956 = vmatprep.subr.mxu0 0.0
      %957 = vmatpush2.msra.mxu0 0.0
      %958 = vmatprep.subr.mxu0 0.0
      %959 = vmatpush2.msra.mxu0 0.0
      %960 = vmatprep.subr.mxu0 0.0
      %961 = vmatpush2.msra.mxu0 0.0
      %962 = vmatprep.subr.mxu0 0.0
      %963 = vmatpush2.msra.mxu0 0.0
      %964 = vmatprep.subr.mxu0 0.0
      %965 = vmatpush2.msra.mxu0 0.0
      %966 = vmatprep.subr.mxu0 0.0
      %967 = vmatpush2.msra.mxu0 0.0
      %968 = vmatprep.subr.mxu0 0.0
      %969 = vmatpush2.msra.mxu0 0.0
      %970 = vmatprep.subr.mxu0 0.0
      %971 = vmatpush2.msra.mxu0 0.0
      %972 = vmatprep.subr.mxu0 0.0
      %973 = vmatpush2.msra.mxu0 0.0
      %974 = vmatprep.subr.mxu0 0.0
      %975 = vmatpush2.msra.mxu0 0.0
      %976 = vmatprep.subr.mxu0 0.0
      %977 = vmatpush2.msra.mxu0 0.0
      %978 = vmatprep.subr.mxu0 0.0
      %979 = vmatpush2.msra.mxu0 0.0
      %980 = vmatprep.subr.mxu0 0.0
      %981 = vmatpush2.msra.mxu0 0.0
      %982 = vmatprep.mubr.f32.mxu0 0.0
      %983 = vmatmul.mubr.f32.gmra.mxu0 %v916
      %v984 = vpop.f32.mrf.mxu0
      %v985 = vadd.f32 0.0, %v984
      %v986 = vpop.f32.mrf.mxu0
      %987 = vdwg.mxu0
      %v988 = vld [vmem:[%s6] sm:$0xff]
      %v989 = vld [vmem:[%s6 + $0x8] sm:$0xff]
      %v990 = vld [vmem:[%s6 + $0x10] sm:$0xff]
      %v991 = vld [vmem:[%s6 + $0x18] sm:$0xff]
      %v992 = vld [vmem:[%s6 + $0x20] sm:$0xff]
      %v993 = vld [vmem:[%s6 + $0x28] sm:$0xff]
      %v994 = vld [vmem:[%s6 + $0x30] sm:$0xff]
      %v995 = vld [vmem:[%s6 + $0x38] sm:$0xff]
      %v996 = vld [vmem:[%s6 + $0x40] sm:$0xff]
      %v997 = vld [vmem:[%s6 + $0x48] sm:$0xff]
      %v998 = vld [vmem:[%s6 + $0x50] sm:$0xff]
      %v999 = vld [vmem:[%s6 + $0x58] sm:$0xff]
      %v1000 = vld [vmem:[%s6 + $0x60] sm:$0xff]
      %v1001 = vld [vmem:[%s6 + $0x68] sm:$0xff]
      %v1002 = vld [vmem:[%s6 + $0x70] sm:$0xff]
      %v1003 = vld [vmem:[%s6 + $0x78] sm:$0xff]
      %s1004 = scalar_lea.vmem %s3, 256
      %v1005 = vld [vmem:[%s1004] sm:$0xff]
      %v1006 = vld [vmem:[%s1004 + $0x8] sm:$0xff]
      %v1007 = vld [vmem:[%s1004 + $0x10] sm:$0xff]
      %v1008 = vld [vmem:[%s1004 + $0x18] sm:$0xff]
      %v1009 = vld [vmem:[%s1004 + $0x20] sm:$0xff]
      %v1010 = vld [vmem:[%s1004 + $0x28] sm:$0xff]
      %v1011 = vld [vmem:[%s1004 + $0x30] sm:$0xff]
      %v1012 = vld [vmem:[%s1004 + $0x38] sm:$0xff]
      %v1013 = vld [vmem:[%s1004 + $0x40] sm:$0xff]
      %v1014 = vld [vmem:[%s1004 + $0x48] sm:$0xff]
      %v1015 = vld [vmem:[%s1004 + $0x50] sm:$0xff]
      %v1016 = vld [vmem:[%s1004 + $0x58] sm:$0xff]
      %v1017 = vld [vmem:[%s1004 + $0x60] sm:$0xff]
      %v1018 = vld [vmem:[%s1004 + $0x68] sm:$0xff]
      %v1019 = vld [vmem:[%s1004 + $0x70] sm:$0xff]
      %v1020 = vld [vmem:[%s1004 + $0x78] sm:$0xff]
      %v1021 = vld [vmem:[%s1004 + $0x80] sm:$0xff]
      %v1022 = vld [vmem:[%s1004 + $0x88] sm:$0xff]
      %v1023 = vld [vmem:[%s1004 + $0x90] sm:$0xff]
      %v1024 = vld [vmem:[%s1004 + $0x98] sm:$0xff]
      %v1025 = vld [vmem:[%s1004 + $0xa0] sm:$0xff]
      %v1026 = vld [vmem:[%s1004 + $0xa8] sm:$0xff]
      %v1027 = vld [vmem:[%s1004 + $0xb0] sm:$0xff]
      %v1028 = vld [vmem:[%s1004 + $0xb8] sm:$0xff]
      %v1029 = vld [vmem:[%s1004 + $0xc0] sm:$0xff]
      %v1030 = vld [vmem:[%s1004 + $0xc8] sm:$0xff]
      %v1031 = vld [vmem:[%s1004 + $0xd0] sm:$0xff]
      %v1032 = vld [vmem:[%s1004 + $0xd8] sm:$0xff]
      %v1033 = vld [vmem:[%s1004 + $0xe0] sm:$0xff]
      %v1034 = vld [vmem:[%s1004 + $0xe8] sm:$0xff]
      %v1035 = vld [vmem:[%s1004 + $0xf0] sm:$0xff]
      %v1036 = vld [vmem:[%s1004 + $0xf8] sm:$0xff]
      %1037 = vmatprep.subr.mxu0 0.0
      %1038 = vmatpush1.msra.mxu0 %v1020
      %1039 = vmatprep.subr.mxu0 0.0
      %1040 = vmatpush1.msra.mxu0 %v1019
      %1041 = vmatprep.subr.mxu0 0.0
      %1042 = vmatpush1.msra.mxu0 %v1018
      %1043 = vmatprep.subr.mxu0 0.0
      %1044 = vmatpush1.msra.mxu0 %v1017
      %1045 = vmatprep.subr.mxu0 0.0
      %1046 = vmatpush1.msra.mxu0 %v1016
      %1047 = vmatprep.subr.mxu0 0.0
      %1048 = vmatpush1.msra.mxu0 %v1015
      %1049 = vmatprep.subr.mxu0 0.0
      %1050 = vmatpush1.msra.mxu0 %v1014
      %1051 = vmatprep.subr.mxu0 0.0
      %1052 = vmatpush1.msra.mxu0 %v1013
      %1053 = vmatprep.subr.mxu0 0.0
      %1054 = vmatpush1.msra.mxu0 %v1012
      %1055 = vmatprep.subr.mxu0 0.0
      %1056 = vmatpush1.msra.mxu0 %v1011
      %1057 = vmatprep.subr.mxu0 0.0
      %1058 = vmatpush1.msra.mxu0 %v1010
      %1059 = vmatprep.subr.mxu0 0.0
      %1060 = vmatpush1.msra.mxu0 %v1009
      %1061 = vmatprep.subr.mxu0 0.0
      %1062 = vmatpush1.msra.mxu0 %v1008
      %1063 = vmatprep.subr.mxu0 0.0
      %1064 = vmatpush1.msra.mxu0 %v1007
      %1065 = vmatprep.subr.mxu0 0.0
      %1066 = vmatpush1.msra.mxu0 %v1006
      %1067 = vmatprep.subr.mxu0 0.0
      %1068 = vmatpush1.msra.mxu0 %v1005
      %1069 = vmatprep.subr.mxu0 0.0
      %1070 = vmatpush2.msra.mxu0 %v1036
      %1071 = vmatprep.subr.mxu0 0.0
      %1072 = vmatpush2.msra.mxu0 %v1035
      %1073 = vmatprep.subr.mxu0 0.0
      %1074 = vmatpush2.msra.mxu0 %v1034
      %1075 = vmatprep.subr.mxu0 0.0
      %1076 = vmatpush2.msra.mxu0 %v1033
      %1077 = vmatprep.subr.mxu0 0.0
      %1078 = vmatpush2.msra.mxu0 %v1032
      %1079 = vmatprep.subr.mxu0 0.0
      %1080 = vmatpush2.msra.mxu0 %v1031
      %1081 = vmatprep.subr.mxu0 0.0
      %1082 = vmatpush2.msra.mxu0 %v1030
      %1083 = vmatprep.subr.mxu0 0.0
      %1084 = vmatpush2.msra.mxu0 %v1029
      %1085 = vmatprep.subr.mxu0 0.0
      %1086 = vmatpush2.msra.mxu0 %v1028
      %1087 = vmatprep.subr.mxu0 0.0
      %1088 = vmatpush2.msra.mxu0 %v1027
      %1089 = vmatprep.subr.mxu0 0.0
      %1090 = vmatpush2.msra.mxu0 %v1026
      %1091 = vmatprep.subr.mxu0 0.0
      %1092 = vmatpush2.msra.mxu0 %v1025
      %1093 = vmatprep.subr.mxu0 0.0
      %1094 = vmatpush2.msra.mxu0 %v1024
      %1095 = vmatprep.subr.mxu0 0.0
      %1096 = vmatpush2.msra.mxu0 %v1023
      %1097 = vmatprep.subr.mxu0 0.0
      %1098 = vmatpush2.msra.mxu0 %v1022
      %1099 = vmatprep.subr.mxu0 0.0
      %1100 = vmatpush2.msra.mxu0 %v1021
      %1101 = vmatprep.mubr.f32.mxu0 %v517
      %1102 = vmatmul.mubr.f32.gmra.mxu0 %v516
      %v1103 = vpop.f32.mrf.mxu0
      %v1104 = vadd.f32 0.0, %v1103
      %v1105 = vpop.f32.mrf.mxu0
      %1106 = vdwg.mxu0
      %s1107 = scalar_lea.vmem %s4, 256
      %v1108 = vld [vmem:[%s1107] sm:$0xff]
      %v1109 = vld [vmem:[%s1107 + $0x8] sm:$0xff]
      %v1110 = vld [vmem:[%s1107 + $0x10] sm:$0xff]
      %v1111 = vld [vmem:[%s1107 + $0x18] sm:$0xff]
      %v1112 = vld [vmem:[%s1107 + $0x20] sm:$0xff]
      %v1113 = vld [vmem:[%s1107 + $0x28] sm:$0xff]
      %v1114 = vld [vmem:[%s1107 + $0x30] sm:$0xff]
      %v1115 = vld [vmem:[%s1107 + $0x38] sm:$0xff]
      %v1116 = vld [vmem:[%s1107 + $0x40] sm:$0xff]
      %v1117 = vld [vmem:[%s1107 + $0x48] sm:$0xff]
      %v1118 = vld [vmem:[%s1107 + $0x50] sm:$0xff]
      %v1119 = vld [vmem:[%s1107 + $0x58] sm:$0xff]
      %v1120 = vld [vmem:[%s1107 + $0x60] sm:$0xff]
      %v1121 = vld [vmem:[%s1107 + $0x68] sm:$0xff]
      %v1122 = vld [vmem:[%s1107 + $0x70] sm:$0xff]
      %v1123 = vld [vmem:[%s1107 + $0x78] sm:$0xff]
      %v1124 = vld [vmem:[%s1107 + $0x80] sm:$0xff]
      %v1125 = vld [vmem:[%s1107 + $0x88] sm:$0xff]
      %v1126 = vld [vmem:[%s1107 + $0x90] sm:$0xff]
      %v1127 = vld [vmem:[%s1107 + $0x98] sm:$0xff]
      %v1128 = vld [vmem:[%s1107 + $0xa0] sm:$0xff]
      %v1129 = vld [vmem:[%s1107 + $0xa8] sm:$0xff]
      %v1130 = vld [vmem:[%s1107 + $0xb0] sm:$0xff]
      %v1131 = vld [vmem:[%s1107 + $0xb8] sm:$0xff]
      %v1132 = vld [vmem:[%s1107 + $0xc0] sm:$0xff]
      %v1133 = vld [vmem:[%s1107 + $0xc8] sm:$0xff]
      %v1134 = vld [vmem:[%s1107 + $0xd0] sm:$0xff]
      %v1135 = vld [vmem:[%s1107 + $0xd8] sm:$0xff]
      %v1136 = vld [vmem:[%s1107 + $0xe0] sm:$0xff]
      %v1137 = vld [vmem:[%s1107 + $0xe8] sm:$0xff]
      %v1138 = vld [vmem:[%s1107 + $0xf0] sm:$0xff]
      %v1139 = vld [vmem:[%s1107 + $0xf8] sm:$0xff]
      %1140 = vmatprep.subr.mxu0 0.0
      %1141 = vmatpush1.msra.mxu0 %v1123
      %1142 = vmatprep.subr.mxu0 0.0
      %1143 = vmatpush1.msra.mxu0 %v1122
      %1144 = vmatprep.subr.mxu0 0.0
      %1145 = vmatpush1.msra.mxu0 %v1121
      %1146 = vmatprep.subr.mxu0 0.0
      %1147 = vmatpush1.msra.mxu0 %v1120
      %1148 = vmatprep.subr.mxu0 0.0
      %1149 = vmatpush1.msra.mxu0 %v1119
      %1150 = vmatprep.subr.mxu0 0.0
      %1151 = vmatpush1.msra.mxu0 %v1118
      %1152 = vmatprep.subr.mxu0 0.0
      %1153 = vmatpush1.msra.mxu0 %v1117
      %1154 = vmatprep.subr.mxu0 0.0
      %1155 = vmatpush1.msra.mxu0 %v1116
      %1156 = vmatprep.subr.mxu0 0.0
      %1157 = vmatpush1.msra.mxu0 %v1115
      %1158 = vmatprep.subr.mxu0 0.0
      %1159 = vmatpush1.msra.mxu0 %v1114
      %1160 = vmatprep.subr.mxu0 0.0
      %1161 = vmatpush1.msra.mxu0 %v1113
      %1162 = vmatprep.subr.mxu0 0.0
      %1163 = vmatpush1.msra.mxu0 %v1112
      %1164 = vmatprep.subr.mxu0 0.0
      %1165 = vmatpush1.msra.mxu0 %v1111
      %1166 = vmatprep.subr.mxu0 0.0
      %1167 = vmatpush1.msra.mxu0 %v1110
      %1168 = vmatprep.subr.mxu0 0.0
      %1169 = vmatpush1.msra.mxu0 %v1109
      %1170 = vmatprep.subr.mxu0 0.0
      %1171 = vmatpush1.msra.mxu0 %v1108
      %1172 = vmatprep.subr.mxu0 0.0
      %1173 = vmatpush2.msra.mxu0 %v1139
      %1174 = vmatprep.subr.mxu0 0.0
      %1175 = vmatpush2.msra.mxu0 %v1138
      %1176 = vmatprep.subr.mxu0 0.0
      %1177 = vmatpush2.msra.mxu0 %v1137
      %1178 = vmatprep.subr.mxu0 0.0
      %1179 = vmatpush2.msra.mxu0 %v1136
      %1180 = vmatprep.subr.mxu0 0.0
      %1181 = vmatpush2.msra.mxu0 %v1135
      %1182 = vmatprep.subr.mxu0 0.0
      %1183 = vmatpush2.msra.mxu0 %v1134
      %1184 = vmatprep.subr.mxu0 0.0
      %1185 = vmatpush2.msra.mxu0 %v1133
      %1186 = vmatprep.subr.mxu0 0.0
      %1187 = vmatpush2.msra.mxu0 %v1132
      %1188 = vmatprep.subr.mxu0 0.0
      %1189 = vmatpush2.msra.mxu0 %v1131
      %1190 = vmatprep.subr.mxu0 0.0
      %1191 = vmatpush2.msra.mxu0 %v1130
      %1192 = vmatprep.subr.mxu0 0.0
      %1193 = vmatpush2.msra.mxu0 %v1129
      %1194 = vmatprep.subr.mxu0 0.0
      %1195 = vmatpush2.msra.mxu0 %v1128
      %1196 = vmatprep.subr.mxu0 0.0
      %1197 = vmatpush2.msra.mxu0 %v1127
      %1198 = vmatprep.subr.mxu0 0.0
      %1199 = vmatpush2.msra.mxu0 %v1126
      %1200 = vmatprep.subr.mxu0 0.0
      %1201 = vmatpush2.msra.mxu0 %v1125
      %1202 = vmatprep.subr.mxu0 0.0
      %1203 = vmatpush2.msra.mxu0 %v1124
      %1204 = vmatprep.mubr.f32.mxu0 %v517
      %1205 = vmatmul.mubr.f32.gmra.mxu0 %v516
      %v1206 = vpop.f32.mrf.mxu0
      %v1207 = vadd.f32 0.0, %v1206
      %v1208 = vpop.f32.mrf.mxu0
      %1209 = vdwg.mxu0
      %s1210 = scalar_lea.vmem %s5, 256
      %v1211 = vld [vmem:[%s1210] sm:$0xff]
      %v1212 = vld [vmem:[%s1210 + $0x8] sm:$0xff]
      %v1213 = vld [vmem:[%s1210 + $0x10] sm:$0xff]
      %v1214 = vld [vmem:[%s1210 + $0x18] sm:$0xff]
      %v1215 = vld [vmem:[%s1210 + $0x20] sm:$0xff]
      %v1216 = vld [vmem:[%s1210 + $0x28] sm:$0xff]
      %v1217 = vld [vmem:[%s1210 + $0x30] sm:$0xff]
      %v1218 = vld [vmem:[%s1210 + $0x38] sm:$0xff]
      %v1219 = vld [vmem:[%s1210 + $0x40] sm:$0xff]
      %v1220 = vld [vmem:[%s1210 + $0x48] sm:$0xff]
      %v1221 = vld [vmem:[%s1210 + $0x50] sm:$0xff]
      %v1222 = vld [vmem:[%s1210 + $0x58] sm:$0xff]
      %v1223 = vld [vmem:[%s1210 + $0x60] sm:$0xff]
      %v1224 = vld [vmem:[%s1210 + $0x68] sm:$0xff]
      %v1225 = vld [vmem:[%s1210 + $0x70] sm:$0xff]
      %v1226 = vld [vmem:[%s1210 + $0x78] sm:$0xff]
      %v1227 = vld [vmem:[%s1210 + $0x80] sm:$0xff]
      %v1228 = vld [vmem:[%s1210 + $0x88] sm:$0xff]
      %v1229 = vld [vmem:[%s1210 + $0x90] sm:$0xff]
      %v1230 = vld [vmem:[%s1210 + $0x98] sm:$0xff]
      %v1231 = vld [vmem:[%s1210 + $0xa0] sm:$0xff]
      %v1232 = vld [vmem:[%s1210 + $0xa8] sm:$0xff]
      %v1233 = vld [vmem:[%s1210 + $0xb0] sm:$0xff]
      %v1234 = vld [vmem:[%s1210 + $0xb8] sm:$0xff]
      %v1235 = vld [vmem:[%s1210 + $0xc0] sm:$0xff]
      %v1236 = vld [vmem:[%s1210 + $0xc8] sm:$0xff]
      %v1237 = vld [vmem:[%s1210 + $0xd0] sm:$0xff]
      %v1238 = vld [vmem:[%s1210 + $0xd8] sm:$0xff]
      %v1239 = vld [vmem:[%s1210 + $0xe0] sm:$0xff]
      %v1240 = vld [vmem:[%s1210 + $0xe8] sm:$0xff]
      %v1241 = vld [vmem:[%s1210 + $0xf0] sm:$0xff]
      %v1242 = vld [vmem:[%s1210 + $0xf8] sm:$0xff]
      %1243 = vmatprep.subr.mxu0 0.0
      %1244 = vmatpush1.msra.mxu0 %v1226
      %1245 = vmatprep.subr.mxu0 0.0
      %1246 = vmatpush1.msra.mxu0 %v1225
      %1247 = vmatprep.subr.mxu0 0.0
      %1248 = vmatpush1.msra.mxu0 %v1224
      %1249 = vmatprep.subr.mxu0 0.0
      %1250 = vmatpush1.msra.mxu0 %v1223
      %1251 = vmatprep.subr.mxu0 0.0
      %1252 = vmatpush1.msra.mxu0 %v1222
      %1253 = vmatprep.subr.mxu0 0.0
      %1254 = vmatpush1.msra.mxu0 %v1221
      %1255 = vmatprep.subr.mxu0 0.0
      %1256 = vmatpush1.msra.mxu0 %v1220
      %1257 = vmatprep.subr.mxu0 0.0
      %1258 = vmatpush1.msra.mxu0 %v1219
      %1259 = vmatprep.subr.mxu0 0.0
      %1260 = vmatpush1.msra.mxu0 %v1218
      %1261 = vmatprep.subr.mxu0 0.0
      %1262 = vmatpush1.msra.mxu0 %v1217
      %1263 = vmatprep.subr.mxu0 0.0
      %1264 = vmatpush1.msra.mxu0 %v1216
      %1265 = vmatprep.subr.mxu0 0.0
      %1266 = vmatpush1.msra.mxu0 %v1215
      %1267 = vmatprep.subr.mxu0 0.0
      %1268 = vmatpush1.msra.mxu0 %v1214
      %1269 = vmatprep.subr.mxu0 0.0
      %1270 = vmatpush1.msra.mxu0 %v1213
      %1271 = vmatprep.subr.mxu0 0.0
      %1272 = vmatpush1.msra.mxu0 %v1212
      %1273 = vmatprep.subr.mxu0 0.0
      %1274 = vmatpush1.msra.mxu0 %v1211
      %1275 = vmatprep.subr.mxu0 0.0
      %1276 = vmatpush2.msra.mxu0 %v1242
      %1277 = vmatprep.subr.mxu0 0.0
      %1278 = vmatpush2.msra.mxu0 %v1241
      %1279 = vmatprep.subr.mxu0 0.0
      %1280 = vmatpush2.msra.mxu0 %v1240
      %1281 = vmatprep.subr.mxu0 0.0
      %1282 = vmatpush2.msra.mxu0 %v1239
      %1283 = vmatprep.subr.mxu0 0.0
      %1284 = vmatpush2.msra.mxu0 %v1238
      %1285 = vmatprep.subr.mxu0 0.0
      %1286 = vmatpush2.msra.mxu0 %v1237
      %1287 = vmatprep.subr.mxu0 0.0
      %1288 = vmatpush2.msra.mxu0 %v1236
      %1289 = vmatprep.subr.mxu0 0.0
      %1290 = vmatpush2.msra.mxu0 %v1235
      %1291 = vmatprep.subr.mxu0 0.0
      %1292 = vmatpush2.msra.mxu0 %v1234
      %1293 = vmatprep.subr.mxu0 0.0
      %1294 = vmatpush2.msra.mxu0 %v1233
      %1295 = vmatprep.subr.mxu0 0.0
      %1296 = vmatpush2.msra.mxu0 %v1232
      %1297 = vmatprep.subr.mxu0 0.0
      %1298 = vmatpush2.msra.mxu0 %v1231
      %1299 = vmatprep.subr.mxu0 0.0
      %1300 = vmatpush2.msra.mxu0 %v1230
      %1301 = vmatprep.subr.mxu0 0.0
      %1302 = vmatpush2.msra.mxu0 %v1229
      %1303 = vmatprep.subr.mxu0 0.0
      %1304 = vmatpush2.msra.mxu0 %v1228
      %1305 = vmatprep.subr.mxu0 0.0
      %1306 = vmatpush2.msra.mxu0 %v1227
      %1307 = vmatprep.mubr.f32.mxu0 %v517
      %1308 = vmatmul.mubr.f32.gmra.mxu0 %v516
      %v1309 = vpop.f32.mrf.mxu0
      %v1310 = vadd.f32 0.0, %v1309
      %v1311 = vpop.f32.mrf.mxu0
      %1312 = vdwg.mxu0
      %v1314 = vsel %vm824, %v1104, 0
      %v1317 = vsel %vm824, %v1207, 0
      %1319 = vmatprep.subr.mxu0 0.0
      %1320 = vmatpush1.xpose.msra.mxu0 0.0
      %1321 = vmatprep.subr.mxu0 0.0
      %1322 = vmatpush1.xpose.msra.mxu0 0.0
      %1323 = vmatprep.subr.mxu0 0.0
      %1324 = vmatpush1.xpose.msra.mxu0 0.0
      %1325 = vmatprep.subr.mxu0 0.0
      %1326 = vmatpush1.xpose.msra.mxu0 0.0
      %1327 = vmatprep.subr.mxu0 0.0
      %1328 = vmatpush1.xpose.msra.mxu0 0.0
      %1329 = vmatprep.subr.mxu0 0.0
      %1330 = vmatpush1.xpose.msra.mxu0 0.0
      %1331 = vmatprep.subr.mxu0 0.0
      %1332 = vmatpush1.xpose.msra.mxu0 0.0
      %1333 = vmatprep.subr.mxu0 0.0
      %1334 = vmatpush1.xpose.msra.mxu0 0.0
      %1335 = vmatprep.subr.mxu0 0.0
      %1336 = vmatpush1.xpose.msra.mxu0 0.0
      %1337 = vmatprep.subr.mxu0 0.0
      %1338 = vmatpush1.xpose.msra.mxu0 0.0
      %1339 = vmatprep.subr.mxu0 0.0
      %1340 = vmatpush1.xpose.msra.mxu0 0.0
      %1341 = vmatprep.subr.mxu0 0.0
      %1342 = vmatpush1.xpose.msra.mxu0 0.0
      %1343 = vmatprep.subr.mxu0 0.0
      %1344 = vmatpush1.xpose.msra.mxu0 0.0
      %1345 = vmatprep.subr.mxu0 0.0
      %1346 = vmatpush1.xpose.msra.mxu0 0.0
      %1347 = vmatprep.subr.mxu0 0.0
      %1348 = vmatpush1.xpose.msra.mxu0 0.0
      %1349 = vmatprep.subr.mxu0 0.0
      %1350 = vmatpush1.xpose.msra.mxu0 %v1317
      %1351 = vmatprep.subr.mxu0 0.0
      %1352 = vmatpush2.xpose.msra.mxu0 0.0
      %1353 = vmatprep.subr.mxu0 0.0
      %1354 = vmatpush2.xpose.msra.mxu0 0.0
      %1355 = vmatprep.subr.mxu0 0.0
      %1356 = vmatpush2.xpose.msra.mxu0 0.0
      %1357 = vmatprep.subr.mxu0 0.0
      %1358 = vmatpush2.xpose.msra.mxu0 0.0
      %1359 = vmatprep.subr.mxu0 0.0
      %1360 = vmatpush2.xpose.msra.mxu0 0.0
      %1361 = vmatprep.subr.mxu0 0.0
      %1362 = vmatpush2.xpose.msra.mxu0 0.0
      %1363 = vmatprep.subr.mxu0 0.0
      %1364 = vmatpush2.xpose.msra.mxu0 0.0
      %1365 = vmatprep.subr.mxu0 0.0
      %1366 = vmatpush2.xpose.msra.mxu0 0.0
      %1367 = vmatprep.subr.mxu0 0.0
      %1368 = vmatpush2.xpose.msra.mxu0 0.0
      %1369 = vmatprep.subr.mxu0 0.0
      %1370 = vmatpush2.xpose.msra.mxu0 0.0
      %1371 = vmatprep.subr.mxu0 0.0
      %1372 = vmatpush2.xpose.msra.mxu0 0.0
      %1373 = vmatprep.subr.mxu0 0.0
      %1374 = vmatpush2.xpose.msra.mxu0 0.0
      %1375 = vmatprep.subr.mxu0 0.0
      %1376 = vmatpush2.xpose.msra.mxu0 0.0
      %1377 = vmatprep.subr.mxu0 0.0
      %1378 = vmatpush2.xpose.msra.mxu0 0.0
      %1379 = vmatprep.subr.mxu0 0.0
      %1380 = vmatpush2.xpose.msra.mxu0 0.0
      %1381 = vmatprep.subr.mxu0 0.0
      %1382 = vmatpush2.xpose.msra.mxu0 0.0
      %1383 = vmatprep.mubr.f32.mxu0 0.0
      %1384 = vmatmul.mubr.f32.gmra.mxu0 %v1314
      %v1385 = vpop.f32.mrf.mxu0
      %v1386 = vadd.f32 0.0, %v1385
      %v1387 = vpop.f32.mrf.mxu0
      %1388 = vdwg.mxu0
      %v1389 = vmul.f32 %v1386, 0.125
      %v1390 = vsel %vm472, %v1389, -1e+30
      %v1391 = vsel %vm903, %v1390, -inf
      %1392 = vmax.xlane.f32.xlu0 %v1391
      %v1393 = vpop.xlane.xlu0 %1392
      %v1394 = vsub.f32 %v1390, %v1393
      %v1395 = vmul.f32 %v1394, 1.442695
      %v1396 = vpow.pop %v1395
      %v1397 = vsel %vm903, %v1396, 0.0
      %1398 = vadd.xlane.f32.xlu0 %v1397
      %v1399 = vpop.xlane.xlu0 %1398
      %v1400 = vrcp.pop %v1399
      %v1401 = vmul.f32 %v1396, %v1400
      %v1403 = vsel %vm903, %v1401, 0
      %1405 = vmatprep.subr.mxu0 0.0
      %1406 = vmatpush1.msra.mxu0 0.0
      %1407 = vmatprep.subr.mxu0 0.0
      %1408 = vmatpush1.msra.mxu0 0.0
      %1409 = vmatprep.subr.mxu0 0.0
      %1410 = vmatpush1.msra.mxu0 0.0
      %1411 = vmatprep.subr.mxu0 0.0
      %1412 = vmatpush1.msra.mxu0 0.0
      %1413 = vmatprep.subr.mxu0 0.0
      %1414 = vmatpush1.msra.mxu0 0.0
      %1415 = vmatprep.subr.mxu0 0.0
      %1416 = vmatpush1.msra.mxu0 0.0
      %1417 = vmatprep.subr.mxu0 0.0
      %1418 = vmatpush1.msra.mxu0 0.0
      %1419 = vmatprep.subr.mxu0 0.0
      %1420 = vmatpush1.msra.mxu0 0.0
      %1421 = vmatprep.subr.mxu0 0.0
      %1422 = vmatpush1.msra.mxu0 0.0
      %1423 = vmatprep.subr.mxu0 0.0
      %1424 = vmatpush1.msra.mxu0 0.0
      %1425 = vmatprep.subr.mxu0 0.0
      %1426 = vmatpush1.msra.mxu0 0.0
      %1427 = vmatprep.subr.mxu0 0.0
      %1428 = vmatpush1.msra.mxu0 0.0
      %1429 = vmatprep.subr.mxu0 0.0
      %1430 = vmatpush1.msra.mxu0 0.0
      %1431 = vmatprep.subr.mxu0 0.0
      %1432 = vmatpush1.msra.mxu0 0.0
      %1433 = vmatprep.subr.mxu0 0.0
      %1434 = vmatpush1.msra.mxu0 0.0
      %1435 = vmatprep.subr.mxu0 0.0
      %1436 = vmatpush1.msra.mxu0 %v1310
      %1437 = vmatprep.subr.mxu0 0.0
      %1438 = vmatpush2.msra.mxu0 0.0
      %1439 = vmatprep.subr.mxu0 0.0
      %1440 = vmatpush2.msra.mxu0 0.0
      %1441 = vmatprep.subr.mxu0 0.0
      %1442 = vmatpush2.msra.mxu0 0.0
      %1443 = vmatprep.subr.mxu0 0.0
      %1444 = vmatpush2.msra.mxu0 0.0
      %1445 = vmatprep.subr.mxu0 0.0
      %1446 = vmatpush2.msra.mxu0 0.0
      %1447 = vmatprep.subr.mxu0 0.0
      %1448 = vmatpush2.msra.mxu0 0.0
      %1449 = vmatprep.subr.mxu0 0.0
      %1450 = vmatpush2.msra.mxu0 0.0
      %1451 = vmatprep.subr.mxu0 0.0
      %1452 = vmatpush2.msra.mxu0 0.0
      %1453 = vmatprep.subr.mxu0 0.0
      %1454 = vmatpush2.msra.mxu0 0.0
      %1455 = vmatprep.subr.mxu0 0.0
      %1456 = vmatpush2.msra.mxu0 0.0
      %1457 = vmatprep.subr.mxu0 0.0
      %1458 = vmatpush2.msra.mxu0 0.0
      %1459 = vmatprep.subr.mxu0 0.0
      %1460 = vmatpush2.msra.mxu0 0.0
      %1461 = vmatprep.subr.mxu0 0.0
      %1462 = vmatpush2.msra.mxu0 0.0
      %1463 = vmatprep.subr.mxu0 0.0
      %1464 = vmatpush2.msra.mxu0 0.0
      %1465 = vmatprep.subr.mxu0 0.0
      %1466 = vmatpush2.msra.mxu0 0.0
      %1467 = vmatprep.subr.mxu0 0.0
      %1468 = vmatpush2.msra.mxu0 0.0
      %1469 = vmatprep.mubr.f32.mxu0 0.0
      %1470 = vmatmul.mubr.f32.gmra.mxu0 %v1403
      %v1471 = vpop.f32.mrf.mxu0
      %v1472 = vadd.f32 0.0, %v1471
      %v1473 = vpop.f32.mrf.mxu0
      %1474 = vdwg.mxu0
      %s1475 = scalar_lea.vmem %s6, 128
      %v1476 = vld [vmem:[%s1475] sm:$0xff]
      %v1477 = vld [vmem:[%s1475 + $0x8] sm:$0xff]
      %v1478 = vld [vmem:[%s1475 + $0x10] sm:$0xff]
      %v1479 = vld [vmem:[%s1475 + $0x18] sm:$0xff]
      %v1480 = vld [vmem:[%s1475 + $0x20] sm:$0xff]
      %v1481 = vld [vmem:[%s1475 + $0x28] sm:$0xff]
      %v1482 = vld [vmem:[%s1475 + $0x30] sm:$0xff]
      %v1483 = vld [vmem:[%s1475 + $0x38] sm:$0xff]
      %v1484 = vld [vmem:[%s1475 + $0x40] sm:$0xff]
      %v1485 = vld [vmem:[%s1475 + $0x48] sm:$0xff]
      %v1486 = vld [vmem:[%s1475 + $0x50] sm:$0xff]
      %v1487 = vld [vmem:[%s1475 + $0x58] sm:$0xff]
      %v1488 = vld [vmem:[%s1475 + $0x60] sm:$0xff]
      %v1489 = vld [vmem:[%s1475 + $0x68] sm:$0xff]
      %v1490 = vld [vmem:[%s1475 + $0x70] sm:$0xff]
      %v1491 = vld [vmem:[%s1475 + $0x78] sm:$0xff]
      %v1493 = vsel %vm824, %v1472, 0
      %1495 = vmatprep.subr.mxu0 0.0
      %1496 = vmatpush1.msra.mxu0 0.0
      %1497 = vmatprep.subr.mxu0 0.0
      %1498 = vmatpush1.msra.mxu0 0.0
      %1499 = vmatprep.subr.mxu0 0.0
      %1500 = vmatpush1.msra.mxu0 0.0
      %1501 = vmatprep.subr.mxu0 0.0
      %1502 = vmatpush1.msra.mxu0 0.0
      %1503 = vmatprep.subr.mxu0 0.0
      %1504 = vmatpush1.msra.mxu0 0.0
      %1505 = vmatprep.subr.mxu0 0.0
      %1506 = vmatpush1.msra.mxu0 0.0
      %1507 = vmatprep.subr.mxu0 0.0
      %1508 = vmatpush1.msra.mxu0 0.0
      %1509 = vmatprep.subr.mxu0 0.0
      %1510 = vmatpush1.msra.mxu0 0.0
      %1511 = vmatprep.subr.mxu0 %v1491
      %1512 = vmatpush1.msra.mxu0 %v1490
      %1513 = vmatprep.subr.mxu0 %v1489
      %1514 = vmatpush1.msra.mxu0 %v1488
      %1515 = vmatprep.subr.mxu0 %v1487
      %1516 = vmatpush1.msra.mxu0 %v1486
      %1517 = vmatprep.subr.mxu0 %v1485
      %1518 = vmatpush1.msra.mxu0 %v1484
      %1519 = vmatprep.subr.mxu0 %v1483
      %1520 = vmatpush1.msra.mxu0 %v1482
      %1521 = vmatprep.subr.mxu0 %v1481
      %1522 = vmatpush1.msra.mxu0 %v1480
      %1523 = vmatprep.subr.mxu0 %v1479
      %1524 = vmatpush1.msra.mxu0 %v1478
      %1525 = vmatprep.subr.mxu0 %v1477
      %1526 = vmatpush1.msra.mxu0 %v1476
      %1527 = vmatprep.subr.mxu0 0.0
      %1528 = vmatpush2.msra.mxu0 0.0
      %1529 = vmatprep.subr.mxu0 0.0
      %1530 = vmatpush2.msra.mxu0 0.0
      %1531 = vmatprep.subr.mxu0 0.0
      %1532 = vmatpush2.msra.mxu0 0.0
      %1533 = vmatprep.subr.mxu0 0.0
      %1534 = vmatpush2.msra.mxu0 0.0
      %1535 = vmatprep.subr.mxu0 0.0
      %1536 = vmatpush2.msra.mxu0 0.0
      %1537 = vmatprep.subr.mxu0 0.0
      %1538 = vmatpush2.msra.mxu0 0.0
      %1539 = vmatprep.subr.mxu0 0.0
      %1540 = vmatpush2.msra.mxu0 0.0
      %1541 = vmatprep.subr.mxu0 0.0
      %1542 = vmatpush2.msra.mxu0 0.0
      %1543 = vmatprep.subr.mxu0 0.0
      %1544 = vmatpush2.msra.mxu0 0.0
      %1545 = vmatprep.subr.mxu0 0.0
      %1546 = vmatpush2.msra.mxu0 0.0
      %1547 = vmatprep.subr.mxu0 0.0
      %1548 = vmatpush2.msra.mxu0 0.0
      %1549 = vmatprep.subr.mxu0 0.0
      %1550 = vmatpush2.msra.mxu0 0.0
      %1551 = vmatprep.subr.mxu0 0.0
      %1552 = vmatpush2.msra.mxu0 0.0
      %1553 = vmatprep.subr.mxu0 0.0
      %1554 = vmatpush2.msra.mxu0 0.0
      %1555 = vmatprep.subr.mxu0 0.0
      %1556 = vmatpush2.msra.mxu0 0.0
      %1557 = vmatprep.subr.mxu0 0.0
      %1558 = vmatpush2.msra.mxu0 0.0
      %1559 = vmatprep.mubr.f32.mxu0 0.0
      %1560 = vmatmul.mubr.f32.gmra.mxu0 %v1493
      %v1561 = vpop.f32.mrf.mxu0
      %v1562 = vadd.f32 0.0, %v1561
      %v1563 = vpop.f32.mrf.mxu0
      %v1564 = vadd.f32 0.0, %v1563
      %1565 = vdwg.mxu0
      %v1567 = vsel %vm824, %v985, 0
      %1569 = vmatprep.subr.mxu0 0.0
      %1570 = vmatpush1.msra.mxu0 0.0
      %1571 = vmatprep.subr.mxu0 0.0
      %1572 = vmatpush1.msra.mxu0 0.0
      %1573 = vmatprep.subr.mxu0 0.0
      %1574 = vmatpush1.msra.mxu0 0.0
      %1575 = vmatprep.subr.mxu0 0.0
      %1576 = vmatpush1.msra.mxu0 0.0
      %1577 = vmatprep.subr.mxu0 0.0
      %1578 = vmatpush1.msra.mxu0 0.0
      %1579 = vmatprep.subr.mxu0 0.0
      %1580 = vmatpush1.msra.mxu0 0.0
      %1581 = vmatprep.subr.mxu0 0.0
      %1582 = vmatpush1.msra.mxu0 0.0
      %1583 = vmatprep.subr.mxu0 0.0
      %1584 = vmatpush1.msra.mxu0 0.0
      %1585 = vmatprep.subr.mxu0 %v1003
      %1586 = vmatpush1.msra.mxu0 %v1002
      %1587 = vmatprep.subr.mxu0 %v1001
      %1588 = vmatpush1.msra.mxu0 %v1000
      %1589 = vmatprep.subr.mxu0 %v999
      %1590 = vmatpush1.msra.mxu0 %v998
      %1591 = vmatprep.subr.mxu0 %v997
      %1592 = vmatpush1.msra.mxu0 %v996
      %1593 = vmatprep.subr.mxu0 %v995
      %1594 = vmatpush1.msra.mxu0 %v994
      %1595 = vmatprep.subr.mxu0 %v993
      %1596 = vmatpush1.msra.mxu0 %v992
      %1597 = vmatprep.subr.mxu0 %v991
      %1598 = vmatpush1.msra.mxu0 %v990
      %1599 = vmatprep.subr.mxu0 %v989
      %1600 = vmatpush1.msra.mxu0 %v988
      %1601 = vmatprep.subr.mxu0 0.0
      %1602 = vmatpush2.msra.mxu0 0.0
      %1603 = vmatprep.subr.mxu0 0.0
      %1604 = vmatpush2.msra.mxu0 0.0
      %1605 = vmatprep.subr.mxu0 0.0
      %1606 = vmatpush2.msra.mxu0 0.0
      %1607 = vmatprep.subr.mxu0 0.0
      %1608 = vmatpush2.msra.mxu0 0.0
      %1609 = vmatprep.subr.mxu0 0.0
      %1610 = vmatpush2.msra.mxu0 0.0
      %1611 = vmatprep.subr.mxu0 0.0
      %1612 = vmatpush2.msra.mxu0 0.0
      %1613 = vmatprep.subr.mxu0 0.0
      %1614 = vmatpush2.msra.mxu0 0.0
      %1615 = vmatprep.subr.mxu0 0.0
      %1616 = vmatpush2.msra.mxu0 0.0
      %1617 = vmatprep.subr.mxu0 0.0
      %1618 = vmatpush2.msra.mxu0 0.0
      %1619 = vmatprep.subr.mxu0 0.0
      %1620 = vmatpush2.msra.mxu0 0.0
      %1621 = vmatprep.subr.mxu0 0.0
      %1622 = vmatpush2.msra.mxu0 0.0
      %1623 = vmatprep.subr.mxu0 0.0
      %1624 = vmatpush2.msra.mxu0 0.0
      %1625 = vmatprep.subr.mxu0 0.0
      %1626 = vmatpush2.msra.mxu0 0.0
      %1627 = vmatprep.subr.mxu0 0.0
      %1628 = vmatpush2.msra.mxu0 0.0
      %1629 = vmatprep.subr.mxu0 0.0
      %1630 = vmatpush2.msra.mxu0 0.0
      %1631 = vmatprep.subr.mxu0 0.0
      %1632 = vmatpush2.msra.mxu0 0.0
      %1633 = vmatprep.mubr.f32.mxu0 0.0
      %1634 = vmatmul.mubr.f32.gmra.mxu0 %v1567
      %v1635 = vpop.f32.mrf.mxu0
      %v1636 = vadd.f32 %v1562, %v1635
      %v1637 = vpop.f32.mrf.mxu0
      %v1638 = vadd.f32 %v1564, %v1637
      %1639 = vdwg.mxu0
      %s1640 = scalar_lea.vmem %s3, 512
      %v1641 = vld [vmem:[%s1640] sm:$0xff]
      %v1642 = vld [vmem:[%s1640 + $0x8] sm:$0xff]
      %v1643 = vld [vmem:[%s1640 + $0x10] sm:$0xff]
      %v1644 = vld [vmem:[%s1640 + $0x18] sm:$0xff]
      %v1645 = vld [vmem:[%s1640 + $0x20] sm:$0xff]
      %v1646 = vld [vmem:[%s1640 + $0x28] sm:$0xff]
      %v1647 = vld [vmem:[%s1640 + $0x30] sm:$0xff]
      %v1648 = vld [vmem:[%s1640 + $0x38] sm:$0xff]
      %v1649 = vld [vmem:[%s1640 + $0x40] sm:$0xff]
      %v1650 = vld [vmem:[%s1640 + $0x48] sm:$0xff]
      %v1651 = vld [vmem:[%s1640 + $0x50] sm:$0xff]
      %v1652 = vld [vmem:[%s1640 + $0x58] sm:$0xff]
      %v1653 = vld [vmem:[%s1640 + $0x60] sm:$0xff]
      %v1654 = vld [vmem:[%s1640 + $0x68] sm:$0xff]
      %v1655 = vld [vmem:[%s1640 + $0x70] sm:$0xff]
      %v1656 = vld [vmem:[%s1640 + $0x78] sm:$0xff]
      %v1657 = vld [vmem:[%s1640 + $0x80] sm:$0xff]
      %v1658 = vld [vmem:[%s1640 + $0x88] sm:$0xff]
      %v1659 = vld [vmem:[%s1640 + $0x90] sm:$0xff]
      %v1660 = vld [vmem:[%s1640 + $0x98] sm:$0xff]
      %v1661 = vld [vmem:[%s1640 + $0xa0] sm:$0xff]
      %v1662 = vld [vmem:[%s1640 + $0xa8] sm:$0xff]
      %v1663 = vld [vmem:[%s1640 + $0xb0] sm:$0xff]
      %v1664 = vld [vmem:[%s1640 + $0xb8] sm:$0xff]
      %v1665 = vld [vmem:[%s1640 + $0xc0] sm:$0xff]
      %v1666 = vld [vmem:[%s1640 + $0xc8] sm:$0xff]
      %v1667 = vld [vmem:[%s1640 + $0xd0] sm:$0xff]
      %v1668 = vld [vmem:[%s1640 + $0xd8] sm:$0xff]
      %v1669 = vld [vmem:[%s1640 + $0xe0] sm:$0xff]
      %v1670 = vld [vmem:[%s1640 + $0xe8] sm:$0xff]
      %v1671 = vld [vmem:[%s1640 + $0xf0] sm:$0xff]
      %v1672 = vld [vmem:[%s1640 + $0xf8] sm:$0xff]
      %1673 = vmatprep.subr.mxu0 0.0
      %1674 = vmatpush1.msra.mxu0 %v1656
      %1675 = vmatprep.subr.mxu0 0.0
      %1676 = vmatpush1.msra.mxu0 %v1655
      %1677 = vmatprep.subr.mxu0 0.0
      %1678 = vmatpush1.msra.mxu0 %v1654
      %1679 = vmatprep.subr.mxu0 0.0
      %1680 = vmatpush1.msra.mxu0 %v1653
      %1681 = vmatprep.subr.mxu0 0.0
      %1682 = vmatpush1.msra.mxu0 %v1652
      %1683 = vmatprep.subr.mxu0 0.0
      %1684 = vmatpush1.msra.mxu0 %v1651
      %1685 = vmatprep.subr.mxu0 0.0
      %1686 = vmatpush1.msra.mxu0 %v1650
      %1687 = vmatprep.subr.mxu0 0.0
      %1688 = vmatpush1.msra.mxu0 %v1649
      %1689 = vmatprep.subr.mxu0 0.0
      %1690 = vmatpush1.msra.mxu0 %v1648
      %1691 = vmatprep.subr.mxu0 0.0
      %1692 = vmatpush1.msra.mxu0 %v1647
      %1693 = vmatprep.subr.mxu0 0.0
      %1694 = vmatpush1.msra.mxu0 %v1646
      %1695 = vmatprep.subr.mxu0 0.0
      %1696 = vmatpush1.msra.mxu0 %v1645
      %1697 = vmatprep.subr.mxu0 0.0
      %1698 = vmatpush1.msra.mxu0 %v1644
      %1699 = vmatprep.subr.mxu0 0.0
      %1700 = vmatpush1.msra.mxu0 %v1643
      %1701 = vmatprep.subr.mxu0 0.0
      %1702 = vmatpush1.msra.mxu0 %v1642
      %1703 = vmatprep.subr.mxu0 0.0
      %1704 = vmatpush1.msra.mxu0 %v1641
      %1705 = vmatprep.subr.mxu0 0.0
      %1706 = vmatpush2.msra.mxu0 %v1672
      %1707 = vmatprep.subr.mxu0 0.0
      %1708 = vmatpush2.msra.mxu0 %v1671
      %1709 = vmatprep.subr.mxu0 0.0
      %1710 = vmatpush2.msra.mxu0 %v1670
      %1711 = vmatprep.subr.mxu0 0.0
      %1712 = vmatpush2.msra.mxu0 %v1669
      %1713 = vmatprep.subr.mxu0 0.0
      %1714 = vmatpush2.msra.mxu0 %v1668
      %1715 = vmatprep.subr.mxu0 0.0
      %1716 = vmatpush2.msra.mxu0 %v1667
      %1717 = vmatprep.subr.mxu0 0.0
      %1718 = vmatpush2.msra.mxu0 %v1666
      %1719 = vmatprep.subr.mxu0 0.0
      %1720 = vmatpush2.msra.mxu0 %v1665
      %1721 = vmatprep.subr.mxu0 0.0
      %1722 = vmatpush2.msra.mxu0 %v1664
      %1723 = vmatprep.subr.mxu0 0.0
      %1724 = vmatpush2.msra.mxu0 %v1663
      %1725 = vmatprep.subr.mxu0 0.0
      %1726 = vmatpush2.msra.mxu0 %v1662
      %1727 = vmatprep.subr.mxu0 0.0
      %1728 = vmatpush2.msra.mxu0 %v1661
      %1729 = vmatprep.subr.mxu0 0.0
      %1730 = vmatpush2.msra.mxu0 %v1660
      %1731 = vmatprep.subr.mxu0 0.0
      %1732 = vmatpush2.msra.mxu0 %v1659
      %1733 = vmatprep.subr.mxu0 0.0
      %1734 = vmatpush2.msra.mxu0 %v1658
      %1735 = vmatprep.subr.mxu0 0.0
      %1736 = vmatpush2.msra.mxu0 %v1657
      %1737 = vmatprep.mubr.f32.mxu0 %v517
      %1738 = vmatmul.mubr.f32.gmra.mxu0 %v516
      %v1739 = vpop.f32.mrf.mxu0
      %v1740 = vadd.f32 0.0, %v1739
      %v1741 = vpop.f32.mrf.mxu0
      %1742 = vdwg.mxu0
      %s1743 = scalar_lea.vmem %s4, 512
      %v1744 = vld [vmem:[%s1743] sm:$0xff]
      %v1745 = vld [vmem:[%s1743 + $0x8] sm:$0xff]
      %v1746 = vld [vmem:[%s1743 + $0x10] sm:$0xff]
      %v1747 = vld [vmem:[%s1743 + $0x18] sm:$0xff]
      %v1748 = vld [vmem:[%s1743 + $0x20] sm:$0xff]
      %v1749 = vld [vmem:[%s1743 + $0x28] sm:$0xff]
      %v1750 = vld [vmem:[%s1743 + $0x30] sm:$0xff]
      %v1751 = vld [vmem:[%s1743 + $0x38] sm:$0xff]
      %v1752 = vld [vmem:[%s1743 + $0x40] sm:$0xff]
      %v1753 = vld [vmem:[%s1743 + $0x48] sm:$0xff]
      %v1754 = vld [vmem:[%s1743 + $0x50] sm:$0xff]
      %v1755 = vld [vmem:[%s1743 + $0x58] sm:$0xff]
      %v1756 = vld [vmem:[%s1743 + $0x60] sm:$0xff]
      %v1757 = vld [vmem:[%s1743 + $0x68] sm:$0xff]
      %v1758 = vld [vmem:[%s1743 + $0x70] sm:$0xff]
      %v1759 = vld [vmem:[%s1743 + $0x78] sm:$0xff]
      %v1760 = vld [vmem:[%s1743 + $0x80] sm:$0xff]
      %v1761 = vld [vmem:[%s1743 + $0x88] sm:$0xff]
      %v1762 = vld [vmem:[%s1743 + $0x90] sm:$0xff]
      %v1763 = vld [vmem:[%s1743 + $0x98] sm:$0xff]
      %v1764 = vld [vmem:[%s1743 + $0xa0] sm:$0xff]
      %v1765 = vld [vmem:[%s1743 + $0xa8] sm:$0xff]
      %v1766 = vld [vmem:[%s1743 + $0xb0] sm:$0xff]
      %v1767 = vld [vmem:[%s1743 + $0xb8] sm:$0xff]
      %v1768 = vld [vmem:[%s1743 + $0xc0] sm:$0xff]
      %v1769 = vld [vmem:[%s1743 + $0xc8] sm:$0xff]
      %v1770 = vld [vmem:[%s1743 + $0xd0] sm:$0xff]
      %v1771 = vld [vmem:[%s1743 + $0xd8] sm:$0xff]
      %v1772 = vld [vmem:[%s1743 + $0xe0] sm:$0xff]
      %v1773 = vld [vmem:[%s1743 + $0xe8] sm:$0xff]
      %v1774 = vld [vmem:[%s1743 + $0xf0] sm:$0xff]
      %v1775 = vld [vmem:[%s1743 + $0xf8] sm:$0xff]
      %1776 = vmatprep.subr.mxu0 0.0
      %1777 = vmatpush1.msra.mxu0 %v1759
      %1778 = vmatprep.subr.mxu0 0.0
      %1779 = vmatpush1.msra.mxu0 %v1758
      %1780 = vmatprep.subr.mxu0 0.0
      %1781 = vmatpush1.msra.mxu0 %v1757
      %1782 = vmatprep.subr.mxu0 0.0
      %1783 = vmatpush1.msra.mxu0 %v1756
      %1784 = vmatprep.subr.mxu0 0.0
      %1785 = vmatpush1.msra.mxu0 %v1755
      %1786 = vmatprep.subr.mxu0 0.0
      %1787 = vmatpush1.msra.mxu0 %v1754
      %1788 = vmatprep.subr.mxu0 0.0
      %1789 = vmatpush1.msra.mxu0 %v1753
      %1790 = vmatprep.subr.mxu0 0.0
      %1791 = vmatpush1.msra.mxu0 %v1752
      %1792 = vmatprep.subr.mxu0 0.0
      %1793 = vmatpush1.msra.mxu0 %v1751
      %1794 = vmatprep.subr.mxu0 0.0
      %1795 = vmatpush1.msra.mxu0 %v1750
      %1796 = vmatprep.subr.mxu0 0.0
      %1797 = vmatpush1.msra.mxu0 %v1749
      %1798 = vmatprep.subr.mxu0 0.0
      %1799 = vmatpush1.msra.mxu0 %v1748
      %1800 = vmatprep.subr.mxu0 0.0
      %1801 = vmatpush1.msra.mxu0 %v1747
      %1802 = vmatprep.subr.mxu0 0.0
      %1803 = vmatpush1.msra.mxu0 %v1746
      %1804 = vmatprep.subr.mxu0 0.0
      %1805 = vmatpush1.msra.mxu0 %v1745
      %1806 = vmatprep.subr.mxu0 0.0
      %1807 = vmatpush1.msra.mxu0 %v1744
      %1808 = vmatprep.subr.mxu0 0.0
      %1809 = vmatpush2.msra.mxu0 %v1775
      %1810 = vmatprep.subr.mxu0 0.0
      %1811 = vmatpush2.msra.mxu0 %v1774
      %1812 = vmatprep.subr.mxu0 0.0
      %1813 = vmatpush2.msra.mxu0 %v1773
      %1814 = vmatprep.subr.mxu0 0.0
      %1815 = vmatpush2.msra.mxu0 %v1772
      %1816 = vmatprep.subr.mxu0 0.0
      %1817 = vmatpush2.msra.mxu0 %v1771
      %1818 = vmatprep.subr.mxu0 0.0
      %1819 = vmatpush2.msra.mxu0 %v1770
      %1820 = vmatprep.subr.mxu0 0.0
      %1821 = vmatpush2.msra.mxu0 %v1769
      %1822 = vmatprep.subr.mxu0 0.0
      %1823 = vmatpush2.msra.mxu0 %v1768
      %1824 = vmatprep.subr.mxu0 0.0
      %1825 = vmatpush2.msra.mxu0 %v1767
      %1826 = vmatprep.subr.mxu0 0.0
      %1827 = vmatpush2.msra.mxu0 %v1766
      %1828 = vmatprep.subr.mxu0 0.0
      %1829 = vmatpush2.msra.mxu0 %v1765
      %1830 = vmatprep.subr.mxu0 0.0
      %1831 = vmatpush2.msra.mxu0 %v1764
      %1832 = vmatprep.subr.mxu0 0.0
      %1833 = vmatpush2.msra.mxu0 %v1763
      %1834 = vmatprep.subr.mxu0 0.0
      %1835 = vmatpush2.msra.mxu0 %v1762
      %1836 = vmatprep.subr.mxu0 0.0
      %1837 = vmatpush2.msra.mxu0 %v1761
      %1838 = vmatprep.subr.mxu0 0.0
      %1839 = vmatpush2.msra.mxu0 %v1760
      %1840 = vmatprep.mubr.f32.mxu0 %v517
      %1841 = vmatmul.mubr.f32.gmra.mxu0 %v516
      %v1842 = vpop.f32.mrf.mxu0
      %v1843 = vadd.f32 0.0, %v1842
      %v1844 = vpop.f32.mrf.mxu0
      %1845 = vdwg.mxu0
      %s1846 = scalar_lea.vmem %s5, 512
      %v1847 = vld [vmem:[%s1846] sm:$0xff]
      %v1848 = vld [vmem:[%s1846 + $0x8] sm:$0xff]
      %v1849 = vld [vmem:[%s1846 + $0x10] sm:$0xff]
      %v1850 = vld [vmem:[%s1846 + $0x18] sm:$0xff]
      %v1851 = vld [vmem:[%s1846 + $0x20] sm:$0xff]
      %v1852 = vld [vmem:[%s1846 + $0x28] sm:$0xff]
      %v1853 = vld [vmem:[%s1846 + $0x30] sm:$0xff]
      %v1854 = vld [vmem:[%s1846 + $0x38] sm:$0xff]
      %v1855 = vld [vmem:[%s1846 + $0x40] sm:$0xff]
      %v1856 = vld [vmem:[%s1846 + $0x48] sm:$0xff]
      %v1857 = vld [vmem:[%s1846 + $0x50] sm:$0xff]
      %v1858 = vld [vmem:[%s1846 + $0x58] sm:$0xff]
      %v1859 = vld [vmem:[%s1846 + $0x60] sm:$0xff]
      %v1860 = vld [vmem:[%s1846 + $0x68] sm:$0xff]
      %v1861 = vld [vmem:[%s1846 + $0x70] sm:$0xff]
      %v1862 = vld [vmem:[%s1846 + $0x78] sm:$0xff]
      %v1863 = vld [vmem:[%s1846 + $0x80] sm:$0xff]
      %v1864 = vld [vmem:[%s1846 + $0x88] sm:$0xff]
      %v1865 = vld [vmem:[%s1846 + $0x90] sm:$0xff]
      %v1866 = vld [vmem:[%s1846 + $0x98] sm:$0xff]
      %v1867 = vld [vmem:[%s1846 + $0xa0] sm:$0xff]
      %v1868 = vld [vmem:[%s1846 + $0xa8] sm:$0xff]
      %v1869 = vld [vmem:[%s1846 + $0xb0] sm:$0xff]
      %v1870 = vld [vmem:[%s1846 + $0xb8] sm:$0xff]
      %v1871 = vld [vmem:[%s1846 + $0xc0] sm:$0xff]
      %v1872 = vld [vmem:[%s1846 + $0xc8] sm:$0xff]
      %v1873 = vld [vmem:[%s1846 + $0xd0] sm:$0xff]
      %v1874 = vld [vmem:[%s1846 + $0xd8] sm:$0xff]
      %v1875 = vld [vmem:[%s1846 + $0xe0] sm:$0xff]
      %v1876 = vld [vmem:[%s1846 + $0xe8] sm:$0xff]
      %v1877 = vld [vmem:[%s1846 + $0xf0] sm:$0xff]
      %v1878 = vld [vmem:[%s1846 + $0xf8] sm:$0xff]
      %1879 = vmatprep.subr.mxu0 0.0
      %1880 = vmatpush1.msra.mxu0 %v1862
      %1881 = vmatprep.subr.mxu0 0.0
      %1882 = vmatpush1.msra.mxu0 %v1861
      %1883 = vmatprep.subr.mxu0 0.0
      %1884 = vmatpush1.msra.mxu0 %v1860
      %1885 = vmatprep.subr.mxu0 0.0
      %1886 = vmatpush1.msra.mxu0 %v1859
      %1887 = vmatprep.subr.mxu0 0.0
      %1888 = vmatpush1.msra.mxu0 %v1858
      %1889 = vmatprep.subr.mxu0 0.0
      %1890 = vmatpush1.msra.mxu0 %v1857
      %1891 = vmatprep.subr.mxu0 0.0
      %1892 = vmatpush1.msra.mxu0 %v1856
      %1893 = vmatprep.subr.mxu0 0.0
      %1894 = vmatpush1.msra.mxu0 %v1855
      %1895 = vmatprep.subr.mxu0 0.0
      %1896 = vmatpush1.msra.mxu0 %v1854
      %1897 = vmatprep.subr.mxu0 0.0
      %1898 = vmatpush1.msra.mxu0 %v1853
      %1899 = vmatprep.subr.mxu0 0.0
      %1900 = vmatpush1.msra.mxu0 %v1852
      %1901 = vmatprep.subr.mxu0 0.0
      %1902 = vmatpush1.msra.mxu0 %v1851
      %1903 = vmatprep.subr.mxu0 0.0
      %1904 = vmatpush1.msra.mxu0 %v1850
      %1905 = vmatprep.subr.mxu0 0.0
      %1906 = vmatpush1.msra.mxu0 %v1849
      %1907 = vmatprep.subr.mxu0 0.0
      %1908 = vmatpush1.msra.mxu0 %v1848
      %1909 = vmatprep.subr.mxu0 0.0
      %1910 = vmatpush1.msra.mxu0 %v1847
      %1911 = vmatprep.subr.mxu0 0.0
      %1912 = vmatpush2.msra.mxu0 %v1878
      %1913 = vmatprep.subr.mxu0 0.0
      %1914 = vmatpush2.msra.mxu0 %v1877
      %1915 = vmatprep.subr.mxu0 0.0
      %1916 = vmatpush2.msra.mxu0 %v1876
      %1917 = vmatprep.subr.mxu0 0.0
      %1918 = vmatpush2.msra.mxu0 %v1875
      %1919 = vmatprep.subr.mxu0 0.0
      %1920 = vmatpush2.msra.mxu0 %v1874
      %1921 = vmatprep.subr.mxu0 0.0
      %1922 = vmatpush2.msra.mxu0 %v1873
      %1923 = vmatprep.subr.mxu0 0.0
      %1924 = vmatpush2.msra.mxu0 %v1872
      %1925 = vmatprep.subr.mxu0 0.0
      %1926 = vmatpush2.msra.mxu0 %v1871
      %1927 = vmatprep.subr.mxu0 0.0
      %1928 = vmatpush2.msra.mxu0 %v1870
      %1929 = vmatprep.subr.mxu0 0.0
      %1930 = vmatpush2.msra.mxu0 %v1869
      %1931 = vmatprep.subr.mxu0 0.0
      %1932 = vmatpush2.msra.mxu0 %v1868
      %1933 = vmatprep.subr.mxu0 0.0
      %1934 = vmatpush2.msra.mxu0 %v1867
      %1935 = vmatprep.subr.mxu0 0.0
      %1936 = vmatpush2.msra.mxu0 %v1866
      %1937 = vmatprep.subr.mxu0 0.0
      %1938 = vmatpush2.msra.mxu0 %v1865
      %1939 = vmatprep.subr.mxu0 0.0
      %1940 = vmatpush2.msra.mxu0 %v1864
      %1941 = vmatprep.subr.mxu0 0.0
      %1942 = vmatpush2.msra.mxu0 %v1863
      %1943 = vmatprep.mubr.f32.mxu0 %v517
      %1944 = vmatmul.mubr.f32.gmra.mxu0 %v516
      %v1945 = vpop.f32.mrf.mxu0
      %v1946 = vadd.f32 0.0, %v1945
      %v1947 = vpop.f32.mrf.mxu0
      %1948 = vdwg.mxu0
      %v1950 = vsel %vm824, %v1740, 0
      %v1953 = vsel %vm824, %v1843, 0
      %1955 = vmatprep.subr.mxu0 0.0
      %1956 = vmatpush1.xpose.msra.mxu0 0.0
      %1957 = vmatprep.subr.mxu0 0.0
      %1958 = vmatpush1.xpose.msra.mxu0 0.0
      %1959 = vmatprep.subr.mxu0 0.0
      %1960 = vmatpush1.xpose.msra.mxu0 0.0
      %1961 = vmatprep.subr.mxu0 0.0
      %1962 = vmatpush1.xpose.msra.mxu0 0.0
      %1963 = vmatprep.subr.mxu0 0.0
      %1964 = vmatpush1.xpose.msra.mxu0 0.0
      %1965 = vmatprep.subr.mxu0 0.0
      %1966 = vmatpush1.xpose.msra.mxu0 0.0
      %1967 = vmatprep.subr.mxu0 0.0
      %1968 = vmatpush1.xpose.msra.mxu0 0.0
      %1969 = vmatprep.subr.mxu0 0.0
      %1970 = vmatpush1.xpose.msra.mxu0 0.0
      %1971 = vmatprep.subr.mxu0 0.0
      %1972 = vmatpush1.xpose.msra.mxu0 0.0
      %1973 = vmatprep.subr.mxu0 0.0
      %1974 = vmatpush1.xpose.msra.mxu0 0.0
      %1975 = vmatprep.subr.mxu0 0.0
      %1976 = vmatpush1.xpose.msra.mxu0 0.0
      %1977 = vmatprep.subr.mxu0 0.0
      %1978 = vmatpush1.xpose.msra.mxu0 0.0
      %1979 = vmatprep.subr.mxu0 0.0
      %1980 = vmatpush1.xpose.msra.mxu0 0.0
      %1981 = vmatprep.subr.mxu0 0.0
      %1982 = vmatpush1.xpose.msra.mxu0 0.0
      %1983 = vmatprep.subr.mxu0 0.0
      %1984 = vmatpush1.xpose.msra.mxu0 0.0
      %1985 = vmatprep.subr.mxu0 0.0
      %1986 = vmatpush1.xpose.msra.mxu0 %v1953
      %1987 = vmatprep.subr.mxu0 0.0
      %1988 = vmatpush2.xpose.msra.mxu0 0.0
      %1989 = vmatprep.subr.mxu0 0.0
      %1990 = vmatpush2.xpose.msra.mxu0 0.0
      %1991 = vmatprep.subr.mxu0 0.0
      %1992 = vmatpush2.xpose.msra.mxu0 0.0
      %1993 = vmatprep.subr.mxu0 0.0
      %1994 = vmatpush2.xpose.msra.mxu0 0.0
      %1995 = vmatprep.subr.mxu0 0.0
      %1996 = vmatpush2.xpose.msra.mxu0 0.0
      %1997 = vmatprep.subr.mxu0 0.0
      %1998 = vmatpush2.xpose.msra.mxu0 0.0
      %1999 = vmatprep.subr.mxu0 0.0
      %2000 = vmatpush2.xpose.msra.mxu0 0.0
      %2001 = vmatprep.subr.mxu0 0.0
      %2002 = vmatpush2.xpose.msra.mxu0 0.0
      %2003 = vmatprep.subr.mxu0 0.0
      %2004 = vmatpush2.xpose.msra.mxu0 0.0
      %2005 = vmatprep.subr.mxu0 0.0
      %2006 = vmatpush2.xpose.msra.mxu0 0.0
      %2007 = vmatprep.subr.mxu0 0.0
      %2008 = vmatpush2.xpose.msra.mxu0 0.0
      %2009 = vmatprep.subr.mxu0 0.0
      %2010 = vmatpush2.xpose.msra.mxu0 0.0
      %2011 = vmatprep.subr.mxu0 0.0
      %2012 = vmatpush2.xpose.msra.mxu0 0.0
      %2013 = vmatprep.subr.mxu0 0.0
      %2014 = vmatpush2.xpose.msra.mxu0 0.0
      %2015 = vmatprep.subr.mxu0 0.0
      %2016 = vmatpush2.xpose.msra.mxu0 0.0
      %2017 = vmatprep.subr.mxu0 0.0
      %2018 = vmatpush2.xpose.msra.mxu0 0.0
      %2019 = vmatprep.mubr.f32.mxu0 0.0
      %2020 = vmatmul.mubr.f32.gmra.mxu0 %v1950
      %v2021 = vpop.f32.mrf.mxu0
      %v2022 = vadd.f32 0.0, %v2021
      %v2023 = vpop.f32.mrf.mxu0
      %2024 = vdwg.mxu0
      %v2025 = vmul.f32 %v2022, 0.125
      %v2026 = vsel %vm472, %v2025, -1e+30
      %v2027 = vsel %vm903, %v2026, -inf
      %2028 = vmax.xlane.f32.xlu0 %v2027
      %v2029 = vpop.xlane.xlu0 %2028
      %v2030 = vsub.f32 %v2026, %v2029
      %v2031 = vmul.f32 %v2030, 1.442695
      %v2032 = vpow.pop %v2031
      %v2033 = vsel %vm903, %v2032, 0.0
      %2034 = vadd.xlane.f32.xlu0 %v2033
      %v2035 = vpop.xlane.xlu0 %2034
      %v2036 = vrcp.pop %v2035
      %v2037 = vmul.f32 %v2032, %v2036
      %v2039 = vsel %vm903, %v2037, 0
      %2041 = vmatprep.subr.mxu0 0.0
      %2042 = vmatpush1.msra.mxu0 0.0
      %2043 = vmatprep.subr.mxu0 0.0
      %2044 = vmatpush1.msra.mxu0 0.0
      %2045 = vmatprep.subr.mxu0 0.0
      %2046 = vmatpush1.msra.mxu0 0.0
      %2047 = vmatprep.subr.mxu0 0.0
      %2048 = vmatpush1.msra.mxu0 0.0
      %2049 = vmatprep.subr.mxu0 0.0
      %2050 = vmatpush1.msra.mxu0 0.0
      %2051 = vmatprep.subr.mxu0 0.0
      %2052 = vmatpush1.msra.mxu0 0.0
      %2053 = vmatprep.subr.mxu0 0.0
      %2054 = vmatpush1.msra.mxu0 0.0
      %2055 = vmatprep.subr.mxu0 0.0
      %2056 = vmatpush1.msra.mxu0 0.0
      %2057 = vmatprep.subr.mxu0 0.0
      %2058 = vmatpush1.msra.mxu0 0.0
      %2059 = vmatprep.subr.mxu0 0.0
      %2060 = vmatpush1.msra.mxu0 0.0
      %2061 = vmatprep.subr.mxu0 0.0
      %2062 = vmatpush1.msra.mxu0 0.0
      %2063 = vmatprep.subr.mxu0 0.0
      %2064 = vmatpush1.msra.mxu0 0.0
      %2065 = vmatprep.subr.mxu0 0.0
      %2066 = vmatpush1.msra.mxu0 0.0
      %2067 = vmatprep.subr.mxu0 0.0
      %2068 = vmatpush1.msra.mxu0 0.0
      %2069 = vmatprep.subr.mxu0 0.0
      %2070 = vmatpush1.msra.mxu0 0.0
      %2071 = vmatprep.subr.mxu0 0.0
      %2072 = vmatpush1.msra.mxu0 %v1946
      %2073 = vmatprep.subr.mxu0 0.0
      %2074 = vmatpush2.msra.mxu0 0.0
      %2075 = vmatprep.subr.mxu0 0.0
      %2076 = vmatpush2.msra.mxu0 0.0
      %2077 = vmatprep.subr.mxu0 0.0
      %2078 = vmatpush2.msra.mxu0 0.0
      %2079 = vmatprep.subr.mxu0 0.0
      %2080 = vmatpush2.msra.mxu0 0.0
      %2081 = vmatprep.subr.mxu0 0.0
      %2082 = vmatpush2.msra.mxu0 0.0
      %2083 = vmatprep.subr.mxu0 0.0
      %2084 = vmatpush2.msra.mxu0 0.0
      %2085 = vmatprep.subr.mxu0 0.0
      %2086 = vmatpush2.msra.mxu0 0.0
      %2087 = vmatprep.subr.mxu0 0.0
      %2088 = vmatpush2.msra.mxu0 0.0
      %2089 = vmatprep.subr.mxu0 0.0
      %2090 = vmatpush2.msra.mxu0 0.0
      %2091 = vmatprep.subr.mxu0 0.0
      %2092 = vmatpush2.msra.mxu0 0.0
      %2093 = vmatprep.subr.mxu0 0.0
      %2094 = vmatpush2.msra.mxu0 0.0
      %2095 = vmatprep.subr.mxu0 0.0
      %2096 = vmatpush2.msra.mxu0 0.0
      %2097 = vmatprep.subr.mxu0 0.0
      %2098 = vmatpush2.msra.mxu0 0.0
      %2099 = vmatprep.subr.mxu0 0.0
      %2100 = vmatpush2.msra.mxu0 0.0
      %2101 = vmatprep.subr.mxu0 0.0
      %2102 = vmatpush2.msra.mxu0 0.0
      %2103 = vmatprep.subr.mxu0 0.0
      %2104 = vmatpush2.msra.mxu0 0.0
      %2105 = vmatprep.mubr.f32.mxu0 0.0
      %2106 = vmatmul.mubr.f32.gmra.mxu0 %v2039
      %v2107 = vpop.f32.mrf.mxu0
      %v2108 = vadd.f32 0.0, %v2107
      %v2109 = vpop.f32.mrf.mxu0
      %2110 = vdwg.mxu0
      %s2111 = scalar_lea.vmem %s6, 256
      %v2112 = vld [vmem:[%s2111] sm:$0xff]
      %v2113 = vld [vmem:[%s2111 + $0x8] sm:$0xff]
      %v2114 = vld [vmem:[%s2111 + $0x10] sm:$0xff]
      %v2115 = vld [vmem:[%s2111 + $0x18] sm:$0xff]
      %v2116 = vld [vmem:[%s2111 + $0x20] sm:$0xff]
      %v2117 = vld [vmem:[%s2111 + $0x28] sm:$0xff]
      %v2118 = vld [vmem:[%s2111 + $0x30] sm:$0xff]
      %v2119 = vld [vmem:[%s2111 + $0x38] sm:$0xff]
      %v2120 = vld [vmem:[%s2111 + $0x40] sm:$0xff]
      %v2121 = vld [vmem:[%s2111 + $0x48] sm:$0xff]
      %v2122 = vld [vmem:[%s2111 + $0x50] sm:$0xff]
      %v2123 = vld [vmem:[%s2111 + $0x58] sm:$0xff]
      %v2124 = vld [vmem:[%s2111 + $0x60] sm:$0xff]
      %v2125 = vld [vmem:[%s2111 + $0x68] sm:$0xff]
      %v2126 = vld [vmem:[%s2111 + $0x70] sm:$0xff]
      %v2127 = vld [vmem:[%s2111 + $0x78] sm:$0xff]
      %v2129 = vsel %vm824, %v2108, 0
      %2131 = vmatprep.subr.mxu0 0.0
      %2132 = vmatpush1.msra.mxu0 0.0
      %2133 = vmatprep.subr.mxu0 0.0
      %2134 = vmatpush1.msra.mxu0 0.0
      %2135 = vmatprep.subr.mxu0 0.0
      %2136 = vmatpush1.msra.mxu0 0.0
      %2137 = vmatprep.subr.mxu0 0.0
      %2138 = vmatpush1.msra.mxu0 0.0
      %2139 = vmatprep.subr.mxu0 0.0
      %2140 = vmatpush1.msra.mxu0 0.0
      %2141 = vmatprep.subr.mxu0 0.0
      %2142 = vmatpush1.msra.mxu0 0.0
      %2143 = vmatprep.subr.mxu0 0.0
      %2144 = vmatpush1.msra.mxu0 0.0
      %2145 = vmatprep.subr.mxu0 0.0
      %2146 = vmatpush1.msra.mxu0 0.0
      %2147 = vmatprep.subr.mxu0 %v2127
      %2148 = vmatpush1.msra.mxu0 %v2126
      %2149 = vmatprep.subr.mxu0 %v2125
      %2150 = vmatpush1.msra.mxu0 %v2124
      %2151 = vmatprep.subr.mxu0 %v2123
      %2152 = vmatpush1.msra.mxu0 %v2122
      %2153 = vmatprep.subr.mxu0 %v2121
      %2154 = vmatpush1.msra.mxu0 %v2120
      %2155 = vmatprep.subr.mxu0 %v2119
      %2156 = vmatpush1.msra.mxu0 %v2118
      %2157 = vmatprep.subr.mxu0 %v2117
      %2158 = vmatpush1.msra.mxu0 %v2116
      %2159 = vmatprep.subr.mxu0 %v2115
      %2160 = vmatpush1.msra.mxu0 %v2114
      %2161 = vmatprep.subr.mxu0 %v2113
      %2162 = vmatpush1.msra.mxu0 %v2112
      %2163 = vmatprep.subr.mxu0 0.0
      %2164 = vmatpush2.msra.mxu0 0.0
      %2165 = vmatprep.subr.mxu0 0.0
      %2166 = vmatpush2.msra.mxu0 0.0
      %2167 = vmatprep.subr.mxu0 0.0
      %2168 = vmatpush2.msra.mxu0 0.0
      %2169 = vmatprep.subr.mxu0 0.0
      %2170 = vmatpush2.msra.mxu0 0.0
      %2171 = vmatprep.subr.mxu0 0.0
      %2172 = vmatpush2.msra.mxu0 0.0
      %2173 = vmatprep.subr.mxu0 0.0
      %2174 = vmatpush2.msra.mxu0 0.0
      %2175 = vmatprep.subr.mxu0 0.0
      %2176 = vmatpush2.msra.mxu0 0.0
      %2177 = vmatprep.subr.mxu0 0.0
      %2178 = vmatpush2.msra.mxu0 0.0
      %2179 = vmatprep.subr.mxu0 0.0
      %2180 = vmatpush2.msra.mxu0 0.0
      %2181 = vmatprep.subr.mxu0 0.0
      %2182 = vmatpush2.msra.mxu0 0.0
      %2183 = vmatprep.subr.mxu0 0.0
      %2184 = vmatpush2.msra.mxu0 0.0
      %2185 = vmatprep.subr.mxu0 0.0
      %2186 = vmatpush2.msra.mxu0 0.0
      %2187 = vmatprep.subr.mxu0 0.0
      %2188 = vmatpush2.msra.mxu0 0.0
      %2189 = vmatprep.subr.mxu0 0.0
      %2190 = vmatpush2.msra.mxu0 0.0
      %2191 = vmatprep.subr.mxu0 0.0
      %2192 = vmatpush2.msra.mxu0 0.0
      %2193 = vmatprep.subr.mxu0 0.0
      %2194 = vmatpush2.msra.mxu0 0.0
      %2195 = vmatprep.mubr.f32.mxu0 0.0
      %2196 = vmatmul.mubr.f32.gmra.mxu0 %v2129
      %v2197 = vpop.f32.mrf.mxu0
      %v2198 = vadd.f32 0.0, %v2197
      %v2199 = vpop.f32.mrf.mxu0
      %v2200 = vadd.f32 0.0, %v2199
      %2201 = vdwg.mxu0
      %v2202 = vadd.f32 %v1636, %v2198
      %v2203 = vadd.f32 %v1638, %v2200
      %s2204 = scalar_lea.vmem %s3, 768
      %v2205 = vld [vmem:[%s2204] sm:$0xff]
      %v2206 = vld [vmem:[%s2204 + $0x8] sm:$0xff]
      %v2207 = vld [vmem:[%s2204 + $0x10] sm:$0xff]
      %v2208 = vld [vmem:[%s2204 + $0x18] sm:$0xff]
      %v2209 = vld [vmem:[%s2204 + $0x20] sm:$0xff]
      %v2210 = vld [vmem:[%s2204 + $0x28] sm:$0xff]
      %v2211 = vld [vmem:[%s2204 + $0x30] sm:$0xff]
      %v2212 = vld [vmem:[%s2204 + $0x38] sm:$0xff]
      %v2213 = vld [vmem:[%s2204 + $0x40] sm:$0xff]
      %v2214 = vld [vmem:[%s2204 + $0x48] sm:$0xff]
      %v2215 = vld [vmem:[%s2204 + $0x50] sm:$0xff]
      %v2216 = vld [vmem:[%s2204 + $0x58] sm:$0xff]
      %v2217 = vld [vmem:[%s2204 + $0x60] sm:$0xff]
      %v2218 = vld [vmem:[%s2204 + $0x68] sm:$0xff]
      %v2219 = vld [vmem:[%s2204 + $0x70] sm:$0xff]
      %v2220 = vld [vmem:[%s2204 + $0x78] sm:$0xff]
      %v2221 = vld [vmem:[%s2204 + $0x80] sm:$0xff]
      %v2222 = vld [vmem:[%s2204 + $0x88] sm:$0xff]
      %v2223 = vld [vmem:[%s2204 + $0x90] sm:$0xff]
      %v2224 = vld [vmem:[%s2204 + $0x98] sm:$0xff]
      %v2225 = vld [vmem:[%s2204 + $0xa0] sm:$0xff]
      %v2226 = vld [vmem:[%s2204 + $0xa8] sm:$0xff]
      %v2227 = vld [vmem:[%s2204 + $0xb0] sm:$0xff]
      %v2228 = vld [vmem:[%s2204 + $0xb8] sm:$0xff]
      %v2229 = vld [vmem:[%s2204 + $0xc0] sm:$0xff]
      %v2230 = vld [vmem:[%s2204 + $0xc8] sm:$0xff]
      %v2231 = vld [vmem:[%s2204 + $0xd0] sm:$0xff]
      %v2232 = vld [vmem:[%s2204 + $0xd8] sm:$0xff]
      %v2233 = vld [vmem:[%s2204 + $0xe0] sm:$0xff]
      %v2234 = vld [vmem:[%s2204 + $0xe8] sm:$0xff]
      %v2235 = vld [vmem:[%s2204 + $0xf0] sm:$0xff]
      %v2236 = vld [vmem:[%s2204 + $0xf8] sm:$0xff]
      %2237 = vmatprep.subr.mxu0 0.0
      %2238 = vmatpush1.msra.mxu0 %v2220
      %2239 = vmatprep.subr.mxu0 0.0
      %2240 = vmatpush1.msra.mxu0 %v2219
      %2241 = vmatprep.subr.mxu0 0.0
      %2242 = vmatpush1.msra.mxu0 %v2218
      %2243 = vmatprep.subr.mxu0 0.0
      %2244 = vmatpush1.msra.mxu0 %v2217
      %2245 = vmatprep.subr.mxu0 0.0
      %2246 = vmatpush1.msra.mxu0 %v2216
      %2247 = vmatprep.subr.mxu0 0.0
      %2248 = vmatpush1.msra.mxu0 %v2215
      %2249 = vmatprep.subr.mxu0 0.0
      %2250 = vmatpush1.msra.mxu0 %v2214
      %2251 = vmatprep.subr.mxu0 0.0
      %2252 = vmatpush1.msra.mxu0 %v2213
      %2253 = vmatprep.subr.mxu0 0.0
      %2254 = vmatpush1.msra.mxu0 %v2212
      %2255 = vmatprep.subr.mxu0 0.0
      %2256 = vmatpush1.msra.mxu0 %v2211
      %2257 = vmatprep.subr.mxu0 0.0
      %2258 = vmatpush1.msra.mxu0 %v2210
      %2259 = vmatprep.subr.mxu0 0.0
      %2260 = vmatpush1.msra.mxu0 %v2209
      %2261 = vmatprep.subr.mxu0 0.0
      %2262 = vmatpush1.msra.mxu0 %v2208
      %2263 = vmatprep.subr.mxu0 0.0
      %2264 = vmatpush1.msra.mxu0 %v2207
      %2265 = vmatprep.subr.mxu0 0.0
      %2266 = vmatpush1.msra.mxu0 %v2206
      %2267 = vmatprep.subr.mxu0 0.0
      %2268 = vmatpush1.msra.mxu0 %v2205
      %2269 = vmatprep.subr.mxu0 0.0
      %2270 = vmatpush2.msra.mxu0 %v2236
      %2271 = vmatprep.subr.mxu0 0.0
      %2272 = vmatpush2.msra.mxu0 %v2235
      %2273 = vmatprep.subr.mxu0 0.0
      %2274 = vmatpush2.msra.mxu0 %v2234
      %2275 = vmatprep.subr.mxu0 0.0
      %2276 = vmatpush2.msra.mxu0 %v2233
      %2277 = vmatprep.subr.mxu0 0.0
      %2278 = vmatpush2.msra.mxu0 %v2232
      %2279 = vmatprep.subr.mxu0 0.0
      %2280 = vmatpush2.msra.mxu0 %v2231
      %2281 = vmatprep.subr.mxu0 0.0
      %2282 = vmatpush2.msra.mxu0 %v2230
      %2283 = vmatprep.subr.mxu0 0.0
      %2284 = vmatpush2.msra.mxu0 %v2229
      %2285 = vmatprep.subr.mxu0 0.0
      %2286 = vmatpush2.msra.mxu0 %v2228
      %2287 = vmatprep.subr.mxu0 0.0
      %2288 = vmatpush2.msra.mxu0 %v2227
      %2289 = vmatprep.subr.mxu0 0.0
      %2290 = vmatpush2.msra.mxu0 %v2226
      %2291 = vmatprep.subr.mxu0 0.0
      %2292 = vmatpush2.msra.mxu0 %v2225
      %2293 = vmatprep.subr.mxu0 0.0
      %2294 = vmatpush2.msra.mxu0 %v2224
      %2295 = vmatprep.subr.mxu0 0.0
      %2296 = vmatpush2.msra.mxu0 %v2223
      %2297 = vmatprep.subr.mxu0 0.0
      %2298 = vmatpush2.msra.mxu0 %v2222
      %2299 = vmatprep.subr.mxu0 0.0
      %2300 = vmatpush2.msra.mxu0 %v2221
      %2301 = vmatprep.mubr.f32.mxu0 %v517
      %2302 = vmatmul.mubr.f32.gmra.mxu0 %v516
      %v2303 = vpop.f32.mrf.mxu0
      %v2304 = vadd.f32 0.0, %v2303
      %v2305 = vpop.f32.mrf.mxu0
      %2306 = vdwg.mxu0
      %s2307 = scalar_lea.vmem %s4, 768
      %v2308 = vld [vmem:[%s2307] sm:$0xff]
      %v2309 = vld [vmem:[%s2307 + $0x8] sm:$0xff]
      %v2310 = vld [vmem:[%s2307 + $0x10] sm:$0xff]
      %v2311 = vld [vmem:[%s2307 + $0x18] sm:$0xff]
      %v2312 = vld [vmem:[%s2307 + $0x20] sm:$0xff]
      %v2313 = vld [vmem:[%s2307 + $0x28] sm:$0xff]
      %v2314 = vld [vmem:[%s2307 + $0x30] sm:$0xff]
      %v2315 = vld [vmem:[%s2307 + $0x38] sm:$0xff]
      %v2316 = vld [vmem:[%s2307 + $0x40] sm:$0xff]
      %v2317 = vld [vmem:[%s2307 + $0x48] sm:$0xff]
      %v2318 = vld [vmem:[%s2307 + $0x50] sm:$0xff]
      %v2319 = vld [vmem:[%s2307 + $0x58] sm:$0xff]
      %v2320 = vld [vmem:[%s2307 + $0x60] sm:$0xff]
      %v2321 = vld [vmem:[%s2307 + $0x68] sm:$0xff]
      %v2322 = vld [vmem:[%s2307 + $0x70] sm:$0xff]
      %v2323 = vld [vmem:[%s2307 + $0x78] sm:$0xff]
      %v2324 = vld [vmem:[%s2307 + $0x80] sm:$0xff]
      %v2325 = vld [vmem:[%s2307 + $0x88] sm:$0xff]
      %v2326 = vld [vmem:[%s2307 + $0x90] sm:$0xff]
      %v2327 = vld [vmem:[%s2307 + $0x98] sm:$0xff]
      %v2328 = vld [vmem:[%s2307 + $0xa0] sm:$0xff]
      %v2329 = vld [vmem:[%s2307 + $0xa8] sm:$0xff]
      %v2330 = vld [vmem:[%s2307 + $0xb0] sm:$0xff]
      %v2331 = vld [vmem:[%s2307 + $0xb8] sm:$0xff]
      %v2332 = vld [vmem:[%s2307 + $0xc0] sm:$0xff]
      %v2333 = vld [vmem:[%s2307 + $0xc8] sm:$0xff]
      %v2334 = vld [vmem:[%s2307 + $0xd0] sm:$0xff]
      %v2335 = vld [vmem:[%s2307 + $0xd8] sm:$0xff]
      %v2336 = vld [vmem:[%s2307 + $0xe0] sm:$0xff]
      %v2337 = vld [vmem:[%s2307 + $0xe8] sm:$0xff]
      %v2338 = vld [vmem:[%s2307 + $0xf0] sm:$0xff]
      %v2339 = vld [vmem:[%s2307 + $0xf8] sm:$0xff]
      %2340 = vmatprep.subr.mxu0 0.0
      %2341 = vmatpush1.msra.mxu0 %v2323
      %2342 = vmatprep.subr.mxu0 0.0
      %2343 = vmatpush1.msra.mxu0 %v2322
      %2344 = vmatprep.subr.mxu0 0.0
      %2345 = vmatpush1.msra.mxu0 %v2321
      %2346 = vmatprep.subr.mxu0 0.0
      %2347 = vmatpush1.msra.mxu0 %v2320
      %2348 = vmatprep.subr.mxu0 0.0
      %2349 = vmatpush1.msra.mxu0 %v2319
      %2350 = vmatprep.subr.mxu0 0.0
      %2351 = vmatpush1.msra.mxu0 %v2318
      %2352 = vmatprep.subr.mxu0 0.0
      %2353 = vmatpush1.msra.mxu0 %v2317
      %2354 = vmatprep.subr.mxu0 0.0
      %2355 = vmatpush1.msra.mxu0 %v2316
      %2356 = vmatprep.subr.mxu0 0.0
      %2357 = vmatpush1.msra.mxu0 %v2315
      %2358 = vmatprep.subr.mxu0 0.0
      %2359 = vmatpush1.msra.mxu0 %v2314
      %2360 = vmatprep.subr.mxu0 0.0
      %2361 = vmatpush1.msra.mxu0 %v2313
      %2362 = vmatprep.subr.mxu0 0.0
      %2363 = vmatpush1.msra.mxu0 %v2312
      %2364 = vmatprep.subr.mxu0 0.0
      %2365 = vmatpush1.msra.mxu0 %v2311
      %2366 = vmatprep.subr.mxu0 0.0
      %2367 = vmatpush1.msra.mxu0 %v2310
      %2368 = vmatprep.subr.mxu0 0.0
      %2369 = vmatpush1.msra.mxu0 %v2309
      %2370 = vmatprep.subr.mxu0 0.0
      %2371 = vmatpush1.msra.mxu0 %v2308
      %2372 = vmatprep.subr.mxu0 0.0
      %2373 = vmatpush2.msra.mxu0 %v2339
      %2374 = vmatprep.subr.mxu0 0.0
      %2375 = vmatpush2.msra.mxu0 %v2338
      %2376 = vmatprep.subr.mxu0 0.0
      %2377 = vmatpush2.msra.mxu0 %v2337
      %2378 = vmatprep.subr.mxu0 0.0
      %2379 = vmatpush2.msra.mxu0 %v2336
      %2380 = vmatprep.subr.mxu0 0.0
      %2381 = vmatpush2.msra.mxu0 %v2335
      %2382 = vmatprep.subr.mxu0 0.0
      %2383 = vmatpush2.msra.mxu0 %v2334
      %2384 = vmatprep.subr.mxu0 0.0
      %2385 = vmatpush2.msra.mxu0 %v2333
      %2386 = vmatprep.subr.mxu0 0.0
      %2387 = vmatpush2.msra.mxu0 %v2332
      %2388 = vmatprep.subr.mxu0 0.0
      %2389 = vmatpush2.msra.mxu0 %v2331
      %2390 = vmatprep.subr.mxu0 0.0
      %2391 = vmatpush2.msra.mxu0 %v2330
      %2392 = vmatprep.subr.mxu0 0.0
      %2393 = vmatpush2.msra.mxu0 %v2329
      %2394 = vmatprep.subr.mxu0 0.0
      %2395 = vmatpush2.msra.mxu0 %v2328
      %2396 = vmatprep.subr.mxu0 0.0
      %2397 = vmatpush2.msra.mxu0 %v2327
      %2398 = vmatprep.subr.mxu0 0.0
      %2399 = vmatpush2.msra.mxu0 %v2326
      %2400 = vmatprep.subr.mxu0 0.0
      %2401 = vmatpush2.msra.mxu0 %v2325
      %2402 = vmatprep.subr.mxu0 0.0
      %2403 = vmatpush2.msra.mxu0 %v2324
      %2404 = vmatprep.mubr.f32.mxu0 %v517
      %2405 = vmatmul.mubr.f32.gmra.mxu0 %v516
      %v2406 = vpop.f32.mrf.mxu0
      %v2407 = vadd.f32 0.0, %v2406
      %v2408 = vpop.f32.mrf.mxu0
      %2409 = vdwg.mxu0
      %s2410 = scalar_lea.vmem %s5, 768
      %v2411 = vld [vmem:[%s2410] sm:$0xff]
      %v2412 = vld [vmem:[%s2410 + $0x8] sm:$0xff]
      %v2413 = vld [vmem:[%s2410 + $0x10] sm:$0xff]
      %v2414 = vld [vmem:[%s2410 + $0x18] sm:$0xff]
      %v2415 = vld [vmem:[%s2410 + $0x20] sm:$0xff]
      %v2416 = vld [vmem:[%s2410 + $0x28] sm:$0xff]
      %v2417 = vld [vmem:[%s2410 + $0x30] sm:$0xff]
      %v2418 = vld [vmem:[%s2410 + $0x38] sm:$0xff]
      %v2419 = vld [vmem:[%s2410 + $0x40] sm:$0xff]
      %v2420 = vld [vmem:[%s2410 + $0x48] sm:$0xff]
      %v2421 = vld [vmem:[%s2410 + $0x50] sm:$0xff]
      %v2422 = vld [vmem:[%s2410 + $0x58] sm:$0xff]
      %v2423 = vld [vmem:[%s2410 + $0x60] sm:$0xff]
      %v2424 = vld [vmem:[%s2410 + $0x68] sm:$0xff]
      %v2425 = vld [vmem:[%s2410 + $0x70] sm:$0xff]
      %v2426 = vld [vmem:[%s2410 + $0x78] sm:$0xff]
      %v2427 = vld [vmem:[%s2410 + $0x80] sm:$0xff]
      %v2428 = vld [vmem:[%s2410 + $0x88] sm:$0xff]
      %v2429 = vld [vmem:[%s2410 + $0x90] sm:$0xff]
      %v2430 = vld [vmem:[%s2410 + $0x98] sm:$0xff]
      %v2431 = vld [vmem:[%s2410 + $0xa0] sm:$0xff]
      %v2432 = vld [vmem:[%s2410 + $0xa8] sm:$0xff]
      %v2433 = vld [vmem:[%s2410 + $0xb0] sm:$0xff]
      %v2434 = vld [vmem:[%s2410 + $0xb8] sm:$0xff]
      %v2435 = vld [vmem:[%s2410 + $0xc0] sm:$0xff]
      %v2436 = vld [vmem:[%s2410 + $0xc8] sm:$0xff]
      %v2437 = vld [vmem:[%s2410 + $0xd0] sm:$0xff]
      %v2438 = vld [vmem:[%s2410 + $0xd8] sm:$0xff]
      %v2439 = vld [vmem:[%s2410 + $0xe0] sm:$0xff]
      %v2440 = vld [vmem:[%s2410 + $0xe8] sm:$0xff]
      %v2441 = vld [vmem:[%s2410 + $0xf0] sm:$0xff]
      %v2442 = vld [vmem:[%s2410 + $0xf8] sm:$0xff]
      %2443 = vmatprep.subr.mxu0 0.0
      %2444 = vmatpush1.msra.mxu0 %v2426
      %2445 = vmatprep.subr.mxu0 0.0
      %2446 = vmatpush1.msra.mxu0 %v2425
      %2447 = vmatprep.subr.mxu0 0.0
      %2448 = vmatpush1.msra.mxu0 %v2424
      %2449 = vmatprep.subr.mxu0 0.0
      %2450 = vmatpush1.msra.mxu0 %v2423
      %2451 = vmatprep.subr.mxu0 0.0
      %2452 = vmatpush1.msra.mxu0 %v2422
      %2453 = vmatprep.subr.mxu0 0.0
      %2454 = vmatpush1.msra.mxu0 %v2421
      %2455 = vmatprep.subr.mxu0 0.0
      %2456 = vmatpush1.msra.mxu0 %v2420
      %2457 = vmatprep.subr.mxu0 0.0
      %2458 = vmatpush1.msra.mxu0 %v2419
      %2459 = vmatprep.subr.mxu0 0.0
      %2460 = vmatpush1.msra.mxu0 %v2418
      %2461 = vmatprep.subr.mxu0 0.0
      %2462 = vmatpush1.msra.mxu0 %v2417
      %2463 = vmatprep.subr.mxu0 0.0
      %2464 = vmatpush1.msra.mxu0 %v2416
      %2465 = vmatprep.subr.mxu0 0.0
      %2466 = vmatpush1.msra.mxu0 %v2415
      %2467 = vmatprep.subr.mxu0 0.0
      %2468 = vmatpush1.msra.mxu0 %v2414
      %2469 = vmatprep.subr.mxu0 0.0
      %2470 = vmatpush1.msra.mxu0 %v2413
      %2471 = vmatprep.subr.mxu0 0.0
      %2472 = vmatpush1.msra.mxu0 %v2412
      %2473 = vmatprep.subr.mxu0 0.0
      %2474 = vmatpush1.msra.mxu0 %v2411
      %2475 = vmatprep.subr.mxu0 0.0
      %2476 = vmatpush2.msra.mxu0 %v2442
      %2477 = vmatprep.subr.mxu0 0.0
      %2478 = vmatpush2.msra.mxu0 %v2441
      %2479 = vmatprep.subr.mxu0 0.0
      %2480 = vmatpush2.msra.mxu0 %v2440
      %2481 = vmatprep.subr.mxu0 0.0
      %2482 = vmatpush2.msra.mxu0 %v2439
      %2483 = vmatprep.subr.mxu0 0.0
      %2484 = vmatpush2.msra.mxu0 %v2438
      %2485 = vmatprep.subr.mxu0 0.0
      %2486 = vmatpush2.msra.mxu0 %v2437
      %2487 = vmatprep.subr.mxu0 0.0
      %2488 = vmatpush2.msra.mxu0 %v2436
      %2489 = vmatprep.subr.mxu0 0.0
      %2490 = vmatpush2.msra.mxu0 %v2435
      %2491 = vmatprep.subr.mxu0 0.0
      %2492 = vmatpush2.msra.mxu0 %v2434
      %2493 = vmatprep.subr.mxu0 0.0
      %2494 = vmatpush2.msra.mxu0 %v2433
      %2495 = vmatprep.subr.mxu0 0.0
      %2496 = vmatpush2.msra.mxu0 %v2432
      %2497 = vmatprep.subr.mxu0 0.0
      %2498 = vmatpush2.msra.mxu0 %v2431
      %2499 = vmatprep.subr.mxu0 0.0
      %2500 = vmatpush2.msra.mxu0 %v2430
      %2501 = vmatprep.subr.mxu0 0.0
      %2502 = vmatpush2.msra.mxu0 %v2429
      %2503 = vmatprep.subr.mxu0 0.0
      %2504 = vmatpush2.msra.mxu0 %v2428
      %2505 = vmatprep.subr.mxu0 0.0
      %2506 = vmatpush2.msra.mxu0 %v2427
      %2507 = vmatprep.mubr.f32.mxu0 %v517
      %2508 = vmatmul.mubr.f32.gmra.mxu0 %v516
      %v2509 = vpop.f32.mrf.mxu0
      %v2510 = vadd.f32 0.0, %v2509
      %v2511 = vpop.f32.mrf.mxu0
      %2512 = vdwg.mxu0
      %v2514 = vsel %vm824, %v2304, 0
      %v2517 = vsel %vm824, %v2407, 0
      %2519 = vmatprep.subr.mxu0 0.0
      %2520 = vmatpush1.xpose.msra.mxu0 0.0
      %2521 = vmatprep.subr.mxu0 0.0
      %2522 = vmatpush1.xpose.msra.mxu0 0.0
      %2523 = vmatprep.subr.mxu0 0.0
      %2524 = vmatpush1.xpose.msra.mxu0 0.0
      %2525 = vmatprep.subr.mxu0 0.0
      %2526 = vmatpush1.xpose.msra.mxu0 0.0
      %2527 = vmatprep.subr.mxu0 0.0
      %2528 = vmatpush1.xpose.msra.mxu0 0.0
      %2529 = vmatprep.subr.mxu0 0.0
      %2530 = vmatpush1.xpose.msra.mxu0 0.0
      %2531 = vmatprep.subr.mxu0 0.0
      %2532 = vmatpush1.xpose.msra.mxu0 0.0
      %2533 = vmatprep.subr.mxu0 0.0
      %2534 = vmatpush1.xpose.msra.mxu0 0.0
      %2535 = vmatprep.subr.mxu0 0.0
      %2536 = vmatpush1.xpose.msra.mxu0 0.0
      %2537 = vmatprep.subr.mxu0 0.0
      %2538 = vmatpush1.xpose.msra.mxu0 0.0
      %2539 = vmatprep.subr.mxu0 0.0
      %2540 = vmatpush1.xpose.msra.mxu0 0.0
      %2541 = vmatprep.subr.mxu0 0.0
      %2542 = vmatpush1.xpose.msra.mxu0 0.0
      %2543 = vmatprep.subr.mxu0 0.0
      %2544 = vmatpush1.xpose.msra.mxu0 0.0
      %2545 = vmatprep.subr.mxu0 0.0
      %2546 = vmatpush1.xpose.msra.mxu0 0.0
      %2547 = vmatprep.subr.mxu0 0.0
      %2548 = vmatpush1.xpose.msra.mxu0 0.0
      %2549 = vmatprep.subr.mxu0 0.0
      %2550 = vmatpush1.xpose.msra.mxu0 %v2517
      %2551 = vmatprep.subr.mxu0 0.0
      %2552 = vmatpush2.xpose.msra.mxu0 0.0
      %2553 = vmatprep.subr.mxu0 0.0
      %2554 = vmatpush2.xpose.msra.mxu0 0.0
      %2555 = vmatprep.subr.mxu0 0.0
      %2556 = vmatpush2.xpose.msra.mxu0 0.0
      %2557 = vmatprep.subr.mxu0 0.0
      %2558 = vmatpush2.xpose.msra.mxu0 0.0
      %2559 = vmatprep.subr.mxu0 0.0
      %2560 = vmatpush2.xpose.msra.mxu0 0.0
      %2561 = vmatprep.subr.mxu0 0.0
      %2562 = vmatpush2.xpose.msra.mxu0 0.0
      %2563 = vmatprep.subr.mxu0 0.0
      %2564 = vmatpush2.xpose.msra.mxu0 0.0
      %2565 = vmatprep.subr.mxu0 0.0
      %2566 = vmatpush2.xpose.msra.mxu0 0.0
      %2567 = vmatprep.subr.mxu0 0.0
      %2568 = vmatpush2.xpose.msra.mxu0 0.0
      %2569 = vmatprep.subr.mxu0 0.0
      %2570 = vmatpush2.xpose.msra.mxu0 0.0
      %2571 = vmatprep.subr.mxu0 0.0
      %2572 = vmatpush2.xpose.msra.mxu0 0.0
      %2573 = vmatprep.subr.mxu0 0.0
      %2574 = vmatpush2.xpose.msra.mxu0 0.0
      %2575 = vmatprep.subr.mxu0 0.0
      %2576 = vmatpush2.xpose.msra.mxu0 0.0
      %2577 = vmatprep.subr.mxu0 0.0
      %2578 = vmatpush2.xpose.msra.mxu0 0.0
      %2579 = vmatprep.subr.mxu0 0.0
      %2580 = vmatpush2.xpose.msra.mxu0 0.0
      %2581 = vmatprep.subr.mxu0 0.0
      %2582 = vmatpush2.xpose.msra.mxu0 0.0
      %2583 = vmatprep.mubr.f32.mxu0 0.0
      %2584 = vmatmul.mubr.f32.gmra.mxu0 %v2514
      %v2585 = vpop.f32.mrf.mxu0
      %v2586 = vadd.f32 0.0, %v2585
      %v2587 = vpop.f32.mrf.mxu0
      %2588 = vdwg.mxu0
      %v2589 = vmul.f32 %v2586, 0.125
      %v2590 = vsel %vm472, %v2589, -1e+30
      %v2591 = vsel %vm903, %v2590, -inf
      %2592 = vmax.xlane.f32.xlu0 %v2591
      %v2593 = vpop.xlane.xlu0 %2592
      %v2594 = vsub.f32 %v2590, %v2593
      %v2595 = vmul.f32 %v2594, 1.442695
      %v2596 = vpow.pop %v2595
      %v2597 = vsel %vm903, %v2596, 0.0
      %2598 = vadd.xlane.f32.xlu0 %v2597
      %v2599 = vpop.xlane.xlu0 %2598
      %v2600 = vrcp.pop %v2599
      %v2601 = vmul.f32 %v2596, %v2600
      %v2603 = vsel %vm903, %v2601, 0
      %2605 = vmatprep.subr.mxu0 0.0
      %2606 = vmatpush1.msra.mxu0 0.0
      %2607 = vmatprep.subr.mxu0 0.0
      %2608 = vmatpush1.msra.mxu0 0.0
      %2609 = vmatprep.subr.mxu0 0.0
      %2610 = vmatpush1.msra.mxu0 0.0
      %2611 = vmatprep.subr.mxu0 0.0
      %2612 = vmatpush1.msra.mxu0 0.0
      %2613 = vmatprep.subr.mxu0 0.0
      %2614 = vmatpush1.msra.mxu0 0.0
      %2615 = vmatprep.subr.mxu0 0.0
      %2616 = vmatpush1.msra.mxu0 0.0
      %2617 = vmatprep.subr.mxu0 0.0
      %2618 = vmatpush1.msra.mxu0 0.0
      %2619 = vmatprep.subr.mxu0 0.0
      %2620 = vmatpush1.msra.mxu0 0.0
      %2621 = vmatprep.subr.mxu0 0.0
      %2622 = vmatpush1.msra.mxu0 0.0
      %2623 = vmatprep.subr.mxu0 0.0
      %2624 = vmatpush1.msra.mxu0 0.0
      %2625 = vmatprep.subr.mxu0 0.0
      %2626 = vmatpush1.msra.mxu0 0.0
      %2627 = vmatprep.subr.mxu0 0.0
      %2628 = vmatpush1.msra.mxu0 0.0
      %2629 = vmatprep.subr.mxu0 0.0
      %2630 = vmatpush1.msra.mxu0 0.0
      %2631 = vmatprep.subr.mxu0 0.0
      %2632 = vmatpush1.msra.mxu0 0.0
      %2633 = vmatprep.subr.mxu0 0.0
      %2634 = vmatpush1.msra.mxu0 0.0
      %2635 = vmatprep.subr.mxu0 0.0
      %2636 = vmatpush1.msra.mxu0 %v2510
      %2637 = vmatprep.subr.mxu0 0.0
      %2638 = vmatpush2.msra.mxu0 0.0
      %2639 = vmatprep.subr.mxu0 0.0
      %2640 = vmatpush2.msra.mxu0 0.0
      %2641 = vmatprep.subr.mxu0 0.0
      %2642 = vmatpush2.msra.mxu0 0.0
      %2643 = vmatprep.subr.mxu0 0.0
      %2644 = vmatpush2.msra.mxu0 0.0
      %2645 = vmatprep.subr.mxu0 0.0
      %2646 = vmatpush2.msra.mxu0 0.0
      %2647 = vmatprep.subr.mxu0 0.0
      %2648 = vmatpush2.msra.mxu0 0.0
      %2649 = vmatprep.subr.mxu0 0.0
      %2650 = vmatpush2.msra.mxu0 0.0
      %2651 = vmatprep.subr.mxu0 0.0
      %2652 = vmatpush2.msra.mxu0 0.0
      %2653 = vmatprep.subr.mxu0 0.0
      %2654 = vmatpush2.msra.mxu0 0.0
      %2655 = vmatprep.subr.mxu0 0.0
      %2656 = vmatpush2.msra.mxu0 0.0
      %2657 = vmatprep.subr.mxu0 0.0
      %2658 = vmatpush2.msra.mxu0 0.0
      %2659 = vmatprep.subr.mxu0 0.0
      %2660 = vmatpush2.msra.mxu0 0.0
      %2661 = vmatprep.subr.mxu0 0.0
      %2662 = vmatpush2.msra.mxu0 0.0
      %2663 = vmatprep.subr.mxu0 0.0
      %2664 = vmatpush2.msra.mxu0 0.0
      %2665 = vmatprep.subr.mxu0 0.0
      %2666 = vmatpush2.msra.mxu0 0.0
      %2667 = vmatprep.subr.mxu0 0.0
      %2668 = vmatpush2.msra.mxu0 0.0
      %2669 = vmatprep.mubr.f32.mxu0 0.0
      %2670 = vmatmul.mubr.f32.gmra.mxu0 %v2603
      %v2671 = vpop.f32.mrf.mxu0
      %v2672 = vadd.f32 0.0, %v2671
      %v2673 = vpop.f32.mrf.mxu0
      %2674 = vdwg.mxu0
      %s2675 = scalar_lea.vmem %s6, 384
      %v2676 = vld [vmem:[%s2675] sm:$0xff]
      %v2677 = vld [vmem:[%s2675 + $0x8] sm:$0xff]
      %v2678 = vld [vmem:[%s2675 + $0x10] sm:$0xff]
      %v2679 = vld [vmem:[%s2675 + $0x18] sm:$0xff]
      %v2680 = vld [vmem:[%s2675 + $0x20] sm:$0xff]
      %v2681 = vld [vmem:[%s2675 + $0x28] sm:$0xff]
      %v2682 = vld [vmem:[%s2675 + $0x30] sm:$0xff]
      %v2683 = vld [vmem:[%s2675 + $0x38] sm:$0xff]
      %v2684 = vld [vmem:[%s2675 + $0x40] sm:$0xff]
      %v2685 = vld [vmem:[%s2675 + $0x48] sm:$0xff]
      %v2686 = vld [vmem:[%s2675 + $0x50] sm:$0xff]
      %v2687 = vld [vmem:[%s2675 + $0x58] sm:$0xff]
      %v2688 = vld [vmem:[%s2675 + $0x60] sm:$0xff]
      %v2689 = vld [vmem:[%s2675 + $0x68] sm:$0xff]
      %v2690 = vld [vmem:[%s2675 + $0x70] sm:$0xff]
      %v2691 = vld [vmem:[%s2675 + $0x78] sm:$0xff]
      %v2693 = vsel %vm824, %v2672, 0
      %2695 = vmatprep.subr.mxu0 0.0
      %2696 = vmatpush1.msra.mxu0 0.0
      %2697 = vmatprep.subr.mxu0 0.0
      %2698 = vmatpush1.msra.mxu0 0.0
      %2699 = vmatprep.subr.mxu0 0.0
      %2700 = vmatpush1.msra.mxu0 0.0
      %2701 = vmatprep.subr.mxu0 0.0
      %2702 = vmatpush1.msra.mxu0 0.0
      %2703 = vmatprep.subr.mxu0 0.0
      %2704 = vmatpush1.msra.mxu0 0.0
      %2705 = vmatprep.subr.mxu0 0.0
      %2706 = vmatpush1.msra.mxu0 0.0
      %2707 = vmatprep.subr.mxu0 0.0
      %2708 = vmatpush1.msra.mxu0 0.0
      %2709 = vmatprep.subr.mxu0 0.0
      %2710 = vmatpush1.msra.mxu0 0.0
      %2711 = vmatprep.subr.mxu0 %v2691
      %2712 = vmatpush1.msra.mxu0 %v2690
      %2713 = vmatprep.subr.mxu0 %v2689
      %2714 = vmatpush1.msra.mxu0 %v2688
      %2715 = vmatprep.subr.mxu0 %v2687
      %2716 = vmatpush1.msra.mxu0 %v2686
      %2717 = vmatprep.subr.mxu0 %v2685
      %2718 = vmatpush1.msra.mxu0 %v2684
      %2719 = vmatprep.subr.mxu0 %v2683
      %2720 = vmatpush1.msra.mxu0 %v2682
      %2721 = vmatprep.subr.mxu0 %v2681
      %2722 = vmatpush1.msra.mxu0 %v2680
      %2723 = vmatprep.subr.mxu0 %v2679
      %2724 = vmatpush1.msra.mxu0 %v2678
      %2725 = vmatprep.subr.mxu0 %v2677
      %2726 = vmatpush1.msra.mxu0 %v2676
      %2727 = vmatprep.subr.mxu0 0.0
      %2728 = vmatpush2.msra.mxu0 0.0
      %2729 = vmatprep.subr.mxu0 0.0
      %2730 = vmatpush2.msra.mxu0 0.0
      %2731 = vmatprep.subr.mxu0 0.0
      %2732 = vmatpush2.msra.mxu0 0.0
      %2733 = vmatprep.subr.mxu0 0.0
      %2734 = vmatpush2.msra.mxu0 0.0
      %2735 = vmatprep.subr.mxu0 0.0
      %2736 = vmatpush2.msra.mxu0 0.0
      %2737 = vmatprep.subr.mxu0 0.0
      %2738 = vmatpush2.msra.mxu0 0.0
      %2739 = vmatprep.subr.mxu0 0.0
      %2740 = vmatpush2.msra.mxu0 0.0
      %2741 = vmatprep.subr.mxu0 0.0
      %2742 = vmatpush2.msra.mxu0 0.0
      %2743 = vmatprep.subr.mxu0 0.0
      %2744 = vmatpush2.msra.mxu0 0.0
      %2745 = vmatprep.subr.mxu0 0.0
      %2746 = vmatpush2.msra.mxu0 0.0
      %2747 = vmatprep.subr.mxu0 0.0
      %2748 = vmatpush2.msra.mxu0 0.0
      %2749 = vmatprep.subr.mxu0 0.0
      %2750 = vmatpush2.msra.mxu0 0.0
      %2751 = vmatprep.subr.mxu0 0.0
      %2752 = vmatpush2.msra.mxu0 0.0
      %2753 = vmatprep.subr.mxu0 0.0
      %2754 = vmatpush2.msra.mxu0 0.0
      %2755 = vmatprep.subr.mxu0 0.0
      %2756 = vmatpush2.msra.mxu0 0.0
      %2757 = vmatprep.subr.mxu0 0.0
      %2758 = vmatpush2.msra.mxu0 0.0
      %2759 = vmatprep.mubr.f32.mxu0 0.0
      %2760 = vmatmul.mubr.f32.gmra.mxu0 %v2693
      %v2761 = vpop.f32.mrf.mxu0
      %v2762 = vadd.f32 0.0, %v2761
      %v2763 = vpop.f32.mrf.mxu0
      %v2764 = vadd.f32 0.0, %v2763
      %2765 = vdwg.mxu0
      %v2766 = vadd.f32 %v2202, %v2762
      %v2767 = vadd.f32 %v2203, %v2764
      %v2768 = vadd.f32 %v468, %v2766
      %v2769 = vadd.f32 %v469, %v2767
      %v2770 = vld [vmem:[%s7] sm:$0x3]
      %v2772 = vlaneseq
      %v2773 = vshrl.u32 %v2772, 7
      %v2774 = vsub.s32 0, %v2773
      %v2775 = vrot.slane %v2770, %v2774
      %v2776 = vlaneseq
      %v2777 = vshrl.u32 %v2776, 7
      %v2778 = vsub.s32 1, %v2777
      %v2779 = vrot.slane %v2770, %v2778
      %v2782 = vadd.f32 %v2768, %v2775
      %v2783 = vadd.f32 %v2769, %v2779
      %v2784 = vld [vmem:[%s8] sm:$0x3]
      %v2785 = vld [vmem:[%s9] sm:$0x3]
      %v2786 = vadd.f32 %v2782, %v2783
      %2787 = vadd.xlane.f32.xlu0 %v2786
      %v2788 = vpop.xlane.xlu0 %2787
      %v2789 = vmul.f32 %v2788, %v478
      %v2790 = vsub.f32 %v2782, %v2789
      %v2791 = vsub.f32 %v2783, %v2789
      %v2792 = vmul.f32 %v2790, %v2790
      %v2793 = vmul.f32 %v2791, %v2791
      %v2794 = vadd.f32 %v2792, %v2793
      %2795 = vadd.xlane.f32.xlu0 %v2794
      %v2796 = vpop.xlane.xlu0 %2795
      %v2797 = vmul.f32 %v2796, %v478
      %v2798 = vadd.f32 %v2797, 1e-05
      %v2799 = vrsqrt.pop %v2798
      %v2800 = vmul.f32 %v2790, %v2799
      %v2801 = vmul.f32 %v2791, %v2799
      %v2803 = vlaneseq
      %v2804 = vshrl.u32 %v2803, 7
      %v2805 = vsub.s32 0, %v2804
      %v2806 = vrot.slane %v2784, %v2805
      %v2807 = vlaneseq
      %v2808 = vshrl.u32 %v2807, 7
      %v2809 = vsub.s32 1, %v2808
      %v2810 = vrot.slane %v2784, %v2809
      %v2813 = vmul.f32 %v2800, %v2806
      %v2814 = vmul.f32 %v2801, %v2810
      %v2816 = vlaneseq
      %v2817 = vshrl.u32 %v2816, 7
      %v2818 = vsub.s32 0, %v2817
      %v2819 = vrot.slane %v2785, %v2818
      %v2820 = vlaneseq
      %v2821 = vshrl.u32 %v2820, 7
      %v2822 = vsub.s32 1, %v2821
      %v2823 = vrot.slane %v2785, %v2822
      %v2826 = vadd.f32 %v2813, %v2819
      %v2827 = vadd.f32 %v2814, %v2823
      %v2828 = vld [vmem:[%s10] sm:$0xff]
      %v2829 = vld [vmem:[%s10 + $0x8] sm:$0xff]
      %v2830 = vld [vmem:[%s10 + $0x10] sm:$0xff]
      %v2831 = vld [vmem:[%s10 + $0x18] sm:$0xff]
      %v2832 = vld [vmem:[%s10 + $0x20] sm:$0xff]
      %v2833 = vld [vmem:[%s10 + $0x28] sm:$0xff]
      %v2834 = vld [vmem:[%s10 + $0x30] sm:$0xff]
      %v2835 = vld [vmem:[%s10 + $0x38] sm:$0xff]
      %v2836 = vld [vmem:[%s10 + $0x40] sm:$0xff]
      %v2837 = vld [vmem:[%s10 + $0x48] sm:$0xff]
      %v2838 = vld [vmem:[%s10 + $0x50] sm:$0xff]
      %v2839 = vld [vmem:[%s10 + $0x58] sm:$0xff]
      %v2840 = vld [vmem:[%s10 + $0x60] sm:$0xff]
      %v2841 = vld [vmem:[%s10 + $0x68] sm:$0xff]
      %v2842 = vld [vmem:[%s10 + $0x70] sm:$0xff]
      %v2843 = vld [vmem:[%s10 + $0x78] sm:$0xff]
      %v2844 = vld [vmem:[%s10 + $0x80] sm:$0xff]
      %v2845 = vld [vmem:[%s10 + $0x88] sm:$0xff]
      %v2846 = vld [vmem:[%s10 + $0x90] sm:$0xff]
      %v2847 = vld [vmem:[%s10 + $0x98] sm:$0xff]
      %v2848 = vld [vmem:[%s10 + $0xa0] sm:$0xff]
      %v2849 = vld [vmem:[%s10 + $0xa8] sm:$0xff]
      %v2850 = vld [vmem:[%s10 + $0xb0] sm:$0xff]
      %v2851 = vld [vmem:[%s10 + $0xb8] sm:$0xff]
      %v2852 = vld [vmem:[%s10 + $0xc0] sm:$0xff]
      %v2853 = vld [vmem:[%s10 + $0xc8] sm:$0xff]
      %v2854 = vld [vmem:[%s10 + $0xd0] sm:$0xff]
      %v2855 = vld [vmem:[%s10 + $0xd8] sm:$0xff]
      %v2856 = vld [vmem:[%s10 + $0xe0] sm:$0xff]
      %v2857 = vld [vmem:[%s10 + $0xe8] sm:$0xff]
      %v2858 = vld [vmem:[%s10 + $0xf0] sm:$0xff]
      %v2859 = vld [vmem:[%s10 + $0xf8] sm:$0xff]
      %v2860 = vld [vmem:[%s10 + $0x100] sm:$0xff]
      %v2861 = vld [vmem:[%s10 + $0x108] sm:$0xff]
      %v2862 = vld [vmem:[%s10 + $0x110] sm:$0xff]
      %v2863 = vld [vmem:[%s10 + $0x118] sm:$0xff]
      %v2864 = vld [vmem:[%s10 + $0x120] sm:$0xff]
      %v2865 = vld [vmem:[%s10 + $0x128] sm:$0xff]
      %v2866 = vld [vmem:[%s10 + $0x130] sm:$0xff]
      %v2867 = vld [vmem:[%s10 + $0x138] sm:$0xff]
      %v2868 = vld [vmem:[%s10 + $0x140] sm:$0xff]
      %v2869 = vld [vmem:[%s10 + $0x148] sm:$0xff]
      %v2870 = vld [vmem:[%s10 + $0x150] sm:$0xff]
      %v2871 = vld [vmem:[%s10 + $0x158] sm:$0xff]
      %v2872 = vld [vmem:[%s10 + $0x160] sm:$0xff]
      %v2873 = vld [vmem:[%s10 + $0x168] sm:$0xff]
      %v2874 = vld [vmem:[%s10 + $0x170] sm:$0xff]
      %v2875 = vld [vmem:[%s10 + $0x178] sm:$0xff]
      %v2876 = vld [vmem:[%s10 + $0x180] sm:$0xff]
      %v2877 = vld [vmem:[%s10 + $0x188] sm:$0xff]
      %v2878 = vld [vmem:[%s10 + $0x190] sm:$0xff]
      %v2879 = vld [vmem:[%s10 + $0x198] sm:$0xff]
      %v2880 = vld [vmem:[%s10 + $0x1a0] sm:$0xff]
      %v2881 = vld [vmem:[%s10 + $0x1a8] sm:$0xff]
      %v2882 = vld [vmem:[%s10 + $0x1b0] sm:$0xff]
      %v2883 = vld [vmem:[%s10 + $0x1b8] sm:$0xff]
      %v2884 = vld [vmem:[%s10 + $0x1c0] sm:$0xff]
      %v2885 = vld [vmem:[%s10 + $0x1c8] sm:$0xff]
      %v2886 = vld [vmem:[%s10 + $0x1d0] sm:$0xff]
      %v2887 = vld [vmem:[%s10 + $0x1d8] sm:$0xff]
      %v2888 = vld [vmem:[%s10 + $0x1e0] sm:$0xff]
      %v2889 = vld [vmem:[%s10 + $0x1e8] sm:$0xff]
      %v2890 = vld [vmem:[%s10 + $0x1f0] sm:$0xff]
      %v2891 = vld [vmem:[%s10 + $0x1f8] sm:$0xff]
      %v2892 = vld [vmem:[%s10 + $0x200] sm:$0xff]
      %v2893 = vld [vmem:[%s10 + $0x208] sm:$0xff]
      %v2894 = vld [vmem:[%s10 + $0x210] sm:$0xff]
      %v2895 = vld [vmem:[%s10 + $0x218] sm:$0xff]
      %v2896 = vld [vmem:[%s10 + $0x220] sm:$0xff]
      %v2897 = vld [vmem:[%s10 + $0x228] sm:$0xff]
      %v2898 = vld [vmem:[%s10 + $0x230] sm:$0xff]
      %v2899 = vld [vmem:[%s10 + $0x238] sm:$0xff]
      %v2900 = vld [vmem:[%s10 + $0x240] sm:$0xff]
      %v2901 = vld [vmem:[%s10 + $0x248] sm:$0xff]
      %v2902 = vld [vmem:[%s10 + $0x250] sm:$0xff]
      %v2903 = vld [vmem:[%s10 + $0x258] sm:$0xff]
      %v2904 = vld [vmem:[%s10 + $0x260] sm:$0xff]
      %v2905 = vld [vmem:[%s10 + $0x268] sm:$0xff]
      %v2906 = vld [vmem:[%s10 + $0x270] sm:$0xff]
      %v2907 = vld [vmem:[%s10 + $0x278] sm:$0xff]
      %v2908 = vld [vmem:[%s10 + $0x280] sm:$0xff]
      %v2909 = vld [vmem:[%s10 + $0x288] sm:$0xff]
      %v2910 = vld [vmem:[%s10 + $0x290] sm:$0xff]
      %v2911 = vld [vmem:[%s10 + $0x298] sm:$0xff]
      %v2912 = vld [vmem:[%s10 + $0x2a0] sm:$0xff]
      %v2913 = vld [vmem:[%s10 + $0x2a8] sm:$0xff]
      %v2914 = vld [vmem:[%s10 + $0x2b0] sm:$0xff]
      %v2915 = vld [vmem:[%s10 + $0x2b8] sm:$0xff]
      %v2916 = vld [vmem:[%s10 + $0x2c0] sm:$0xff]
      %v2917 = vld [vmem:[%s10 + $0x2c8] sm:$0xff]
      %v2918 = vld [vmem:[%s10 + $0x2d0] sm:$0xff]
      %v2919 = vld [vmem:[%s10 + $0x2d8] sm:$0xff]
      %v2920 = vld [vmem:[%s10 + $0x2e0] sm:$0xff]
      %v2921 = vld [vmem:[%s10 + $0x2e8] sm:$0xff]
      %v2922 = vld [vmem:[%s10 + $0x2f0] sm:$0xff]
      %v2923 = vld [vmem:[%s10 + $0x2f8] sm:$0xff]
      %v2924 = vld [vmem:[%s10 + $0x300] sm:$0xff]
      %v2925 = vld [vmem:[%s10 + $0x308] sm:$0xff]
      %v2926 = vld [vmem:[%s10 + $0x310] sm:$0xff]
      %v2927 = vld [vmem:[%s10 + $0x318] sm:$0xff]
      %v2928 = vld [vmem:[%s10 + $0x320] sm:$0xff]
      %v2929 = vld [vmem:[%s10 + $0x328] sm:$0xff]
      %v2930 = vld [vmem:[%s10 + $0x330] sm:$0xff]
      %v2931 = vld [vmem:[%s10 + $0x338] sm:$0xff]
      %v2932 = vld [vmem:[%s10 + $0x340] sm:$0xff]
      %v2933 = vld [vmem:[%s10 + $0x348] sm:$0xff]
      %v2934 = vld [vmem:[%s10 + $0x350] sm:$0xff]
      %v2935 = vld [vmem:[%s10 + $0x358] sm:$0xff]
      %v2936 = vld [vmem:[%s10 + $0x360] sm:$0xff]
      %v2937 = vld [vmem:[%s10 + $0x368] sm:$0xff]
      %v2938 = vld [vmem:[%s10 + $0x370] sm:$0xff]
      %v2939 = vld [vmem:[%s10 + $0x378] sm:$0xff]
      %v2940 = vld [vmem:[%s10 + $0x380] sm:$0xff]
      %v2941 = vld [vmem:[%s10 + $0x388] sm:$0xff]
      %v2942 = vld [vmem:[%s10 + $0x390] sm:$0xff]
      %v2943 = vld [vmem:[%s10 + $0x398] sm:$0xff]
      %v2944 = vld [vmem:[%s10 + $0x3a0] sm:$0xff]
      %v2945 = vld [vmem:[%s10 + $0x3a8] sm:$0xff]
      %v2946 = vld [vmem:[%s10 + $0x3b0] sm:$0xff]
      %v2947 = vld [vmem:[%s10 + $0x3b8] sm:$0xff]
      %v2948 = vld [vmem:[%s10 + $0x3c0] sm:$0xff]
      %v2949 = vld [vmem:[%s10 + $0x3c8] sm:$0xff]
      %v2950 = vld [vmem:[%s10 + $0x3d0] sm:$0xff]
      %v2951 = vld [vmem:[%s10 + $0x3d8] sm:$0xff]
      %v2952 = vld [vmem:[%s10 + $0x3e0] sm:$0xff]
      %v2953 = vld [vmem:[%s10 + $0x3e8] sm:$0xff]
      %v2954 = vld [vmem:[%s10 + $0x3f0] sm:$0xff]
      %v2955 = vld [vmem:[%s10 + $0x3f8] sm:$0xff]
      %v2956 = vld [vmem:[%s11] sm:$0xf]
      %v2958 = vlaneseq
      %v2959 = vshrl.u32 %v2958, 7
      %v2960 = vsub.s32 0, %v2959
      %v2961 = vrot.slane %v2956, %v2960
      %v2962 = vlaneseq
      %v2963 = vshrl.u32 %v2962, 7
      %v2964 = vsub.s32 1, %v2963
      %v2965 = vrot.slane %v2956, %v2964
      %v2966 = vlaneseq
      %v2967 = vshrl.u32 %v2966, 7
      %v2968 = vsub.s32 2, %v2967
      %v2969 = vrot.slane %v2956, %v2968
      %v2970 = vlaneseq
      %v2971 = vshrl.u32 %v2970, 7
      %v2972 = vsub.s32 3, %v2971
      %v2973 = vrot.slane %v2956, %v2972
      %2978 = vmatprep.subr.mxu0 %v2889
      %2979 = vmatpush1.msra.mxu0 %v2888
      %2980 = vmatprep.subr.mxu0 %v2885
      %2981 = vmatpush1.msra.mxu0 %v2884
      %2982 = vmatprep.subr.mxu0 %v2881
      %2983 = vmatpush1.msra.mxu0 %v2880
      %2984 = vmatprep.subr.mxu0 %v2877
      %2985 = vmatpush1.msra.mxu0 %v2876
      %2986 = vmatprep.subr.mxu0 %v2873
      %2987 = vmatpush1.msra.mxu0 %v2872
      %2988 = vmatprep.subr.mxu0 %v2869
      %2989 = vmatpush1.msra.mxu0 %v2868
      %2990 = vmatprep.subr.mxu0 %v2865
      %2991 = vmatpush1.msra.mxu0 %v2864
      %2992 = vmatprep.subr.mxu0 %v2861
      %2993 = vmatpush1.msra.mxu0 %v2860
      %2994 = vmatprep.subr.mxu0 %v2857
      %2995 = vmatpush1.msra.mxu0 %v2856
      %2996 = vmatprep.subr.mxu0 %v2853
      %2997 = vmatpush1.msra.mxu0 %v2852
      %2998 = vmatprep.subr.mxu0 %v2849
      %2999 = vmatpush1.msra.mxu0 %v2848
      %3000 = vmatprep.subr.mxu0 %v2845
      %3001 = vmatpush1.msra.mxu0 %v2844
      %3002 = vmatprep.subr.mxu0 %v2841
      %3003 = vmatpush1.msra.mxu0 %v2840
      %3004 = vmatprep.subr.mxu0 %v2837
      %3005 = vmatpush1.msra.mxu0 %v2836
      %3006 = vmatprep.subr.mxu0 %v2833
      %3007 = vmatpush1.msra.mxu0 %v2832
      %3008 = vmatprep.subr.mxu0 %v2829
      %3009 = vmatpush1.msra.mxu0 %v2828
      %3010 = vmatprep.subr.mxu0 %v2953
      %3011 = vmatpush2.msra.mxu0 %v2952
      %3012 = vmatprep.subr.mxu0 %v2949
      %3013 = vmatpush2.msra.mxu0 %v2948
      %3014 = vmatprep.subr.mxu0 %v2945
      %3015 = vmatpush2.msra.mxu0 %v2944
      %3016 = vmatprep.subr.mxu0 %v2941
      %3017 = vmatpush2.msra.mxu0 %v2940
      %3018 = vmatprep.subr.mxu0 %v2937
      %3019 = vmatpush2.msra.mxu0 %v2936
      %3020 = vmatprep.subr.mxu0 %v2933
      %3021 = vmatpush2.msra.mxu0 %v2932
      %3022 = vmatprep.subr.mxu0 %v2929
      %3023 = vmatpush2.msra.mxu0 %v2928
      %3024 = vmatprep.subr.mxu0 %v2925
      %3025 = vmatpush2.msra.mxu0 %v2924
      %3026 = vmatprep.subr.mxu0 %v2921
      %3027 = vmatpush2.msra.mxu0 %v2920
      %3028 = vmatprep.subr.mxu0 %v2917
      %3029 = vmatpush2.msra.mxu0 %v2916
      %3030 = vmatprep.subr.mxu0 %v2913
      %3031 = vmatpush2.msra.mxu0 %v2912
      %3032 = vmatprep.subr.mxu0 %v2909
      %3033 = vmatpush2.msra.mxu0 %v2908
      %3034 = vmatprep.subr.mxu0 %v2905
      %3035 = vmatpush2.msra.mxu0 %v2904
      %3036 = vmatprep.subr.mxu0 %v2901
      %3037 = vmatpush2.msra.mxu0 %v2900
      %3038 = vmatprep.subr.mxu0 %v2897
      %3039 = vmatpush2.msra.mxu0 %v2896
      %3040 = vmatprep.subr.mxu0 %v2893
      %3041 = vmatpush2.msra.mxu0 %v2892
      %3042 = vmatprep.mubr.f32.mxu0 %v2827
      %3043 = vmatmul.mubr.f32.gmra.mxu0 %v2826
      %v3044 = vpop.f32.mrf.mxu0
      %v3045 = vadd.f32 %v2961, %v3044
      %v3046 = vpop.f32.mrf.mxu0
      %v3047 = vadd.f32 %v2965, %v3046
      %3048 = vdwg.mxu0
      %3049 = vmatprep.subr.mxu0 %v2891
      %3050 = vmatpush1.msra.mxu0 %v2890
      %3051 = vmatprep.subr.mxu0 %v2887
      %3052 = vmatpush1.msra.mxu0 %v2886
      %3053 = vmatprep.subr.mxu0 %v2883
      %3054 = vmatpush1.msra.mxu0 %v2882
      %3055 = vmatprep.subr.mxu0 %v2879
      %3056 = vmatpush1.msra.mxu0 %v2878
      %3057 = vmatprep.subr.mxu0 %v2875
      %3058 = vmatpush1.msra.mxu0 %v2874
      %3059 = vmatprep.subr.mxu0 %v2871
      %3060 = vmatpush1.msra.mxu0 %v2870
      %3061 = vmatprep.subr.mxu0 %v2867
      %3062 = vmatpush1.msra.mxu0 %v2866
      %3063 = vmatprep.subr.mxu0 %v2863
      %3064 = vmatpush1.msra.mxu0 %v2862
      %3065 = vmatprep.subr.mxu0 %v2859
      %3066 = vmatpush1.msra.mxu0 %v2858
      %3067 = vmatprep.subr.mxu0 %v2855
      %3068 = vmatpush1.msra.mxu0 %v2854
      %3069 = vmatprep.subr.mxu0 %v2851
      %3070 = vmatpush1.msra.mxu0 %v2850
      %3071 = vmatprep.subr.mxu0 %v2847
      %3072 = vmatpush1.msra.mxu0 %v2846
      %3073 = vmatprep.subr.mxu0 %v2843
      %3074 = vmatpush1.msra.mxu0 %v2842
      %3075 = vmatprep.subr.mxu0 %v2839
      %3076 = vmatpush1.msra.mxu0 %v2838
      %3077 = vmatprep.subr.mxu0 %v2835
      %3078 = vmatpush1.msra.mxu0 %v2834
      %3079 = vmatprep.subr.mxu0 %v2831
      %3080 = vmatpush1.msra.mxu0 %v2830
      %3081 = vmatprep.subr.mxu0 %v2955
      %3082 = vmatpush2.msra.mxu0 %v2954
      %3083 = vmatprep.subr.mxu0 %v2951
      %3084 = vmatpush2.msra.mxu0 %v2950
      %3085 = vmatprep.subr.mxu0 %v2947
      %3086 = vmatpush2.msra.mxu0 %v2946
      %3087 = vmatprep.subr.mxu0 %v2943
      %3088 = vmatpush2.msra.mxu0 %v2942
      %3089 = vmatprep.subr.mxu0 %v2939
      %3090 = vmatpush2.msra.mxu0 %v2938
      %3091 = vmatprep.subr.mxu0 %v2935
      %3092 = vmatpush2.msra.mxu0 %v2934
      %3093 = vmatprep.subr.mxu0 %v2931
      %3094 = vmatpush2.msra.mxu0 %v2930
      %3095 = vmatprep.subr.mxu0 %v2927
      %3096 = vmatpush2.msra.mxu0 %v2926
      %3097 = vmatprep.subr.mxu0 %v2923
      %3098 = vmatpush2.msra.mxu0 %v2922
      %3099 = vmatprep.subr.mxu0 %v2919
      %3100 = vmatpush2.msra.mxu0 %v2918
      %3101 = vmatprep.subr.mxu0 %v2915
      %3102 = vmatpush2.msra.mxu0 %v2914
      %3103 = vmatprep.subr.mxu0 %v2911
      %3104 = vmatpush2.msra.mxu0 %v2910
      %3105 = vmatprep.subr.mxu0 %v2907
      %3106 = vmatpush2.msra.mxu0 %v2906
      %3107 = vmatprep.subr.mxu0 %v2903
      %3108 = vmatpush2.msra.mxu0 %v2902
      %3109 = vmatprep.subr.mxu0 %v2899
      %3110 = vmatpush2.msra.mxu0 %v2898
      %3111 = vmatprep.subr.mxu0 %v2895
      %3112 = vmatpush2.msra.mxu0 %v2894
      %3113 = vmatprep.mubr.f32.mxu0 %v2827
      %3114 = vmatmul.mubr.f32.gmra.mxu0 %v2826
      %v3115 = vpop.f32.mrf.mxu0
      %v3116 = vadd.f32 %v2969, %v3115
      %v3117 = vpop.f32.mrf.mxu0
      %v3118 = vadd.f32 %v2973, %v3117
      %3119 = vdwg.mxu0
      %v3120 = vmul.f32 %v3045, 0.5
      %v3121 = vmul.f32 %v3047, 0.5
      %v3122 = vmul.f32 %v3116, 0.5
      %v3123 = vmul.f32 %v3118, 0.5
      %v3124 = vmul.f32 %v3045, 0.70710677
      %v3125 = vmul.f32 %v3047, 0.70710677
      %v3126 = vmul.f32 %v3116, 0.70710677
      %v3127 = vmul.f32 %v3118, 0.70710677
      %v3128 = verf.f32.pop %v3124
      %v3129 = verf.f32.pop %v3125
      %v3130 = verf.f32.pop %v3126
      %v3131 = verf.f32.pop %v3127
      %v3132 = vadd.f32 %v3128, 1.0
      %v3133 = vadd.f32 %v3129, 1.0
      %v3134 = vadd.f32 %v3130, 1.0
      %v3135 = vadd.f32 %v3131, 1.0
      %v3136 = vmul.f32 %v3120, %v3132
      %v3137 = vmul.f32 %v3121, %v3133
      %v3138 = vmul.f32 %v3122, %v3134
      %v3139 = vmul.f32 %v3123, %v3135
      %v3140 = vld [vmem:[%s12] sm:$0xff]
      %v3141 = vld [vmem:[%s12 + $0x8] sm:$0xff]
      %v3142 = vld [vmem:[%s12 + $0x10] sm:$0xff]
      %v3143 = vld [vmem:[%s12 + $0x18] sm:$0xff]
      %v3144 = vld [vmem:[%s12 + $0x20] sm:$0xff]
      %v3145 = vld [vmem:[%s12 + $0x28] sm:$0xff]
      %v3146 = vld [vmem:[%s12 + $0x30] sm:$0xff]
      %v3147 = vld [vmem:[%s12 + $0x38] sm:$0xff]
      %v3148 = vld [vmem:[%s12 + $0x40] sm:$0xff]
      %v3149 = vld [vmem:[%s12 + $0x48] sm:$0xff]
      %v3150 = vld [vmem:[%s12 + $0x50] sm:$0xff]
      %v3151 = vld [vmem:[%s12 + $0x58] sm:$0xff]
      %v3152 = vld [vmem:[%s12 + $0x60] sm:$0xff]
      %v3153 = vld [vmem:[%s12 + $0x68] sm:$0xff]
      %v3154 = vld [vmem:[%s12 + $0x70] sm:$0xff]
      %v3155 = vld [vmem:[%s12 + $0x78] sm:$0xff]
      %v3156 = vld [vmem:[%s12 + $0x80] sm:$0xff]
      %v3157 = vld [vmem:[%s12 + $0x88] sm:$0xff]
      %v3158 = vld [vmem:[%s12 + $0x90] sm:$0xff]
      %v3159 = vld [vmem:[%s12 + $0x98] sm:$0xff]
      %v3160 = vld [vmem:[%s12 + $0xa0] sm:$0xff]
      %v3161 = vld [vmem:[%s12 + $0xa8] sm:$0xff]
      %v3162 = vld [vmem:[%s12 + $0xb0] sm:$0xff]
      %v3163 = vld [vmem:[%s12 + $0xb8] sm:$0xff]
      %v3164 = vld [vmem:[%s12 + $0xc0] sm:$0xff]
      %v3165 = vld [vmem:[%s12 + $0xc8] sm:$0xff]
      %v3166 = vld [vmem:[%s12 + $0xd0] sm:$0xff]
      %v3167 = vld [vmem:[%s12 + $0xd8] sm:$0xff]
      %v3168 = vld [vmem:[%s12 + $0xe0] sm:$0xff]
      %v3169 = vld [vmem:[%s12 + $0xe8] sm:$0xff]
      %v3170 = vld [vmem:[%s12 + $0xf0] sm:$0xff]
      %v3171 = vld [vmem:[%s12 + $0xf8] sm:$0xff]
      %v3172 = vld [vmem:[%s12 + $0x100] sm:$0xff]
      %v3173 = vld [vmem:[%s12 + $0x108] sm:$0xff]
      %v3174 = vld [vmem:[%s12 + $0x110] sm:$0xff]
      %v3175 = vld [vmem:[%s12 + $0x118] sm:$0xff]
      %v3176 = vld [vmem:[%s12 + $0x120] sm:$0xff]
      %v3177 = vld [vmem:[%s12 + $0x128] sm:$0xff]
      %v3178 = vld [vmem:[%s12 + $0x130] sm:$0xff]
      %v3179 = vld [vmem:[%s12 + $0x138] sm:$0xff]
      %v3180 = vld [vmem:[%s12 + $0x140] sm:$0xff]
      %v3181 = vld [vmem:[%s12 + $0x148] sm:$0xff]
      %v3182 = vld [vmem:[%s12 + $0x150] sm:$0xff]
      %v3183 = vld [vmem:[%s12 + $0x158] sm:$0xff]
      %v3184 = vld [vmem:[%s12 + $0x160] sm:$0xff]
      %v3185 = vld [vmem:[%s12 + $0x168] sm:$0xff]
      %v3186 = vld [vmem:[%s12 + $0x170] sm:$0xff]
      %v3187 = vld [vmem:[%s12 + $0x178] sm:$0xff]
      %v3188 = vld [vmem:[%s12 + $0x180] sm:$0xff]
      %v3189 = vld [vmem:[%s12 + $0x188] sm:$0xff]
      %v3190 = vld [vmem:[%s12 + $0x190] sm:$0xff]
      %v3191 = vld [vmem:[%s12 + $0x198] sm:$0xff]
      %v3192 = vld [vmem:[%s12 + $0x1a0] sm:$0xff]
      %v3193 = vld [vmem:[%s12 + $0x1a8] sm:$0xff]
      %v3194 = vld [vmem:[%s12 + $0x1b0] sm:$0xff]
      %v3195 = vld [vmem:[%s12 + $0x1b8] sm:$0xff]
      %v3196 = vld [vmem:[%s12 + $0x1c0] sm:$0xff]
      %v3197 = vld [vmem:[%s12 + $0x1c8] sm:$0xff]
      %v3198 = vld [vmem:[%s12 + $0x1d0] sm:$0xff]
      %v3199 = vld [vmem:[%s12 + $0x1d8] sm:$0xff]
      %v3200 = vld [vmem:[%s12 + $0x1e0] sm:$0xff]
      %v3201 = vld [vmem:[%s12 + $0x1e8] sm:$0xff]
      %v3202 = vld [vmem:[%s12 + $0x1f0] sm:$0xff]
      %v3203 = vld [vmem:[%s12 + $0x1f8] sm:$0xff]
      %v3204 = vld [vmem:[%s12 + $0x200] sm:$0xff]
      %v3205 = vld [vmem:[%s12 + $0x208] sm:$0xff]
      %v3206 = vld [vmem:[%s12 + $0x210] sm:$0xff]
      %v3207 = vld [vmem:[%s12 + $0x218] sm:$0xff]
      %v3208 = vld [vmem:[%s12 + $0x220] sm:$0xff]
      %v3209 = vld [vmem:[%s12 + $0x228] sm:$0xff]
      %v3210 = vld [vmem:[%s12 + $0x230] sm:$0xff]
      %v3211 = vld [vmem:[%s12 + $0x238] sm:$0xff]
      %v3212 = vld [vmem:[%s12 + $0x240] sm:$0xff]
      %v3213 = vld [vmem:[%s12 + $0x248] sm:$0xff]
      %v3214 = vld [vmem:[%s12 + $0x250] sm:$0xff]
      %v3215 = vld [vmem:[%s12 + $0x258] sm:$0xff]
      %v3216 = vld [vmem:[%s12 + $0x260] sm:$0xff]
      %v3217 = vld [vmem:[%s12 + $0x268] sm:$0xff]
      %v3218 = vld [vmem:[%s12 + $0x270] sm:$0xff]
      %v3219 = vld [vmem:[%s12 + $0x278] sm:$0xff]
      %v3220 = vld [vmem:[%s12 + $0x280] sm:$0xff]
      %v3221 = vld [vmem:[%s12 + $0x288] sm:$0xff]
      %v3222 = vld [vmem:[%s12 + $0x290] sm:$0xff]
      %v3223 = vld [vmem:[%s12 + $0x298] sm:$0xff]
      %v3224 = vld [vmem:[%s12 + $0x2a0] sm:$0xff]
      %v3225 = vld [vmem:[%s12 + $0x2a8] sm:$0xff]
      %v3226 = vld [vmem:[%s12 + $0x2b0] sm:$0xff]
      %v3227 = vld [vmem:[%s12 + $0x2b8] sm:$0xff]
      %v3228 = vld [vmem:[%s12 + $0x2c0] sm:$0xff]
      %v3229 = vld [vmem:[%s12 + $0x2c8] sm:$0xff]
      %v3230 = vld [vmem:[%s12 + $0x2d0] sm:$0xff]
      %v3231 = vld [vmem:[%s12 + $0x2d8] sm:$0xff]
      %v3232 = vld [vmem:[%s12 + $0x2e0] sm:$0xff]
      %v3233 = vld [vmem:[%s12 + $0x2e8] sm:$0xff]
      %v3234 = vld [vmem:[%s12 + $0x2f0] sm:$0xff]
      %v3235 = vld [vmem:[%s12 + $0x2f8] sm:$0xff]
      %v3236 = vld [vmem:[%s12 + $0x300] sm:$0xff]
      %v3237 = vld [vmem:[%s12 + $0x308] sm:$0xff]
      %v3238 = vld [vmem:[%s12 + $0x310] sm:$0xff]
      %v3239 = vld [vmem:[%s12 + $0x318] sm:$0xff]
      %v3240 = vld [vmem:[%s12 + $0x320] sm:$0xff]
      %v3241 = vld [vmem:[%s12 + $0x328] sm:$0xff]
      %v3242 = vld [vmem:[%s12 + $0x330] sm:$0xff]
      %v3243 = vld [vmem:[%s12 + $0x338] sm:$0xff]
      %v3244 = vld [vmem:[%s12 + $0x340] sm:$0xff]
      %v3245 = vld [vmem:[%s12 + $0x348] sm:$0xff]
      %v3246 = vld [vmem:[%s12 + $0x350] sm:$0xff]
      %v3247 = vld [vmem:[%s12 + $0x358] sm:$0xff]
      %v3248 = vld [vmem:[%s12 + $0x360] sm:$0xff]
      %v3249 = vld [vmem:[%s12 + $0x368] sm:$0xff]
      %v3250 = vld [vmem:[%s12 + $0x370] sm:$0xff]
      %v3251 = vld [vmem:[%s12 + $0x378] sm:$0xff]
      %v3252 = vld [vmem:[%s12 + $0x380] sm:$0xff]
      %v3253 = vld [vmem:[%s12 + $0x388] sm:$0xff]
      %v3254 = vld [vmem:[%s12 + $0x390] sm:$0xff]
      %v3255 = vld [vmem:[%s12 + $0x398] sm:$0xff]
      %v3256 = vld [vmem:[%s12 + $0x3a0] sm:$0xff]
      %v3257 = vld [vmem:[%s12 + $0x3a8] sm:$0xff]
      %v3258 = vld [vmem:[%s12 + $0x3b0] sm:$0xff]
      %v3259 = vld [vmem:[%s12 + $0x3b8] sm:$0xff]
      %v3260 = vld [vmem:[%s12 + $0x3c0] sm:$0xff]
      %v3261 = vld [vmem:[%s12 + $0x3c8] sm:$0xff]
      %v3262 = vld [vmem:[%s12 + $0x3d0] sm:$0xff]
      %v3263 = vld [vmem:[%s12 + $0x3d8] sm:$0xff]
      %v3264 = vld [vmem:[%s12 + $0x3e0] sm:$0xff]
      %v3265 = vld [vmem:[%s12 + $0x3e8] sm:$0xff]
      %v3266 = vld [vmem:[%s12 + $0x3f0] sm:$0xff]
      %v3267 = vld [vmem:[%s12 + $0x3f8] sm:$0xff]
      %v3268 = vld [vmem:[%s13] sm:$0x3]
      %v3270 = vlaneseq
      %v3271 = vshrl.u32 %v3270, 7
      %v3272 = vsub.s32 0, %v3271
      %v3273 = vrot.slane %v3268, %v3272
      %v3274 = vlaneseq
      %v3275 = vshrl.u32 %v3274, 7
      %v3276 = vsub.s32 1, %v3275
      %v3277 = vrot.slane %v3268, %v3276
      %3280 = vmatprep.subr.mxu0 %v3171
      %3281 = vmatpush1.msra.mxu0 %v3170
      %3282 = vmatprep.subr.mxu0 %v3169
      %3283 = vmatpush1.msra.mxu0 %v3168
      %3284 = vmatprep.subr.mxu0 %v3167
      %3285 = vmatpush1.msra.mxu0 %v3166
      %3286 = vmatprep.subr.mxu0 %v3165
      %3287 = vmatpush1.msra.mxu0 %v3164
      %3288 = vmatprep.subr.mxu0 %v3163
      %3289 = vmatpush1.msra.mxu0 %v3162
      %3290 = vmatprep.subr.mxu0 %v3161
      %3291 = vmatpush1.msra.mxu0 %v3160
      %3292 = vmatprep.subr.mxu0 %v3159
      %3293 = vmatpush1.msra.mxu0 %v3158
      %3294 = vmatprep.subr.mxu0 %v3157
      %3295 = vmatpush1.msra.mxu0 %v3156
      %3296 = vmatprep.subr.mxu0 %v3155
      %3297 = vmatpush1.msra.mxu0 %v3154
      %3298 = vmatprep.subr.mxu0 %v3153
      %3299 = vmatpush1.msra.mxu0 %v3152
      %3300 = vmatprep.subr.mxu0 %v3151
      %3301 = vmatpush1.msra.mxu0 %v3150
      %3302 = vmatprep.subr.mxu0 %v3149
      %3303 = vmatpush1.msra.mxu0 %v3148
      %3304 = vmatprep.subr.mxu0 %v3147
      %3305 = vmatpush1.msra.mxu0 %v3146
      %3306 = vmatprep.subr.mxu0 %v3145
      %3307 = vmatpush1.msra.mxu0 %v3144
      %3308 = vmatprep.subr.mxu0 %v3143
      %3309 = vmatpush1.msra.mxu0 %v3142
      %3310 = vmatprep.subr.mxu0 %v3141
      %3311 = vmatpush1.msra.mxu0 %v3140
      %3312 = vmatprep.subr.mxu0 %v3203
      %3313 = vmatpush2.msra.mxu0 %v3202
      %3314 = vmatprep.subr.mxu0 %v3201
      %3315 = vmatpush2.msra.mxu0 %v3200
      %3316 = vmatprep.subr.mxu0 %v3199
      %3317 = vmatpush2.msra.mxu0 %v3198
      %3318 = vmatprep.subr.mxu0 %v3197
      %3319 = vmatpush2.msra.mxu0 %v3196
      %3320 = vmatprep.subr.mxu0 %v3195
      %3321 = vmatpush2.msra.mxu0 %v3194
      %3322 = vmatprep.subr.mxu0 %v3193
      %3323 = vmatpush2.msra.mxu0 %v3192
      %3324 = vmatprep.subr.mxu0 %v3191
      %3325 = vmatpush2.msra.mxu0 %v3190
      %3326 = vmatprep.subr.mxu0 %v3189
      %3327 = vmatpush2.msra.mxu0 %v3188
      %3328 = vmatprep.subr.mxu0 %v3187
      %3329 = vmatpush2.msra.mxu0 %v3186
      %3330 = vmatprep.subr.mxu0 %v3185
      %3331 = vmatpush2.msra.mxu0 %v3184
      %3332 = vmatprep.subr.mxu0 %v3183
      %3333 = vmatpush2.msra.mxu0 %v3182
      %3334 = vmatprep.subr.mxu0 %v3181
      %3335 = vmatpush2.msra.mxu0 %v3180
      %3336 = vmatprep.subr.mxu0 %v3179
      %3337 = vmatpush2.msra.mxu0 %v3178
      %3338 = vmatprep.subr.mxu0 %v3177
      %3339 = vmatpush2.msra.mxu0 %v3176
      %3340 = vmatprep.subr.mxu0 %v3175
      %3341 = vmatpush2.msra.mxu0 %v3174
      %3342 = vmatprep.subr.mxu0 %v3173
      %3343 = vmatpush2.msra.mxu0 %v3172
      %3344 = vmatprep.mubr.f32.mxu0 %v3137
      %3345 = vmatmul.mubr.f32.gmra.mxu0 %v3136
      %v3346 = vpop.f32.mrf.mxu0
      %v3347 = vadd.f32 %v3273, %v3346
      %v3348 = vpop.f32.mrf.mxu0
      %v3349 = vadd.f32 %v3277, %v3348
      %3350 = vdwg.mxu0
      %3351 = vmatprep.subr.mxu0 %v3235
      %3352 = vmatpush1.msra.mxu0 %v3234
      %3353 = vmatprep.subr.mxu0 %v3233
      %3354 = vmatpush1.msra.mxu0 %v3232
      %3355 = vmatprep.subr.mxu0 %v3231
      %3356 = vmatpush1.msra.mxu0 %v3230
      %3357 = vmatprep.subr.mxu0 %v3229
      %3358 = vmatpush1.msra.mxu0 %v3228
      %3359 = vmatprep.subr.mxu0 %v3227
      %3360 = vmatpush1.msra.mxu0 %v3226
      %3361 = vmatprep.subr.mxu0 %v3225
      %3362 = vmatpush1.msra.mxu0 %v3224
      %3363 = vmatprep.subr.mxu0 %v3223
      %3364 = vmatpush1.msra.mxu0 %v3222
      %3365 = vmatprep.subr.mxu0 %v3221
      %3366 = vmatpush1.msra.mxu0 %v3220
      %3367 = vmatprep.subr.mxu0 %v3219
      %3368 = vmatpush1.msra.mxu0 %v3218
      %3369 = vmatprep.subr.mxu0 %v3217
      %3370 = vmatpush1.msra.mxu0 %v3216
      %3371 = vmatprep.subr.mxu0 %v3215
      %3372 = vmatpush1.msra.mxu0 %v3214
      %3373 = vmatprep.subr.mxu0 %v3213
      %3374 = vmatpush1.msra.mxu0 %v3212
      %3375 = vmatprep.subr.mxu0 %v3211
      %3376 = vmatpush1.msra.mxu0 %v3210
      %3377 = vmatprep.subr.mxu0 %v3209
      %3378 = vmatpush1.msra.mxu0 %v3208
      %3379 = vmatprep.subr.mxu0 %v3207
      %3380 = vmatpush1.msra.mxu0 %v3206
      %3381 = vmatprep.subr.mxu0 %v3205
      %3382 = vmatpush1.msra.mxu0 %v3204
      %3383 = vmatprep.subr.mxu0 %v3267
      %3384 = vmatpush2.msra.mxu0 %v3266
      %3385 = vmatprep.subr.mxu0 %v3265
      %3386 = vmatpush2.msra.mxu0 %v3264
      %3387 = vmatprep.subr.mxu0 %v3263
      %3388 = vmatpush2.msra.mxu0 %v3262
      %3389 = vmatprep.subr.mxu0 %v3261
      %3390 = vmatpush2.msra.mxu0 %v3260
      %3391 = vmatprep.subr.mxu0 %v3259
      %3392 = vmatpush2.msra.mxu0 %v3258
      %3393 = vmatprep.subr.mxu0 %v3257
      %3394 = vmatpush2.msra.mxu0 %v3256
      %3395 = vmatprep.subr.mxu0 %v3255
      %3396 = vmatpush2.msra.mxu0 %v3254
      %3397 = vmatprep.subr.mxu0 %v3253
      %3398 = vmatpush2.msra.mxu0 %v3252
      %3399 = vmatprep.subr.mxu0 %v3251
      %3400 = vmatpush2.msra.mxu0 %v3250
      %3401 = vmatprep.subr.mxu0 %v3249
      %3402 = vmatpush2.msra.mxu0 %v3248
      %3403 = vmatprep.subr.mxu0 %v3247
      %3404 = vmatpush2.msra.mxu0 %v3246
      %3405 = vmatprep.subr.mxu0 %v3245
      %3406 = vmatpush2.msra.mxu0 %v3244
      %3407 = vmatprep.subr.mxu0 %v3243
      %3408 = vmatpush2.msra.mxu0 %v3242
      %3409 = vmatprep.subr.mxu0 %v3241
      %3410 = vmatpush2.msra.mxu0 %v3240
      %3411 = vmatprep.subr.mxu0 %v3239
      %3412 = vmatpush2.msra.mxu0 %v3238
      %3413 = vmatprep.subr.mxu0 %v3237
      %3414 = vmatpush2.msra.mxu0 %v3236
      %3415 = vmatprep.mubr.f32.mxu0 %v3139
      %3416 = vmatmul.mubr.f32.gmra.mxu0 %v3138
      %v3417 = vpop.f32.mrf.mxu0
      %v3418 = vadd.f32 %v3347, %v3417
      %v3419 = vpop.f32.mrf.mxu0
      %v3420 = vadd.f32 %v3349, %v3419
      %3421 = vdwg.mxu0
      %v3422 = vadd.f32 %v2782, %v3418
      %v3423 = vadd.f32 %v2783, %v3420
      %v3424 = vlaneseq
      %v3425 = vshrl.u32 %v3424, 7
      %vm3426 = vcmp.lt.s32.totalorder %v3425, 5
      %v3427 = vsel %vm3426, %v3422, 0.0
      %v3428 = vsel %vm3426, %v3423, 0.0
      %3429 = vst [vmem:[%s467] sm:$0xff] %v3427
      %3430 = vst [vmem:[%s467 + $0x8] sm:$0xff] %v3428
      %p3431 = scmp.lt.s32.totalorder %s25, 1
      %s3432 = scalar_select %p3431, %s25, 1
      %s3433 = smul.addr %s3432, 2
      %s3434 = smul.addr %s3433, 8
      %s3435 = scalar_lea.vmem %s14, %s3434
      // Predicated region
      $region77: #{vit_extractor_forward.5} parent=75 // pred_check
        %p3436 = pneg %p342
      $region78: #{vit_extractor_forward.5} parent=75 // pred_check_branch
        %3438 = sbr.rel (%p3436) target = $region80
      $region79: #{vit_extractor_forward.5} parent=75 // pred_region
        _
      $region80: #{vit_extractor_forward.5} parent=75 // pred_fallthru
        _
    $region76: #{vit_extractor_forward.5} parent=5 // pred_fallthru
      _
    %p3439 = scmp.le.s32.totalorder 2, %s20
    // Predicated region
    $region81: #{vit_extractor_forward.5} parent=5 // pred_check
      %p3440 = pneg %p3439
    $region82: #{vit_extractor_forward.5} parent=5 // pred_check_branch
      %3442 = sbr.rel (%p3440) target = $region84
    $region83: #{vit_extractor_forward.5} parent=5 // pred_region
      %s3443 = ssub.s32 %s20, 2
      // Predicated region
      $region85: #{vit_extractor_forward.5} parent=83 // pred_check
        %p3444 = pneg %p348
      $region86: #{vit_extractor_forward.5} parent=83 // pred_check_branch
        %3446 = sbr.rel (%p3444) target = $region88
      $region87: #{vit_extractor_forward.5} parent=83 // pred_region
        %p3447 = scmp.lt.s32.totalorder %s26, 1
        %s3448 = scalar_select %p3447, %s26, 1
        %s3449 = smul.addr %s3448, 2
        %s3450 = smul.addr %s3449, 8
        %s3451 = scalar_lea.vmem %s14, %s3450
      $region88: #{vit_extractor_forward.5} parent=83 // pred_fallthru
        _
    $region84: #{vit_extractor_forward.5} parent=5 // pred_fallthru
      _
  $region6: #{vit_extractor_forward.5} parent=0 // loop_footer
    %s24 = sadd.s32 1, %s20
  $region7: #{vit_extractor_forward.5} parent=0 // loop_footer_branch
    %19 = sbr.rel target = $region3
  $region8: #{vit_extractor_forward.5} parent=0 // loop_exit
    _

</llo_original>
